<compile_context>
chip_gen: v5e
topology: v5e:2x2
jax: 0.10.0
libtpu: 0.0.40
codegen_flags: <defaults>
</compile_context>

<pallas_src>
import jax
import jax.numpy as jnp
from jax import lax
from jax.experimental import pallas as pl
from jax.experimental.pallas import tpu as pltpu
import numpy as np

EPS = 1e-5                      # nn.InstanceNorm2d default
COMPUTE_DTYPE = jnp.bfloat16    # MXU input dtype (accumulation stays f32)


def _residual_block_kernel(x_ref,
                           w1_ref, g1_ref, bt1_ref,
                           w2_ref, g2_ref, bt2_ref,
                           o_ref,
                           pad_ref):
    # x_ref: (1, H, W, C); pad_ref: (H+2, W+2, C) persistent VMEM scratch.
    _, H, W, C = x_ref.shape
    HW = H * W

    def write_padded(img):
        # img: (H, W, C) in COMPUTE_DTYPE.  ReflectionPad2d(1).
        # Requires H >= 2 and W >= 2 (always true for real style-transfer sizes).
        pad_ref[pl.ds(1, H), pl.ds(1, W), :] = img                         # interior
        pad_ref[pl.ds(0, 1), pl.ds(1, W), :] = img[1:2, :, :]              # top row
        pad_ref[pl.ds(H + 1, 1), pl.ds(1, W), :] = img[H - 2:H - 1, :, :]  # bottom
        # Left/right columns mirror padded columns 2 and W-1; since the top and
        # bottom rows are already in place, the corners come along for free.
        pad_ref[:, pl.ds(0, 1), :] = pad_ref[:, pl.ds(2, 1), :]
        pad_ref[:, pl.ds(W + 1, 1), :] = pad_ref[:, pl.ds(W - 1, 1), :]

    def conv3x3(wg_ref):
        # out[y, x] = sum_{dy,dx} pad[y+dy, x+dx, :] @ w[dy, dx]
        # The 3 dy-taps for a fixed dx are grouped along K (K = 3*C per matmul),
        # so the MXU sees wide contractions instead of 9 skinny K=C matmuls.
        # Conv bias intentionally omitted: it is exactly cancelled by the
        # InstanceNorm mean-subtraction that always follows this conv.
        acc = None
        for dx in range(3):
            taps = [pad_ref[pl.ds(dy, H), pl.ds(dx, W), :].reshape(HW, C)
                    for dy in range(3)]
            patch = jnp.concatenate(taps, axis=-1)           # (HW, 3C), bf16
            t = jnp.dot(patch, wg_ref[dx],                   # (3C, C), bf16
                        preferred_element_type=jnp.float32)
            acc = t if acc is None else acc + t
        return acc                                           # (HW, C), f32

    def instance_norm(a2d, g_ref, bt_ref):
        # One-pass statistics: var = E[x^2] - mean^2 (biased, matches
        # nn.InstanceNorm2d), all in f32; normalization folded into one FMA.
        inv_n = 1.0 / HW
        mean = jnp.sum(a2d, axis=0, keepdims=True) * inv_n
        ex2 = jnp.sum(a2d * a2d, axis=0, keepdims=True) * inv_n
        var = ex2 - mean * mean
        scale = lax.rsqrt(var + EPS) * g_ref[...]            # (1, C)
        shift = bt_ref[...] - mean * scale                   # (1, C)
        return a2d * scale + shift

    # conv1 -> IN1 -> relu
    write_padded(x_ref[0].astype(COMPUTE_DTYPE))
    out = conv3x3(w1_ref)
    out = instance_norm(out, g1_ref, bt1_ref)
    out = jnp.maximum(out, 0.0)

    # conv2 -> IN2 (padded scratch is fully overwritten, safe to reuse)
    write_padded(out.reshape(H, W, C).astype(COMPUTE_DTYPE))
    out = conv3x3(w2_ref)
    out = instance_norm(out, g2_ref, bt2_ref)

    # residual add — re-read the input block so no extra f32 copy stays live
    o_ref[0] = (out.reshape(H, W, C)
                + x_ref[0].astype(jnp.float32)).astype(o_ref.dtype)


def _group_weights(w, dtype):
    # HWIO (3, 3, Cin, Cout) -> per-dx grouped (3, 3*Cin, Cout) so that
    # wg[dx, dy*Cin + cin, cout] == w[dy, dx, cin, cout].
    kh, kw, cin, cout = w.shape
    return jnp.transpose(w, (1, 0, 2, 3)).reshape(kw, kh * cin, cout).astype(dtype)


def _vmem_limit_bytes(H, W, C):
    f32 = 4
    c16 = jnp.dtype(COMPUTE_DTYPE).itemsize
    img = H * W * C
    need = (
        2 * 2 * img * f32                               # in + out blocks, 2-buffered
        + (H + 2) * (W + 2) * C * c16                   # padded scratch
        + 2 * 2 * (9 * C * C * c16 + 2 * C * f32)       # weights + affine, 2-buffered
        + 3 * img * c16 + 10 * img * f32                # live temporaries (patch/acc/IN)
    )
    return int(min(max(2 * need, 16 * 1024 * 1024), 64 * 1024 * 1024))


def residual_block_nhwc(x, params):
    """Primary entry point. x: (N, H, W, C) float32 (channels last)."""
    w1, b1, g1, bt1, w2, b2, g2, bt2 = params
    # Conv biases b1/b2 are per-channel constants over (H, W); the InstanceNorm
    # mean-subtraction that follows each conv cancels them exactly, so they
    # never influence the block's output.  They are accepted here only for
    # interface compatibility with the PyTorch module.
    del b1, b2
    N, H, W, C = x.shape

    wg1 = _group_weights(w1, COMPUTE_DTYPE)
    wg2 = _group_weights(w2, COMPUTE_DTYPE)

    img_spec = pl.BlockSpec((1, H, W, C), lambda n: (n, 0, 0, 0))
    wg_spec = pl.BlockSpec((3, 3 * C, C), lambda n: (0, 0, 0))
    v_spec = pl.BlockSpec((1, C), lambda n: (0, 0))

    return pl.pallas_call(
        _residual_block_kernel,
        out_shape=jax.ShapeDtypeStruct((N, H, W, C), x.dtype),
        grid_spec=pltpu.PrefetchScalarGridSpec(
            num_scalar_prefetch=0,
            grid=(N,),
            in_specs=[img_spec,
                      wg_spec, v_spec, v_spec,
                      wg_spec, v_spec, v_spec],
            out_specs=img_spec,
            scratch_shapes=[pltpu.VMEM((H + 2, W + 2, C), COMPUTE_DTYPE)],
        ),
        compiler_params=pltpu.CompilerParams(
            dimension_semantics=("parallel",),
            vmem_limit_bytes=_vmem_limit_bytes(H, W, C)),
    )(x, wg1, g1, bt1, wg2, g2, bt2)


def residual_block(x_nchw, params):
    """PyTorch-layout (NCHW) compatibility wrapper.  For a stack of residual
    blocks, use residual_block_nhwc and transpose once at network entry/exit."""
    x = jnp.transpose(x_nchw, (0, 2, 3, 1))
    out = residual_block_nhwc(x, params)
    return jnp.transpose(out, (0, 3, 1, 2))


def init_params(key, channels):
    C = channels
    ks = jax.random.split(key, 8)
    bound = 1.0 / np.sqrt(C * 3 * 3)
    # conv weights in HWIO layout (kh, kw, c_in, c_out)
    w1 = jax.random.uniform(ks[0], (3, 3, C, C), jnp.float32, -bound, bound)
    b1 = jax.random.uniform(ks[1], (1, C), jnp.float32, -bound, bound)
    w2 = jax.random.uniform(ks[2], (3, 3, C, C), jnp.float32, -bound, bound)
    b2 = jax.random.uniform(ks[3], (1, C), jnp.float32, -bound, bound)
    # InstanceNorm2d(affine=True) params — random so the affine path is exercised.
    g1 = 1.0 + 0.1 * jax.random.normal(ks[4], (1, C), jnp.float32)
    bt1 = 0.1 * jax.random.normal(ks[5], (1, C), jnp.float32)
    g2 = 1.0 + 0.1 * jax.random.normal(ks[6], (1, C), jnp.float32)
    bt2 = 0.1 * jax.random.normal(ks[7], (1, C), jnp.float32)
    return (w1, b1, g1, bt1, w2, b2, g2, bt2)


def residual_block_ref(x_nchw, params):
    """Pure-JAX reference mirroring the PyTorch module (including conv biases),
    using the same bf16 matmul-input precision as the kernel (f32 accum)."""
    w1, b1, g1, bt1, w2, b2, g2, bt2 = params

    def conv(x, w, b):
        xp = jnp.pad(x, ((0, 0), (1, 1), (1, 1), (0, 0)), mode="reflect")
        y = lax.conv_general_dilated(
            xp.astype(COMPUTE_DTYPE), w.astype(COMPUTE_DTYPE),
            window_strides=(1, 1), padding="VALID",
            dimension_numbers=("NHWC", "HWIO", "NHWC"),
            preferred_element_type=jnp.float32)
        return y + b

    def inorm(x, g, bt):
        m = jnp.mean(x, axis=(1, 2), keepdims=True)
        v = jnp.mean((x - m) ** 2, axis=(1, 2), keepdims=True)
        return (x - m) / jnp.sqrt(v + EPS) * g + bt

    x = jnp.transpose(x_nchw, (0, 2, 3, 1)).astype(jnp.float32)
    out = jax.nn.relu(inorm(conv(x, w1, b1), g1, bt1))
    out = inorm(conv(out, w2, b2), g2, bt2)
    out = out + x
    return jnp.transpose(out, (0, 3, 1, 2))


if __name__ == "__main__":
    key = jax.random.PRNGKey(0)
    k_x, k_p = jax.random.split(key)

    N, C, H, W = 2, 4, 16, 16
    x = jax.random.normal(k_x, (N, C, H, W), jnp.float32)
    params = init_params(k_p, C)

    out = residual_block(x, params)
    out = jax.block_until_ready(out)

    ref = jax.block_until_ready(residual_block_ref(x, params))
    # bf16 MXU inputs -> tolerance looser than a pure-f32 comparison.
    np.testing.assert_allclose(np.asarray(out), np.asarray(ref),
                               rtol=1e-2, atol=1e-2)
    print("KERNEL_OK")
</pallas_src>

<mosaic_0001>
module attributes {stable_mosaic.version = 11 : i64} {
  func.func @_residual_block_kernel(%arg0: i32, %arg1: memref<1x16x16x4xf32, #tpu.memory_space<vmem>>, %arg2: memref<3x12x4xbf16, #tpu.memory_space<vmem>>, %arg3: memref<1x4xf32, #tpu.memory_space<vmem>>, %arg4: memref<1x4xf32, #tpu.memory_space<vmem>>, %arg5: memref<3x12x4xbf16, #tpu.memory_space<vmem>>, %arg6: memref<1x4xf32, #tpu.memory_space<vmem>>, %arg7: memref<1x4xf32, #tpu.memory_space<vmem>>, %arg8: memref<1x16x16x4xf32, #tpu.memory_space<vmem>>, %arg9: memref<18x18x4xbf16, #tpu.memory_space<vmem>>) attributes {dimension_semantics = [#tpu.dimension_semantics<parallel>], iteration_bounds = array<i64: 2>, scalar_prefetch = 0 : i64, scratch_operands = 1 : i64, tpu.core_type = #tpu.core_type<tc>, window_params = [{transform_indices = @transform_0, window_bounds = array<i64: 1, 16, 16, 4>}, {pipeline_mode = #tpu.pipeline_mode<synchronous>, transform_indices = @transform_1, window_bounds = array<i64: 3, 12, 4>}, {pipeline_mode = #tpu.pipeline_mode<synchronous>, transform_indices = @transform_2, window_bounds = array<i64: 1, 4>}, {pipeline_mode = #tpu.pipeline_mode<synchronous>, transform_indices = @transform_3, window_bounds = array<i64: 1, 4>}, {pipeline_mode = #tpu.pipeline_mode<synchronous>, transform_indices = @transform_4, window_bounds = array<i64: 3, 12, 4>}, {pipeline_mode = #tpu.pipeline_mode<synchronous>, transform_indices = @transform_5, window_bounds = array<i64: 1, 4>}, {pipeline_mode = #tpu.pipeline_mode<synchronous>, transform_indices = @transform_6, window_bounds = array<i64: 1, 4>}, {transform_indices = @transform_7, window_bounds = array<i64: 1, 16, 16, 4>}]} {
    %c0 = arith.constant 0 : index
    %c0_0 = arith.constant 0 : index
    %c0_1 = arith.constant 0 : index
    %c0_2 = arith.constant 0 : index
    %0 = vector.load %arg1[%c0, %c0_0, %c0_1, %c0_2] : memref<1x16x16x4xf32, #tpu.memory_space<vmem>>, vector<1x16x16x4xf32>
    %1 = vector.shape_cast %0 : vector<1x16x16x4xf32> to vector<16x16x4xf32>
    %2 = arith.truncf %1 : vector<16x16x4xf32> to vector<16x16x4xbf16>
    %c1 = arith.constant 1 : index
    %c1_3 = arith.constant 1 : index
    %c0_4 = arith.constant 0 : index
    %3 = vector.load %arg9[%c1, %c1_3, %c0_4] : memref<18x18x4xbf16, #tpu.memory_space<vmem>>, vector<16x16x4xbf16>
    tpu.vector_store %arg9[%c1, %c1_3, %c0_4], %2 {strides = array<i32>} : memref<18x18x4xbf16, #tpu.memory_space<vmem>>, vector<16x16x4xbf16>,
    %4 = vector.extract_strided_slice %2 {offsets = [1, 0, 0], sizes = [1, 16, 4], strides = [1, 1, 1]} : vector<16x16x4xbf16> to vector<1x16x4xbf16>
    %c0_5 = arith.constant 0 : index
    %c1_6 = arith.constant 1 : index
    %c0_7 = arith.constant 0 : index
    %5 = vector.load %arg9[%c0_5, %c1_6, %c0_7] : memref<18x18x4xbf16, #tpu.memory_space<vmem>>, vector<1x16x4xbf16>
    tpu.vector_store %arg9[%c0_5, %c1_6, %c0_7], %4 {strides = array<i32>} : memref<18x18x4xbf16, #tpu.memory_space<vmem>>, vector<1x16x4xbf16>,
    %6 = vector.extract_strided_slice %2 {offsets = [14, 0, 0], sizes = [1, 16, 4], strides = [1, 1, 1]} : vector<16x16x4xbf16> to vector<1x16x4xbf16>
    %c17 = arith.constant 17 : index
    %c1_8 = arith.constant 1 : index
    %c0_9 = arith.constant 0 : index
    %7 = vector.load %arg9[%c17, %c1_8, %c0_9] : memref<18x18x4xbf16, #tpu.memory_space<vmem>>, vector<1x16x4xbf16>
    tpu.vector_store %arg9[%c17, %c1_8, %c0_9], %6 {strides = array<i32>} : memref<18x18x4xbf16, #tpu.memory_space<vmem>>, vector<1x16x4xbf16>,
    %c0_10 = arith.constant 0 : index
    %c2 = arith.constant 2 : index
    %c0_11 = arith.constant 0 : index
    %8 = vector.load %arg9[%c0_10, %c2, %c0_11] : memref<18x18x4xbf16, #tpu.memory_space<vmem>>, vector<18x1x4xbf16>
    %c0_12 = arith.constant 0 : index
    %c0_13 = arith.constant 0 : index
    %c0_14 = arith.constant 0 : index
    %9 = vector.load %arg9[%c0_12, %c0_13, %c0_14] : memref<18x18x4xbf16, #tpu.memory_space<vmem>>, vector<18x1x4xbf16>
    tpu.vector_store %arg9[%c0_12, %c0_13, %c0_14], %8 {strides = array<i32>} : memref<18x18x4xbf16, #tpu.memory_space<vmem>>, vector<18x1x4xbf16>,
    %c0_15 = arith.constant 0 : index
    %c15 = arith.constant 15 : index
    %c0_16 = arith.constant 0 : index
    %10 = vector.load %arg9[%c0_15, %c15, %c0_16] : memref<18x18x4xbf16, #tpu.memory_space<vmem>>, vector<18x1x4xbf16>
    %c0_17 = arith.constant 0 : index
    %c17_18 = arith.constant 17 : index
    %c0_19 = arith.constant 0 : index
    %11 = vector.load %arg9[%c0_17, %c17_18, %c0_19] : memref<18x18x4xbf16, #tpu.memory_space<vmem>>, vector<18x1x4xbf16>
    tpu.vector_store %arg9[%c0_17, %c17_18, %c0_19], %10 {strides = array<i32>} : memref<18x18x4xbf16, #tpu.memory_space<vmem>>, vector<18x1x4xbf16>,
    %c0_20 = arith.constant 0 : index
    %c0_21 = arith.constant 0 : index
    %c0_22 = arith.constant 0 : index
    %12 = vector.load %arg9[%c0_20, %c0_21, %c0_22] : memref<18x18x4xbf16, #tpu.memory_space<vmem>>, vector<16x16x4xbf16>
    %13 = vector.shape_cast %12 : vector<16x16x4xbf16> to vector<256x4xbf16>
    %c1_23 = arith.constant 1 : index
    %c0_24 = arith.constant 0 : index
    %c0_25 = arith.constant 0 : index
    %14 = vector.load %arg9[%c1_23, %c0_24, %c0_25] : memref<18x18x4xbf16, #tpu.memory_space<vmem>>, vector<16x16x4xbf16>
    %15 = vector.shape_cast %14 : vector<16x16x4xbf16> to vector<256x4xbf16>
    %c2_26 = arith.constant 2 : index
    %c0_27 = arith.constant 0 : index
    %c0_28 = arith.constant 0 : index
    %16 = vector.load %arg9[%c2_26, %c0_27, %c0_28] : memref<18x18x4xbf16, #tpu.memory_space<vmem>>, vector<16x16x4xbf16>
    %17 = vector.shape_cast %16 : vector<16x16x4xbf16> to vector<256x4xbf16>
    %18 = tpu.concatenate %13, %15, %17 in 1 : vector<256x4xbf16>, vector<256x4xbf16>, vector<256x4xbf16> -> vector<256x12xbf16>
    %c0_29 = arith.constant 0 : index
    %c0_30 = arith.constant 0 : index
    %c0_31 = arith.constant 0 : index
    %19 = vector.load %arg2[%c0_29, %c0_30, %c0_31] : memref<3x12x4xbf16, #tpu.memory_space<vmem>>, vector<1x12x4xbf16>
    %20 = vector.shape_cast %19 : vector<1x12x4xbf16> to vector<12x4xbf16>
    %cst = arith.constant dense<0.000000e+00> : vector<256x4xf32>
    %21 = tpu.matmul %18, %20, %cst {dimension_numbers = #tpu.dot_dimension_numbers<[1], [0], [0], [1], [0, 0, 1, 1], [], []>} : vector<256x12xbf16>, vector<12x4xbf16>, vector<256x4xf32> -> vector<256x4xf32>
    %c0_32 = arith.constant 0 : index
    %c1_33 = arith.constant 1 : index
    %c0_34 = arith.constant 0 : index
    %22 = vector.load %arg9[%c0_32, %c1_33, %c0_34] : memref<18x18x4xbf16, #tpu.memory_space<vmem>>, vector<16x16x4xbf16>
    %23 = vector.shape_cast %22 : vector<16x16x4xbf16> to vector<256x4xbf16>
    %c1_35 = arith.constant 1 : index
    %c1_36 = arith.constant 1 : index
    %c0_37 = arith.constant 0 : index
    %24 = vector.load %arg9[%c1_35, %c1_36, %c0_37] : memref<18x18x4xbf16, #tpu.memory_space<vmem>>, vector<16x16x4xbf16>
    %25 = vector.shape_cast %24 : vector<16x16x4xbf16> to vector<256x4xbf16>
    %c2_38 = arith.constant 2 : index
    %c1_39 = arith.constant 1 : index
    %c0_40 = arith.constant 0 : index
    %26 = vector.load %arg9[%c2_38, %c1_39, %c0_40] : memref<18x18x4xbf16, #tpu.memory_space<vmem>>, vector<16x16x4xbf16>
    %27 = vector.shape_cast %26 : vector<16x16x4xbf16> to vector<256x4xbf16>
    %28 = tpu.concatenate %23, %25, %27 in 1 : vector<256x4xbf16>, vector<256x4xbf16>, vector<256x4xbf16> -> vector<256x12xbf16>
    %c1_41 = arith.constant 1 : index
    %c0_42 = arith.constant 0 : index
    %c0_43 = arith.constant 0 : index
    %29 = vector.load %arg2[%c1_41, %c0_42, %c0_43] : memref<3x12x4xbf16, #tpu.memory_space<vmem>>, vector<1x12x4xbf16>
    %30 = vector.shape_cast %29 : vector<1x12x4xbf16> to vector<12x4xbf16>
    %cst_44 = arith.constant dense<0.000000e+00> : vector<256x4xf32>
    %31 = tpu.matmul %28, %30, %cst_44 {dimension_numbers = #tpu.dot_dimension_numbers<[1], [0], [0], [1], [0, 0, 1, 1], [], []>} : vector<256x12xbf16>, vector<12x4xbf16>, vector<256x4xf32> -> vector<256x4xf32>
    %32 = arith.addf %21, %31 : vector<256x4xf32>
    %c0_45 = arith.constant 0 : index
    %c2_46 = arith.constant 2 : index
    %c0_47 = arith.constant 0 : index
    %33 = vector.load %arg9[%c0_45, %c2_46, %c0_47] : memref<18x18x4xbf16, #tpu.memory_space<vmem>>, vector<16x16x4xbf16>
    %34 = vector.shape_cast %33 : vector<16x16x4xbf16> to vector<256x4xbf16>
    %c1_48 = arith.constant 1 : index
    %c2_49 = arith.constant 2 : index
    %c0_50 = arith.constant 0 : index
    %35 = vector.load %arg9[%c1_48, %c2_49, %c0_50] : memref<18x18x4xbf16, #tpu.memory_space<vmem>>, vector<16x16x4xbf16>
    %36 = vector.shape_cast %35 : vector<16x16x4xbf16> to vector<256x4xbf16>
    %c2_51 = arith.constant 2 : index
    %c2_52 = arith.constant 2 : index
    %c0_53 = arith.constant 0 : index
    %37 = vector.load %arg9[%c2_51, %c2_52, %c0_53] : memref<18x18x4xbf16, #tpu.memory_space<vmem>>, vector<16x16x4xbf16>
    %38 = vector.shape_cast %37 : vector<16x16x4xbf16> to vector<256x4xbf16>
    %39 = tpu.concatenate %34, %36, %38 in 1 : vector<256x4xbf16>, vector<256x4xbf16>, vector<256x4xbf16> -> vector<256x12xbf16>
    %c2_54 = arith.constant 2 : index
    %c0_55 = arith.constant 0 : index
    %c0_56 = arith.constant 0 : index
    %40 = vector.load %arg2[%c2_54, %c0_55, %c0_56] : memref<3x12x4xbf16, #tpu.memory_space<vmem>>, vector<1x12x4xbf16>
    %41 = vector.shape_cast %40 : vector<1x12x4xbf16> to vector<12x4xbf16>
    %cst_57 = arith.constant dense<0.000000e+00> : vector<256x4xf32>
    %42 = tpu.matmul %39, %41, %cst_57 {dimension_numbers = #tpu.dot_dimension_numbers<[1], [0], [0], [1], [0, 0, 1, 1], [], []>} : vector<256x12xbf16>, vector<12x4xbf16>, vector<256x4xf32> -> vector<256x4xf32>
    %43 = arith.addf %32, %42 : vector<256x4xf32>
    %cst_58 = arith.constant dense<0.000000e+00> : vector<4xf32>
    %44 = vector.multi_reduction <add>, %43, %cst_58 [0] : vector<256x4xf32> to vector<4xf32>
    %45 = vector.shape_cast %44 : vector<4xf32> to vector<1x4xf32>
    %cst_59 = arith.constant 3.906250e-03 : f32
    %46 = vector.broadcast %cst_59 : f32 to vector<1x4xf32>
    %47 = arith.mulf %45, %46 : vector<1x4xf32>
    %48 = arith.mulf %43, %43 : vector<256x4xf32>
    %cst_60 = arith.constant dense<0.000000e+00> : vector<4xf32>
    %49 = vector.multi_reduction <add>, %48, %cst_60 [0] : vector<256x4xf32> to vector<4xf32>
    %50 = vector.shape_cast %49 : vector<4xf32> to vector<1x4xf32>
    %cst_61 = arith.constant 3.906250e-03 : f32
    %51 = vector.broadcast %cst_61 : f32 to vector<1x4xf32>
    %52 = arith.mulf %50, %51 : vector<1x4xf32>
    %53 = arith.mulf %47, %47 : vector<1x4xf32>
    %54 = arith.subf %52, %53 : vector<1x4xf32>
    %cst_62 = arith.constant 9.99999974E-6 : f32
    %55 = vector.broadcast %cst_62 : f32 to vector<1x4xf32>
    %56 = arith.addf %54, %55 : vector<1x4xf32>
    %57 = math.rsqrt %56 : vector<1x4xf32>
    %c0_63 = arith.constant 0 : index
    %c0_64 = arith.constant 0 : index
    %58 = vector.load %arg3[%c0_63, %c0_64] : memref<1x4xf32, #tpu.memory_space<vmem>>, vector<1x4xf32>
    %59 = arith.mulf %57, %58 : vector<1x4xf32>
    %c0_65 = arith.constant 0 : index
    %c0_66 = arith.constant 0 : index
    %60 = vector.load %arg4[%c0_65, %c0_66] : memref<1x4xf32, #tpu.memory_space<vmem>>, vector<1x4xf32>
    %61 = arith.mulf %47, %59 : vector<1x4xf32>
    %62 = arith.subf %60, %61 : vector<1x4xf32>
    %63 = vector.broadcast %59 : vector<1x4xf32> to vector<256x4xf32>
    %64 = arith.mulf %43, %63 : vector<256x4xf32>
    %65 = vector.broadcast %62 : vector<1x4xf32> to vector<256x4xf32>
    %66 = arith.addf %64, %65 : vector<256x4xf32>
    %cst_67 = arith.constant 0.000000e+00 : f32
    %67 = vector.broadcast %cst_67 : f32 to vector<256x4xf32>
    %68 = arith.maximumf %66, %67 : vector<256x4xf32>
    %69 = vector.shape_cast %68 : vector<256x4xf32> to vector<16x16x4xf32>
    %70 = arith.truncf %69 : vector<16x16x4xf32> to vector<16x16x4xbf16>
    %c1_68 = arith.constant 1 : index
    %c1_69 = arith.constant 1 : index
    %c0_70 = arith.constant 0 : index
    %71 = vector.load %arg9[%c1_68, %c1_69, %c0_70] : memref<18x18x4xbf16, #tpu.memory_space<vmem>>, vector<16x16x4xbf16>
    tpu.vector_store %arg9[%c1_68, %c1_69, %c0_70], %70 {strides = array<i32>} : memref<18x18x4xbf16, #tpu.memory_space<vmem>>, vector<16x16x4xbf16>,
    %72 = vector.extract_strided_slice %70 {offsets = [1, 0, 0], sizes = [1, 16, 4], strides = [1, 1, 1]} : vector<16x16x4xbf16> to vector<1x16x4xbf16>
    %c0_71 = arith.constant 0 : index
    %c1_72 = arith.constant 1 : index
    %c0_73 = arith.constant 0 : index
    %73 = vector.load %arg9[%c0_71, %c1_72, %c0_73] : memref<18x18x4xbf16, #tpu.memory_space<vmem>>, vector<1x16x4xbf16>
    tpu.vector_store %arg9[%c0_71, %c1_72, %c0_73], %72 {strides = array<i32>} : memref<18x18x4xbf16, #tpu.memory_space<vmem>>, vector<1x16x4xbf16>,
    %74 = vector.extract_strided_slice %70 {offsets = [14, 0, 0], sizes = [1, 16, 4], strides = [1, 1, 1]} : vector<16x16x4xbf16> to vector<1x16x4xbf16>
    %c17_74 = arith.constant 17 : index
    %c1_75 = arith.constant 1 : index
    %c0_76 = arith.constant 0 : index
    %75 = vector.load %arg9[%c17_74, %c1_75, %c0_76] : memref<18x18x4xbf16, #tpu.memory_space<vmem>>, vector<1x16x4xbf16>
    tpu.vector_store %arg9[%c17_74, %c1_75, %c0_76], %74 {strides = array<i32>} : memref<18x18x4xbf16, #tpu.memory_space<vmem>>, vector<1x16x4xbf16>,
    %c0_77 = arith.constant 0 : index
    %c2_78 = arith.constant 2 : index
    %c0_79 = arith.constant 0 : index
    %76 = vector.load %arg9[%c0_77, %c2_78, %c0_79] : memref<18x18x4xbf16, #tpu.memory_space<vmem>>, vector<18x1x4xbf16>
    %c0_80 = arith.constant 0 : index
    %c0_81 = arith.constant 0 : index
    %c0_82 = arith.constant 0 : index
    %77 = vector.load %arg9[%c0_80, %c0_81, %c0_82] : memref<18x18x4xbf16, #tpu.memory_space<vmem>>, vector<18x1x4xbf16>
    tpu.vector_store %arg9[%c0_80, %c0_81, %c0_82], %76 {strides = array<i32>} : memref<18x18x4xbf16, #tpu.memory_space<vmem>>, vector<18x1x4xbf16>,
    %c0_83 = arith.constant 0 : index
    %c15_84 = arith.constant 15 : index
    %c0_85 = arith.constant 0 : index
    %78 = vector.load %arg9[%c0_83, %c15_84, %c0_85] : memref<18x18x4xbf16, #tpu.memory_space<vmem>>, vector<18x1x4xbf16>
    %c0_86 = arith.constant 0 : index
    %c17_87 = arith.constant 17 : index
    %c0_88 = arith.constant 0 : index
    %79 = vector.load %arg9[%c0_86, %c17_87, %c0_88] : memref<18x18x4xbf16, #tpu.memory_space<vmem>>, vector<18x1x4xbf16>
    tpu.vector_store %arg9[%c0_86, %c17_87, %c0_88], %78 {strides = array<i32>} : memref<18x18x4xbf16, #tpu.memory_space<vmem>>, vector<18x1x4xbf16>,
    %c0_89 = arith.constant 0 : index
    %c0_90 = arith.constant 0 : index
    %c0_91 = arith.constant 0 : index
    %80 = vector.load %arg9[%c0_89, %c0_90, %c0_91] : memref<18x18x4xbf16, #tpu.memory_space<vmem>>, vector<16x16x4xbf16>
    %81 = vector.shape_cast %80 : vector<16x16x4xbf16> to vector<256x4xbf16>
    %c1_92 = arith.constant 1 : index
    %c0_93 = arith.constant 0 : index
    %c0_94 = arith.constant 0 : index
    %82 = vector.load %arg9[%c1_92, %c0_93, %c0_94] : memref<18x18x4xbf16, #tpu.memory_space<vmem>>, vector<16x16x4xbf16>
    %83 = vector.shape_cast %82 : vector<16x16x4xbf16> to vector<256x4xbf16>
    %c2_95 = arith.constant 2 : index
    %c0_96 = arith.constant 0 : index
    %c0_97 = arith.constant 0 : index
    %84 = vector.load %arg9[%c2_95, %c0_96, %c0_97] : memref<18x18x4xbf16, #tpu.memory_space<vmem>>, vector<16x16x4xbf16>
    %85 = vector.shape_cast %84 : vector<16x16x4xbf16> to vector<256x4xbf16>
    %86 = tpu.concatenate %81, %83, %85 in 1 : vector<256x4xbf16>, vector<256x4xbf16>, vector<256x4xbf16> -> vector<256x12xbf16>
    %c0_98 = arith.constant 0 : index
    %c0_99 = arith.constant 0 : index
    %c0_100 = arith.constant 0 : index
    %87 = vector.load %arg5[%c0_98, %c0_99, %c0_100] : memref<3x12x4xbf16, #tpu.memory_space<vmem>>, vector<1x12x4xbf16>
    %88 = vector.shape_cast %87 : vector<1x12x4xbf16> to vector<12x4xbf16>
    %cst_101 = arith.constant dense<0.000000e+00> : vector<256x4xf32>
    %89 = tpu.matmul %86, %88, %cst_101 {dimension_numbers = #tpu.dot_dimension_numbers<[1], [0], [0], [1], [0, 0, 1, 1], [], []>} : vector<256x12xbf16>, vector<12x4xbf16>, vector<256x4xf32> -> vector<256x4xf32>
    %c0_102 = arith.constant 0 : index
    %c1_103 = arith.constant 1 : index
    %c0_104 = arith.constant 0 : index
    %90 = vector.load %arg9[%c0_102, %c1_103, %c0_104] : memref<18x18x4xbf16, #tpu.memory_space<vmem>>, vector<16x16x4xbf16>
    %91 = vector.shape_cast %90 : vector<16x16x4xbf16> to vector<256x4xbf16>
    %c1_105 = arith.constant 1 : index
    %c1_106 = arith.constant 1 : index
    %c0_107 = arith.constant 0 : index
    %92 = vector.load %arg9[%c1_105, %c1_106, %c0_107] : memref<18x18x4xbf16, #tpu.memory_space<vmem>>, vector<16x16x4xbf16>
    %93 = vector.shape_cast %92 : vector<16x16x4xbf16> to vector<256x4xbf16>
    %c2_108 = arith.constant 2 : index
    %c1_109 = arith.constant 1 : index
    %c0_110 = arith.constant 0 : index
    %94 = vector.load %arg9[%c2_108, %c1_109, %c0_110] : memref<18x18x4xbf16, #tpu.memory_space<vmem>>, vector<16x16x4xbf16>
    %95 = vector.shape_cast %94 : vector<16x16x4xbf16> to vector<256x4xbf16>
    %96 = tpu.concatenate %91, %93, %95 in 1 : vector<256x4xbf16>, vector<256x4xbf16>, vector<256x4xbf16> -> vector<256x12xbf16>
    %c1_111 = arith.constant 1 : index
    %c0_112 = arith.constant 0 : index
    %c0_113 = arith.constant 0 : index
    %97 = vector.load %arg5[%c1_111, %c0_112, %c0_113] : memref<3x12x4xbf16, #tpu.memory_space<vmem>>, vector<1x12x4xbf16>
    %98 = vector.shape_cast %97 : vector<1x12x4xbf16> to vector<12x4xbf16>
    %cst_114 = arith.constant dense<0.000000e+00> : vector<256x4xf32>
    %99 = tpu.matmul %96, %98, %cst_114 {dimension_numbers = #tpu.dot_dimension_numbers<[1], [0], [0], [1], [0, 0, 1, 1], [], []>} : vector<256x12xbf16>, vector<12x4xbf16>, vector<256x4xf32> -> vector<256x4xf32>
    %100 = arith.addf %89, %99 : vector<256x4xf32>
    %c0_115 = arith.constant 0 : index
    %c2_116 = arith.constant 2 : index
    %c0_117 = arith.constant 0 : index
    %101 = vector.load %arg9[%c0_115, %c2_116, %c0_117] : memref<18x18x4xbf16, #tpu.memory_space<vmem>>, vector<16x16x4xbf16>
    %102 = vector.shape_cast %101 : vector<16x16x4xbf16> to vector<256x4xbf16>
    %c1_118 = arith.constant 1 : index
    %c2_119 = arith.constant 2 : index
    %c0_120 = arith.constant 0 : index
    %103 = vector.load %arg9[%c1_118, %c2_119, %c0_120] : memref<18x18x4xbf16, #tpu.memory_space<vmem>>, vector<16x16x4xbf16>
    %104 = vector.shape_cast %103 : vector<16x16x4xbf16> to vector<256x4xbf16>
    %c2_121 = arith.constant 2 : index
    %c2_122 = arith.constant 2 : index
    %c0_123 = arith.constant 0 : index
    %105 = vector.load %arg9[%c2_121, %c2_122, %c0_123] : memref<18x18x4xbf16, #tpu.memory_space<vmem>>, vector<16x16x4xbf16>
    %106 = vector.shape_cast %105 : vector<16x16x4xbf16> to vector<256x4xbf16>
    %107 = tpu.concatenate %102, %104, %106 in 1 : vector<256x4xbf16>, vector<256x4xbf16>, vector<256x4xbf16> -> vector<256x12xbf16>
    %c2_124 = arith.constant 2 : index
    %c0_125 = arith.constant 0 : index
    %c0_126 = arith.constant 0 : index
    %108 = vector.load %arg5[%c2_124, %c0_125, %c0_126] : memref<3x12x4xbf16, #tpu.memory_space<vmem>>, vector<1x12x4xbf16>
    %109 = vector.shape_cast %108 : vector<1x12x4xbf16> to vector<12x4xbf16>
    %cst_127 = arith.constant dense<0.000000e+00> : vector<256x4xf32>
    %110 = tpu.matmul %107, %109, %cst_127 {dimension_numbers = #tpu.dot_dimension_numbers<[1], [0], [0], [1], [0, 0, 1, 1], [], []>} : vector<256x12xbf16>, vector<12x4xbf16>, vector<256x4xf32> -> vector<256x4xf32>
    %111 = arith.addf %100, %110 : vector<256x4xf32>
    %cst_128 = arith.constant dense<0.000000e+00> : vector<4xf32>
    %112 = vector.multi_reduction <add>, %111, %cst_128 [0] : vector<256x4xf32> to vector<4xf32>
    %113 = vector.shape_cast %112 : vector<4xf32> to vector<1x4xf32>
    %cst_129 = arith.constant 3.906250e-03 : f32
    %114 = vector.broadcast %cst_129 : f32 to vector<1x4xf32>
    %115 = arith.mulf %113, %114 : vector<1x4xf32>
    %116 = arith.mulf %111, %111 : vector<256x4xf32>
    %cst_130 = arith.constant dense<0.000000e+00> : vector<4xf32>
    %117 = vector.multi_reduction <add>, %116, %cst_130 [0] : vector<256x4xf32> to vector<4xf32>
    %118 = vector.shape_cast %117 : vector<4xf32> to vector<1x4xf32>
    %cst_131 = arith.constant 3.906250e-03 : f32
    %119 = vector.broadcast %cst_131 : f32 to vector<1x4xf32>
    %120 = arith.mulf %118, %119 : vector<1x4xf32>
    %121 = arith.mulf %115, %115 : vector<1x4xf32>
    %122 = arith.subf %120, %121 : vector<1x4xf32>
    %cst_132 = arith.constant 9.99999974E-6 : f32
    %123 = vector.broadcast %cst_132 : f32 to vector<1x4xf32>
    %124 = arith.addf %122, %123 : vector<1x4xf32>
    %125 = math.rsqrt %124 : vector<1x4xf32>
    %c0_133 = arith.constant 0 : index
    %c0_134 = arith.constant 0 : index
    %126 = vector.load %arg6[%c0_133, %c0_134] : memref<1x4xf32, #tpu.memory_space<vmem>>, vector<1x4xf32>
    %127 = arith.mulf %125, %126 : vector<1x4xf32>
    %c0_135 = arith.constant 0 : index
    %c0_136 = arith.constant 0 : index
    %128 = vector.load %arg7[%c0_135, %c0_136] : memref<1x4xf32, #tpu.memory_space<vmem>>, vector<1x4xf32>
    %129 = arith.mulf %115, %127 : vector<1x4xf32>
    %130 = arith.subf %128, %129 : vector<1x4xf32>
    %131 = vector.broadcast %127 : vector<1x4xf32> to vector<256x4xf32>
    %132 = arith.mulf %111, %131 : vector<256x4xf32>
    %133 = vector.broadcast %130 : vector<1x4xf32> to vector<256x4xf32>
    %134 = arith.addf %132, %133 : vector<256x4xf32>
    %135 = vector.shape_cast %134 : vector<256x4xf32> to vector<16x16x4xf32>
    %c0_137 = arith.constant 0 : index
    %c0_138 = arith.constant 0 : index
    %c0_139 = arith.constant 0 : index
    %c0_140 = arith.constant 0 : index
    %136 = vector.load %arg1[%c0_137, %c0_138, %c0_139, %c0_140] : memref<1x16x16x4xf32, #tpu.memory_space<vmem>>, vector<1x16x16x4xf32>
    %137 = vector.shape_cast %136 : vector<1x16x16x4xf32> to vector<16x16x4xf32>
    %138 = arith.addf %135, %137 : vector<16x16x4xf32>
    %c0_141 = arith.constant 0 : index
    %c0_142 = arith.constant 0 : index
    %c0_143 = arith.constant 0 : index
    %c0_144 = arith.constant 0 : index
    %139 = vector.load %arg8[%c0_141, %c0_142, %c0_143, %c0_144] : memref<1x16x16x4xf32, #tpu.memory_space<vmem>>, vector<1x16x16x4xf32>
    %140 = vector.shape_cast %139 : vector<1x16x16x4xf32> to vector<16x16x4xf32>
    %141 = vector.shape_cast %138 : vector<16x16x4xf32> to vector<1x16x16x4xf32>
    tpu.vector_store %arg8[%c0_141, %c0_142, %c0_143, %c0_144], %141 {strides = array<i32>} : memref<1x16x16x4xf32, #tpu.memory_space<vmem>>, vector<1x16x16x4xf32>,
    return
  }
  func.func @transform_0(%arg0: i32) -> (i32, i32, i32, i32) {
    %c0_i32 = arith.constant 0 : i32
    %c0_i32_0 = arith.constant 0 : i32
    %c0_i32_1 = arith.constant 0 : i32
    %c0_i32_2 = arith.constant 0 : i32
    return %arg0, %c0_i32, %c0_i32_0, %c0_i32_1 : i32, i32, i32, i32
  }
  func.func @transform_1(%arg0: i32) -> (i32, i32, i32) {
    %c0_i32 = arith.constant 0 : i32
    %c0_i32_0 = arith.constant 0 : i32
    %c0_i32_1 = arith.constant 0 : i32
    %c0_i32_2 = arith.constant 0 : i32
    return %c0_i32, %c0_i32_0, %c0_i32_1 : i32, i32, i32
  }
  func.func @transform_2(%arg0: i32) -> (i32, i32) {
    %c0_i32 = arith.constant 0 : i32
    %c0_i32_0 = arith.constant 0 : i32
    %c0_i32_1 = arith.constant 0 : i32
    return %c0_i32, %c0_i32_0 : i32, i32
  }
  func.func @transform_3(%arg0: i32) -> (i32, i32) {
    %c0_i32 = arith.constant 0 : i32
    %c0_i32_0 = arith.constant 0 : i32
    %c0_i32_1 = arith.constant 0 : i32
    return %c0_i32, %c0_i32_0 : i32, i32
  }
  func.func @transform_4(%arg0: i32) -> (i32, i32, i32) {
    %c0_i32 = arith.constant 0 : i32
    %c0_i32_0 = arith.constant 0 : i32
    %c0_i32_1 = arith.constant 0 : i32
    %c0_i32_2 = arith.constant 0 : i32
    return %c0_i32, %c0_i32_0, %c0_i32_1 : i32, i32, i32
  }
  func.func @transform_5(%arg0: i32) -> (i32, i32) {
    %c0_i32 = arith.constant 0 : i32
    %c0_i32_0 = arith.constant 0 : i32
    %c0_i32_1 = arith.constant 0 : i32
    return %c0_i32, %c0_i32_0 : i32, i32
  }
  func.func @transform_6(%arg0: i32) -> (i32, i32) {
    %c0_i32 = arith.constant 0 : i32
    %c0_i32_0 = arith.constant 0 : i32
    %c0_i32_1 = arith.constant 0 : i32
    return %c0_i32, %c0_i32_0 : i32, i32
  }
  func.func @transform_7(%arg0: i32) -> (i32, i32, i32, i32) {
    %c0_i32 = arith.constant 0 : i32
    %c0_i32_0 = arith.constant 0 : i32
    %c0_i32_1 = arith.constant 0 : i32
    %c0_i32_2 = arith.constant 0 : i32
    return %arg0, %c0_i32, %c0_i32_0, %c0_i32_1 : i32, i32, i32, i32
  }
}

</mosaic_0001>

<llo_original>
// kernel: tpu_custom_call.1
$region0: #{tpu_custom_call.1}
  #allocation0 [shape = 'u32[]', space=smem, size = 0x4, offset = 0x4, fixed_abs, tag = 'smem constant byte address 0x4 - core index']
  #allocation1 [shape = 'u32[72,128]{1,0:T(1,128)}', space=vmem, size = 0x9000, scoped, tag = 'internal scratch']
  #allocation2 [shape = 'bf16[18,18,4]{2,1,0:T(8,128)(2,1)}', space=vmem, size = 0x1b000, scoped, tag = 'scratch operand']
  %s0 = inlined_call_operand.vmem [shape: f32[2,16,16,4], index: 0, kind: input, shape index: {}]
  %s1 = inlined_call_operand.vmem [shape: bf16[3,12,4], index: 1, kind: input, shape index: {}]
  %s2 = inlined_call_operand.vmem [shape: f32[1,4], index: 2, kind: input, shape index: {}]
  %s3 = inlined_call_operand.vmem [shape: f32[1,4], index: 3, kind: input, shape index: {}]
  %s4 = inlined_call_operand.vmem [shape: bf16[3,12,4], index: 4, kind: input, shape index: {}]
  %s5 = inlined_call_operand.vmem [shape: f32[1,4], index: 5, kind: input, shape index: {}]
  %s6 = inlined_call_operand.vmem [shape: f32[1,4], index: 6, kind: input, shape index: {}]
  %s7 = inlined_call_operand.vmem [shape: f32[2,16,16,4], index: 7, kind: output, shape index: {}]
  %s8 = sld [smem:[#allocation0]]
  $region61: #{tpu_custom_call.1} parent=0
    _
  %s10 = ssub.s32 1, %s8
  %s11 = scalar_select 0, %s10, %s8
  loop: start=0, step=1, limit=4
  $region2: #{tpu_custom_call.1} parent=0 // loop_pre_header
    _
  $region3: #{tpu_custom_call.1} parent=0 // loop_header
    %s13 = sphi 0, %s17
    %p14 = scmp.ge.s32.totalorder %s13, 4
    %s23 = sphi 0, %s25
    %s26 = sphi 0, %s23
    %s27 = sphi 0, %s26
    %s43 = sphi 0, %s27
    %s47 = sphi 0, %s47
    %s49 = sphi 0, %s47
    %s50 = sphi 0, %s49
    %s64 = sphi 0, %s50
    %s68 = sphi 0, %s68
    %s70 = sphi 0, %s68
    %s71 = sphi 0, %s70
    %s85 = sphi 0, %s71
    %s89 = sphi 0, %s89
    %s91 = sphi 0, %s89
    %s92 = sphi 0, %s91
    %s106 = sphi 0, %s92
    %s110 = sphi 0, %s110
    %s112 = sphi 0, %s110
    %s113 = sphi 0, %s112
    %s127 = sphi 0, %s113
    %s131 = sphi 0, %s131
    %s133 = sphi 0, %s131
    %s134 = sphi 0, %s133
    %s148 = sphi 0, %s134
    %s152 = sphi 0, %s152
    %s154 = sphi 0, %s152
    %s155 = sphi 0, %s154
    %s169 = sphi 0, %s155
    %s175 = sphi 0, %s177
    %s178 = sphi 0, %s175
    %s179 = sphi 0, %s178
    %s195 = sphi 0, %s179
  $region4: #{tpu_custom_call.1} parent=0 // loop_header_branch
    %16 = sbr.rel (%p14) target = $region8
  $region5: #{tpu_custom_call.1} parent=0 // loop_body
    %s18 = ssub.s32 %s13, 1
    %s19 = ssub.s32 %s13, 2
    %s20 = sadd.s32 %s13, 1
    %s21 = ssub.s32 %s13, %s20
    %p22 = scmp.eq.s32.totalorder %s21, 0
    %s24 = sadd.s32 %s23, 1
    %s25 = scalar_select %p22, %s23, %s24
    %p28 = pneg %p22
    %p29 = scmp.eq.s32.totalorder %s13, 1
    %p30 = por %p28, %p29
    %p31 = scmp.ne.s32.totalorder %s23, %s26
    %p32 = scmp.eq.s32.totalorder %s13, 0
    %p33 = por %p31, %p32
    %p34 = scmp.ne.s32.totalorder %s23, %s26
    %p35 = scmp.eq.s32.totalorder %s18, 1
    %p36 = por %p34, %p35
    %p37 = scmp.ne.s32.totalorder %s26, %s27
    %p38 = scmp.eq.s32.totalorder %s18, 0
    %p39 = por %p37, %p38
    %p40 = scmp.ne.s32.totalorder %s26, %s27
    %p41 = scmp.eq.s32.totalorder %s19, 1
    %p42 = por %p40, %p41
    %p44 = scmp.ne.s32.totalorder %s27, %s43
    %p45 = scmp.eq.s32.totalorder %s19, 0
    %p46 = por %p44, %p45
    %s48 = sadd.s32 %s47, 1
    %p51 = scmp.eq.s32.totalorder %s13, 1
    %p52 = scmp.ne.s32.totalorder %s47, %s49
    %p53 = scmp.eq.s32.totalorder %s13, 0
    %p54 = por %p52, %p53
    %p55 = scmp.ne.s32.totalorder %s47, %s49
    %p56 = scmp.eq.s32.totalorder %s18, 1
    %p57 = por %p55, %p56
    %p58 = scmp.ne.s32.totalorder %s49, %s50
    %p59 = scmp.eq.s32.totalorder %s18, 0
    %p60 = por %p58, %p59
    %p61 = scmp.ne.s32.totalorder %s49, %s50
    %p62 = scmp.eq.s32.totalorder %s19, 1
    %p63 = por %p61, %p62
    %p65 = scmp.ne.s32.totalorder %s50, %s64
    %p66 = scmp.eq.s32.totalorder %s19, 0
    %p67 = por %p65, %p66
    %s69 = sadd.s32 %s68, 1
    %p72 = scmp.eq.s32.totalorder %s13, 1
    %p73 = scmp.ne.s32.totalorder %s68, %s70
    %p74 = scmp.eq.s32.totalorder %s13, 0
    %p75 = por %p73, %p74
    %p76 = scmp.ne.s32.totalorder %s68, %s70
    %p77 = scmp.eq.s32.totalorder %s18, 1
    %p78 = por %p76, %p77
    %p79 = scmp.ne.s32.totalorder %s70, %s71
    %p80 = scmp.eq.s32.totalorder %s18, 0
    %p81 = por %p79, %p80
    %p82 = scmp.ne.s32.totalorder %s70, %s71
    %p83 = scmp.eq.s32.totalorder %s19, 1
    %p84 = por %p82, %p83
    %p86 = scmp.ne.s32.totalorder %s71, %s85
    %p87 = scmp.eq.s32.totalorder %s19, 0
    %p88 = por %p86, %p87
    %s90 = sadd.s32 %s89, 1
    %p93 = scmp.eq.s32.totalorder %s13, 1
    %p94 = scmp.ne.s32.totalorder %s89, %s91
    %p95 = scmp.eq.s32.totalorder %s13, 0
    %p96 = por %p94, %p95
    %p97 = scmp.ne.s32.totalorder %s89, %s91
    %p98 = scmp.eq.s32.totalorder %s18, 1
    %p99 = por %p97, %p98
    %p100 = scmp.ne.s32.totalorder %s91, %s92
    %p101 = scmp.eq.s32.totalorder %s18, 0
    %p102 = por %p100, %p101
    %p103 = scmp.ne.s32.totalorder %s91, %s92
    %p104 = scmp.eq.s32.totalorder %s19, 1
    %p105 = por %p103, %p104
    %p107 = scmp.ne.s32.totalorder %s92, %s106
    %p108 = scmp.eq.s32.totalorder %s19, 0
    %p109 = por %p107, %p108
    %s111 = sadd.s32 %s110, 1
    %p114 = scmp.eq.s32.totalorder %s13, 1
    %p115 = scmp.ne.s32.totalorder %s110, %s112
    %p116 = scmp.eq.s32.totalorder %s13, 0
    %p117 = por %p115, %p116
    %p118 = scmp.ne.s32.totalorder %s110, %s112
    %p119 = scmp.eq.s32.totalorder %s18, 1
    %p120 = por %p118, %p119
    %p121 = scmp.ne.s32.totalorder %s112, %s113
    %p122 = scmp.eq.s32.totalorder %s18, 0
    %p123 = por %p121, %p122
    %p124 = scmp.ne.s32.totalorder %s112, %s113
    %p125 = scmp.eq.s32.totalorder %s19, 1
    %p126 = por %p124, %p125
    %p128 = scmp.ne.s32.totalorder %s113, %s127
    %p129 = scmp.eq.s32.totalorder %s19, 0
    %p130 = por %p128, %p129
    %s132 = sadd.s32 %s131, 1
    %p135 = scmp.eq.s32.totalorder %s13, 1
    %p136 = scmp.ne.s32.totalorder %s131, %s133
    %p137 = scmp.eq.s32.totalorder %s13, 0
    %p138 = por %p136, %p137
    %p139 = scmp.ne.s32.totalorder %s131, %s133
    %p140 = scmp.eq.s32.totalorder %s18, 1
    %p141 = por %p139, %p140
    %p142 = scmp.ne.s32.totalorder %s133, %s134
    %p143 = scmp.eq.s32.totalorder %s18, 0
    %p144 = por %p142, %p143
    %p145 = scmp.ne.s32.totalorder %s133, %s134
    %p146 = scmp.eq.s32.totalorder %s19, 1
    %p147 = por %p145, %p146
    %p149 = scmp.ne.s32.totalorder %s134, %s148
    %p150 = scmp.eq.s32.totalorder %s19, 0
    %p151 = por %p149, %p150
    %s153 = sadd.s32 %s152, 1
    %p156 = scmp.eq.s32.totalorder %s13, 1
    %p157 = scmp.ne.s32.totalorder %s152, %s154
    %p158 = scmp.eq.s32.totalorder %s13, 0
    %p159 = por %p157, %p158
    %p160 = scmp.ne.s32.totalorder %s152, %s154
    %p161 = scmp.eq.s32.totalorder %s18, 1
    %p162 = por %p160, %p161
    %p163 = scmp.ne.s32.totalorder %s154, %s155
    %p164 = scmp.eq.s32.totalorder %s18, 0
    %p165 = por %p163, %p164
    %p166 = scmp.ne.s32.totalorder %s154, %s155
    %p167 = scmp.eq.s32.totalorder %s19, 1
    %p168 = por %p166, %p167
    %p170 = scmp.ne.s32.totalorder %s155, %s169
    %p171 = scmp.eq.s32.totalorder %s19, 0
    %p172 = por %p170, %p171
    %s173 = ssub.s32 %s13, %s20
    %p174 = scmp.eq.s32.totalorder %s173, 0
    %s176 = sadd.s32 %s175, 1
    %s177 = scalar_select %p174, %s175, %s176
    %p180 = pneg %p174
    %p181 = scmp.eq.s32.totalorder %s13, 1
    %p182 = por %p180, %p181
    %p183 = scmp.ne.s32.totalorder %s175, %s178
    %p184 = scmp.eq.s32.totalorder %s13, 0
    %p185 = por %p183, %p184
    %p186 = scmp.ne.s32.totalorder %s175, %s178
    %p187 = scmp.eq.s32.totalorder %s18, 1
    %p188 = por %p186, %p187
    %p189 = scmp.ne.s32.totalorder %s178, %s179
    %p190 = scmp.eq.s32.totalorder %s18, 0
    %p191 = por %p189, %p190
    %p192 = scmp.ne.s32.totalorder %s178, %s179
    %p193 = scmp.eq.s32.totalorder %s19, 1
    %p194 = por %p192, %p193
    %p196 = scmp.ne.s32.totalorder %s179, %s195
    %p197 = scmp.eq.s32.totalorder %s19, 0
    %p198 = por %p196, %p197
    %p199 = scmp.le.s32.totalorder 1, %s13
    %p200 = scmp.lt.s32.totalorder %s13, 3
    %p201 = pnand %p199, %p200
    %p202 = pneg %p201
    // Predicated region
    $region9: #{tpu_custom_call.1} parent=5 // pred_check
      _
    $region10: #{tpu_custom_call.1} parent=5 // pred_check_branch
      %204 = sbr.rel (%p201) target = $region12
    $region11: #{tpu_custom_call.1} parent=5 // pred_region
      %s205 = ssub.s32 %s13, 1
      // Predicated region
      $region13: #{tpu_custom_call.1} parent=11 // pred_check
        %p206 = pneg %p60
      $region14: #{tpu_custom_call.1} parent=11 // pred_check_branch
        %208 = sbr.rel (%p206) target = $region16
      $region15: #{tpu_custom_call.1} parent=11 // pred_region
        _
      $region16: #{tpu_custom_call.1} parent=11 // pred_fallthru
        _
      // Predicated region
      $region17: #{tpu_custom_call.1} parent=11 // pred_check
        %p209 = pneg %p81
      $region18: #{tpu_custom_call.1} parent=11 // pred_check_branch
        %211 = sbr.rel (%p209) target = $region20
      $region19: #{tpu_custom_call.1} parent=11 // pred_region
        _
      $region20: #{tpu_custom_call.1} parent=11 // pred_fallthru
        _
      // Predicated region
      $region21: #{tpu_custom_call.1} parent=11 // pred_check
        %p212 = pneg %p102
      $region22: #{tpu_custom_call.1} parent=11 // pred_check_branch
        %214 = sbr.rel (%p212) target = $region24
      $region23: #{tpu_custom_call.1} parent=11 // pred_region
        _
      $region24: #{tpu_custom_call.1} parent=11 // pred_fallthru
        _
      // Predicated region
      $region25: #{tpu_custom_call.1} parent=11 // pred_check
        %p215 = pneg %p123
      $region26: #{tpu_custom_call.1} parent=11 // pred_check_branch
        %217 = sbr.rel (%p215) target = $region28
      $region27: #{tpu_custom_call.1} parent=11 // pred_region
        _
      $region28: #{tpu_custom_call.1} parent=11 // pred_fallthru
        _
      // Predicated region
      $region29: #{tpu_custom_call.1} parent=11 // pred_check
        %p218 = pneg %p144
      $region30: #{tpu_custom_call.1} parent=11 // pred_check_branch
        %220 = sbr.rel (%p218) target = $region32
      $region31: #{tpu_custom_call.1} parent=11 // pred_region
        _
      $region32: #{tpu_custom_call.1} parent=11 // pred_fallthru
        _
      // Predicated region
      $region33: #{tpu_custom_call.1} parent=11 // pred_check
        %p221 = pneg %p165
      $region34: #{tpu_custom_call.1} parent=11 // pred_check_branch
        %223 = sbr.rel (%p221) target = $region36
      $region35: #{tpu_custom_call.1} parent=11 // pred_region
        _
      $region36: #{tpu_custom_call.1} parent=11 // pred_fallthru
        _
    $region12: #{tpu_custom_call.1} parent=5 // pred_fallthru
      _
    %p224 = scmp.lt.s32.totalorder %s13, 2
    // Predicated region
    $region37: #{tpu_custom_call.1} parent=5 // pred_check
      %p225 = pneg %p224
    $region38: #{tpu_custom_call.1} parent=5 // pred_check_branch
      %227 = sbr.rel (%p225) target = $region40
    $region39: #{tpu_custom_call.1} parent=5 // pred_region
      // Predicated region
      $region41: #{tpu_custom_call.1} parent=39 // pred_check
        %p228 = pneg %p33
      $region42: #{tpu_custom_call.1} parent=39 // pred_check_branch
        %230 = sbr.rel (%p228) target = $region44
      $region43: #{tpu_custom_call.1} parent=39 // pred_region
        %p231 = scmp.lt.s32.totalorder %s13, 1
        %s232 = scalar_select %p231, %s13, 1
        %s233 = smul.addr %s232, 32
        %s234 = smul.addr %s233, 8
        %s235 = scalar_lea.vmem %s0, %s234
      $region44: #{tpu_custom_call.1} parent=39 // pred_fallthru
        _
    $region40: #{tpu_custom_call.1} parent=5 // pred_fallthru
      _
    %p236 = scmp.le.s32.totalorder 1, %s13
    %p237 = scmp.lt.s32.totalorder %s13, 3
    %p238 = pnand %p236, %p237
    %p239 = pneg %p238
    // Predicated region
    $region45: #{tpu_custom_call.1} parent=5 // pred_check
      _
    $region46: #{tpu_custom_call.1} parent=5 // pred_check_branch
      %241 = sbr.rel (%p238) target = $region48
    $region47: #{tpu_custom_call.1} parent=5 // pred_region
      %s242 = ssub.s32 %s13, 1
      %p243 = scmp.lt.s32.totalorder %s18, 1
      %s244 = scalar_select %p243, %s18, 1
      %s245 = smul.addr %s244, 32
      %s246 = smul.addr %s245, 8
      %s247 = scalar_lea.vmem %s0, %s246
      %p248 = pneg %p39
      %p249 = pneg %p36
      %p250 = pneg %p60
      %p251 = pneg %p57
      %p252 = pneg %p81
      %p253 = pneg %p78
      %p254 = pneg %p102
      %p255 = pneg %p99
      %p256 = pneg %p123
      %p257 = pneg %p120
      %p258 = pneg %p144
      %p259 = pneg %p141
      %p260 = pneg %p165
      %p261 = pneg %p162
      %p262 = pneg %p191
      %p263 = pneg %p188
      %p264 = scmp.lt.s32.totalorder %s18, 1
      %s265 = scalar_select %p264, %s18, 1
      %s266 = smul.addr %s265, 32
      %s267 = smul.addr %s266, 8
      %s268 = scalar_lea.vmem %s7, %s267
      %p269 = scmp.lt.s32.totalorder %s18, 1
      %s270 = scalar_select %p269, %s18, 1
      %s271 = smul.addr %s270, 32
      %s272 = smul.addr %s271, 8
      %s273 = scalar_lea.vmem %s0, %s272
      %p274 = scmp.lt.s32.totalorder %s18, 1
      %s275 = scalar_select %p274, %s18, 1
      %s276 = smul.addr %s275, 32
      %s277 = smul.addr %s276, 8
      %s278 = scalar_lea.vmem %s7, %s277
      %v280 = vld [vmem:[%s273] sm:$0xff]
      %v281 = vld [vmem:[%s273 + $0x8] sm:$0xff]
      %v282 = vld [vmem:[%s273 + $0x10] sm:$0xff]
      %v283 = vld [vmem:[%s273 + $0x18] sm:$0xff]
      %v284 = vld [vmem:[%s273 + $0x20] sm:$0xff]
      %v285 = vld [vmem:[%s273 + $0x28] sm:$0xff]
      %v286 = vld [vmem:[%s273 + $0x30] sm:$0xff]
      %v287 = vld [vmem:[%s273 + $0x38] sm:$0xff]
      %v288 = vld [vmem:[%s273 + $0x40] sm:$0xff]
      %v289 = vld [vmem:[%s273 + $0x48] sm:$0xff]
      %v290 = vld [vmem:[%s273 + $0x50] sm:$0xff]
      %v291 = vld [vmem:[%s273 + $0x58] sm:$0xff]
      %v292 = vld [vmem:[%s273 + $0x60] sm:$0xff]
      %v293 = vld [vmem:[%s273 + $0x68] sm:$0xff]
      %v294 = vld [vmem:[%s273 + $0x70] sm:$0xff]
      %v295 = vld [vmem:[%s273 + $0x78] sm:$0xff]
      %v296 = vld [vmem:[%s273 + $0x80] sm:$0xff]
      %v297 = vld [vmem:[%s273 + $0x88] sm:$0xff]
      %v298 = vld [vmem:[%s273 + $0x90] sm:$0xff]
      %v299 = vld [vmem:[%s273 + $0x98] sm:$0xff]
      %v300 = vld [vmem:[%s273 + $0xa0] sm:$0xff]
      %v301 = vld [vmem:[%s273 + $0xa8] sm:$0xff]
      %v302 = vld [vmem:[%s273 + $0xb0] sm:$0xff]
      %v303 = vld [vmem:[%s273 + $0xb8] sm:$0xff]
      %v304 = vld [vmem:[%s273 + $0xc0] sm:$0xff]
      %v305 = vld [vmem:[%s273 + $0xc8] sm:$0xff]
      %v306 = vld [vmem:[%s273 + $0xd0] sm:$0xff]
      %v307 = vld [vmem:[%s273 + $0xd8] sm:$0xff]
      %v308 = vld [vmem:[%s273 + $0xe0] sm:$0xff]
      %v309 = vld [vmem:[%s273 + $0xe8] sm:$0xff]
      %v310 = vld [vmem:[%s273 + $0xf0] sm:$0xff]
      %v311 = vld [vmem:[%s273 + $0xf8] sm:$0xff]
      %v312 = vpack.c.bf16 %v280, %v280
      %v313 = vpack.c.bf16 %v281, %v281
      %v314 = vpack.c.bf16 %v282, %v282
      %v315 = vpack.c.bf16 %v283, %v283
      %v316 = vpack.c.bf16 %v284, %v284
      %v317 = vpack.c.bf16 %v285, %v285
      %v318 = vpack.c.bf16 %v286, %v286
      %v319 = vpack.c.bf16 %v287, %v287
      %v320 = vpack.c.bf16 %v288, %v288
      %v321 = vpack.c.bf16 %v289, %v289
      %v322 = vpack.c.bf16 %v290, %v290
      %v323 = vpack.c.bf16 %v291, %v291
      %v324 = vpack.c.bf16 %v292, %v292
      %v325 = vpack.c.bf16 %v293, %v293
      %v326 = vpack.c.bf16 %v294, %v294
      %v327 = vpack.c.bf16 %v295, %v295
      %v328 = vpack.c.bf16 %v296, %v296
      %v329 = vpack.c.bf16 %v297, %v297
      %v330 = vpack.c.bf16 %v298, %v298
      %v331 = vpack.c.bf16 %v299, %v299
      %v332 = vpack.c.bf16 %v300, %v300
      %v333 = vpack.c.bf16 %v301, %v301
      %v334 = vpack.c.bf16 %v302, %v302
      %v335 = vpack.c.bf16 %v303, %v303
      %v336 = vpack.c.bf16 %v304, %v304
      %v337 = vpack.c.bf16 %v305, %v305
      %v338 = vpack.c.bf16 %v306, %v306
      %v339 = vpack.c.bf16 %v307, %v307
      %v340 = vpack.c.bf16 %v308, %v308
      %v341 = vpack.c.bf16 %v309, %v309
      %v342 = vpack.c.bf16 %v310, %v310
      %v343 = vpack.c.bf16 %v311, %v311
      %vm344 = vsmask.f32 256
      %vm345 = vsmask.f32 4368
      %vm346 = vmor %vm344, %vm345
      %v348 = vshrl.u32 %v312, 16
      %v350 = vrot.slane %v348, 7
      %v351 = vshll.u32 %v312, 16
      %v353 = vor.u32 %v350, %v351
      %v354 = vrot.slane %v350, 4
      %v356 = vshrl.u32 %v313, 16
      %v358 = vrot.slane %v356, 7
      %v359 = vshll.u32 %v313, 16
      %v361 = vor.u32 %v358, %v359
      %v362 = vsel %vm346, %v354, %v361
      %v363 = vrot.slane %v358, 4
      %v365 = vshrl.u32 %v314, 16
      %v367 = vrot.slane %v365, 7
      %v368 = vshll.u32 %v314, 16
      %v370 = vor.u32 %v367, %v368
      %v371 = vrot.slane %v367, 4
      %v373 = vshrl.u32 %v315, 16
      %v375 = vrot.slane %v373, 7
      %v376 = vshll.u32 %v315, 16
      %v378 = vor.u32 %v375, %v376
      %v379 = vsel %vm346, %v371, %v378
      %v380 = vrot.slane %v375, 4
      %v382 = vshrl.u32 %v316, 16
      %v384 = vrot.slane %v382, 7
      %v385 = vshll.u32 %v316, 16
      %v387 = vor.u32 %v384, %v385
      %v388 = vrot.slane %v384, 4
      %v390 = vshrl.u32 %v317, 16
      %v392 = vrot.slane %v390, 7
      %v393 = vshll.u32 %v317, 16
      %v395 = vor.u32 %v392, %v393
      %v396 = vsel %vm346, %v388, %v395
      %v397 = vrot.slane %v392, 4
      %v399 = vshrl.u32 %v318, 16
      %v401 = vrot.slane %v399, 7
      %v402 = vshll.u32 %v318, 16
      %v404 = vor.u32 %v401, %v402
      %v405 = vrot.slane %v401, 4
      %v407 = vshrl.u32 %v319, 16
      %v409 = vrot.slane %v407, 7
      %v410 = vshll.u32 %v319, 16
      %v412 = vor.u32 %v409, %v410
      %v413 = vsel %vm346, %v405, %v412
      %v414 = vrot.slane %v409, 4
      %v416 = vshrl.u32 %v320, 16
      %v418 = vrot.slane %v416, 7
      %v419 = vshll.u32 %v320, 16
      %v421 = vor.u32 %v418, %v419
      %v422 = vrot.slane %v418, 4
      %v424 = vshrl.u32 %v321, 16
      %v426 = vrot.slane %v424, 7
      %v427 = vshll.u32 %v321, 16
      %v429 = vor.u32 %v426, %v427
      %v430 = vsel %vm346, %v422, %v429
      %v431 = vrot.slane %v426, 4
      %v433 = vshrl.u32 %v322, 16
      %v435 = vrot.slane %v433, 7
      %v436 = vshll.u32 %v322, 16
      %v438 = vor.u32 %v435, %v436
      %v439 = vrot.slane %v435, 4
      %v441 = vshrl.u32 %v323, 16
      %v443 = vrot.slane %v441, 7
      %v444 = vshll.u32 %v323, 16
      %v446 = vor.u32 %v443, %v444
      %v447 = vsel %vm346, %v439, %v446
      %v448 = vrot.slane %v443, 4
      %v450 = vshrl.u32 %v324, 16
      %v452 = vrot.slane %v450, 7
      %v453 = vshll.u32 %v324, 16
      %v455 = vor.u32 %v452, %v453
      %v456 = vrot.slane %v452, 4
      %v458 = vshrl.u32 %v325, 16
      %v460 = vrot.slane %v458, 7
      %v461 = vshll.u32 %v325, 16
      %v463 = vor.u32 %v460, %v461
      %v464 = vsel %vm346, %v456, %v463
      %v465 = vrot.slane %v460, 4
      %v467 = vshrl.u32 %v326, 16
      %v469 = vrot.slane %v467, 7
      %v470 = vshll.u32 %v326, 16
      %v472 = vor.u32 %v469, %v470
      %v473 = vrot.slane %v469, 4
      %v475 = vshrl.u32 %v327, 16
      %v477 = vrot.slane %v475, 7
      %v478 = vshll.u32 %v327, 16
      %v480 = vor.u32 %v477, %v478
      %v481 = vsel %vm346, %v473, %v480
      %v482 = vrot.slane %v477, 4
      %v484 = vshrl.u32 %v328, 16
      %v486 = vrot.slane %v484, 7
      %v487 = vshll.u32 %v328, 16
      %v489 = vor.u32 %v486, %v487
      %v490 = vrot.slane %v486, 4
      %v492 = vshrl.u32 %v329, 16
      %v494 = vrot.slane %v492, 7
      %v495 = vshll.u32 %v329, 16
      %v497 = vor.u32 %v494, %v495
      %v498 = vsel %vm346, %v490, %v497
      %v499 = vrot.slane %v494, 4
      %v501 = vshrl.u32 %v330, 16
      %v503 = vrot.slane %v501, 7
      %v504 = vshll.u32 %v330, 16
      %v506 = vor.u32 %v503, %v504
      %v507 = vrot.slane %v503, 4
      %v509 = vshrl.u32 %v331, 16
      %v511 = vrot.slane %v509, 7
      %v512 = vshll.u32 %v331, 16
      %v514 = vor.u32 %v511, %v512
      %v515 = vsel %vm346, %v507, %v514
      %v516 = vrot.slane %v511, 4
      %v518 = vshrl.u32 %v332, 16
      %v520 = vrot.slane %v518, 7
      %v521 = vshll.u32 %v332, 16
      %v523 = vor.u32 %v520, %v521
      %v524 = vrot.slane %v520, 4
      %v526 = vshrl.u32 %v333, 16
      %v528 = vrot.slane %v526, 7
      %v529 = vshll.u32 %v333, 16
      %v531 = vor.u32 %v528, %v529
      %v532 = vsel %vm346, %v524, %v531
      %v533 = vrot.slane %v528, 4
      %v535 = vshrl.u32 %v334, 16
      %v537 = vrot.slane %v535, 7
      %v538 = vshll.u32 %v334, 16
      %v540 = vor.u32 %v537, %v538
      %v541 = vrot.slane %v537, 4
      %v543 = vshrl.u32 %v335, 16
      %v545 = vrot.slane %v543, 7
      %v546 = vshll.u32 %v335, 16
      %v548 = vor.u32 %v545, %v546
      %v549 = vsel %vm346, %v541, %v548
      %v550 = vrot.slane %v545, 4
      %v552 = vshrl.u32 %v336, 16
      %v554 = vrot.slane %v552, 7
      %v555 = vshll.u32 %v336, 16
      %v557 = vor.u32 %v554, %v555
      %v558 = vrot.slane %v554, 4
      %v560 = vshrl.u32 %v337, 16
      %v562 = vrot.slane %v560, 7
      %v563 = vshll.u32 %v337, 16
      %v565 = vor.u32 %v562, %v563
      %v566 = vsel %vm346, %v558, %v565
      %v567 = vrot.slane %v562, 4
      %v569 = vshrl.u32 %v338, 16
      %v571 = vrot.slane %v569, 7
      %v572 = vshll.u32 %v338, 16
      %v574 = vor.u32 %v571, %v572
      %v575 = vrot.slane %v571, 4
      %v577 = vshrl.u32 %v339, 16
      %v579 = vrot.slane %v577, 7
      %v580 = vshll.u32 %v339, 16
      %v582 = vor.u32 %v579, %v580
      %v583 = vsel %vm346, %v575, %v582
      %v584 = vrot.slane %v579, 4
      %v586 = vshrl.u32 %v340, 16
      %v588 = vrot.slane %v586, 7
      %v589 = vshll.u32 %v340, 16
      %v591 = vor.u32 %v588, %v589
      %v592 = vrot.slane %v588, 4
      %v594 = vshrl.u32 %v341, 16
      %v596 = vrot.slane %v594, 7
      %v597 = vshll.u32 %v341, 16
      %v599 = vor.u32 %v596, %v597
      %v600 = vsel %vm346, %v592, %v599
      %v601 = vrot.slane %v596, 4
      %v603 = vshrl.u32 %v342, 16
      %v605 = vrot.slane %v603, 7
      %v606 = vshll.u32 %v342, 16
      %v608 = vor.u32 %v605, %v606
      %v609 = vrot.slane %v605, 4
      %v611 = vshrl.u32 %v343, 16
      %v613 = vrot.slane %v611, 7
      %v614 = vshll.u32 %v343, 16
      %v616 = vor.u32 %v613, %v614
      %v617 = vsel %vm346, %v609, %v616
      %v618 = vrot.slane %v613, 4
      %s667 = scalar_lea.vmem [#allocation2], 12
      %vm668 = vcmask 27648
      %vm669 = vsmask.f32 7938
      %vm670 = vmand %vm668, %vm669
      %v671 = vld [vmem:[%s667] sm:$0xf]
      %v672 = vsel %vm670, %v353, %v671
      %673 = vst [vmem:[%s667] sm:$0xf] %v672
      %vm674 = vcmask 27648
      %675 = vst.msk [vmem:[%s667 + $0x4] sm:$0xf] %vm674, %v362
      %vm676 = vcmask 24576
      %vm677 = vmand %vm676, %vm344
      %v678 = vld [vmem:[%s667 + $0x8] sm:$0x1]
      %v679 = vsel %vm677, %v363, %v678
      %680 = vst [vmem:[%s667 + $0x8] sm:$0x1] %v679
      %v681 = vld [vmem:[%s667 + $0xc] sm:$0xf]
      %v682 = vsel %vm670, %v370, %v681
      %683 = vst [vmem:[%s667 + $0xc] sm:$0xf] %v682
      %684 = vst.msk [vmem:[%s667 + $0x10] sm:$0xf] %vm674, %v379
      %v685 = vld [vmem:[%s667 + $0x14] sm:$0x1]
      %v686 = vsel %vm677, %v380, %v685
      %687 = vst [vmem:[%s667 + $0x14] sm:$0x1] %v686
      %v688 = vld [vmem:[%s667 + $0x18] sm:$0xf]
      %v689 = vsel %vm670, %v387, %v688
      %690 = vst [vmem:[%s667 + $0x18] sm:$0xf] %v689
      %691 = vst.msk [vmem:[%s667 + $0x1c] sm:$0xf] %vm674, %v396
      %v692 = vld [vmem:[%s667 + $0x20] sm:$0x1]
      %v693 = vsel %vm677, %v397, %v692
      %694 = vst [vmem:[%s667 + $0x20] sm:$0x1] %v693
      %v695 = vld [vmem:[%s667 + $0x24] sm:$0xf]
      %v696 = vsel %vm670, %v404, %v695
      %697 = vst [vmem:[%s667 + $0x24] sm:$0xf] %v696
      %698 = vst.msk [vmem:[%s667 + $0x28] sm:$0xf] %vm674, %v413
      %v699 = vld [vmem:[%s667 + $0x2c] sm:$0x1]
      %v700 = vsel %vm677, %v414, %v699
      %701 = vst [vmem:[%s667 + $0x2c] sm:$0x1] %v700
      %v702 = vld [vmem:[%s667 + $0x30] sm:$0xf]
      %v703 = vsel %vm670, %v421, %v702
      %704 = vst [vmem:[%s667 + $0x30] sm:$0xf] %v703
      %705 = vst.msk [vmem:[%s667 + $0x34] sm:$0xf] %vm674, %v430
      %v706 = vld [vmem:[%s667 + $0x38] sm:$0x1]
      %v707 = vsel %vm677, %v431, %v706
      %708 = vst [vmem:[%s667 + $0x38] sm:$0x1] %v707
      %v709 = vld [vmem:[%s667 + $0x3c] sm:$0xf]
      %v710 = vsel %vm670, %v438, %v709
      %711 = vst [vmem:[%s667 + $0x3c] sm:$0xf] %v710
      %712 = vst.msk [vmem:[%s667 + $0x40] sm:$0xf] %vm674, %v447
      %v713 = vld [vmem:[%s667 + $0x44] sm:$0x1]
      %v714 = vsel %vm677, %v448, %v713
      %715 = vst [vmem:[%s667 + $0x44] sm:$0x1] %v714
      %v716 = vld [vmem:[%s667 + $0x48] sm:$0xf]
      %v717 = vsel %vm670, %v455, %v716
      %718 = vst [vmem:[%s667 + $0x48] sm:$0xf] %v717
      %719 = vst.msk [vmem:[%s667 + $0x4c] sm:$0xf] %vm674, %v464
      %v720 = vld [vmem:[%s667 + $0x50] sm:$0x1]
      %v721 = vsel %vm677, %v465, %v720
      %722 = vst [vmem:[%s667 + $0x50] sm:$0x1] %v721
      %v723 = vld [vmem:[%s667 + $0x54] sm:$0xf]
      %v724 = vsel %vm670, %v472, %v723
      %725 = vst [vmem:[%s667 + $0x54] sm:$0xf] %v724
      %726 = vst.msk [vmem:[%s667 + $0x58] sm:$0xf] %vm674, %v481
      %v727 = vld [vmem:[%s667 + $0x5c] sm:$0x1]
      %v728 = vsel %vm677, %v482, %v727
      %729 = vst [vmem:[%s667 + $0x5c] sm:$0x1] %v728
      %v730 = vld [vmem:[%s667 + $0x60] sm:$0xf]
      %v731 = vsel %vm670, %v489, %v730
      %732 = vst [vmem:[%s667 + $0x60] sm:$0xf] %v731
      %733 = vst.msk [vmem:[%s667 + $0x64] sm:$0xf] %vm674, %v498
      %v734 = vld [vmem:[%s667 + $0x68] sm:$0x1]
      %v735 = vsel %vm677, %v499, %v734
      %736 = vst [vmem:[%s667 + $0x68] sm:$0x1] %v735
      %v737 = vld [vmem:[%s667 + $0x6c] sm:$0xf]
      %v738 = vsel %vm670, %v506, %v737
      %739 = vst [vmem:[%s667 + $0x6c] sm:$0xf] %v738
      %740 = vst.msk [vmem:[%s667 + $0x70] sm:$0xf] %vm674, %v515
      %v741 = vld [vmem:[%s667 + $0x74] sm:$0x1]
      %v742 = vsel %vm677, %v516, %v741
      %743 = vst [vmem:[%s667 + $0x74] sm:$0x1] %v742
      %v744 = vld [vmem:[%s667 + $0x78] sm:$0xf]
      %v745 = vsel %vm670, %v523, %v744
      %746 = vst [vmem:[%s667 + $0x78] sm:$0xf] %v745
      %747 = vst.msk [vmem:[%s667 + $0x7c] sm:$0xf] %vm674, %v532
      %v748 = vld [vmem:[%s667 + $0x80] sm:$0x1]
      %v749 = vsel %vm677, %v533, %v748
      %750 = vst [vmem:[%s667 + $0x80] sm:$0x1] %v749
      %v751 = vld [vmem:[%s667 + $0x84] sm:$0xf]
      %v752 = vsel %vm670, %v540, %v751
      %753 = vst [vmem:[%s667 + $0x84] sm:$0xf] %v752
      %754 = vst.msk [vmem:[%s667 + $0x88] sm:$0xf] %vm674, %v549
      %v755 = vld [vmem:[%s667 + $0x8c] sm:$0x1]
      %v756 = vsel %vm677, %v550, %v755
      %757 = vst [vmem:[%s667 + $0x8c] sm:$0x1] %v756
      %v758 = vld [vmem:[%s667 + $0x90] sm:$0xf]
      %v759 = vsel %vm670, %v557, %v758
      %760 = vst [vmem:[%s667 + $0x90] sm:$0xf] %v759
      %761 = vst.msk [vmem:[%s667 + $0x94] sm:$0xf] %vm674, %v566
      %v762 = vld [vmem:[%s667 + $0x98] sm:$0x1]
      %v763 = vsel %vm677, %v567, %v762
      %764 = vst [vmem:[%s667 + $0x98] sm:$0x1] %v763
      %v765 = vld [vmem:[%s667 + $0x9c] sm:$0xf]
      %v766 = vsel %vm670, %v574, %v765
      %767 = vst [vmem:[%s667 + $0x9c] sm:$0xf] %v766
      %768 = vst.msk [vmem:[%s667 + $0xa0] sm:$0xf] %vm674, %v583
      %v769 = vld [vmem:[%s667 + $0xa4] sm:$0x1]
      %v770 = vsel %vm677, %v584, %v769
      %771 = vst [vmem:[%s667 + $0xa4] sm:$0x1] %v770
      %v772 = vld [vmem:[%s667 + $0xa8] sm:$0xf]
      %v773 = vsel %vm670, %v591, %v772
      %774 = vst [vmem:[%s667 + $0xa8] sm:$0xf] %v773
      %775 = vst.msk [vmem:[%s667 + $0xac] sm:$0xf] %vm674, %v600
      %v776 = vld [vmem:[%s667 + $0xb0] sm:$0x1]
      %v777 = vsel %vm677, %v601, %v776
      %778 = vst [vmem:[%s667 + $0xb0] sm:$0x1] %v777
      %v779 = vld [vmem:[%s667 + $0xb4] sm:$0xf]
      %v780 = vsel %vm670, %v608, %v779
      %781 = vst [vmem:[%s667 + $0xb4] sm:$0xf] %v780
      %782 = vst.msk [vmem:[%s667 + $0xb8] sm:$0xf] %vm674, %v617
      %v783 = vld [vmem:[%s667 + $0xbc] sm:$0x1]
      %v784 = vsel %vm677, %v618, %v783
      %785 = vst [vmem:[%s667 + $0xbc] sm:$0x1] %v784
      %v786 = vld [vmem:[#allocation2] sm:$0xf]
      %v787 = vsel %vm670, %v370, %v786
      %788 = vst [vmem:[#allocation2] sm:$0xf] %v787
      %789 = vst.msk [vmem:[#allocation2 + $0x4] sm:$0xf] %vm674, %v379
      %v790 = vld [vmem:[#allocation2 + $0x8] sm:$0x1]
      %v791 = vsel %vm677, %v380, %v790
      %792 = vst [vmem:[#allocation2 + $0x8] sm:$0x1] %v791
      %s793 = scalar_lea.vmem [#allocation2], 204
      %v794 = vld [vmem:[%s793] sm:$0xf]
      %v795 = vsel %vm670, %v591, %v794
      %796 = vst [vmem:[%s793] sm:$0xf] %v795
      %797 = vst.msk [vmem:[%s793 + $0x4] sm:$0xf] %vm674, %v600
      %v798 = vld [vmem:[%s793 + $0x8] sm:$0x1]
      %v799 = vsel %vm677, %v601, %v798
      %800 = vst [vmem:[%s793 + $0x8] sm:$0x1] %v799
      %v801 = vld [vmem:[#allocation2] sm:$0x2]
      %v802 = vld [vmem:[#allocation2 + $0xc] sm:$0x2]
      %v803 = vld [vmem:[#allocation2 + $0x18] sm:$0x2]
      %v804 = vld [vmem:[#allocation2 + $0x24] sm:$0x2]
      %v805 = vld [vmem:[#allocation2 + $0x30] sm:$0x2]
      %v806 = vld [vmem:[#allocation2 + $0x3c] sm:$0x2]
      %v807 = vld [vmem:[#allocation2 + $0x48] sm:$0x2]
      %v808 = vld [vmem:[#allocation2 + $0x54] sm:$0x2]
      %v809 = vld [vmem:[#allocation2 + $0x60] sm:$0x2]
      %v810 = vld [vmem:[#allocation2 + $0x6c] sm:$0x2]
      %v811 = vld [vmem:[#allocation2 + $0x78] sm:$0x2]
      %v812 = vld [vmem:[#allocation2 + $0x84] sm:$0x2]
      %v813 = vld [vmem:[#allocation2 + $0x90] sm:$0x2]
      %v814 = vld [vmem:[#allocation2 + $0x9c] sm:$0x2]
      %v815 = vld [vmem:[#allocation2 + $0xa8] sm:$0x2]
      %v816 = vld [vmem:[#allocation2 + $0xb4] sm:$0x2]
      %v817 = vld [vmem:[#allocation2 + $0xc0] sm:$0x2]
      %v818 = vld [vmem:[#allocation2 + $0xcc] sm:$0x2]
      %v837 = vrot.slane %v801, 5
      %v838 = vrot.slane %v837, 4
      %v839 = vrot.slane %v802, 5
      %v840 = vrot.slane %v839, 4
      %v841 = vrot.slane %v803, 5
      %v842 = vrot.slane %v841, 4
      %v843 = vrot.slane %v804, 5
      %v844 = vrot.slane %v843, 4
      %v845 = vrot.slane %v805, 5
      %v846 = vrot.slane %v845, 4
      %v847 = vrot.slane %v806, 5
      %v848 = vrot.slane %v847, 4
      %v849 = vrot.slane %v807, 5
      %v850 = vrot.slane %v849, 4
      %v851 = vrot.slane %v808, 5
      %v852 = vrot.slane %v851, 4
      %v853 = vrot.slane %v809, 5
      %v854 = vrot.slane %v853, 4
      %v855 = vrot.slane %v810, 5
      %v856 = vrot.slane %v855, 4
      %v857 = vrot.slane %v811, 5
      %v858 = vrot.slane %v857, 4
      %v859 = vrot.slane %v812, 5
      %v860 = vrot.slane %v859, 4
      %v861 = vrot.slane %v813, 5
      %v862 = vrot.slane %v861, 4
      %v863 = vrot.slane %v814, 5
      %v864 = vrot.slane %v863, 4
      %v865 = vrot.slane %v815, 5
      %v866 = vrot.slane %v865, 4
      %v867 = vrot.slane %v816, 5
      %v868 = vrot.slane %v867, 4
      %v869 = vrot.slane %v817, 5
      %v870 = vrot.slane %v869, 4
      %v871 = vrot.slane %v818, 5
      %v872 = vrot.slane %v871, 4
      %v891 = vld [vmem:[#allocation2] sm:$0x1]
      %v892 = vsel %vm677, %v838, %v891
      %893 = vst [vmem:[#allocation2] sm:$0x1] %v892
      %v894 = vld [vmem:[#allocation2 + $0xc] sm:$0x1]
      %v895 = vsel %vm677, %v840, %v894
      %896 = vst [vmem:[#allocation2 + $0xc] sm:$0x1] %v895
      %v897 = vld [vmem:[#allocation2 + $0x18] sm:$0x1]
      %v898 = vsel %vm677, %v842, %v897
      %899 = vst [vmem:[#allocation2 + $0x18] sm:$0x1] %v898
      %v900 = vld [vmem:[#allocation2 + $0x24] sm:$0x1]
      %v901 = vsel %vm677, %v844, %v900
      %902 = vst [vmem:[#allocation2 + $0x24] sm:$0x1] %v901
      %v903 = vld [vmem:[#allocation2 + $0x30] sm:$0x1]
      %v904 = vsel %vm677, %v846, %v903
      %905 = vst [vmem:[#allocation2 + $0x30] sm:$0x1] %v904
      %v906 = vld [vmem:[#allocation2 + $0x3c] sm:$0x1]
      %v907 = vsel %vm677, %v848, %v906
      %908 = vst [vmem:[#allocation2 + $0x3c] sm:$0x1] %v907
      %v909 = vld [vmem:[#allocation2 + $0x48] sm:$0x1]
      %v910 = vsel %vm677, %v850, %v909
      %911 = vst [vmem:[#allocation2 + $0x48] sm:$0x1] %v910
      %v912 = vld [vmem:[#allocation2 + $0x54] sm:$0x1]
      %v913 = vsel %vm677, %v852, %v912
      %914 = vst [vmem:[#allocation2 + $0x54] sm:$0x1] %v913
      %v915 = vld [vmem:[#allocation2 + $0x60] sm:$0x1]
      %v916 = vsel %vm677, %v854, %v915
      %917 = vst [vmem:[#allocation2 + $0x60] sm:$0x1] %v916
      %v918 = vld [vmem:[#allocation2 + $0x6c] sm:$0x1]
      %v919 = vsel %vm677, %v856, %v918
      %920 = vst [vmem:[#allocation2 + $0x6c] sm:$0x1] %v919
      %v921 = vld [vmem:[#allocation2 + $0x78] sm:$0x1]
      %v922 = vsel %vm677, %v858, %v921
      %923 = vst [vmem:[#allocation2 + $0x78] sm:$0x1] %v922
      %v924 = vld [vmem:[#allocation2 + $0x84] sm:$0x1]
      %v925 = vsel %vm677, %v860, %v924
      %926 = vst [vmem:[#allocation2 + $0x84] sm:$0x1] %v925
      %v927 = vld [vmem:[#allocation2 + $0x90] sm:$0x1]
      %v928 = vsel %vm677, %v862, %v927
      %929 = vst [vmem:[#allocation2 + $0x90] sm:$0x1] %v928
      %v930 = vld [vmem:[#allocation2 + $0x9c] sm:$0x1]
      %v931 = vsel %vm677, %v864, %v930
      %932 = vst [vmem:[#allocation2 + $0x9c] sm:$0x1] %v931
      %v933 = vld [vmem:[#allocation2 + $0xa8] sm:$0x1]
      %v934 = vsel %vm677, %v866, %v933
      %935 = vst [vmem:[#allocation2 + $0xa8] sm:$0x1] %v934
      %v936 = vld [vmem:[#allocation2 + $0xb4] sm:$0x1]
      %v937 = vsel %vm677, %v868, %v936
      %938 = vst [vmem:[#allocation2 + $0xb4] sm:$0x1] %v937
      %v939 = vld [vmem:[#allocation2 + $0xc0] sm:$0x1]
      %v940 = vsel %vm677, %v870, %v939
      %941 = vst [vmem:[#allocation2 + $0xc0] sm:$0x1] %v940
      %v942 = vld [vmem:[#allocation2 + $0xcc] sm:$0x1]
      %v943 = vsel %vm677, %v872, %v942
      %944 = vst [vmem:[#allocation2 + $0xcc] sm:$0x1] %v943
      %v945 = vld [vmem:[#allocation2 + $0x4] sm:$0x8]
      %v946 = vld [vmem:[#allocation2 + $0x10] sm:$0x8]
      %v947 = vld [vmem:[#allocation2 + $0x1c] sm:$0x8]
      %v948 = vld [vmem:[#allocation2 + $0x28] sm:$0x8]
      %v949 = vld [vmem:[#allocation2 + $0x34] sm:$0x8]
      %v950 = vld [vmem:[#allocation2 + $0x40] sm:$0x8]
      %v951 = vld [vmem:[#allocation2 + $0x4c] sm:$0x8]
      %v952 = vld [vmem:[#allocation2 + $0x58] sm:$0x8]
      %v953 = vld [vmem:[#allocation2 + $0x64] sm:$0x8]
      %v954 = vld [vmem:[#allocation2 + $0x70] sm:$0x8]
      %v955 = vld [vmem:[#allocation2 + $0x7c] sm:$0x8]
      %v956 = vld [vmem:[#allocation2 + $0x88] sm:$0x8]
      %v957 = vld [vmem:[#allocation2 + $0x94] sm:$0x8]
      %v958 = vld [vmem:[#allocation2 + $0xa0] sm:$0x8]
      %v959 = vld [vmem:[#allocation2 + $0xac] sm:$0x8]
      %v960 = vld [vmem:[#allocation2 + $0xb8] sm:$0x8]
      %v961 = vld [vmem:[#allocation2 + $0xc4] sm:$0x8]
      %v962 = vld [vmem:[#allocation2 + $0xd0] sm:$0x8]
      %v981 = vrot.slane %v945, 7
      %v982 = vrot.slane %v981, 4
      %v983 = vrot.slane %v946, 7
      %v984 = vrot.slane %v983, 4
      %v985 = vrot.slane %v947, 7
      %v986 = vrot.slane %v985, 4
      %v987 = vrot.slane %v948, 7
      %v988 = vrot.slane %v987, 4
      %v989 = vrot.slane %v949, 7
      %v990 = vrot.slane %v989, 4
      %v991 = vrot.slane %v950, 7
      %v992 = vrot.slane %v991, 4
      %v993 = vrot.slane %v951, 7
      %v994 = vrot.slane %v993, 4
      %v995 = vrot.slane %v952, 7
      %v996 = vrot.slane %v995, 4
      %v997 = vrot.slane %v953, 7
      %v998 = vrot.slane %v997, 4
      %v999 = vrot.slane %v954, 7
      %v1000 = vrot.slane %v999, 4
      %v1001 = vrot.slane %v955, 7
      %v1002 = vrot.slane %v1001, 4
      %v1003 = vrot.slane %v956, 7
      %v1004 = vrot.slane %v1003, 4
      %v1005 = vrot.slane %v957, 7
      %v1006 = vrot.slane %v1005, 4
      %v1007 = vrot.slane %v958, 7
      %v1008 = vrot.slane %v1007, 4
      %v1009 = vrot.slane %v959, 7
      %v1010 = vrot.slane %v1009, 4
      %v1011 = vrot.slane %v960, 7
      %v1012 = vrot.slane %v1011, 4
      %v1013 = vrot.slane %v961, 7
      %v1014 = vrot.slane %v1013, 4
      %v1015 = vrot.slane %v962, 7
      %v1016 = vrot.slane %v1015, 4
      %vm1035 = vmand %vm676, %vm669
      %v1036 = vld [vmem:[#allocation2 + $0x8] sm:$0x1]
      %v1037 = vsel %vm1035, %v982, %v1036
      %1038 = vst [vmem:[#allocation2 + $0x8] sm:$0x1] %v1037
      %v1039 = vld [vmem:[#allocation2 + $0x14] sm:$0x1]
      %v1040 = vsel %vm1035, %v984, %v1039
      %1041 = vst [vmem:[#allocation2 + $0x14] sm:$0x1] %v1040
      %v1042 = vld [vmem:[#allocation2 + $0x20] sm:$0x1]
      %v1043 = vsel %vm1035, %v986, %v1042
      %1044 = vst [vmem:[#allocation2 + $0x20] sm:$0x1] %v1043
      %v1045 = vld [vmem:[#allocation2 + $0x2c] sm:$0x1]
      %v1046 = vsel %vm1035, %v988, %v1045
      %1047 = vst [vmem:[#allocation2 + $0x2c] sm:$0x1] %v1046
      %v1048 = vld [vmem:[#allocation2 + $0x38] sm:$0x1]
      %v1049 = vsel %vm1035, %v990, %v1048
      %1050 = vst [vmem:[#allocation2 + $0x38] sm:$0x1] %v1049
      %v1051 = vld [vmem:[#allocation2 + $0x44] sm:$0x1]
      %v1052 = vsel %vm1035, %v992, %v1051
      %1053 = vst [vmem:[#allocation2 + $0x44] sm:$0x1] %v1052
      %v1054 = vld [vmem:[#allocation2 + $0x50] sm:$0x1]
      %v1055 = vsel %vm1035, %v994, %v1054
      %1056 = vst [vmem:[#allocation2 + $0x50] sm:$0x1] %v1055
      %v1057 = vld [vmem:[#allocation2 + $0x5c] sm:$0x1]
      %v1058 = vsel %vm1035, %v996, %v1057
      %1059 = vst [vmem:[#allocation2 + $0x5c] sm:$0x1] %v1058
      %v1060 = vld [vmem:[#allocation2 + $0x68] sm:$0x1]
      %v1061 = vsel %vm1035, %v998, %v1060
      %1062 = vst [vmem:[#allocation2 + $0x68] sm:$0x1] %v1061
      %v1063 = vld [vmem:[#allocation2 + $0x74] sm:$0x1]
      %v1064 = vsel %vm1035, %v1000, %v1063
      %1065 = vst [vmem:[#allocation2 + $0x74] sm:$0x1] %v1064
      %v1066 = vld [vmem:[#allocation2 + $0x80] sm:$0x1]
      %v1067 = vsel %vm1035, %v1002, %v1066
      %1068 = vst [vmem:[#allocation2 + $0x80] sm:$0x1] %v1067
      %v1069 = vld [vmem:[#allocation2 + $0x8c] sm:$0x1]
      %v1070 = vsel %vm1035, %v1004, %v1069
      %1071 = vst [vmem:[#allocation2 + $0x8c] sm:$0x1] %v1070
      %v1072 = vld [vmem:[#allocation2 + $0x98] sm:$0x1]
      %v1073 = vsel %vm1035, %v1006, %v1072
      %1074 = vst [vmem:[#allocation2 + $0x98] sm:$0x1] %v1073
      %v1075 = vld [vmem:[#allocation2 + $0xa4] sm:$0x1]
      %v1076 = vsel %vm1035, %v1008, %v1075
      %1077 = vst [vmem:[#allocation2 + $0xa4] sm:$0x1] %v1076
      %v1078 = vld [vmem:[#allocation2 + $0xb0] sm:$0x1]
      %v1079 = vsel %vm1035, %v1010, %v1078
      %1080 = vst [vmem:[#allocation2 + $0xb0] sm:$0x1] %v1079
      %v1081 = vld [vmem:[#allocation2 + $0xbc] sm:$0x1]
      %v1082 = vsel %vm1035, %v1012, %v1081
      %1083 = vst [vmem:[#allocation2 + $0xbc] sm:$0x1] %v1082
      %v1084 = vld [vmem:[#allocation2 + $0xc8] sm:$0x1]
      %v1085 = vsel %vm1035, %v1014, %v1084
      %1086 = vst [vmem:[#allocation2 + $0xc8] sm:$0x1] %v1085
      %v1087 = vld [vmem:[#allocation2 + $0xd4] sm:$0x1]
      %v1088 = vsel %vm1035, %v1016, %v1087
      %1089 = vst [vmem:[#allocation2 + $0xd4] sm:$0x1] %v1088
      %v1090 = vld [vmem:[#allocation2] sm:$0xf]
      %v1091 = vld [vmem:[#allocation2 + $0x4] sm:$0xf]
      %v1092 = vld [vmem:[#allocation2 + $0xc] sm:$0xf]
      %v1093 = vld [vmem:[#allocation2 + $0x10] sm:$0xf]
      %v1094 = vld [vmem:[#allocation2 + $0x18] sm:$0xf]
      %v1095 = vld [vmem:[#allocation2 + $0x1c] sm:$0xf]
      %v1096 = vld [vmem:[#allocation2 + $0x24] sm:$0xf]
      %v1097 = vld [vmem:[#allocation2 + $0x28] sm:$0xf]
      %v1098 = vld [vmem:[#allocation2 + $0x30] sm:$0xf]
      %v1099 = vld [vmem:[#allocation2 + $0x34] sm:$0xf]
      %v1100 = vld [vmem:[#allocation2 + $0x3c] sm:$0xf]
      %v1101 = vld [vmem:[#allocation2 + $0x40] sm:$0xf]
      %v1102 = vld [vmem:[#allocation2 + $0x48] sm:$0xf]
      %v1103 = vld [vmem:[#allocation2 + $0x4c] sm:$0xf]
      %v1104 = vld [vmem:[#allocation2 + $0x54] sm:$0xf]
      %v1105 = vld [vmem:[#allocation2 + $0x58] sm:$0xf]
      %v1106 = vld [vmem:[#allocation2 + $0x60] sm:$0xf]
      %v1107 = vld [vmem:[#allocation2 + $0x64] sm:$0xf]
      %v1108 = vld [vmem:[#allocation2 + $0x6c] sm:$0xf]
      %v1109 = vld [vmem:[#allocation2 + $0x70] sm:$0xf]
      %v1110 = vld [vmem:[#allocation2 + $0x78] sm:$0xf]
      %v1111 = vld [vmem:[#allocation2 + $0x7c] sm:$0xf]
      %v1112 = vld [vmem:[#allocation2 + $0x84] sm:$0xf]
      %v1113 = vld [vmem:[#allocation2 + $0x88] sm:$0xf]
      %v1114 = vld [vmem:[#allocation2 + $0x90] sm:$0xf]
      %v1115 = vld [vmem:[#allocation2 + $0x94] sm:$0xf]
      %v1116 = vld [vmem:[#allocation2 + $0x9c] sm:$0xf]
      %v1117 = vld [vmem:[#allocation2 + $0xa0] sm:$0xf]
      %v1118 = vld [vmem:[#allocation2 + $0xa8] sm:$0xf]
      %v1119 = vld [vmem:[#allocation2 + $0xac] sm:$0xf]
      %v1120 = vld [vmem:[#allocation2 + $0xb4] sm:$0xf]
      %v1121 = vld [vmem:[#allocation2 + $0xb8] sm:$0xf]
      %v1122 = vld [vmem:[%s667] sm:$0xf]
      %v1123 = vld [vmem:[%s667 + $0x4] sm:$0xf]
      %v1124 = vld [vmem:[%s667 + $0xc] sm:$0xf]
      %v1125 = vld [vmem:[%s667 + $0x10] sm:$0xf]
      %v1126 = vld [vmem:[%s667 + $0x18] sm:$0xf]
      %v1127 = vld [vmem:[%s667 + $0x1c] sm:$0xf]
      %v1128 = vld [vmem:[%s667 + $0x24] sm:$0xf]
      %v1129 = vld [vmem:[%s667 + $0x28] sm:$0xf]
      %v1130 = vld [vmem:[%s667 + $0x30] sm:$0xf]
      %v1131 = vld [vmem:[%s667 + $0x34] sm:$0xf]
      %v1132 = vld [vmem:[%s667 + $0x3c] sm:$0xf]
      %v1133 = vld [vmem:[%s667 + $0x40] sm:$0xf]
      %v1134 = vld [vmem:[%s667 + $0x48] sm:$0xf]
      %v1135 = vld [vmem:[%s667 + $0x4c] sm:$0xf]
      %v1136 = vld [vmem:[%s667 + $0x54] sm:$0xf]
      %v1137 = vld [vmem:[%s667 + $0x58] sm:$0xf]
      %v1138 = vld [vmem:[%s667 + $0x60] sm:$0xf]
      %v1139 = vld [vmem:[%s667 + $0x64] sm:$0xf]
      %v1140 = vld [vmem:[%s667 + $0x6c] sm:$0xf]
      %v1141 = vld [vmem:[%s667 + $0x70] sm:$0xf]
      %v1142 = vld [vmem:[%s667 + $0x78] sm:$0xf]
      %v1143 = vld [vmem:[%s667 + $0x7c] sm:$0xf]
      %v1144 = vld [vmem:[%s667 + $0x84] sm:$0xf]
      %v1145 = vld [vmem:[%s667 + $0x88] sm:$0xf]
      %v1146 = vld [vmem:[%s667 + $0x90] sm:$0xf]
      %v1147 = vld [vmem:[%s667 + $0x94] sm:$0xf]
      %v1148 = vld [vmem:[%s667 + $0x9c] sm:$0xf]
      %v1149 = vld [vmem:[%s667 + $0xa0] sm:$0xf]
      %v1150 = vld [vmem:[%s667 + $0xa8] sm:$0xf]
      %v1151 = vld [vmem:[%s667 + $0xac] sm:$0xf]
      %v1152 = vld [vmem:[%s667 + $0xb4] sm:$0xf]
      %v1153 = vld [vmem:[%s667 + $0xb8] sm:$0xf]
      %s1154 = scalar_lea.vmem [#allocation2], 24
      %v1155 = vld [vmem:[%s1154] sm:$0xf]
      %v1156 = vld [vmem:[%s1154 + $0x4] sm:$0xf]
      %v1157 = vld [vmem:[%s1154 + $0xc] sm:$0xf]
      %v1158 = vld [vmem:[%s1154 + $0x10] sm:$0xf]
      %v1159 = vld [vmem:[%s1154 + $0x18] sm:$0xf]
      %v1160 = vld [vmem:[%s1154 + $0x1c] sm:$0xf]
      %v1161 = vld [vmem:[%s1154 + $0x24] sm:$0xf]
      %v1162 = vld [vmem:[%s1154 + $0x28] sm:$0xf]
      %v1163 = vld [vmem:[%s1154 + $0x30] sm:$0xf]
      %v1164 = vld [vmem:[%s1154 + $0x34] sm:$0xf]
      %v1165 = vld [vmem:[%s1154 + $0x3c] sm:$0xf]
      %v1166 = vld [vmem:[%s1154 + $0x40] sm:$0xf]
      %v1167 = vld [vmem:[%s1154 + $0x48] sm:$0xf]
      %v1168 = vld [vmem:[%s1154 + $0x4c] sm:$0xf]
      %v1169 = vld [vmem:[%s1154 + $0x54] sm:$0xf]
      %v1170 = vld [vmem:[%s1154 + $0x58] sm:$0xf]
      %v1171 = vld [vmem:[%s1154 + $0x60] sm:$0xf]
      %v1172 = vld [vmem:[%s1154 + $0x64] sm:$0xf]
      %v1173 = vld [vmem:[%s1154 + $0x6c] sm:$0xf]
      %v1174 = vld [vmem:[%s1154 + $0x70] sm:$0xf]
      %v1175 = vld [vmem:[%s1154 + $0x78] sm:$0xf]
      %v1176 = vld [vmem:[%s1154 + $0x7c] sm:$0xf]
      %v1177 = vld [vmem:[%s1154 + $0x84] sm:$0xf]
      %v1178 = vld [vmem:[%s1154 + $0x88] sm:$0xf]
      %v1179 = vld [vmem:[%s1154 + $0x90] sm:$0xf]
      %v1180 = vld [vmem:[%s1154 + $0x94] sm:$0xf]
      %v1181 = vld [vmem:[%s1154 + $0x9c] sm:$0xf]
      %v1182 = vld [vmem:[%s1154 + $0xa0] sm:$0xf]
      %v1183 = vld [vmem:[%s1154 + $0xa8] sm:$0xf]
      %v1184 = vld [vmem:[%s1154 + $0xac] sm:$0xf]
      %v1185 = vld [vmem:[%s1154 + $0xb4] sm:$0xf]
      %v1186 = vld [vmem:[%s1154 + $0xb8] sm:$0xf]
      %v1219 = vunpack.c.l.b16 %v1090
      %v1220 = vunpack.c.l.b16 %v1091
      %v1221 = vunpack.c.l.b16 %v1092
      %v1222 = vunpack.c.l.b16 %v1093
      %v1223 = vunpack.c.l.b16 %v1094
      %v1224 = vunpack.c.l.b16 %v1095
      %v1225 = vunpack.c.l.b16 %v1096
      %v1226 = vunpack.c.l.b16 %v1097
      %v1227 = vunpack.c.l.b16 %v1098
      %v1228 = vunpack.c.l.b16 %v1099
      %v1229 = vunpack.c.l.b16 %v1100
      %v1230 = vunpack.c.l.b16 %v1101
      %v1231 = vunpack.c.l.b16 %v1102
      %v1232 = vunpack.c.l.b16 %v1103
      %v1233 = vunpack.c.l.b16 %v1104
      %v1234 = vunpack.c.l.b16 %v1105
      %v1235 = vunpack.c.l.b16 %v1106
      %v1236 = vunpack.c.l.b16 %v1107
      %v1237 = vunpack.c.l.b16 %v1108
      %v1238 = vunpack.c.l.b16 %v1109
      %v1239 = vunpack.c.l.b16 %v1110
      %v1240 = vunpack.c.l.b16 %v1111
      %v1241 = vunpack.c.l.b16 %v1112
      %v1242 = vunpack.c.l.b16 %v1113
      %v1243 = vunpack.c.l.b16 %v1114
      %v1244 = vunpack.c.l.b16 %v1115
      %v1245 = vunpack.c.l.b16 %v1116
      %v1246 = vunpack.c.l.b16 %v1117
      %v1247 = vunpack.c.l.b16 %v1118
      %v1248 = vunpack.c.l.b16 %v1119
      %v1249 = vunpack.c.l.b16 %v1120
      %v1250 = vunpack.c.l.b16 %v1121
      %v1251 = vpack.c.b16 %v1220, %v1219
      %v1252 = vpack.c.b16 %v1222, %v1221
      %v1253 = vpack.c.b16 %v1224, %v1223
      %v1254 = vpack.c.b16 %v1226, %v1225
      %v1255 = vpack.c.b16 %v1228, %v1227
      %v1256 = vpack.c.b16 %v1230, %v1229
      %v1257 = vpack.c.b16 %v1232, %v1231
      %v1258 = vpack.c.b16 %v1234, %v1233
      %v1259 = vpack.c.b16 %v1236, %v1235
      %v1260 = vpack.c.b16 %v1238, %v1237
      %v1261 = vpack.c.b16 %v1240, %v1239
      %v1262 = vpack.c.b16 %v1242, %v1241
      %v1263 = vpack.c.b16 %v1244, %v1243
      %v1264 = vpack.c.b16 %v1246, %v1245
      %v1265 = vpack.c.b16 %v1248, %v1247
      %v1266 = vpack.c.b16 %v1250, %v1249
      %v1299 = vunpack.c.l.b16 %v1122
      %v1300 = vunpack.c.l.b16 %v1123
      %v1301 = vunpack.c.l.b16 %v1124
      %v1302 = vunpack.c.l.b16 %v1125
      %v1303 = vunpack.c.l.b16 %v1126
      %v1304 = vunpack.c.l.b16 %v1127
      %v1305 = vunpack.c.l.b16 %v1128
      %v1306 = vunpack.c.l.b16 %v1129
      %v1307 = vunpack.c.l.b16 %v1130
      %v1308 = vunpack.c.l.b16 %v1131
      %v1309 = vunpack.c.l.b16 %v1132
      %v1310 = vunpack.c.l.b16 %v1133
      %v1311 = vunpack.c.l.b16 %v1134
      %v1312 = vunpack.c.l.b16 %v1135
      %v1313 = vunpack.c.l.b16 %v1136
      %v1314 = vunpack.c.l.b16 %v1137
      %v1315 = vunpack.c.l.b16 %v1138
      %v1316 = vunpack.c.l.b16 %v1139
      %v1317 = vunpack.c.l.b16 %v1140
      %v1318 = vunpack.c.l.b16 %v1141
      %v1319 = vunpack.c.l.b16 %v1142
      %v1320 = vunpack.c.l.b16 %v1143
      %v1321 = vunpack.c.l.b16 %v1144
      %v1322 = vunpack.c.l.b16 %v1145
      %v1323 = vunpack.c.l.b16 %v1146
      %v1324 = vunpack.c.l.b16 %v1147
      %v1325 = vunpack.c.l.b16 %v1148
      %v1326 = vunpack.c.l.b16 %v1149
      %v1327 = vunpack.c.l.b16 %v1150
      %v1328 = vunpack.c.l.b16 %v1151
      %v1329 = vunpack.c.l.b16 %v1152
      %v1330 = vunpack.c.l.b16 %v1153
      %v1331 = vpack.c.b16 %v1300, %v1299
      %v1332 = vpack.c.b16 %v1302, %v1301
      %v1333 = vpack.c.b16 %v1304, %v1303
      %v1334 = vpack.c.b16 %v1306, %v1305
      %v1335 = vpack.c.b16 %v1308, %v1307
      %v1336 = vpack.c.b16 %v1310, %v1309
      %v1337 = vpack.c.b16 %v1312, %v1311
      %v1338 = vpack.c.b16 %v1314, %v1313
      %v1339 = vpack.c.b16 %v1316, %v1315
      %v1340 = vpack.c.b16 %v1318, %v1317
      %v1341 = vpack.c.b16 %v1320, %v1319
      %v1342 = vpack.c.b16 %v1322, %v1321
      %v1343 = vpack.c.b16 %v1324, %v1323
      %v1344 = vpack.c.b16 %v1326, %v1325
      %v1345 = vpack.c.b16 %v1328, %v1327
      %v1346 = vpack.c.b16 %v1330, %v1329
      %1347 = vrot.lane.b32.xlu0 %v1331, 4
      %v1348 = vpop.permute.xlu0 %1347
      %1349 = vrot.lane.b32.xlu0 %v1332, 4
      %v1350 = vpop.permute.xlu0 %1349
      %1351 = vrot.lane.b32.xlu0 %v1333, 4
      %v1352 = vpop.permute.xlu0 %1351
      %1353 = vrot.lane.b32.xlu0 %v1334, 4
      %v1354 = vpop.permute.xlu0 %1353
      %1355 = vrot.lane.b32.xlu0 %v1335, 4
      %v1356 = vpop.permute.xlu0 %1355
      %1357 = vrot.lane.b32.xlu0 %v1336, 4
      %v1358 = vpop.permute.xlu0 %1357
      %1359 = vrot.lane.b32.xlu0 %v1337, 4
      %v1360 = vpop.permute.xlu0 %1359
      %1361 = vrot.lane.b32.xlu0 %v1338, 4
      %v1362 = vpop.permute.xlu0 %1361
      %1363 = vrot.lane.b32.xlu0 %v1339, 4
      %v1364 = vpop.permute.xlu0 %1363
      %1365 = vrot.lane.b32.xlu0 %v1340, 4
      %v1366 = vpop.permute.xlu0 %1365
      %1367 = vrot.lane.b32.xlu0 %v1341, 4
      %v1368 = vpop.permute.xlu0 %1367
      %1369 = vrot.lane.b32.xlu0 %v1342, 4
      %v1370 = vpop.permute.xlu0 %1369
      %1371 = vrot.lane.b32.xlu0 %v1343, 4
      %v1372 = vpop.permute.xlu0 %1371
      %1373 = vrot.lane.b32.xlu0 %v1344, 4
      %v1374 = vpop.permute.xlu0 %1373
      %1375 = vrot.lane.b32.xlu0 %v1345, 4
      %v1376 = vpop.permute.xlu0 %1375
      %1377 = vrot.lane.b32.xlu0 %v1346, 4
      %v1378 = vpop.permute.xlu0 %1377
      %v1411 = vunpack.c.l.b16 %v1155
      %v1412 = vunpack.c.l.b16 %v1156
      %v1413 = vunpack.c.l.b16 %v1157
      %v1414 = vunpack.c.l.b16 %v1158
      %v1415 = vunpack.c.l.b16 %v1159
      %v1416 = vunpack.c.l.b16 %v1160
      %v1417 = vunpack.c.l.b16 %v1161
      %v1418 = vunpack.c.l.b16 %v1162
      %v1419 = vunpack.c.l.b16 %v1163
      %v1420 = vunpack.c.l.b16 %v1164
      %v1421 = vunpack.c.l.b16 %v1165
      %v1422 = vunpack.c.l.b16 %v1166
      %v1423 = vunpack.c.l.b16 %v1167
      %v1424 = vunpack.c.l.b16 %v1168
      %v1425 = vunpack.c.l.b16 %v1169
      %v1426 = vunpack.c.l.b16 %v1170
      %v1427 = vunpack.c.l.b16 %v1171
      %v1428 = vunpack.c.l.b16 %v1172
      %v1429 = vunpack.c.l.b16 %v1173
      %v1430 = vunpack.c.l.b16 %v1174
      %v1431 = vunpack.c.l.b16 %v1175
      %v1432 = vunpack.c.l.b16 %v1176
      %v1433 = vunpack.c.l.b16 %v1177
      %v1434 = vunpack.c.l.b16 %v1178
      %v1435 = vunpack.c.l.b16 %v1179
      %v1436 = vunpack.c.l.b16 %v1180
      %v1437 = vunpack.c.l.b16 %v1181
      %v1438 = vunpack.c.l.b16 %v1182
      %v1439 = vunpack.c.l.b16 %v1183
      %v1440 = vunpack.c.l.b16 %v1184
      %v1441 = vunpack.c.l.b16 %v1185
      %v1442 = vunpack.c.l.b16 %v1186
      %v1443 = vpack.c.b16 %v1412, %v1411
      %v1444 = vpack.c.b16 %v1414, %v1413
      %v1445 = vpack.c.b16 %v1416, %v1415
      %v1446 = vpack.c.b16 %v1418, %v1417
      %v1447 = vpack.c.b16 %v1420, %v1419
      %v1448 = vpack.c.b16 %v1422, %v1421
      %v1449 = vpack.c.b16 %v1424, %v1423
      %v1450 = vpack.c.b16 %v1426, %v1425
      %v1451 = vpack.c.b16 %v1428, %v1427
      %v1452 = vpack.c.b16 %v1430, %v1429
      %v1453 = vpack.c.b16 %v1432, %v1431
      %v1454 = vpack.c.b16 %v1434, %v1433
      %v1455 = vpack.c.b16 %v1436, %v1435
      %v1456 = vpack.c.b16 %v1438, %v1437
      %v1457 = vpack.c.b16 %v1440, %v1439
      %v1458 = vpack.c.b16 %v1442, %v1441
      %1459 = vrot.lane.b32.xlu0 %v1443, 8
      %v1460 = vpop.permute.xlu0 %1459
      %1461 = vrot.lane.b32.xlu0 %v1444, 8
      %v1462 = vpop.permute.xlu0 %1461
      %1463 = vrot.lane.b32.xlu0 %v1445, 8
      %v1464 = vpop.permute.xlu0 %1463
      %1465 = vrot.lane.b32.xlu0 %v1446, 8
      %v1466 = vpop.permute.xlu0 %1465
      %1467 = vrot.lane.b32.xlu0 %v1447, 8
      %v1468 = vpop.permute.xlu0 %1467
      %1469 = vrot.lane.b32.xlu0 %v1448, 8
      %v1470 = vpop.permute.xlu0 %1469
      %1471 = vrot.lane.b32.xlu0 %v1449, 8
      %v1472 = vpop.permute.xlu0 %1471
      %1473 = vrot.lane.b32.xlu0 %v1450, 8
      %v1474 = vpop.permute.xlu0 %1473
      %1475 = vrot.lane.b32.xlu0 %v1451, 8
      %v1476 = vpop.permute.xlu0 %1475
      %1477 = vrot.lane.b32.xlu0 %v1452, 8
      %v1478 = vpop.permute.xlu0 %1477
      %1479 = vrot.lane.b32.xlu0 %v1453, 8
      %v1480 = vpop.permute.xlu0 %1479
      %1481 = vrot.lane.b32.xlu0 %v1454, 8
      %v1482 = vpop.permute.xlu0 %1481
      %1483 = vrot.lane.b32.xlu0 %v1455, 8
      %v1484 = vpop.permute.xlu0 %1483
      %1485 = vrot.lane.b32.xlu0 %v1456, 8
      %v1486 = vpop.permute.xlu0 %1485
      %1487 = vrot.lane.b32.xlu0 %v1457, 8
      %v1488 = vpop.permute.xlu0 %1487
      %1489 = vrot.lane.b32.xlu0 %v1458, 8
      %v1490 = vpop.permute.xlu0 %1489
      %vm1491 = vcmask 31744
      %v1494 = vsel %vm1491, %v1251, %v1348
      %v1497 = vsel %vm1491, %v1252, %v1350
      %v1500 = vsel %vm1491, %v1253, %v1352
      %v1503 = vsel %vm1491, %v1254, %v1354
      %v1506 = vsel %vm1491, %v1255, %v1356
      %v1509 = vsel %vm1491, %v1256, %v1358
      %v1512 = vsel %vm1491, %v1257, %v1360
      %v1515 = vsel %vm1491, %v1258, %v1362
      %v1518 = vsel %vm1491, %v1259, %v1364
      %v1521 = vsel %vm1491, %v1260, %v1366
      %v1524 = vsel %vm1491, %v1261, %v1368
      %v1527 = vsel %vm1491, %v1262, %v1370
      %v1530 = vsel %vm1491, %v1263, %v1372
      %v1533 = vsel %vm1491, %v1264, %v1374
      %v1536 = vsel %vm1491, %v1265, %v1376
      %v1539 = vsel %vm1491, %v1266, %v1378
      %vm1540 = vcmask 64512
      %v1542 = vsel %vm1540, %v1494, %v1460
      %v1544 = vsel %vm1540, %v1497, %v1462
      %v1546 = vsel %vm1540, %v1500, %v1464
      %v1548 = vsel %vm1540, %v1503, %v1466
      %v1550 = vsel %vm1540, %v1506, %v1468
      %v1552 = vsel %vm1540, %v1509, %v1470
      %v1554 = vsel %vm1540, %v1512, %v1472
      %v1556 = vsel %vm1540, %v1515, %v1474
      %v1558 = vsel %vm1540, %v1518, %v1476
      %v1560 = vsel %vm1540, %v1521, %v1478
      %v1562 = vsel %vm1540, %v1524, %v1480
      %v1564 = vsel %vm1540, %v1527, %v1482
      %v1566 = vsel %vm1540, %v1530, %v1484
      %v1568 = vsel %vm1540, %v1533, %v1486
      %v1570 = vsel %vm1540, %v1536, %v1488
      %v1572 = vsel %vm1540, %v1539, %v1490
      %v1573 = vld [vmem:[%s1] sm:$0xf]
      %v1574 = vld [vmem:[%s1 + $0x4] sm:$0x3]
      %v1575 = vld [vmem:[#allocation2 + $0x8] sm:$0x1]
      %v1576 = vld [vmem:[#allocation2 + $0x14] sm:$0x1]
      %v1577 = vld [vmem:[#allocation2 + $0x20] sm:$0x1]
      %v1578 = vld [vmem:[#allocation2 + $0x2c] sm:$0x1]
      %v1579 = vld [vmem:[#allocation2 + $0x38] sm:$0x1]
      %v1580 = vld [vmem:[#allocation2 + $0x44] sm:$0x1]
      %v1581 = vld [vmem:[#allocation2 + $0x50] sm:$0x1]
      %v1582 = vld [vmem:[#allocation2 + $0x5c] sm:$0x1]
      %v1583 = vld [vmem:[#allocation2 + $0x68] sm:$0x1]
      %v1584 = vld [vmem:[#allocation2 + $0x74] sm:$0x1]
      %v1585 = vld [vmem:[#allocation2 + $0x80] sm:$0x1]
      %v1586 = vld [vmem:[#allocation2 + $0x8c] sm:$0x1]
      %v1587 = vld [vmem:[#allocation2 + $0x98] sm:$0x1]
      %v1588 = vld [vmem:[#allocation2 + $0xa4] sm:$0x1]
      %v1589 = vld [vmem:[#allocation2 + $0xb0] sm:$0x1]
      %v1590 = vld [vmem:[#allocation2 + $0xbc] sm:$0x1]
      %vm1591 = vsmask.f32 3328
      %vm1592 = vsmask.f32 7440
      %vm1593 = vmor %vm1591, %vm1592
      %v1595 = vshrl.u32 %v1090, 16
      %v1597 = vrot.slane %v1595, 4
      %v1598 = vshll.u32 %v1090, 16
      %v1600 = vrot.slane %v1598, 5
      %v1601 = vor.u32 %v1597, %v1600
      %v1602 = vrot.slane %v1601, 4
      %v1604 = vshll.u32 %v1091, 16
      %v1606 = vrot.slane %v1604, 5
      %v1607 = vsel %vm1593, %v1602, %v1606
      %v1608 = vshrl.u32 %v1091, 16
      %v1610 = vrot.slane %v1608, 4
      %v1611 = vor.u32 %v1610, %v1606
      %v1612 = vrot.slane %v1611, 4
      %v1614 = vshll.u32 %v1575, 16
      %v1616 = vrot.slane %v1614, 5
      %v1617 = vsel %vm1593, %v1612, %v1616
      %v1619 = vshrl.u32 %v1092, 16
      %v1621 = vrot.slane %v1619, 4
      %v1622 = vshll.u32 %v1092, 16
      %v1624 = vrot.slane %v1622, 5
      %v1625 = vor.u32 %v1621, %v1624
      %v1626 = vrot.slane %v1625, 4
      %v1628 = vshll.u32 %v1093, 16
      %v1630 = vrot.slane %v1628, 5
      %v1631 = vsel %vm1593, %v1626, %v1630
      %v1632 = vshrl.u32 %v1093, 16
      %v1634 = vrot.slane %v1632, 4
      %v1635 = vor.u32 %v1634, %v1630
      %v1636 = vrot.slane %v1635, 4
      %v1638 = vshll.u32 %v1576, 16
      %v1640 = vrot.slane %v1638, 5
      %v1641 = vsel %vm1593, %v1636, %v1640
      %v1643 = vshrl.u32 %v1094, 16
      %v1645 = vrot.slane %v1643, 4
      %v1646 = vshll.u32 %v1094, 16
      %v1648 = vrot.slane %v1646, 5
      %v1649 = vor.u32 %v1645, %v1648
      %v1650 = vrot.slane %v1649, 4
      %v1652 = vshll.u32 %v1095, 16
      %v1654 = vrot.slane %v1652, 5
      %v1655 = vsel %vm1593, %v1650, %v1654
      %v1656 = vshrl.u32 %v1095, 16
      %v1658 = vrot.slane %v1656, 4
      %v1659 = vor.u32 %v1658, %v1654
      %v1660 = vrot.slane %v1659, 4
      %v1662 = vshll.u32 %v1577, 16
      %v1664 = vrot.slane %v1662, 5
      %v1665 = vsel %vm1593, %v1660, %v1664
      %v1667 = vshrl.u32 %v1096, 16
      %v1669 = vrot.slane %v1667, 4
      %v1670 = vshll.u32 %v1096, 16
      %v1672 = vrot.slane %v1670, 5
      %v1673 = vor.u32 %v1669, %v1672
      %v1674 = vrot.slane %v1673, 4
      %v1676 = vshll.u32 %v1097, 16
      %v1678 = vrot.slane %v1676, 5
      %v1679 = vsel %vm1593, %v1674, %v1678
      %v1680 = vshrl.u32 %v1097, 16
      %v1682 = vrot.slane %v1680, 4
      %v1683 = vor.u32 %v1682, %v1678
      %v1684 = vrot.slane %v1683, 4
      %v1686 = vshll.u32 %v1578, 16
      %v1688 = vrot.slane %v1686, 5
      %v1689 = vsel %vm1593, %v1684, %v1688
      %v1691 = vshrl.u32 %v1098, 16
      %v1693 = vrot.slane %v1691, 4
      %v1694 = vshll.u32 %v1098, 16
      %v1696 = vrot.slane %v1694, 5
      %v1697 = vor.u32 %v1693, %v1696
      %v1698 = vrot.slane %v1697, 4
      %v1700 = vshll.u32 %v1099, 16
      %v1702 = vrot.slane %v1700, 5
      %v1703 = vsel %vm1593, %v1698, %v1702
      %v1704 = vshrl.u32 %v1099, 16
      %v1706 = vrot.slane %v1704, 4
      %v1707 = vor.u32 %v1706, %v1702
      %v1708 = vrot.slane %v1707, 4
      %v1710 = vshll.u32 %v1579, 16
      %v1712 = vrot.slane %v1710, 5
      %v1713 = vsel %vm1593, %v1708, %v1712
      %v1715 = vshrl.u32 %v1100, 16
      %v1717 = vrot.slane %v1715, 4
      %v1718 = vshll.u32 %v1100, 16
      %v1720 = vrot.slane %v1718, 5
      %v1721 = vor.u32 %v1717, %v1720
      %v1722 = vrot.slane %v1721, 4
      %v1724 = vshll.u32 %v1101, 16
      %v1726 = vrot.slane %v1724, 5
      %v1727 = vsel %vm1593, %v1722, %v1726
      %v1728 = vshrl.u32 %v1101, 16
      %v1730 = vrot.slane %v1728, 4
      %v1731 = vor.u32 %v1730, %v1726
      %v1732 = vrot.slane %v1731, 4
      %v1734 = vshll.u32 %v1580, 16
      %v1736 = vrot.slane %v1734, 5
      %v1737 = vsel %vm1593, %v1732, %v1736
      %v1739 = vshrl.u32 %v1102, 16
      %v1741 = vrot.slane %v1739, 4
      %v1742 = vshll.u32 %v1102, 16
      %v1744 = vrot.slane %v1742, 5
      %v1745 = vor.u32 %v1741, %v1744
      %v1746 = vrot.slane %v1745, 4
      %v1748 = vshll.u32 %v1103, 16
      %v1750 = vrot.slane %v1748, 5
      %v1751 = vsel %vm1593, %v1746, %v1750
      %v1752 = vshrl.u32 %v1103, 16
      %v1754 = vrot.slane %v1752, 4
      %v1755 = vor.u32 %v1754, %v1750
      %v1756 = vrot.slane %v1755, 4
      %v1758 = vshll.u32 %v1581, 16
      %v1760 = vrot.slane %v1758, 5
      %v1761 = vsel %vm1593, %v1756, %v1760
      %v1763 = vshrl.u32 %v1104, 16
      %v1765 = vrot.slane %v1763, 4
      %v1766 = vshll.u32 %v1104, 16
      %v1768 = vrot.slane %v1766, 5
      %v1769 = vor.u32 %v1765, %v1768
      %v1770 = vrot.slane %v1769, 4
      %v1772 = vshll.u32 %v1105, 16
      %v1774 = vrot.slane %v1772, 5
      %v1775 = vsel %vm1593, %v1770, %v1774
      %v1776 = vshrl.u32 %v1105, 16
      %v1778 = vrot.slane %v1776, 4
      %v1779 = vor.u32 %v1778, %v1774
      %v1780 = vrot.slane %v1779, 4
      %v1782 = vshll.u32 %v1582, 16
      %v1784 = vrot.slane %v1782, 5
      %v1785 = vsel %vm1593, %v1780, %v1784
      %v1787 = vshrl.u32 %v1106, 16
      %v1789 = vrot.slane %v1787, 4
      %v1790 = vshll.u32 %v1106, 16
      %v1792 = vrot.slane %v1790, 5
      %v1793 = vor.u32 %v1789, %v1792
      %v1794 = vrot.slane %v1793, 4
      %v1796 = vshll.u32 %v1107, 16
      %v1798 = vrot.slane %v1796, 5
      %v1799 = vsel %vm1593, %v1794, %v1798
      %v1800 = vshrl.u32 %v1107, 16
      %v1802 = vrot.slane %v1800, 4
      %v1803 = vor.u32 %v1802, %v1798
      %v1804 = vrot.slane %v1803, 4
      %v1806 = vshll.u32 %v1583, 16
      %v1808 = vrot.slane %v1806, 5
      %v1809 = vsel %vm1593, %v1804, %v1808
      %v1811 = vshrl.u32 %v1108, 16
      %v1813 = vrot.slane %v1811, 4
      %v1814 = vshll.u32 %v1108, 16
      %v1816 = vrot.slane %v1814, 5
      %v1817 = vor.u32 %v1813, %v1816
      %v1818 = vrot.slane %v1817, 4
      %v1820 = vshll.u32 %v1109, 16
      %v1822 = vrot.slane %v1820, 5
      %v1823 = vsel %vm1593, %v1818, %v1822
      %v1824 = vshrl.u32 %v1109, 16
      %v1826 = vrot.slane %v1824, 4
      %v1827 = vor.u32 %v1826, %v1822
      %v1828 = vrot.slane %v1827, 4
      %v1830 = vshll.u32 %v1584, 16
      %v1832 = vrot.slane %v1830, 5
      %v1833 = vsel %vm1593, %v1828, %v1832
      %v1835 = vshrl.u32 %v1110, 16
      %v1837 = vrot.slane %v1835, 4
      %v1838 = vshll.u32 %v1110, 16
      %v1840 = vrot.slane %v1838, 5
      %v1841 = vor.u32 %v1837, %v1840
      %v1842 = vrot.slane %v1841, 4
      %v1844 = vshll.u32 %v1111, 16
      %v1846 = vrot.slane %v1844, 5
      %v1847 = vsel %vm1593, %v1842, %v1846
      %v1848 = vshrl.u32 %v1111, 16
      %v1850 = vrot.slane %v1848, 4
      %v1851 = vor.u32 %v1850, %v1846
      %v1852 = vrot.slane %v1851, 4
      %v1854 = vshll.u32 %v1585, 16
      %v1856 = vrot.slane %v1854, 5
      %v1857 = vsel %vm1593, %v1852, %v1856
      %v1859 = vshrl.u32 %v1112, 16
      %v1861 = vrot.slane %v1859, 4
      %v1862 = vshll.u32 %v1112, 16
      %v1864 = vrot.slane %v1862, 5
      %v1865 = vor.u32 %v1861, %v1864
      %v1866 = vrot.slane %v1865, 4
      %v1868 = vshll.u32 %v1113, 16
      %v1870 = vrot.slane %v1868, 5
      %v1871 = vsel %vm1593, %v1866, %v1870
      %v1872 = vshrl.u32 %v1113, 16
      %v1874 = vrot.slane %v1872, 4
      %v1875 = vor.u32 %v1874, %v1870
      %v1876 = vrot.slane %v1875, 4
      %v1878 = vshll.u32 %v1586, 16
      %v1880 = vrot.slane %v1878, 5
      %v1881 = vsel %vm1593, %v1876, %v1880
      %v1883 = vshrl.u32 %v1114, 16
      %v1885 = vrot.slane %v1883, 4
      %v1886 = vshll.u32 %v1114, 16
      %v1888 = vrot.slane %v1886, 5
      %v1889 = vor.u32 %v1885, %v1888
      %v1890 = vrot.slane %v1889, 4
      %v1892 = vshll.u32 %v1115, 16
      %v1894 = vrot.slane %v1892, 5
      %v1895 = vsel %vm1593, %v1890, %v1894
      %v1896 = vshrl.u32 %v1115, 16
      %v1898 = vrot.slane %v1896, 4
      %v1899 = vor.u32 %v1898, %v1894
      %v1900 = vrot.slane %v1899, 4
      %v1902 = vshll.u32 %v1587, 16
      %v1904 = vrot.slane %v1902, 5
      %v1905 = vsel %vm1593, %v1900, %v1904
      %v1907 = vshrl.u32 %v1116, 16
      %v1909 = vrot.slane %v1907, 4
      %v1910 = vshll.u32 %v1116, 16
      %v1912 = vrot.slane %v1910, 5
      %v1913 = vor.u32 %v1909, %v1912
      %v1914 = vrot.slane %v1913, 4
      %v1916 = vshll.u32 %v1117, 16
      %v1918 = vrot.slane %v1916, 5
      %v1919 = vsel %vm1593, %v1914, %v1918
      %v1920 = vshrl.u32 %v1117, 16
      %v1922 = vrot.slane %v1920, 4
      %v1923 = vor.u32 %v1922, %v1918
      %v1924 = vrot.slane %v1923, 4
      %v1926 = vshll.u32 %v1588, 16
      %v1928 = vrot.slane %v1926, 5
      %v1929 = vsel %vm1593, %v1924, %v1928
      %v1931 = vshrl.u32 %v1118, 16
      %v1933 = vrot.slane %v1931, 4
      %v1934 = vshll.u32 %v1118, 16
      %v1936 = vrot.slane %v1934, 5
      %v1937 = vor.u32 %v1933, %v1936
      %v1938 = vrot.slane %v1937, 4
      %v1940 = vshll.u32 %v1119, 16
      %v1942 = vrot.slane %v1940, 5
      %v1943 = vsel %vm1593, %v1938, %v1942
      %v1944 = vshrl.u32 %v1119, 16
      %v1946 = vrot.slane %v1944, 4
      %v1947 = vor.u32 %v1946, %v1942
      %v1948 = vrot.slane %v1947, 4
      %v1950 = vshll.u32 %v1589, 16
      %v1952 = vrot.slane %v1950, 5
      %v1953 = vsel %vm1593, %v1948, %v1952
      %v1955 = vshrl.u32 %v1120, 16
      %v1957 = vrot.slane %v1955, 4
      %v1958 = vshll.u32 %v1120, 16
      %v1960 = vrot.slane %v1958, 5
      %v1961 = vor.u32 %v1957, %v1960
      %v1962 = vrot.slane %v1961, 4
      %v1964 = vshll.u32 %v1121, 16
      %v1966 = vrot.slane %v1964, 5
      %v1967 = vsel %vm1593, %v1962, %v1966
      %v1968 = vshrl.u32 %v1121, 16
      %v1970 = vrot.slane %v1968, 4
      %v1971 = vor.u32 %v1970, %v1966
      %v1972 = vrot.slane %v1971, 4
      %v1974 = vshll.u32 %v1590, 16
      %v1976 = vrot.slane %v1974, 5
      %v1977 = vsel %vm1593, %v1972, %v1976
      %v1978 = vld [vmem:[%s667 + $0x8] sm:$0x1]
      %v1979 = vld [vmem:[%s667 + $0x14] sm:$0x1]
      %v1980 = vld [vmem:[%s667 + $0x20] sm:$0x1]
      %v1981 = vld [vmem:[%s667 + $0x2c] sm:$0x1]
      %v1982 = vld [vmem:[%s667 + $0x38] sm:$0x1]
      %v1983 = vld [vmem:[%s667 + $0x44] sm:$0x1]
      %v1984 = vld [vmem:[%s667 + $0x50] sm:$0x1]
      %v1985 = vld [vmem:[%s667 + $0x5c] sm:$0x1]
      %v1986 = vld [vmem:[%s667 + $0x68] sm:$0x1]
      %v1987 = vld [vmem:[%s667 + $0x74] sm:$0x1]
      %v1988 = vld [vmem:[%s667 + $0x80] sm:$0x1]
      %v1989 = vld [vmem:[%s667 + $0x8c] sm:$0x1]
      %v1990 = vld [vmem:[%s667 + $0x98] sm:$0x1]
      %v1991 = vld [vmem:[%s667 + $0xa4] sm:$0x1]
      %v1992 = vld [vmem:[%s667 + $0xb0] sm:$0x1]
      %v1993 = vld [vmem:[%s667 + $0xbc] sm:$0x1]
      %v1995 = vshrl.u32 %v1122, 16
      %v1997 = vrot.slane %v1995, 4
      %v1998 = vshll.u32 %v1122, 16
      %v2000 = vrot.slane %v1998, 5
      %v2001 = vor.u32 %v1997, %v2000
      %v2002 = vrot.slane %v2001, 4
      %v2004 = vshll.u32 %v1123, 16
      %v2006 = vrot.slane %v2004, 5
      %v2007 = vsel %vm1593, %v2002, %v2006
      %v2008 = vshrl.u32 %v1123, 16
      %v2010 = vrot.slane %v2008, 4
      %v2011 = vor.u32 %v2010, %v2006
      %v2012 = vrot.slane %v2011, 4
      %v2014 = vshll.u32 %v1978, 16
      %v2016 = vrot.slane %v2014, 5
      %v2017 = vsel %vm1593, %v2012, %v2016
      %v2019 = vshrl.u32 %v1124, 16
      %v2021 = vrot.slane %v2019, 4
      %v2022 = vshll.u32 %v1124, 16
      %v2024 = vrot.slane %v2022, 5
      %v2025 = vor.u32 %v2021, %v2024
      %v2026 = vrot.slane %v2025, 4
      %v2028 = vshll.u32 %v1125, 16
      %v2030 = vrot.slane %v2028, 5
      %v2031 = vsel %vm1593, %v2026, %v2030
      %v2032 = vshrl.u32 %v1125, 16
      %v2034 = vrot.slane %v2032, 4
      %v2035 = vor.u32 %v2034, %v2030
      %v2036 = vrot.slane %v2035, 4
      %v2038 = vshll.u32 %v1979, 16
      %v2040 = vrot.slane %v2038, 5
      %v2041 = vsel %vm1593, %v2036, %v2040
      %v2043 = vshrl.u32 %v1126, 16
      %v2045 = vrot.slane %v2043, 4
      %v2046 = vshll.u32 %v1126, 16
      %v2048 = vrot.slane %v2046, 5
      %v2049 = vor.u32 %v2045, %v2048
      %v2050 = vrot.slane %v2049, 4
      %v2052 = vshll.u32 %v1127, 16
      %v2054 = vrot.slane %v2052, 5
      %v2055 = vsel %vm1593, %v2050, %v2054
      %v2056 = vshrl.u32 %v1127, 16
      %v2058 = vrot.slane %v2056, 4
      %v2059 = vor.u32 %v2058, %v2054
      %v2060 = vrot.slane %v2059, 4
      %v2062 = vshll.u32 %v1980, 16
      %v2064 = vrot.slane %v2062, 5
      %v2065 = vsel %vm1593, %v2060, %v2064
      %v2067 = vshrl.u32 %v1128, 16
      %v2069 = vrot.slane %v2067, 4
      %v2070 = vshll.u32 %v1128, 16
      %v2072 = vrot.slane %v2070, 5
      %v2073 = vor.u32 %v2069, %v2072
      %v2074 = vrot.slane %v2073, 4
      %v2076 = vshll.u32 %v1129, 16
      %v2078 = vrot.slane %v2076, 5
      %v2079 = vsel %vm1593, %v2074, %v2078
      %v2080 = vshrl.u32 %v1129, 16
      %v2082 = vrot.slane %v2080, 4
      %v2083 = vor.u32 %v2082, %v2078
      %v2084 = vrot.slane %v2083, 4
      %v2086 = vshll.u32 %v1981, 16
      %v2088 = vrot.slane %v2086, 5
      %v2089 = vsel %vm1593, %v2084, %v2088
      %v2091 = vshrl.u32 %v1130, 16
      %v2093 = vrot.slane %v2091, 4
      %v2094 = vshll.u32 %v1130, 16
      %v2096 = vrot.slane %v2094, 5
      %v2097 = vor.u32 %v2093, %v2096
      %v2098 = vrot.slane %v2097, 4
      %v2100 = vshll.u32 %v1131, 16
      %v2102 = vrot.slane %v2100, 5
      %v2103 = vsel %vm1593, %v2098, %v2102
      %v2104 = vshrl.u32 %v1131, 16
      %v2106 = vrot.slane %v2104, 4
      %v2107 = vor.u32 %v2106, %v2102
      %v2108 = vrot.slane %v2107, 4
      %v2110 = vshll.u32 %v1982, 16
      %v2112 = vrot.slane %v2110, 5
      %v2113 = vsel %vm1593, %v2108, %v2112
      %v2115 = vshrl.u32 %v1132, 16
      %v2117 = vrot.slane %v2115, 4
      %v2118 = vshll.u32 %v1132, 16
      %v2120 = vrot.slane %v2118, 5
      %v2121 = vor.u32 %v2117, %v2120
      %v2122 = vrot.slane %v2121, 4
      %v2124 = vshll.u32 %v1133, 16
      %v2126 = vrot.slane %v2124, 5
      %v2127 = vsel %vm1593, %v2122, %v2126
      %v2128 = vshrl.u32 %v1133, 16
      %v2130 = vrot.slane %v2128, 4
      %v2131 = vor.u32 %v2130, %v2126
      %v2132 = vrot.slane %v2131, 4
      %v2134 = vshll.u32 %v1983, 16
      %v2136 = vrot.slane %v2134, 5
      %v2137 = vsel %vm1593, %v2132, %v2136
      %v2139 = vshrl.u32 %v1134, 16
      %v2141 = vrot.slane %v2139, 4
      %v2142 = vshll.u32 %v1134, 16
      %v2144 = vrot.slane %v2142, 5
      %v2145 = vor.u32 %v2141, %v2144
      %v2146 = vrot.slane %v2145, 4
      %v2148 = vshll.u32 %v1135, 16
      %v2150 = vrot.slane %v2148, 5
      %v2151 = vsel %vm1593, %v2146, %v2150
      %v2152 = vshrl.u32 %v1135, 16
      %v2154 = vrot.slane %v2152, 4
      %v2155 = vor.u32 %v2154, %v2150
      %v2156 = vrot.slane %v2155, 4
      %v2158 = vshll.u32 %v1984, 16
      %v2160 = vrot.slane %v2158, 5
      %v2161 = vsel %vm1593, %v2156, %v2160
      %v2163 = vshrl.u32 %v1136, 16
      %v2165 = vrot.slane %v2163, 4
      %v2166 = vshll.u32 %v1136, 16
      %v2168 = vrot.slane %v2166, 5
      %v2169 = vor.u32 %v2165, %v2168
      %v2170 = vrot.slane %v2169, 4
      %v2172 = vshll.u32 %v1137, 16
      %v2174 = vrot.slane %v2172, 5
      %v2175 = vsel %vm1593, %v2170, %v2174
      %v2176 = vshrl.u32 %v1137, 16
      %v2178 = vrot.slane %v2176, 4
      %v2179 = vor.u32 %v2178, %v2174
      %v2180 = vrot.slane %v2179, 4
      %v2182 = vshll.u32 %v1985, 16
      %v2184 = vrot.slane %v2182, 5
      %v2185 = vsel %vm1593, %v2180, %v2184
      %v2187 = vshrl.u32 %v1138, 16
      %v2189 = vrot.slane %v2187, 4
      %v2190 = vshll.u32 %v1138, 16
      %v2192 = vrot.slane %v2190, 5
      %v2193 = vor.u32 %v2189, %v2192
      %v2194 = vrot.slane %v2193, 4
      %v2196 = vshll.u32 %v1139, 16
      %v2198 = vrot.slane %v2196, 5
      %v2199 = vsel %vm1593, %v2194, %v2198
      %v2200 = vshrl.u32 %v1139, 16
      %v2202 = vrot.slane %v2200, 4
      %v2203 = vor.u32 %v2202, %v2198
      %v2204 = vrot.slane %v2203, 4
      %v2206 = vshll.u32 %v1986, 16
      %v2208 = vrot.slane %v2206, 5
      %v2209 = vsel %vm1593, %v2204, %v2208
      %v2211 = vshrl.u32 %v1140, 16
      %v2213 = vrot.slane %v2211, 4
      %v2214 = vshll.u32 %v1140, 16
      %v2216 = vrot.slane %v2214, 5
      %v2217 = vor.u32 %v2213, %v2216
      %v2218 = vrot.slane %v2217, 4
      %v2220 = vshll.u32 %v1141, 16
      %v2222 = vrot.slane %v2220, 5
      %v2223 = vsel %vm1593, %v2218, %v2222
      %v2224 = vshrl.u32 %v1141, 16
      %v2226 = vrot.slane %v2224, 4
      %v2227 = vor.u32 %v2226, %v2222
      %v2228 = vrot.slane %v2227, 4
      %v2230 = vshll.u32 %v1987, 16
      %v2232 = vrot.slane %v2230, 5
      %v2233 = vsel %vm1593, %v2228, %v2232
      %v2235 = vshrl.u32 %v1142, 16
      %v2237 = vrot.slane %v2235, 4
      %v2238 = vshll.u32 %v1142, 16
      %v2240 = vrot.slane %v2238, 5
      %v2241 = vor.u32 %v2237, %v2240
      %v2242 = vrot.slane %v2241, 4
      %v2244 = vshll.u32 %v1143, 16
      %v2246 = vrot.slane %v2244, 5
      %v2247 = vsel %vm1593, %v2242, %v2246
      %v2248 = vshrl.u32 %v1143, 16
      %v2250 = vrot.slane %v2248, 4
      %v2251 = vor.u32 %v2250, %v2246
      %v2252 = vrot.slane %v2251, 4
      %v2254 = vshll.u32 %v1988, 16
      %v2256 = vrot.slane %v2254, 5
      %v2257 = vsel %vm1593, %v2252, %v2256
      %v2259 = vshrl.u32 %v1144, 16
      %v2261 = vrot.slane %v2259, 4
      %v2262 = vshll.u32 %v1144, 16
      %v2264 = vrot.slane %v2262, 5
      %v2265 = vor.u32 %v2261, %v2264
      %v2266 = vrot.slane %v2265, 4
      %v2268 = vshll.u32 %v1145, 16
      %v2270 = vrot.slane %v2268, 5
      %v2271 = vsel %vm1593, %v2266, %v2270
      %v2272 = vshrl.u32 %v1145, 16
      %v2274 = vrot.slane %v2272, 4
      %v2275 = vor.u32 %v2274, %v2270
      %v2276 = vrot.slane %v2275, 4
      %v2278 = vshll.u32 %v1989, 16
      %v2280 = vrot.slane %v2278, 5
      %v2281 = vsel %vm1593, %v2276, %v2280
      %v2283 = vshrl.u32 %v1146, 16
      %v2285 = vrot.slane %v2283, 4
      %v2286 = vshll.u32 %v1146, 16
      %v2288 = vrot.slane %v2286, 5
      %v2289 = vor.u32 %v2285, %v2288
      %v2290 = vrot.slane %v2289, 4
      %v2292 = vshll.u32 %v1147, 16
      %v2294 = vrot.slane %v2292, 5
      %v2295 = vsel %vm1593, %v2290, %v2294
      %v2296 = vshrl.u32 %v1147, 16
      %v2298 = vrot.slane %v2296, 4
      %v2299 = vor.u32 %v2298, %v2294
      %v2300 = vrot.slane %v2299, 4
      %v2302 = vshll.u32 %v1990, 16
      %v2304 = vrot.slane %v2302, 5
      %v2305 = vsel %vm1593, %v2300, %v2304
      %v2307 = vshrl.u32 %v1148, 16
      %v2309 = vrot.slane %v2307, 4
      %v2310 = vshll.u32 %v1148, 16
      %v2312 = vrot.slane %v2310, 5
      %v2313 = vor.u32 %v2309, %v2312
      %v2314 = vrot.slane %v2313, 4
      %v2316 = vshll.u32 %v1149, 16
      %v2318 = vrot.slane %v2316, 5
      %v2319 = vsel %vm1593, %v2314, %v2318
      %v2320 = vshrl.u32 %v1149, 16
      %v2322 = vrot.slane %v2320, 4
      %v2323 = vor.u32 %v2322, %v2318
      %v2324 = vrot.slane %v2323, 4
      %v2326 = vshll.u32 %v1991, 16
      %v2328 = vrot.slane %v2326, 5
      %v2329 = vsel %vm1593, %v2324, %v2328
      %v2331 = vshrl.u32 %v1150, 16
      %v2333 = vrot.slane %v2331, 4
      %v2334 = vshll.u32 %v1150, 16
      %v2336 = vrot.slane %v2334, 5
      %v2337 = vor.u32 %v2333, %v2336
      %v2338 = vrot.slane %v2337, 4
      %v2340 = vshll.u32 %v1151, 16
      %v2342 = vrot.slane %v2340, 5
      %v2343 = vsel %vm1593, %v2338, %v2342
      %v2344 = vshrl.u32 %v1151, 16
      %v2346 = vrot.slane %v2344, 4
      %v2347 = vor.u32 %v2346, %v2342
      %v2348 = vrot.slane %v2347, 4
      %v2350 = vshll.u32 %v1992, 16
      %v2352 = vrot.slane %v2350, 5
      %v2353 = vsel %vm1593, %v2348, %v2352
      %v2355 = vshrl.u32 %v1152, 16
      %v2357 = vrot.slane %v2355, 4
      %v2358 = vshll.u32 %v1152, 16
      %v2360 = vrot.slane %v2358, 5
      %v2361 = vor.u32 %v2357, %v2360
      %v2362 = vrot.slane %v2361, 4
      %v2364 = vshll.u32 %v1153, 16
      %v2366 = vrot.slane %v2364, 5
      %v2367 = vsel %vm1593, %v2362, %v2366
      %v2368 = vshrl.u32 %v1153, 16
      %v2370 = vrot.slane %v2368, 4
      %v2371 = vor.u32 %v2370, %v2366
      %v2372 = vrot.slane %v2371, 4
      %v2374 = vshll.u32 %v1993, 16
      %v2376 = vrot.slane %v2374, 5
      %v2377 = vsel %vm1593, %v2372, %v2376
      %v2378 = vld [vmem:[%s1154 + $0x8] sm:$0x1]
      %v2379 = vld [vmem:[%s1154 + $0x14] sm:$0x1]
      %v2380 = vld [vmem:[%s1154 + $0x20] sm:$0x1]
      %v2381 = vld [vmem:[%s1154 + $0x2c] sm:$0x1]
      %v2382 = vld [vmem:[%s1154 + $0x38] sm:$0x1]
      %v2383 = vld [vmem:[%s1154 + $0x44] sm:$0x1]
      %v2384 = vld [vmem:[%s1154 + $0x50] sm:$0x1]
      %v2385 = vld [vmem:[%s1154 + $0x5c] sm:$0x1]
      %v2386 = vld [vmem:[%s1154 + $0x68] sm:$0x1]
      %v2387 = vld [vmem:[%s1154 + $0x74] sm:$0x1]
      %v2388 = vld [vmem:[%s1154 + $0x80] sm:$0x1]
      %v2389 = vld [vmem:[%s1154 + $0x8c] sm:$0x1]
      %v2390 = vld [vmem:[%s1154 + $0x98] sm:$0x1]
      %v2391 = vld [vmem:[%s1154 + $0xa4] sm:$0x1]
      %v2392 = vld [vmem:[%s1154 + $0xb0] sm:$0x1]
      %v2393 = vld [vmem:[%s1154 + $0xbc] sm:$0x1]
      %v2395 = vshrl.u32 %v1155, 16
      %v2397 = vrot.slane %v2395, 4
      %v2398 = vshll.u32 %v1155, 16
      %v2400 = vrot.slane %v2398, 5
      %v2401 = vor.u32 %v2397, %v2400
      %v2402 = vrot.slane %v2401, 4
      %v2404 = vshll.u32 %v1156, 16
      %v2406 = vrot.slane %v2404, 5
      %v2407 = vsel %vm1593, %v2402, %v2406
      %v2408 = vshrl.u32 %v1156, 16
      %v2410 = vrot.slane %v2408, 4
      %v2411 = vor.u32 %v2410, %v2406
      %v2412 = vrot.slane %v2411, 4
      %v2414 = vshll.u32 %v2378, 16
      %v2416 = vrot.slane %v2414, 5
      %v2417 = vsel %vm1593, %v2412, %v2416
      %v2419 = vshrl.u32 %v1157, 16
      %v2421 = vrot.slane %v2419, 4
      %v2422 = vshll.u32 %v1157, 16
      %v2424 = vrot.slane %v2422, 5
      %v2425 = vor.u32 %v2421, %v2424
      %v2426 = vrot.slane %v2425, 4
      %v2428 = vshll.u32 %v1158, 16
      %v2430 = vrot.slane %v2428, 5
      %v2431 = vsel %vm1593, %v2426, %v2430
      %v2432 = vshrl.u32 %v1158, 16
      %v2434 = vrot.slane %v2432, 4
      %v2435 = vor.u32 %v2434, %v2430
      %v2436 = vrot.slane %v2435, 4
      %v2438 = vshll.u32 %v2379, 16
      %v2440 = vrot.slane %v2438, 5
      %v2441 = vsel %vm1593, %v2436, %v2440
      %v2443 = vshrl.u32 %v1159, 16
      %v2445 = vrot.slane %v2443, 4
      %v2446 = vshll.u32 %v1159, 16
      %v2448 = vrot.slane %v2446, 5
      %v2449 = vor.u32 %v2445, %v2448
      %v2450 = vrot.slane %v2449, 4
      %v2452 = vshll.u32 %v1160, 16
      %v2454 = vrot.slane %v2452, 5
      %v2455 = vsel %vm1593, %v2450, %v2454
      %v2456 = vshrl.u32 %v1160, 16
      %v2458 = vrot.slane %v2456, 4
      %v2459 = vor.u32 %v2458, %v2454
      %v2460 = vrot.slane %v2459, 4
      %v2462 = vshll.u32 %v2380, 16
      %v2464 = vrot.slane %v2462, 5
      %v2465 = vsel %vm1593, %v2460, %v2464
      %v2467 = vshrl.u32 %v1161, 16
      %v2469 = vrot.slane %v2467, 4
      %v2470 = vshll.u32 %v1161, 16
      %v2472 = vrot.slane %v2470, 5
      %v2473 = vor.u32 %v2469, %v2472
      %v2474 = vrot.slane %v2473, 4
      %v2476 = vshll.u32 %v1162, 16
      %v2478 = vrot.slane %v2476, 5
      %v2479 = vsel %vm1593, %v2474, %v2478
      %v2480 = vshrl.u32 %v1162, 16
      %v2482 = vrot.slane %v2480, 4
      %v2483 = vor.u32 %v2482, %v2478
      %v2484 = vrot.slane %v2483, 4
      %v2486 = vshll.u32 %v2381, 16
      %v2488 = vrot.slane %v2486, 5
      %v2489 = vsel %vm1593, %v2484, %v2488
      %v2491 = vshrl.u32 %v1163, 16
      %v2493 = vrot.slane %v2491, 4
      %v2494 = vshll.u32 %v1163, 16
      %v2496 = vrot.slane %v2494, 5
      %v2497 = vor.u32 %v2493, %v2496
      %v2498 = vrot.slane %v2497, 4
      %v2500 = vshll.u32 %v1164, 16
      %v2502 = vrot.slane %v2500, 5
      %v2503 = vsel %vm1593, %v2498, %v2502
      %v2504 = vshrl.u32 %v1164, 16
      %v2506 = vrot.slane %v2504, 4
      %v2507 = vor.u32 %v2506, %v2502
      %v2508 = vrot.slane %v2507, 4
      %v2510 = vshll.u32 %v2382, 16
      %v2512 = vrot.slane %v2510, 5
      %v2513 = vsel %vm1593, %v2508, %v2512
      %v2515 = vshrl.u32 %v1165, 16
      %v2517 = vrot.slane %v2515, 4
      %v2518 = vshll.u32 %v1165, 16
      %v2520 = vrot.slane %v2518, 5
      %v2521 = vor.u32 %v2517, %v2520
      %v2522 = vrot.slane %v2521, 4
      %v2524 = vshll.u32 %v1166, 16
      %v2526 = vrot.slane %v2524, 5
      %v2527 = vsel %vm1593, %v2522, %v2526
      %v2528 = vshrl.u32 %v1166, 16
      %v2530 = vrot.slane %v2528, 4
      %v2531 = vor.u32 %v2530, %v2526
      %v2532 = vrot.slane %v2531, 4
      %v2534 = vshll.u32 %v2383, 16
      %v2536 = vrot.slane %v2534, 5
      %v2537 = vsel %vm1593, %v2532, %v2536
      %v2539 = vshrl.u32 %v1167, 16
      %v2541 = vrot.slane %v2539, 4
      %v2542 = vshll.u32 %v1167, 16
      %v2544 = vrot.slane %v2542, 5
      %v2545 = vor.u32 %v2541, %v2544
      %v2546 = vrot.slane %v2545, 4
      %v2548 = vshll.u32 %v1168, 16
      %v2550 = vrot.slane %v2548, 5
      %v2551 = vsel %vm1593, %v2546, %v2550
      %v2552 = vshrl.u32 %v1168, 16
      %v2554 = vrot.slane %v2552, 4
      %v2555 = vor.u32 %v2554, %v2550
      %v2556 = vrot.slane %v2555, 4
      %v2558 = vshll.u32 %v2384, 16
      %v2560 = vrot.slane %v2558, 5
      %v2561 = vsel %vm1593, %v2556, %v2560
      %v2563 = vshrl.u32 %v1169, 16
      %v2565 = vrot.slane %v2563, 4
      %v2566 = vshll.u32 %v1169, 16
      %v2568 = vrot.slane %v2566, 5
      %v2569 = vor.u32 %v2565, %v2568
      %v2570 = vrot.slane %v2569, 4
      %v2572 = vshll.u32 %v1170, 16
      %v2574 = vrot.slane %v2572, 5
      %v2575 = vsel %vm1593, %v2570, %v2574
      %v2576 = vshrl.u32 %v1170, 16
      %v2578 = vrot.slane %v2576, 4
      %v2579 = vor.u32 %v2578, %v2574
      %v2580 = vrot.slane %v2579, 4
      %v2582 = vshll.u32 %v2385, 16
      %v2584 = vrot.slane %v2582, 5
      %v2585 = vsel %vm1593, %v2580, %v2584
      %v2587 = vshrl.u32 %v1171, 16
      %v2589 = vrot.slane %v2587, 4
      %v2590 = vshll.u32 %v1171, 16
      %v2592 = vrot.slane %v2590, 5
      %v2593 = vor.u32 %v2589, %v2592
      %v2594 = vrot.slane %v2593, 4
      %v2596 = vshll.u32 %v1172, 16
      %v2598 = vrot.slane %v2596, 5
      %v2599 = vsel %vm1593, %v2594, %v2598
      %v2600 = vshrl.u32 %v1172, 16
      %v2602 = vrot.slane %v2600, 4
      %v2603 = vor.u32 %v2602, %v2598
      %v2604 = vrot.slane %v2603, 4
      %v2606 = vshll.u32 %v2386, 16
      %v2608 = vrot.slane %v2606, 5
      %v2609 = vsel %vm1593, %v2604, %v2608
      %v2611 = vshrl.u32 %v1173, 16
      %v2613 = vrot.slane %v2611, 4
      %v2614 = vshll.u32 %v1173, 16
      %v2616 = vrot.slane %v2614, 5
      %v2617 = vor.u32 %v2613, %v2616
      %v2618 = vrot.slane %v2617, 4
      %v2620 = vshll.u32 %v1174, 16
      %v2622 = vrot.slane %v2620, 5
      %v2623 = vsel %vm1593, %v2618, %v2622
      %v2624 = vshrl.u32 %v1174, 16
      %v2626 = vrot.slane %v2624, 4
      %v2627 = vor.u32 %v2626, %v2622
      %v2628 = vrot.slane %v2627, 4
      %v2630 = vshll.u32 %v2387, 16
      %v2632 = vrot.slane %v2630, 5
      %v2633 = vsel %vm1593, %v2628, %v2632
      %v2635 = vshrl.u32 %v1175, 16
      %v2637 = vrot.slane %v2635, 4
      %v2638 = vshll.u32 %v1175, 16
      %v2640 = vrot.slane %v2638, 5
      %v2641 = vor.u32 %v2637, %v2640
      %v2642 = vrot.slane %v2641, 4
      %v2644 = vshll.u32 %v1176, 16
      %v2646 = vrot.slane %v2644, 5
      %v2647 = vsel %vm1593, %v2642, %v2646
      %v2648 = vshrl.u32 %v1176, 16
      %v2650 = vrot.slane %v2648, 4
      %v2651 = vor.u32 %v2650, %v2646
      %v2652 = vrot.slane %v2651, 4
      %v2654 = vshll.u32 %v2388, 16
      %v2656 = vrot.slane %v2654, 5
      %v2657 = vsel %vm1593, %v2652, %v2656
      %v2659 = vshrl.u32 %v1177, 16
      %v2661 = vrot.slane %v2659, 4
      %v2662 = vshll.u32 %v1177, 16
      %v2664 = vrot.slane %v2662, 5
      %v2665 = vor.u32 %v2661, %v2664
      %v2666 = vrot.slane %v2665, 4
      %v2668 = vshll.u32 %v1178, 16
      %v2670 = vrot.slane %v2668, 5
      %v2671 = vsel %vm1593, %v2666, %v2670
      %v2672 = vshrl.u32 %v1178, 16
      %v2674 = vrot.slane %v2672, 4
      %v2675 = vor.u32 %v2674, %v2670
      %v2676 = vrot.slane %v2675, 4
      %v2678 = vshll.u32 %v2389, 16
      %v2680 = vrot.slane %v2678, 5
      %v2681 = vsel %vm1593, %v2676, %v2680
      %v2683 = vshrl.u32 %v1179, 16
      %v2685 = vrot.slane %v2683, 4
      %v2686 = vshll.u32 %v1179, 16
      %v2688 = vrot.slane %v2686, 5
      %v2689 = vor.u32 %v2685, %v2688
      %v2690 = vrot.slane %v2689, 4
      %v2692 = vshll.u32 %v1180, 16
      %v2694 = vrot.slane %v2692, 5
      %v2695 = vsel %vm1593, %v2690, %v2694
      %v2696 = vshrl.u32 %v1180, 16
      %v2698 = vrot.slane %v2696, 4
      %v2699 = vor.u32 %v2698, %v2694
      %v2700 = vrot.slane %v2699, 4
      %v2702 = vshll.u32 %v2390, 16
      %v2704 = vrot.slane %v2702, 5
      %v2705 = vsel %vm1593, %v2700, %v2704
      %v2707 = vshrl.u32 %v1181, 16
      %v2709 = vrot.slane %v2707, 4
      %v2710 = vshll.u32 %v1181, 16
      %v2712 = vrot.slane %v2710, 5
      %v2713 = vor.u32 %v2709, %v2712
      %v2714 = vrot.slane %v2713, 4
      %v2716 = vshll.u32 %v1182, 16
      %v2718 = vrot.slane %v2716, 5
      %v2719 = vsel %vm1593, %v2714, %v2718
      %v2720 = vshrl.u32 %v1182, 16
      %v2722 = vrot.slane %v2720, 4
      %v2723 = vor.u32 %v2722, %v2718
      %v2724 = vrot.slane %v2723, 4
      %v2726 = vshll.u32 %v2391, 16
      %v2728 = vrot.slane %v2726, 5
      %v2729 = vsel %vm1593, %v2724, %v2728
      %v2731 = vshrl.u32 %v1183, 16
      %v2733 = vrot.slane %v2731, 4
      %v2734 = vshll.u32 %v1183, 16
      %v2736 = vrot.slane %v2734, 5
      %v2737 = vor.u32 %v2733, %v2736
      %v2738 = vrot.slane %v2737, 4
      %v2740 = vshll.u32 %v1184, 16
      %v2742 = vrot.slane %v2740, 5
      %v2743 = vsel %vm1593, %v2738, %v2742
      %v2744 = vshrl.u32 %v1184, 16
      %v2746 = vrot.slane %v2744, 4
      %v2747 = vor.u32 %v2746, %v2742
      %v2748 = vrot.slane %v2747, 4
      %v2750 = vshll.u32 %v2392, 16
      %v2752 = vrot.slane %v2750, 5
      %v2753 = vsel %vm1593, %v2748, %v2752
      %v2755 = vshrl.u32 %v1185, 16
      %v2757 = vrot.slane %v2755, 4
      %v2758 = vshll.u32 %v1185, 16
      %v2760 = vrot.slane %v2758, 5
      %v2761 = vor.u32 %v2757, %v2760
      %v2762 = vrot.slane %v2761, 4
      %v2764 = vshll.u32 %v1186, 16
      %v2766 = vrot.slane %v2764, 5
      %v2767 = vsel %vm1593, %v2762, %v2766
      %v2768 = vshrl.u32 %v1186, 16
      %v2770 = vrot.slane %v2768, 4
      %v2771 = vor.u32 %v2770, %v2766
      %v2772 = vrot.slane %v2771, 4
      %v2774 = vshll.u32 %v2393, 16
      %v2776 = vrot.slane %v2774, 5
      %v2777 = vsel %vm1593, %v2772, %v2776
      %v2778 = vunpack.c.l.b16 %v1607
      %v2779 = vunpack.c.l.b16 %v1617
      %v2780 = vunpack.c.l.b16 %v1631
      %v2781 = vunpack.c.l.b16 %v1641
      %v2782 = vunpack.c.l.b16 %v1655
      %v2783 = vunpack.c.l.b16 %v1665
      %v2784 = vunpack.c.l.b16 %v1679
      %v2785 = vunpack.c.l.b16 %v1689
      %v2786 = vunpack.c.l.b16 %v1703
      %v2787 = vunpack.c.l.b16 %v1713
      %v2788 = vunpack.c.l.b16 %v1727
      %v2789 = vunpack.c.l.b16 %v1737
      %v2790 = vunpack.c.l.b16 %v1751
      %v2791 = vunpack.c.l.b16 %v1761
      %v2792 = vunpack.c.l.b16 %v1775
      %v2793 = vunpack.c.l.b16 %v1785
      %v2794 = vunpack.c.l.b16 %v1799
      %v2795 = vunpack.c.l.b16 %v1809
      %v2796 = vunpack.c.l.b16 %v1823
      %v2797 = vunpack.c.l.b16 %v1833
      %v2798 = vunpack.c.l.b16 %v1847
      %v2799 = vunpack.c.l.b16 %v1857
      %v2800 = vunpack.c.l.b16 %v1871
      %v2801 = vunpack.c.l.b16 %v1881
      %v2802 = vunpack.c.l.b16 %v1895
      %v2803 = vunpack.c.l.b16 %v1905
      %v2804 = vunpack.c.l.b16 %v1919
      %v2805 = vunpack.c.l.b16 %v1929
      %v2806 = vunpack.c.l.b16 %v1943
      %v2807 = vunpack.c.l.b16 %v1953
      %v2808 = vunpack.c.l.b16 %v1967
      %v2809 = vunpack.c.l.b16 %v1977
      %v2810 = vpack.c.b16 %v2779, %v2778
      %v2811 = vpack.c.b16 %v2781, %v2780
      %v2812 = vpack.c.b16 %v2783, %v2782
      %v2813 = vpack.c.b16 %v2785, %v2784
      %v2814 = vpack.c.b16 %v2787, %v2786
      %v2815 = vpack.c.b16 %v2789, %v2788
      %v2816 = vpack.c.b16 %v2791, %v2790
      %v2817 = vpack.c.b16 %v2793, %v2792
      %v2818 = vpack.c.b16 %v2795, %v2794
      %v2819 = vpack.c.b16 %v2797, %v2796
      %v2820 = vpack.c.b16 %v2799, %v2798
      %v2821 = vpack.c.b16 %v2801, %v2800
      %v2822 = vpack.c.b16 %v2803, %v2802
      %v2823 = vpack.c.b16 %v2805, %v2804
      %v2824 = vpack.c.b16 %v2807, %v2806
      %v2825 = vpack.c.b16 %v2809, %v2808
      %v2826 = vunpack.c.l.b16 %v2007
      %v2827 = vunpack.c.l.b16 %v2017
      %v2828 = vunpack.c.l.b16 %v2031
      %v2829 = vunpack.c.l.b16 %v2041
      %v2830 = vunpack.c.l.b16 %v2055
      %v2831 = vunpack.c.l.b16 %v2065
      %v2832 = vunpack.c.l.b16 %v2079
      %v2833 = vunpack.c.l.b16 %v2089
      %v2834 = vunpack.c.l.b16 %v2103
      %v2835 = vunpack.c.l.b16 %v2113
      %v2836 = vunpack.c.l.b16 %v2127
      %v2837 = vunpack.c.l.b16 %v2137
      %v2838 = vunpack.c.l.b16 %v2151
      %v2839 = vunpack.c.l.b16 %v2161
      %v2840 = vunpack.c.l.b16 %v2175
      %v2841 = vunpack.c.l.b16 %v2185
      %v2842 = vunpack.c.l.b16 %v2199
      %v2843 = vunpack.c.l.b16 %v2209
      %v2844 = vunpack.c.l.b16 %v2223
      %v2845 = vunpack.c.l.b16 %v2233
      %v2846 = vunpack.c.l.b16 %v2247
      %v2847 = vunpack.c.l.b16 %v2257
      %v2848 = vunpack.c.l.b16 %v2271
      %v2849 = vunpack.c.l.b16 %v2281
      %v2850 = vunpack.c.l.b16 %v2295
      %v2851 = vunpack.c.l.b16 %v2305
      %v2852 = vunpack.c.l.b16 %v2319
      %v2853 = vunpack.c.l.b16 %v2329
      %v2854 = vunpack.c.l.b16 %v2343
      %v2855 = vunpack.c.l.b16 %v2353
      %v2856 = vunpack.c.l.b16 %v2367
      %v2857 = vunpack.c.l.b16 %v2377
      %v2858 = vpack.c.b16 %v2827, %v2826
      %v2859 = vpack.c.b16 %v2829, %v2828
      %v2860 = vpack.c.b16 %v2831, %v2830
      %v2861 = vpack.c.b16 %v2833, %v2832
      %v2862 = vpack.c.b16 %v2835, %v2834
      %v2863 = vpack.c.b16 %v2837, %v2836
      %v2864 = vpack.c.b16 %v2839, %v2838
      %v2865 = vpack.c.b16 %v2841, %v2840
      %v2866 = vpack.c.b16 %v2843, %v2842
      %v2867 = vpack.c.b16 %v2845, %v2844
      %v2868 = vpack.c.b16 %v2847, %v2846
      %v2869 = vpack.c.b16 %v2849, %v2848
      %v2870 = vpack.c.b16 %v2851, %v2850
      %v2871 = vpack.c.b16 %v2853, %v2852
      %v2872 = vpack.c.b16 %v2855, %v2854
      %v2873 = vpack.c.b16 %v2857, %v2856
      %2874 = vrot.lane.b32.xlu0 %v2858, 4
      %v2875 = vpop.permute.xlu0 %2874
      %2876 = vrot.lane.b32.xlu0 %v2859, 4
      %v2877 = vpop.permute.xlu0 %2876
      %2878 = vrot.lane.b32.xlu0 %v2860, 4
      %v2879 = vpop.permute.xlu0 %2878
      %2880 = vrot.lane.b32.xlu0 %v2861, 4
      %v2881 = vpop.permute.xlu0 %2880
      %2882 = vrot.lane.b32.xlu0 %v2862, 4
      %v2883 = vpop.permute.xlu0 %2882
      %2884 = vrot.lane.b32.xlu0 %v2863, 4
      %v2885 = vpop.permute.xlu0 %2884
      %2886 = vrot.lane.b32.xlu0 %v2864, 4
      %v2887 = vpop.permute.xlu0 %2886
      %2888 = vrot.lane.b32.xlu0 %v2865, 4
      %v2889 = vpop.permute.xlu0 %2888
      %2890 = vrot.lane.b32.xlu0 %v2866, 4
      %v2891 = vpop.permute.xlu0 %2890
      %2892 = vrot.lane.b32.xlu0 %v2867, 4
      %v2893 = vpop.permute.xlu0 %2892
      %2894 = vrot.lane.b32.xlu0 %v2868, 4
      %v2895 = vpop.permute.xlu0 %2894
      %2896 = vrot.lane.b32.xlu0 %v2869, 4
      %v2897 = vpop.permute.xlu0 %2896
      %2898 = vrot.lane.b32.xlu0 %v2870, 4
      %v2899 = vpop.permute.xlu0 %2898
      %2900 = vrot.lane.b32.xlu0 %v2871, 4
      %v2901 = vpop.permute.xlu0 %2900
      %2902 = vrot.lane.b32.xlu0 %v2872, 4
      %v2903 = vpop.permute.xlu0 %2902
      %2904 = vrot.lane.b32.xlu0 %v2873, 4
      %v2905 = vpop.permute.xlu0 %2904
      %v2906 = vunpack.c.l.b16 %v2407
      %v2907 = vunpack.c.l.b16 %v2417
      %v2908 = vunpack.c.l.b16 %v2431
      %v2909 = vunpack.c.l.b16 %v2441
      %v2910 = vunpack.c.l.b16 %v2455
      %v2911 = vunpack.c.l.b16 %v2465
      %v2912 = vunpack.c.l.b16 %v2479
      %v2913 = vunpack.c.l.b16 %v2489
      %v2914 = vunpack.c.l.b16 %v2503
      %v2915 = vunpack.c.l.b16 %v2513
      %v2916 = vunpack.c.l.b16 %v2527
      %v2917 = vunpack.c.l.b16 %v2537
      %v2918 = vunpack.c.l.b16 %v2551
      %v2919 = vunpack.c.l.b16 %v2561
      %v2920 = vunpack.c.l.b16 %v2575
      %v2921 = vunpack.c.l.b16 %v2585
      %v2922 = vunpack.c.l.b16 %v2599
      %v2923 = vunpack.c.l.b16 %v2609
      %v2924 = vunpack.c.l.b16 %v2623
      %v2925 = vunpack.c.l.b16 %v2633
      %v2926 = vunpack.c.l.b16 %v2647
      %v2927 = vunpack.c.l.b16 %v2657
      %v2928 = vunpack.c.l.b16 %v2671
      %v2929 = vunpack.c.l.b16 %v2681
      %v2930 = vunpack.c.l.b16 %v2695
      %v2931 = vunpack.c.l.b16 %v2705
      %v2932 = vunpack.c.l.b16 %v2719
      %v2933 = vunpack.c.l.b16 %v2729
      %v2934 = vunpack.c.l.b16 %v2743
      %v2935 = vunpack.c.l.b16 %v2753
      %v2936 = vunpack.c.l.b16 %v2767
      %v2937 = vunpack.c.l.b16 %v2777
      %v2938 = vpack.c.b16 %v2907, %v2906
      %v2939 = vpack.c.b16 %v2909, %v2908
      %v2940 = vpack.c.b16 %v2911, %v2910
      %v2941 = vpack.c.b16 %v2913, %v2912
      %v2942 = vpack.c.b16 %v2915, %v2914
      %v2943 = vpack.c.b16 %v2917, %v2916
      %v2944 = vpack.c.b16 %v2919, %v2918
      %v2945 = vpack.c.b16 %v2921, %v2920
      %v2946 = vpack.c.b16 %v2923, %v2922
      %v2947 = vpack.c.b16 %v2925, %v2924
      %v2948 = vpack.c.b16 %v2927, %v2926
      %v2949 = vpack.c.b16 %v2929, %v2928
      %v2950 = vpack.c.b16 %v2931, %v2930
      %v2951 = vpack.c.b16 %v2933, %v2932
      %v2952 = vpack.c.b16 %v2935, %v2934
      %v2953 = vpack.c.b16 %v2937, %v2936
      %2954 = vrot.lane.b32.xlu0 %v2938, 8
      %v2955 = vpop.permute.xlu0 %2954
      %2956 = vrot.lane.b32.xlu0 %v2939, 8
      %v2957 = vpop.permute.xlu0 %2956
      %2958 = vrot.lane.b32.xlu0 %v2940, 8
      %v2959 = vpop.permute.xlu0 %2958
      %2960 = vrot.lane.b32.xlu0 %v2941, 8
      %v2961 = vpop.permute.xlu0 %2960
      %2962 = vrot.lane.b32.xlu0 %v2942, 8
      %v2963 = vpop.permute.xlu0 %2962
      %2964 = vrot.lane.b32.xlu0 %v2943, 8
      %v2965 = vpop.permute.xlu0 %2964
      %2966 = vrot.lane.b32.xlu0 %v2944, 8
      %v2967 = vpop.permute.xlu0 %2966
      %2968 = vrot.lane.b32.xlu0 %v2945, 8
      %v2969 = vpop.permute.xlu0 %2968
      %2970 = vrot.lane.b32.xlu0 %v2946, 8
      %v2971 = vpop.permute.xlu0 %2970
      %2972 = vrot.lane.b32.xlu0 %v2947, 8
      %v2973 = vpop.permute.xlu0 %2972
      %2974 = vrot.lane.b32.xlu0 %v2948, 8
      %v2975 = vpop.permute.xlu0 %2974
      %2976 = vrot.lane.b32.xlu0 %v2949, 8
      %v2977 = vpop.permute.xlu0 %2976
      %2978 = vrot.lane.b32.xlu0 %v2950, 8
      %v2979 = vpop.permute.xlu0 %2978
      %2980 = vrot.lane.b32.xlu0 %v2951, 8
      %v2981 = vpop.permute.xlu0 %2980
      %2982 = vrot.lane.b32.xlu0 %v2952, 8
      %v2983 = vpop.permute.xlu0 %2982
      %2984 = vrot.lane.b32.xlu0 %v2953, 8
      %v2985 = vpop.permute.xlu0 %2984
      %v2988 = vsel %vm1491, %v2810, %v2875
      %v2991 = vsel %vm1491, %v2811, %v2877
      %v2994 = vsel %vm1491, %v2812, %v2879
      %v2997 = vsel %vm1491, %v2813, %v2881
      %v3000 = vsel %vm1491, %v2814, %v2883
      %v3003 = vsel %vm1491, %v2815, %v2885
      %v3006 = vsel %vm1491, %v2816, %v2887
      %v3009 = vsel %vm1491, %v2817, %v2889
      %v3012 = vsel %vm1491, %v2818, %v2891
      %v3015 = vsel %vm1491, %v2819, %v2893
      %v3018 = vsel %vm1491, %v2820, %v2895
      %v3021 = vsel %vm1491, %v2821, %v2897
      %v3024 = vsel %vm1491, %v2822, %v2899
      %v3027 = vsel %vm1491, %v2823, %v2901
      %v3030 = vsel %vm1491, %v2824, %v2903
      %v3033 = vsel %vm1491, %v2825, %v2905
      %v3035 = vsel %vm1540, %v2988, %v2955
      %v3037 = vsel %vm1540, %v2991, %v2957
      %v3039 = vsel %vm1540, %v2994, %v2959
      %v3041 = vsel %vm1540, %v2997, %v2961
      %v3043 = vsel %vm1540, %v3000, %v2963
      %v3045 = vsel %vm1540, %v3003, %v2965
      %v3047 = vsel %vm1540, %v3006, %v2967
      %v3049 = vsel %vm1540, %v3009, %v2969
      %v3051 = vsel %vm1540, %v3012, %v2971
      %v3053 = vsel %vm1540, %v3015, %v2973
      %v3055 = vsel %vm1540, %v3018, %v2975
      %v3057 = vsel %vm1540, %v3021, %v2977
      %v3059 = vsel %vm1540, %v3024, %v2979
      %v3061 = vsel %vm1540, %v3027, %v2981
      %v3063 = vsel %vm1540, %v3030, %v2983
      %v3065 = vsel %vm1540, %v3033, %v2985
      %s3066 = scalar_lea.vmem %s1, 8
      %v3067 = vld [vmem:[%s3066] sm:$0xf]
      %v3068 = vld [vmem:[%s3066 + $0x4] sm:$0x3]
      %v3071 = vunpack.c.l.b16 %v3067
      %v3072 = vunpack.c.l.b16 %v3068
      %v3073 = vpack.c.b16 %v3072, %v3071
      %vm3074 = vcmask 97280
      %v3075 = vsel %vm3074, %v3035, 0
      %v3077 = vsel %vm3074, %v3037, 0
      %v3079 = vsel %vm3074, %v3039, 0
      %v3081 = vsel %vm3074, %v3041, 0
      %v3083 = vsel %vm3074, %v3043, 0
      %v3085 = vsel %vm3074, %v3045, 0
      %v3087 = vsel %vm3074, %v3047, 0
      %v3089 = vsel %vm3074, %v3049, 0
      %v3091 = vsel %vm3074, %v3051, 0
      %v3093 = vsel %vm3074, %v3053, 0
      %v3095 = vsel %vm3074, %v3055, 0
      %v3097 = vsel %vm3074, %v3057, 0
      %v3099 = vsel %vm3074, %v3059, 0
      %v3101 = vsel %vm3074, %v3061, 0
      %v3103 = vsel %vm3074, %v3063, 0
      %v3105 = vsel %vm3074, %v3065, 0
      %vm3107 = vcmask 1045504
      %v3109 = vsel %vm3107, %v3073, 0
      %3111 = vmatpush.bf16.msra.mxu0 0
      %3112 = vmatpush.bf16.msra.mxu0 0
      %3113 = vmatpush.bf16.msra.mxu0 0
      %3114 = vmatpush.bf16.msra.mxu0 0
      %3115 = vmatpush.bf16.msra.mxu0 0
      %3116 = vmatpush.bf16.msra.mxu0 0
      %3117 = vmatpush.bf16.msra.mxu0 0
      %3118 = vmatpush.bf16.msra.mxu0 %v3109
      %3119 = vmatmul.bf16.gmra.mxu0 %v3075
      %v3120 = vpop.f32.mrf.mxu0
      %v3121 = vadd.f32 0.0, %v3120
      %v3122 = vpop.f32.mrf.mxu0
      %v3123 = vadd.f32 0.0, %v3122
      %3124 = vmatmul.bf16.gmra.mxu0 %v3077
      %v3125 = vpop.f32.mrf.mxu0
      %v3126 = vadd.f32 0.0, %v3125
      %v3127 = vpop.f32.mrf.mxu0
      %v3128 = vadd.f32 0.0, %v3127
      %3129 = vmatmul.bf16.gmra.mxu0 %v3079
      %v3130 = vpop.f32.mrf.mxu0
      %v3131 = vadd.f32 0.0, %v3130
      %v3132 = vpop.f32.mrf.mxu0
      %v3133 = vadd.f32 0.0, %v3132
      %3134 = vmatmul.bf16.gmra.mxu0 %v3081
      %v3135 = vpop.f32.mrf.mxu0
      %v3136 = vadd.f32 0.0, %v3135
      %v3137 = vpop.f32.mrf.mxu0
      %v3138 = vadd.f32 0.0, %v3137
      %3139 = vmatmul.bf16.gmra.mxu0 %v3083
      %v3140 = vpop.f32.mrf.mxu0
      %v3141 = vadd.f32 0.0, %v3140
      %v3142 = vpop.f32.mrf.mxu0
      %v3143 = vadd.f32 0.0, %v3142
      %3144 = vmatmul.bf16.gmra.mxu0 %v3085
      %v3145 = vpop.f32.mrf.mxu0
      %v3146 = vadd.f32 0.0, %v3145
      %v3147 = vpop.f32.mrf.mxu0
      %v3148 = vadd.f32 0.0, %v3147
      %3149 = vmatmul.bf16.gmra.mxu0 %v3087
      %v3150 = vpop.f32.mrf.mxu0
      %v3151 = vadd.f32 0.0, %v3150
      %v3152 = vpop.f32.mrf.mxu0
      %v3153 = vadd.f32 0.0, %v3152
      %3154 = vmatmul.bf16.gmra.mxu0 %v3089
      %v3155 = vpop.f32.mrf.mxu0
      %v3156 = vadd.f32 0.0, %v3155
      %v3157 = vpop.f32.mrf.mxu0
      %v3158 = vadd.f32 0.0, %v3157
      %3159 = vmatmul.bf16.gmra.mxu0 %v3091
      %v3160 = vpop.f32.mrf.mxu0
      %v3161 = vadd.f32 0.0, %v3160
      %v3162 = vpop.f32.mrf.mxu0
      %v3163 = vadd.f32 0.0, %v3162
      %3164 = vmatmul.bf16.gmra.mxu0 %v3093
      %v3165 = vpop.f32.mrf.mxu0
      %v3166 = vadd.f32 0.0, %v3165
      %v3167 = vpop.f32.mrf.mxu0
      %v3168 = vadd.f32 0.0, %v3167
      %3169 = vmatmul.bf16.gmra.mxu0 %v3095
      %v3170 = vpop.f32.mrf.mxu0
      %v3171 = vadd.f32 0.0, %v3170
      %v3172 = vpop.f32.mrf.mxu0
      %v3173 = vadd.f32 0.0, %v3172
      %3174 = vmatmul.bf16.gmra.mxu0 %v3097
      %v3175 = vpop.f32.mrf.mxu0
      %v3176 = vadd.f32 0.0, %v3175
      %v3177 = vpop.f32.mrf.mxu0
      %v3178 = vadd.f32 0.0, %v3177
      %3179 = vmatmul.bf16.gmra.mxu0 %v3099
      %v3180 = vpop.f32.mrf.mxu0
      %v3181 = vadd.f32 0.0, %v3180
      %v3182 = vpop.f32.mrf.mxu0
      %v3183 = vadd.f32 0.0, %v3182
      %3184 = vmatmul.bf16.gmra.mxu0 %v3101
      %v3185 = vpop.f32.mrf.mxu0
      %v3186 = vadd.f32 0.0, %v3185
      %v3187 = vpop.f32.mrf.mxu0
      %v3188 = vadd.f32 0.0, %v3187
      %3189 = vmatmul.bf16.gmra.mxu0 %v3103
      %v3190 = vpop.f32.mrf.mxu0
      %v3191 = vadd.f32 0.0, %v3190
      %v3192 = vpop.f32.mrf.mxu0
      %v3193 = vadd.f32 0.0, %v3192
      %3194 = vmatmul.bf16.gmra.mxu0 %v3105
      %v3195 = vpop.f32.mrf.mxu0
      %v3196 = vadd.f32 0.0, %v3195
      %v3197 = vpop.f32.mrf.mxu0
      %v3198 = vadd.f32 0.0, %v3197
      %3199 = vdwg.mxu0
      %v3202 = vunpack.c.l.b16 %v1573
      %v3203 = vunpack.c.l.b16 %v1574
      %v3204 = vpack.c.b16 %v3203, %v3202
      %v3205 = vsel %vm3074, %v1542, 0
      %v3207 = vsel %vm3074, %v1544, 0
      %v3209 = vsel %vm3074, %v1546, 0
      %v3211 = vsel %vm3074, %v1548, 0
      %v3213 = vsel %vm3074, %v1550, 0
      %v3215 = vsel %vm3074, %v1552, 0
      %v3217 = vsel %vm3074, %v1554, 0
      %v3219 = vsel %vm3074, %v1556, 0
      %v3221 = vsel %vm3074, %v1558, 0
      %v3223 = vsel %vm3074, %v1560, 0
      %v3225 = vsel %vm3074, %v1562, 0
      %v3227 = vsel %vm3074, %v1564, 0
      %v3229 = vsel %vm3074, %v1566, 0
      %v3231 = vsel %vm3074, %v1568, 0
      %v3233 = vsel %vm3074, %v1570, 0
      %v3235 = vsel %vm3074, %v1572, 0
      %v3238 = vsel %vm3107, %v3204, 0
      %3240 = vmatpush.bf16.msra.mxu0 0
      %3241 = vmatpush.bf16.msra.mxu0 0
      %3242 = vmatpush.bf16.msra.mxu0 0
      %3243 = vmatpush.bf16.msra.mxu0 0
      %3244 = vmatpush.bf16.msra.mxu0 0
      %3245 = vmatpush.bf16.msra.mxu0 0
      %3246 = vmatpush.bf16.msra.mxu0 0
      %3247 = vmatpush.bf16.msra.mxu0 %v3238
      %3248 = vmatmul.bf16.gmra.mxu0 %v3205
      %v3249 = vpop.f32.mrf.mxu0
      %v3250 = vadd.f32 %v3121, %v3249
      %v3251 = vpop.f32.mrf.mxu0
      %v3252 = vadd.f32 %v3123, %v3251
      %3253 = vmatmul.bf16.gmra.mxu0 %v3207
      %v3254 = vpop.f32.mrf.mxu0
      %v3255 = vadd.f32 %v3126, %v3254
      %v3256 = vpop.f32.mrf.mxu0
      %v3257 = vadd.f32 %v3128, %v3256
      %3258 = vmatmul.bf16.gmra.mxu0 %v3209
      %v3259 = vpop.f32.mrf.mxu0
      %v3260 = vadd.f32 %v3131, %v3259
      %v3261 = vpop.f32.mrf.mxu0
      %v3262 = vadd.f32 %v3133, %v3261
      %3263 = vmatmul.bf16.gmra.mxu0 %v3211
      %v3264 = vpop.f32.mrf.mxu0
      %v3265 = vadd.f32 %v3136, %v3264
      %v3266 = vpop.f32.mrf.mxu0
      %v3267 = vadd.f32 %v3138, %v3266
      %3268 = vmatmul.bf16.gmra.mxu0 %v3213
      %v3269 = vpop.f32.mrf.mxu0
      %v3270 = vadd.f32 %v3141, %v3269
      %v3271 = vpop.f32.mrf.mxu0
      %v3272 = vadd.f32 %v3143, %v3271
      %3273 = vmatmul.bf16.gmra.mxu0 %v3215
      %v3274 = vpop.f32.mrf.mxu0
      %v3275 = vadd.f32 %v3146, %v3274
      %v3276 = vpop.f32.mrf.mxu0
      %v3277 = vadd.f32 %v3148, %v3276
      %3278 = vmatmul.bf16.gmra.mxu0 %v3217
      %v3279 = vpop.f32.mrf.mxu0
      %v3280 = vadd.f32 %v3151, %v3279
      %v3281 = vpop.f32.mrf.mxu0
      %v3282 = vadd.f32 %v3153, %v3281
      %3283 = vmatmul.bf16.gmra.mxu0 %v3219
      %v3284 = vpop.f32.mrf.mxu0
      %v3285 = vadd.f32 %v3156, %v3284
      %v3286 = vpop.f32.mrf.mxu0
      %v3287 = vadd.f32 %v3158, %v3286
      %3288 = vmatmul.bf16.gmra.mxu0 %v3221
      %v3289 = vpop.f32.mrf.mxu0
      %v3290 = vadd.f32 %v3161, %v3289
      %v3291 = vpop.f32.mrf.mxu0
      %v3292 = vadd.f32 %v3163, %v3291
      %3293 = vmatmul.bf16.gmra.mxu0 %v3223
      %v3294 = vpop.f32.mrf.mxu0
      %v3295 = vadd.f32 %v3166, %v3294
      %v3296 = vpop.f32.mrf.mxu0
      %v3297 = vadd.f32 %v3168, %v3296
      %3298 = vmatmul.bf16.gmra.mxu0 %v3225
      %v3299 = vpop.f32.mrf.mxu0
      %v3300 = vadd.f32 %v3171, %v3299
      %v3301 = vpop.f32.mrf.mxu0
      %v3302 = vadd.f32 %v3173, %v3301
      %3303 = vmatmul.bf16.gmra.mxu0 %v3227
      %v3304 = vpop.f32.mrf.mxu0
      %v3305 = vadd.f32 %v3176, %v3304
      %v3306 = vpop.f32.mrf.mxu0
      %v3307 = vadd.f32 %v3178, %v3306
      %3308 = vmatmul.bf16.gmra.mxu0 %v3229
      %v3309 = vpop.f32.mrf.mxu0
      %v3310 = vadd.f32 %v3181, %v3309
      %v3311 = vpop.f32.mrf.mxu0
      %v3312 = vadd.f32 %v3183, %v3311
      %3313 = vmatmul.bf16.gmra.mxu0 %v3231
      %v3314 = vpop.f32.mrf.mxu0
      %v3315 = vadd.f32 %v3186, %v3314
      %v3316 = vpop.f32.mrf.mxu0
      %v3317 = vadd.f32 %v3188, %v3316
      %3318 = vmatmul.bf16.gmra.mxu0 %v3233
      %v3319 = vpop.f32.mrf.mxu0
      %v3320 = vadd.f32 %v3191, %v3319
      %v3321 = vpop.f32.mrf.mxu0
      %v3322 = vadd.f32 %v3193, %v3321
      %3323 = vmatmul.bf16.gmra.mxu0 %v3235
      %v3324 = vpop.f32.mrf.mxu0
      %v3325 = vadd.f32 %v3196, %v3324
      %v3326 = vpop.f32.mrf.mxu0
      %v3327 = vadd.f32 %v3198, %v3326
      %3328 = vdwg.mxu0
      %v3329 = vld [vmem:[#allocation2] sm:$0xe]
      %v3330 = vld [vmem:[#allocation2 + $0xc] sm:$0xe]
      %v3331 = vld [vmem:[#allocation2 + $0x18] sm:$0xe]
      %v3332 = vld [vmem:[#allocation2 + $0x24] sm:$0xe]
      %v3333 = vld [vmem:[#allocation2 + $0x30] sm:$0xe]
      %v3334 = vld [vmem:[#allocation2 + $0x3c] sm:$0xe]
      %v3335 = vld [vmem:[#allocation2 + $0x48] sm:$0xe]
      %v3336 = vld [vmem:[#allocation2 + $0x54] sm:$0xe]
      %v3337 = vld [vmem:[#allocation2 + $0x60] sm:$0xe]
      %v3338 = vld [vmem:[#allocation2 + $0x6c] sm:$0xe]
      %v3339 = vld [vmem:[#allocation2 + $0x78] sm:$0xe]
      %v3340 = vld [vmem:[#allocation2 + $0x84] sm:$0xe]
      %v3341 = vld [vmem:[#allocation2 + $0x90] sm:$0xe]
      %v3342 = vld [vmem:[#allocation2 + $0x9c] sm:$0xe]
      %v3343 = vld [vmem:[#allocation2 + $0xa8] sm:$0xe]
      %v3344 = vld [vmem:[#allocation2 + $0xb4] sm:$0xe]
      %vm3377 = vcmask 1042432
      %vm3378 = vcmask 1046532
      %vm3379 = vmor %vm3377, %vm3378
      %v3380 = vrot.slane %v3329, 5
      %v3381 = vrot.slane %v3380, 4
      %v3382 = vrot.slane %v1091, 5
      %v3383 = vsel %vm3379, %v3381, %v3382
      %v3384 = vrot.slane %v3382, 4
      %v3385 = vrot.slane %v1575, 5
      %v3386 = vsel %vm3379, %v3384, %v3385
      %v3387 = vrot.slane %v3330, 5
      %v3388 = vrot.slane %v3387, 4
      %v3389 = vrot.slane %v1093, 5
      %v3390 = vsel %vm3379, %v3388, %v3389
      %v3391 = vrot.slane %v3389, 4
      %v3392 = vrot.slane %v1576, 5
      %v3393 = vsel %vm3379, %v3391, %v3392
      %v3394 = vrot.slane %v3331, 5
      %v3395 = vrot.slane %v3394, 4
      %v3396 = vrot.slane %v1095, 5
      %v3397 = vsel %vm3379, %v3395, %v3396
      %v3398 = vrot.slane %v3396, 4
      %v3399 = vrot.slane %v1577, 5
      %v3400 = vsel %vm3379, %v3398, %v3399
      %v3401 = vrot.slane %v3332, 5
      %v3402 = vrot.slane %v3401, 4
      %v3403 = vrot.slane %v1097, 5
      %v3404 = vsel %vm3379, %v3402, %v3403
      %v3405 = vrot.slane %v3403, 4
      %v3406 = vrot.slane %v1578, 5
      %v3407 = vsel %vm3379, %v3405, %v3406
      %v3408 = vrot.slane %v3333, 5
      %v3409 = vrot.slane %v3408, 4
      %v3410 = vrot.slane %v1099, 5
      %v3411 = vsel %vm3379, %v3409, %v3410
      %v3412 = vrot.slane %v3410, 4
      %v3413 = vrot.slane %v1579, 5
      %v3414 = vsel %vm3379, %v3412, %v3413
      %v3415 = vrot.slane %v3334, 5
      %v3416 = vrot.slane %v3415, 4
      %v3417 = vrot.slane %v1101, 5
      %v3418 = vsel %vm3379, %v3416, %v3417
      %v3419 = vrot.slane %v3417, 4
      %v3420 = vrot.slane %v1580, 5
      %v3421 = vsel %vm3379, %v3419, %v3420
      %v3422 = vrot.slane %v3335, 5
      %v3423 = vrot.slane %v3422, 4
      %v3424 = vrot.slane %v1103, 5
      %v3425 = vsel %vm3379, %v3423, %v3424
      %v3426 = vrot.slane %v3424, 4
      %v3427 = vrot.slane %v1581, 5
      %v3428 = vsel %vm3379, %v3426, %v3427
      %v3429 = vrot.slane %v3336, 5
      %v3430 = vrot.slane %v3429, 4
      %v3431 = vrot.slane %v1105, 5
      %v3432 = vsel %vm3379, %v3430, %v3431
      %v3433 = vrot.slane %v3431, 4
      %v3434 = vrot.slane %v1582, 5
      %v3435 = vsel %vm3379, %v3433, %v3434
      %v3436 = vrot.slane %v3337, 5
      %v3437 = vrot.slane %v3436, 4
      %v3438 = vrot.slane %v1107, 5
      %v3439 = vsel %vm3379, %v3437, %v3438
      %v3440 = vrot.slane %v3438, 4
      %v3441 = vrot.slane %v1583, 5
      %v3442 = vsel %vm3379, %v3440, %v3441
      %v3443 = vrot.slane %v3338, 5
      %v3444 = vrot.slane %v3443, 4
      %v3445 = vrot.slane %v1109, 5
      %v3446 = vsel %vm3379, %v3444, %v3445
      %v3447 = vrot.slane %v3445, 4
      %v3448 = vrot.slane %v1584, 5
      %v3449 = vsel %vm3379, %v3447, %v3448
      %v3450 = vrot.slane %v3339, 5
      %v3451 = vrot.slane %v3450, 4
      %v3452 = vrot.slane %v1111, 5
      %v3453 = vsel %vm3379, %v3451, %v3452
      %v3454 = vrot.slane %v3452, 4
      %v3455 = vrot.slane %v1585, 5
      %v3456 = vsel %vm3379, %v3454, %v3455
      %v3457 = vrot.slane %v3340, 5
      %v3458 = vrot.slane %v3457, 4
      %v3459 = vrot.slane %v1113, 5
      %v3460 = vsel %vm3379, %v3458, %v3459
      %v3461 = vrot.slane %v3459, 4
      %v3462 = vrot.slane %v1586, 5
      %v3463 = vsel %vm3379, %v3461, %v3462
      %v3464 = vrot.slane %v3341, 5
      %v3465 = vrot.slane %v3464, 4
      %v3466 = vrot.slane %v1115, 5
      %v3467 = vsel %vm3379, %v3465, %v3466
      %v3468 = vrot.slane %v3466, 4
      %v3469 = vrot.slane %v1587, 5
      %v3470 = vsel %vm3379, %v3468, %v3469
      %v3471 = vrot.slane %v3342, 5
      %v3472 = vrot.slane %v3471, 4
      %v3473 = vrot.slane %v1117, 5
      %v3474 = vsel %vm3379, %v3472, %v3473
      %v3475 = vrot.slane %v3473, 4
      %v3476 = vrot.slane %v1588, 5
      %v3477 = vsel %vm3379, %v3475, %v3476
      %v3478 = vrot.slane %v3343, 5
      %v3479 = vrot.slane %v3478, 4
      %v3480 = vrot.slane %v1119, 5
      %v3481 = vsel %vm3379, %v3479, %v3480
      %v3482 = vrot.slane %v3480, 4
      %v3483 = vrot.slane %v1589, 5
      %v3484 = vsel %vm3379, %v3482, %v3483
      %v3485 = vrot.slane %v3344, 5
      %v3486 = vrot.slane %v3485, 4
      %v3487 = vrot.slane %v1121, 5
      %v3488 = vsel %vm3379, %v3486, %v3487
      %v3489 = vrot.slane %v3487, 4
      %v3490 = vrot.slane %v1590, 5
      %v3491 = vsel %vm3379, %v3489, %v3490
      %v3492 = vld [vmem:[%s667] sm:$0xe]
      %v3493 = vld [vmem:[%s667 + $0xc] sm:$0xe]
      %v3494 = vld [vmem:[%s667 + $0x18] sm:$0xe]
      %v3495 = vld [vmem:[%s667 + $0x24] sm:$0xe]
      %v3496 = vld [vmem:[%s667 + $0x30] sm:$0xe]
      %v3497 = vld [vmem:[%s667 + $0x3c] sm:$0xe]
      %v3498 = vld [vmem:[%s667 + $0x48] sm:$0xe]
      %v3499 = vld [vmem:[%s667 + $0x54] sm:$0xe]
      %v3500 = vld [vmem:[%s667 + $0x60] sm:$0xe]
      %v3501 = vld [vmem:[%s667 + $0x6c] sm:$0xe]
      %v3502 = vld [vmem:[%s667 + $0x78] sm:$0xe]
      %v3503 = vld [vmem:[%s667 + $0x84] sm:$0xe]
      %v3504 = vld [vmem:[%s667 + $0x90] sm:$0xe]
      %v3505 = vld [vmem:[%s667 + $0x9c] sm:$0xe]
      %v3506 = vld [vmem:[%s667 + $0xa8] sm:$0xe]
      %v3507 = vld [vmem:[%s667 + $0xb4] sm:$0xe]
      %v3540 = vrot.slane %v3492, 5
      %v3541 = vrot.slane %v3540, 4
      %v3542 = vrot.slane %v1123, 5
      %v3543 = vsel %vm3379, %v3541, %v3542
      %v3544 = vrot.slane %v3542, 4
      %v3545 = vrot.slane %v1978, 5
      %v3546 = vsel %vm3379, %v3544, %v3545
      %v3547 = vrot.slane %v3493, 5
      %v3548 = vrot.slane %v3547, 4
      %v3549 = vrot.slane %v1125, 5
      %v3550 = vsel %vm3379, %v3548, %v3549
      %v3551 = vrot.slane %v3549, 4
      %v3552 = vrot.slane %v1979, 5
      %v3553 = vsel %vm3379, %v3551, %v3552
      %v3554 = vrot.slane %v3494, 5
      %v3555 = vrot.slane %v3554, 4
      %v3556 = vrot.slane %v1127, 5
      %v3557 = vsel %vm3379, %v3555, %v3556
      %v3558 = vrot.slane %v3556, 4
      %v3559 = vrot.slane %v1980, 5
      %v3560 = vsel %vm3379, %v3558, %v3559
      %v3561 = vrot.slane %v3495, 5
      %v3562 = vrot.slane %v3561, 4
      %v3563 = vrot.slane %v1129, 5
      %v3564 = vsel %vm3379, %v3562, %v3563
      %v3565 = vrot.slane %v3563, 4
      %v3566 = vrot.slane %v1981, 5
      %v3567 = vsel %vm3379, %v3565, %v3566
      %v3568 = vrot.slane %v3496, 5
      %v3569 = vrot.slane %v3568, 4
      %v3570 = vrot.slane %v1131, 5
      %v3571 = vsel %vm3379, %v3569, %v3570
      %v3572 = vrot.slane %v3570, 4
      %v3573 = vrot.slane %v1982, 5
      %v3574 = vsel %vm3379, %v3572, %v3573
      %v3575 = vrot.slane %v3497, 5
      %v3576 = vrot.slane %v3575, 4
      %v3577 = vrot.slane %v1133, 5
      %v3578 = vsel %vm3379, %v3576, %v3577
      %v3579 = vrot.slane %v3577, 4
      %v3580 = vrot.slane %v1983, 5
      %v3581 = vsel %vm3379, %v3579, %v3580
      %v3582 = vrot.slane %v3498, 5
      %v3583 = vrot.slane %v3582, 4
      %v3584 = vrot.slane %v1135, 5
      %v3585 = vsel %vm3379, %v3583, %v3584
      %v3586 = vrot.slane %v3584, 4
      %v3587 = vrot.slane %v1984, 5
      %v3588 = vsel %vm3379, %v3586, %v3587
      %v3589 = vrot.slane %v3499, 5
      %v3590 = vrot.slane %v3589, 4
      %v3591 = vrot.slane %v1137, 5
      %v3592 = vsel %vm3379, %v3590, %v3591
      %v3593 = vrot.slane %v3591, 4
      %v3594 = vrot.slane %v1985, 5
      %v3595 = vsel %vm3379, %v3593, %v3594
      %v3596 = vrot.slane %v3500, 5
      %v3597 = vrot.slane %v3596, 4
      %v3598 = vrot.slane %v1139, 5
      %v3599 = vsel %vm3379, %v3597, %v3598
      %v3600 = vrot.slane %v3598, 4
      %v3601 = vrot.slane %v1986, 5
      %v3602 = vsel %vm3379, %v3600, %v3601
      %v3603 = vrot.slane %v3501, 5
      %v3604 = vrot.slane %v3603, 4
      %v3605 = vrot.slane %v1141, 5
      %v3606 = vsel %vm3379, %v3604, %v3605
      %v3607 = vrot.slane %v3605, 4
      %v3608 = vrot.slane %v1987, 5
      %v3609 = vsel %vm3379, %v3607, %v3608
      %v3610 = vrot.slane %v3502, 5
      %v3611 = vrot.slane %v3610, 4
      %v3612 = vrot.slane %v1143, 5
      %v3613 = vsel %vm3379, %v3611, %v3612
      %v3614 = vrot.slane %v3612, 4
      %v3615 = vrot.slane %v1988, 5
      %v3616 = vsel %vm3379, %v3614, %v3615
      %v3617 = vrot.slane %v3503, 5
      %v3618 = vrot.slane %v3617, 4
      %v3619 = vrot.slane %v1145, 5
      %v3620 = vsel %vm3379, %v3618, %v3619
      %v3621 = vrot.slane %v3619, 4
      %v3622 = vrot.slane %v1989, 5
      %v3623 = vsel %vm3379, %v3621, %v3622
      %v3624 = vrot.slane %v3504, 5
      %v3625 = vrot.slane %v3624, 4
      %v3626 = vrot.slane %v1147, 5
      %v3627 = vsel %vm3379, %v3625, %v3626
      %v3628 = vrot.slane %v3626, 4
      %v3629 = vrot.slane %v1990, 5
      %v3630 = vsel %vm3379, %v3628, %v3629
      %v3631 = vrot.slane %v3505, 5
      %v3632 = vrot.slane %v3631, 4
      %v3633 = vrot.slane %v1149, 5
      %v3634 = vsel %vm3379, %v3632, %v3633
      %v3635 = vrot.slane %v3633, 4
      %v3636 = vrot.slane %v1991, 5
      %v3637 = vsel %vm3379, %v3635, %v3636
      %v3638 = vrot.slane %v3506, 5
      %v3639 = vrot.slane %v3638, 4
      %v3640 = vrot.slane %v1151, 5
      %v3641 = vsel %vm3379, %v3639, %v3640
      %v3642 = vrot.slane %v3640, 4
      %v3643 = vrot.slane %v1992, 5
      %v3644 = vsel %vm3379, %v3642, %v3643
      %v3645 = vrot.slane %v3507, 5
      %v3646 = vrot.slane %v3645, 4
      %v3647 = vrot.slane %v1153, 5
      %v3648 = vsel %vm3379, %v3646, %v3647
      %v3649 = vrot.slane %v3647, 4
      %v3650 = vrot.slane %v1993, 5
      %v3651 = vsel %vm3379, %v3649, %v3650
      %v3652 = vld [vmem:[%s1154] sm:$0xe]
      %v3653 = vld [vmem:[%s1154 + $0xc] sm:$0xe]
      %v3654 = vld [vmem:[%s1154 + $0x18] sm:$0xe]
      %v3655 = vld [vmem:[%s1154 + $0x24] sm:$0xe]
      %v3656 = vld [vmem:[%s1154 + $0x30] sm:$0xe]
      %v3657 = vld [vmem:[%s1154 + $0x3c] sm:$0xe]
      %v3658 = vld [vmem:[%s1154 + $0x48] sm:$0xe]
      %v3659 = vld [vmem:[%s1154 + $0x54] sm:$0xe]
      %v3660 = vld [vmem:[%s1154 + $0x60] sm:$0xe]
      %v3661 = vld [vmem:[%s1154 + $0x6c] sm:$0xe]
      %v3662 = vld [vmem:[%s1154 + $0x78] sm:$0xe]
      %v3663 = vld [vmem:[%s1154 + $0x84] sm:$0xe]
      %v3664 = vld [vmem:[%s1154 + $0x90] sm:$0xe]
      %v3665 = vld [vmem:[%s1154 + $0x9c] sm:$0xe]
      %v3666 = vld [vmem:[%s1154 + $0xa8] sm:$0xe]
      %v3667 = vld [vmem:[%s1154 + $0xb4] sm:$0xe]
      %v3700 = vrot.slane %v3652, 5
      %v3701 = vrot.slane %v3700, 4
      %v3702 = vrot.slane %v1156, 5
      %v3703 = vsel %vm3379, %v3701, %v3702
      %v3704 = vrot.slane %v3702, 4
      %v3705 = vrot.slane %v2378, 5
      %v3706 = vsel %vm3379, %v3704, %v3705
      %v3707 = vrot.slane %v3653, 5
      %v3708 = vrot.slane %v3707, 4
      %v3709 = vrot.slane %v1158, 5
      %v3710 = vsel %vm3379, %v3708, %v3709
      %v3711 = vrot.slane %v3709, 4
      %v3712 = vrot.slane %v2379, 5
      %v3713 = vsel %vm3379, %v3711, %v3712
      %v3714 = vrot.slane %v3654, 5
      %v3715 = vrot.slane %v3714, 4
      %v3716 = vrot.slane %v1160, 5
      %v3717 = vsel %vm3379, %v3715, %v3716
      %v3718 = vrot.slane %v3716, 4
      %v3719 = vrot.slane %v2380, 5
      %v3720 = vsel %vm3379, %v3718, %v3719
      %v3721 = vrot.slane %v3655, 5
      %v3722 = vrot.slane %v3721, 4
      %v3723 = vrot.slane %v1162, 5
      %v3724 = vsel %vm3379, %v3722, %v3723
      %v3725 = vrot.slane %v3723, 4
      %v3726 = vrot.slane %v2381, 5
      %v3727 = vsel %vm3379, %v3725, %v3726
      %v3728 = vrot.slane %v3656, 5
      %v3729 = vrot.slane %v3728, 4
      %v3730 = vrot.slane %v1164, 5
      %v3731 = vsel %vm3379, %v3729, %v3730
      %v3732 = vrot.slane %v3730, 4
      %v3733 = vrot.slane %v2382, 5
      %v3734 = vsel %vm3379, %v3732, %v3733
      %v3735 = vrot.slane %v3657, 5
      %v3736 = vrot.slane %v3735, 4
      %v3737 = vrot.slane %v1166, 5
      %v3738 = vsel %vm3379, %v3736, %v3737
      %v3739 = vrot.slane %v3737, 4
      %v3740 = vrot.slane %v2383, 5
      %v3741 = vsel %vm3379, %v3739, %v3740
      %v3742 = vrot.slane %v3658, 5
      %v3743 = vrot.slane %v3742, 4
      %v3744 = vrot.slane %v1168, 5
      %v3745 = vsel %vm3379, %v3743, %v3744
      %v3746 = vrot.slane %v3744, 4
      %v3747 = vrot.slane %v2384, 5
      %v3748 = vsel %vm3379, %v3746, %v3747
      %v3749 = vrot.slane %v3659, 5
      %v3750 = vrot.slane %v3749, 4
      %v3751 = vrot.slane %v1170, 5
      %v3752 = vsel %vm3379, %v3750, %v3751
      %v3753 = vrot.slane %v3751, 4
      %v3754 = vrot.slane %v2385, 5
      %v3755 = vsel %vm3379, %v3753, %v3754
      %v3756 = vrot.slane %v3660, 5
      %v3757 = vrot.slane %v3756, 4
      %v3758 = vrot.slane %v1172, 5
      %v3759 = vsel %vm3379, %v3757, %v3758
      %v3760 = vrot.slane %v3758, 4
      %v3761 = vrot.slane %v2386, 5
      %v3762 = vsel %vm3379, %v3760, %v3761
      %v3763 = vrot.slane %v3661, 5
      %v3764 = vrot.slane %v3763, 4
      %v3765 = vrot.slane %v1174, 5
      %v3766 = vsel %vm3379, %v3764, %v3765
      %v3767 = vrot.slane %v3765, 4
      %v3768 = vrot.slane %v2387, 5
      %v3769 = vsel %vm3379, %v3767, %v3768
      %v3770 = vrot.slane %v3662, 5
      %v3771 = vrot.slane %v3770, 4
      %v3772 = vrot.slane %v1176, 5
      %v3773 = vsel %vm3379, %v3771, %v3772
      %v3774 = vrot.slane %v3772, 4
      %v3775 = vrot.slane %v2388, 5
      %v3776 = vsel %vm3379, %v3774, %v3775
      %v3777 = vrot.slane %v3663, 5
      %v3778 = vrot.slane %v3777, 4
      %v3779 = vrot.slane %v1178, 5
      %v3780 = vsel %vm3379, %v3778, %v3779
      %v3781 = vrot.slane %v3779, 4
      %v3782 = vrot.slane %v2389, 5
      %v3783 = vsel %vm3379, %v3781, %v3782
      %v3784 = vrot.slane %v3664, 5
      %v3785 = vrot.slane %v3784, 4
      %v3786 = vrot.slane %v1180, 5
      %v3787 = vsel %vm3379, %v3785, %v3786
      %v3788 = vrot.slane %v3786, 4
      %v3789 = vrot.slane %v2390, 5
      %v3790 = vsel %vm3379, %v3788, %v3789
      %v3791 = vrot.slane %v3665, 5
      %v3792 = vrot.slane %v3791, 4
      %v3793 = vrot.slane %v1182, 5
      %v3794 = vsel %vm3379, %v3792, %v3793
      %v3795 = vrot.slane %v3793, 4
      %v3796 = vrot.slane %v2391, 5
      %v3797 = vsel %vm3379, %v3795, %v3796
      %v3798 = vrot.slane %v3666, 5
      %v3799 = vrot.slane %v3798, 4
      %v3800 = vrot.slane %v1184, 5
      %v3801 = vsel %vm3379, %v3799, %v3800
      %v3802 = vrot.slane %v3800, 4
      %v3803 = vrot.slane %v2392, 5
      %v3804 = vsel %vm3379, %v3802, %v3803
      %v3805 = vrot.slane %v3667, 5
      %v3806 = vrot.slane %v3805, 4
      %v3807 = vrot.slane %v1186, 5
      %v3808 = vsel %vm3379, %v3806, %v3807
      %v3809 = vrot.slane %v3807, 4
      %v3810 = vrot.slane %v2393, 5
      %v3811 = vsel %vm3379, %v3809, %v3810
      %v3812 = vunpack.c.l.b16 %v3383
      %v3813 = vunpack.c.l.b16 %v3386
      %v3814 = vunpack.c.l.b16 %v3390
      %v3815 = vunpack.c.l.b16 %v3393
      %v3816 = vunpack.c.l.b16 %v3397
      %v3817 = vunpack.c.l.b16 %v3400
      %v3818 = vunpack.c.l.b16 %v3404
      %v3819 = vunpack.c.l.b16 %v3407
      %v3820 = vunpack.c.l.b16 %v3411
      %v3821 = vunpack.c.l.b16 %v3414
      %v3822 = vunpack.c.l.b16 %v3418
      %v3823 = vunpack.c.l.b16 %v3421
      %v3824 = vunpack.c.l.b16 %v3425
      %v3825 = vunpack.c.l.b16 %v3428
      %v3826 = vunpack.c.l.b16 %v3432
      %v3827 = vunpack.c.l.b16 %v3435
      %v3828 = vunpack.c.l.b16 %v3439
      %v3829 = vunpack.c.l.b16 %v3442
      %v3830 = vunpack.c.l.b16 %v3446
      %v3831 = vunpack.c.l.b16 %v3449
      %v3832 = vunpack.c.l.b16 %v3453
      %v3833 = vunpack.c.l.b16 %v3456
      %v3834 = vunpack.c.l.b16 %v3460
      %v3835 = vunpack.c.l.b16 %v3463
      %v3836 = vunpack.c.l.b16 %v3467
      %v3837 = vunpack.c.l.b16 %v3470
      %v3838 = vunpack.c.l.b16 %v3474
      %v3839 = vunpack.c.l.b16 %v3477
      %v3840 = vunpack.c.l.b16 %v3481
      %v3841 = vunpack.c.l.b16 %v3484
      %v3842 = vunpack.c.l.b16 %v3488
      %v3843 = vunpack.c.l.b16 %v3491
      %v3844 = vpack.c.b16 %v3813, %v3812
      %v3845 = vpack.c.b16 %v3815, %v3814
      %v3846 = vpack.c.b16 %v3817, %v3816
      %v3847 = vpack.c.b16 %v3819, %v3818
      %v3848 = vpack.c.b16 %v3821, %v3820
      %v3849 = vpack.c.b16 %v3823, %v3822
      %v3850 = vpack.c.b16 %v3825, %v3824
      %v3851 = vpack.c.b16 %v3827, %v3826
      %v3852 = vpack.c.b16 %v3829, %v3828
      %v3853 = vpack.c.b16 %v3831, %v3830
      %v3854 = vpack.c.b16 %v3833, %v3832
      %v3855 = vpack.c.b16 %v3835, %v3834
      %v3856 = vpack.c.b16 %v3837, %v3836
      %v3857 = vpack.c.b16 %v3839, %v3838
      %v3858 = vpack.c.b16 %v3841, %v3840
      %v3859 = vpack.c.b16 %v3843, %v3842
      %v3860 = vunpack.c.l.b16 %v3543
      %v3861 = vunpack.c.l.b16 %v3546
      %v3862 = vunpack.c.l.b16 %v3550
      %v3863 = vunpack.c.l.b16 %v3553
      %v3864 = vunpack.c.l.b16 %v3557
      %v3865 = vunpack.c.l.b16 %v3560
      %v3866 = vunpack.c.l.b16 %v3564
      %v3867 = vunpack.c.l.b16 %v3567
      %v3868 = vunpack.c.l.b16 %v3571
      %v3869 = vunpack.c.l.b16 %v3574
      %v3870 = vunpack.c.l.b16 %v3578
      %v3871 = vunpack.c.l.b16 %v3581
      %v3872 = vunpack.c.l.b16 %v3585
      %v3873 = vunpack.c.l.b16 %v3588
      %v3874 = vunpack.c.l.b16 %v3592
      %v3875 = vunpack.c.l.b16 %v3595
      %v3876 = vunpack.c.l.b16 %v3599
      %v3877 = vunpack.c.l.b16 %v3602
      %v3878 = vunpack.c.l.b16 %v3606
      %v3879 = vunpack.c.l.b16 %v3609
      %v3880 = vunpack.c.l.b16 %v3613
      %v3881 = vunpack.c.l.b16 %v3616
      %v3882 = vunpack.c.l.b16 %v3620
      %v3883 = vunpack.c.l.b16 %v3623
      %v3884 = vunpack.c.l.b16 %v3627
      %v3885 = vunpack.c.l.b16 %v3630
      %v3886 = vunpack.c.l.b16 %v3634
      %v3887 = vunpack.c.l.b16 %v3637
      %v3888 = vunpack.c.l.b16 %v3641
      %v3889 = vunpack.c.l.b16 %v3644
      %v3890 = vunpack.c.l.b16 %v3648
      %v3891 = vunpack.c.l.b16 %v3651
      %v3892 = vpack.c.b16 %v3861, %v3860
      %v3893 = vpack.c.b16 %v3863, %v3862
      %v3894 = vpack.c.b16 %v3865, %v3864
      %v3895 = vpack.c.b16 %v3867, %v3866
      %v3896 = vpack.c.b16 %v3869, %v3868
      %v3897 = vpack.c.b16 %v3871, %v3870
      %v3898 = vpack.c.b16 %v3873, %v3872
      %v3899 = vpack.c.b16 %v3875, %v3874
      %v3900 = vpack.c.b16 %v3877, %v3876
      %v3901 = vpack.c.b16 %v3879, %v3878
      %v3902 = vpack.c.b16 %v3881, %v3880
      %v3903 = vpack.c.b16 %v3883, %v3882
      %v3904 = vpack.c.b16 %v3885, %v3884
      %v3905 = vpack.c.b16 %v3887, %v3886
      %v3906 = vpack.c.b16 %v3889, %v3888
      %v3907 = vpack.c.b16 %v3891, %v3890
      %3908 = vrot.lane.b32.xlu0 %v3892, 4
      %v3909 = vpop.permute.xlu0 %3908
      %3910 = vrot.lane.b32.xlu0 %v3893, 4
      %v3911 = vpop.permute.xlu0 %3910
      %3912 = vrot.lane.b32.xlu0 %v3894, 4
      %v3913 = vpop.permute.xlu0 %3912
      %3914 = vrot.lane.b32.xlu0 %v3895, 4
      %v3915 = vpop.permute.xlu0 %3914
      %3916 = vrot.lane.b32.xlu0 %v3896, 4
      %v3917 = vpop.permute.xlu0 %3916
      %3918 = vrot.lane.b32.xlu0 %v3897, 4
      %v3919 = vpop.permute.xlu0 %3918
      %3920 = vrot.lane.b32.xlu0 %v3898, 4
      %v3921 = vpop.permute.xlu0 %3920
      %3922 = vrot.lane.b32.xlu0 %v3899, 4
      %v3923 = vpop.permute.xlu0 %3922
      %3924 = vrot.lane.b32.xlu0 %v3900, 4
      %v3925 = vpop.permute.xlu0 %3924
      %3926 = vrot.lane.b32.xlu0 %v3901, 4
      %v3927 = vpop.permute.xlu0 %3926
      %3928 = vrot.lane.b32.xlu0 %v3902, 4
      %v3929 = vpop.permute.xlu0 %3928
      %3930 = vrot.lane.b32.xlu0 %v3903, 4
      %v3931 = vpop.permute.xlu0 %3930
      %3932 = vrot.lane.b32.xlu0 %v3904, 4
      %v3933 = vpop.permute.xlu0 %3932
      %3934 = vrot.lane.b32.xlu0 %v3905, 4
      %v3935 = vpop.permute.xlu0 %3934
      %3936 = vrot.lane.b32.xlu0 %v3906, 4
      %v3937 = vpop.permute.xlu0 %3936
      %3938 = vrot.lane.b32.xlu0 %v3907, 4
      %v3939 = vpop.permute.xlu0 %3938
      %v3940 = vunpack.c.l.b16 %v3703
      %v3941 = vunpack.c.l.b16 %v3706
      %v3942 = vunpack.c.l.b16 %v3710
      %v3943 = vunpack.c.l.b16 %v3713
      %v3944 = vunpack.c.l.b16 %v3717
      %v3945 = vunpack.c.l.b16 %v3720
      %v3946 = vunpack.c.l.b16 %v3724
      %v3947 = vunpack.c.l.b16 %v3727
      %v3948 = vunpack.c.l.b16 %v3731
      %v3949 = vunpack.c.l.b16 %v3734
      %v3950 = vunpack.c.l.b16 %v3738
      %v3951 = vunpack.c.l.b16 %v3741
      %v3952 = vunpack.c.l.b16 %v3745
      %v3953 = vunpack.c.l.b16 %v3748
      %v3954 = vunpack.c.l.b16 %v3752
      %v3955 = vunpack.c.l.b16 %v3755
      %v3956 = vunpack.c.l.b16 %v3759
      %v3957 = vunpack.c.l.b16 %v3762
      %v3958 = vunpack.c.l.b16 %v3766
      %v3959 = vunpack.c.l.b16 %v3769
      %v3960 = vunpack.c.l.b16 %v3773
      %v3961 = vunpack.c.l.b16 %v3776
      %v3962 = vunpack.c.l.b16 %v3780
      %v3963 = vunpack.c.l.b16 %v3783
      %v3964 = vunpack.c.l.b16 %v3787
      %v3965 = vunpack.c.l.b16 %v3790
      %v3966 = vunpack.c.l.b16 %v3794
      %v3967 = vunpack.c.l.b16 %v3797
      %v3968 = vunpack.c.l.b16 %v3801
      %v3969 = vunpack.c.l.b16 %v3804
      %v3970 = vunpack.c.l.b16 %v3808
      %v3971 = vunpack.c.l.b16 %v3811
      %v3972 = vpack.c.b16 %v3941, %v3940
      %v3973 = vpack.c.b16 %v3943, %v3942
      %v3974 = vpack.c.b16 %v3945, %v3944
      %v3975 = vpack.c.b16 %v3947, %v3946
      %v3976 = vpack.c.b16 %v3949, %v3948
      %v3977 = vpack.c.b16 %v3951, %v3950
      %v3978 = vpack.c.b16 %v3953, %v3952
      %v3979 = vpack.c.b16 %v3955, %v3954
      %v3980 = vpack.c.b16 %v3957, %v3956
      %v3981 = vpack.c.b16 %v3959, %v3958
      %v3982 = vpack.c.b16 %v3961, %v3960
      %v3983 = vpack.c.b16 %v3963, %v3962
      %v3984 = vpack.c.b16 %v3965, %v3964
      %v3985 = vpack.c.b16 %v3967, %v3966
      %v3986 = vpack.c.b16 %v3969, %v3968
      %v3987 = vpack.c.b16 %v3971, %v3970
      %3988 = vrot.lane.b32.xlu0 %v3972, 8
      %v3989 = vpop.permute.xlu0 %3988
      %3990 = vrot.lane.b32.xlu0 %v3973, 8
      %v3991 = vpop.permute.xlu0 %3990
      %3992 = vrot.lane.b32.xlu0 %v3974, 8
      %v3993 = vpop.permute.xlu0 %3992
      %3994 = vrot.lane.b32.xlu0 %v3975, 8
      %v3995 = vpop.permute.xlu0 %3994
      %3996 = vrot.lane.b32.xlu0 %v3976, 8
      %v3997 = vpop.permute.xlu0 %3996
      %3998 = vrot.lane.b32.xlu0 %v3977, 8
      %v3999 = vpop.permute.xlu0 %3998
      %4000 = vrot.lane.b32.xlu0 %v3978, 8
      %v4001 = vpop.permute.xlu0 %4000
      %4002 = vrot.lane.b32.xlu0 %v3979, 8
      %v4003 = vpop.permute.xlu0 %4002
      %4004 = vrot.lane.b32.xlu0 %v3980, 8
      %v4005 = vpop.permute.xlu0 %4004
      %4006 = vrot.lane.b32.xlu0 %v3981, 8
      %v4007 = vpop.permute.xlu0 %4006
      %4008 = vrot.lane.b32.xlu0 %v3982, 8
      %v4009 = vpop.permute.xlu0 %4008
      %4010 = vrot.lane.b32.xlu0 %v3983, 8
      %v4011 = vpop.permute.xlu0 %4010
      %4012 = vrot.lane.b32.xlu0 %v3984, 8
      %v4013 = vpop.permute.xlu0 %4012
      %4014 = vrot.lane.b32.xlu0 %v3985, 8
      %v4015 = vpop.permute.xlu0 %4014
      %4016 = vrot.lane.b32.xlu0 %v3986, 8
      %v4017 = vpop.permute.xlu0 %4016
      %4018 = vrot.lane.b32.xlu0 %v3987, 8
      %v4019 = vpop.permute.xlu0 %4018
      %v4022 = vsel %vm1491, %v3844, %v3909
      %v4025 = vsel %vm1491, %v3845, %v3911
      %v4028 = vsel %vm1491, %v3846, %v3913
      %v4031 = vsel %vm1491, %v3847, %v3915
      %v4034 = vsel %vm1491, %v3848, %v3917
      %v4037 = vsel %vm1491, %v3849, %v3919
      %v4040 = vsel %vm1491, %v3850, %v3921
      %v4043 = vsel %vm1491, %v3851, %v3923
      %v4046 = vsel %vm1491, %v3852, %v3925
      %v4049 = vsel %vm1491, %v3853, %v3927
      %v4052 = vsel %vm1491, %v3854, %v3929
      %v4055 = vsel %vm1491, %v3855, %v3931
      %v4058 = vsel %vm1491, %v3856, %v3933
      %v4061 = vsel %vm1491, %v3857, %v3935
      %v4064 = vsel %vm1491, %v3858, %v3937
      %v4067 = vsel %vm1491, %v3859, %v3939
      %v4069 = vsel %vm1540, %v4022, %v3989
      %v4071 = vsel %vm1540, %v4025, %v3991
      %v4073 = vsel %vm1540, %v4028, %v3993
      %v4075 = vsel %vm1540, %v4031, %v3995
      %v4077 = vsel %vm1540, %v4034, %v3997
      %v4079 = vsel %vm1540, %v4037, %v3999
      %v4081 = vsel %vm1540, %v4040, %v4001
      %v4083 = vsel %vm1540, %v4043, %v4003
      %v4085 = vsel %vm1540, %v4046, %v4005
      %v4087 = vsel %vm1540, %v4049, %v4007
      %v4089 = vsel %vm1540, %v4052, %v4009
      %v4091 = vsel %vm1540, %v4055, %v4011
      %v4093 = vsel %vm1540, %v4058, %v4013
      %v4095 = vsel %vm1540, %v4061, %v4015
      %v4097 = vsel %vm1540, %v4064, %v4017
      %v4099 = vsel %vm1540, %v4067, %v4019
      %s4100 = scalar_lea.vmem %s1, 16
      %v4101 = vld [vmem:[%s4100] sm:$0xf]
      %v4102 = vld [vmem:[%s4100 + $0x4] sm:$0x3]
      %v4105 = vunpack.c.l.b16 %v4101
      %v4106 = vunpack.c.l.b16 %v4102
      %v4107 = vpack.c.b16 %v4106, %v4105
      %v4108 = vsel %vm3074, %v4069, 0
      %v4110 = vsel %vm3074, %v4071, 0
      %v4112 = vsel %vm3074, %v4073, 0
      %v4114 = vsel %vm3074, %v4075, 0
      %v4116 = vsel %vm3074, %v4077, 0
      %v4118 = vsel %vm3074, %v4079, 0
      %v4120 = vsel %vm3074, %v4081, 0
      %v4122 = vsel %vm3074, %v4083, 0
      %v4124 = vsel %vm3074, %v4085, 0
      %v4126 = vsel %vm3074, %v4087, 0
      %v4128 = vsel %vm3074, %v4089, 0
      %v4130 = vsel %vm3074, %v4091, 0
      %v4132 = vsel %vm3074, %v4093, 0
      %v4134 = vsel %vm3074, %v4095, 0
      %v4136 = vsel %vm3074, %v4097, 0
      %v4138 = vsel %vm3074, %v4099, 0
      %v4141 = vsel %vm3107, %v4107, 0
      %4143 = vmatpush.bf16.msra.mxu0 0
      %4144 = vmatpush.bf16.msra.mxu0 0
      %4145 = vmatpush.bf16.msra.mxu0 0
      %4146 = vmatpush.bf16.msra.mxu0 0
      %4147 = vmatpush.bf16.msra.mxu0 0
      %4148 = vmatpush.bf16.msra.mxu0 0
      %4149 = vmatpush.bf16.msra.mxu0 0
      %4150 = vmatpush.bf16.msra.mxu0 %v4141
      %4151 = vmatmul.bf16.gmra.mxu0 %v4108
      %v4152 = vpop.f32.mrf.mxu0
      %v4153 = vadd.f32 0.0, %v4152
      %v4154 = vpop.f32.mrf.mxu0
      %v4155 = vadd.f32 0.0, %v4154
      %4156 = vmatmul.bf16.gmra.mxu0 %v4110
      %v4157 = vpop.f32.mrf.mxu0
      %v4158 = vadd.f32 0.0, %v4157
      %v4159 = vpop.f32.mrf.mxu0
      %v4160 = vadd.f32 0.0, %v4159
      %4161 = vmatmul.bf16.gmra.mxu0 %v4112
      %v4162 = vpop.f32.mrf.mxu0
      %v4163 = vadd.f32 0.0, %v4162
      %v4164 = vpop.f32.mrf.mxu0
      %v4165 = vadd.f32 0.0, %v4164
      %4166 = vmatmul.bf16.gmra.mxu0 %v4114
      %v4167 = vpop.f32.mrf.mxu0
      %v4168 = vadd.f32 0.0, %v4167
      %v4169 = vpop.f32.mrf.mxu0
      %v4170 = vadd.f32 0.0, %v4169
      %4171 = vmatmul.bf16.gmra.mxu0 %v4116
      %v4172 = vpop.f32.mrf.mxu0
      %v4173 = vadd.f32 0.0, %v4172
      %v4174 = vpop.f32.mrf.mxu0
      %v4175 = vadd.f32 0.0, %v4174
      %4176 = vmatmul.bf16.gmra.mxu0 %v4118
      %v4177 = vpop.f32.mrf.mxu0
      %v4178 = vadd.f32 0.0, %v4177
      %v4179 = vpop.f32.mrf.mxu0
      %v4180 = vadd.f32 0.0, %v4179
      %4181 = vmatmul.bf16.gmra.mxu0 %v4120
      %v4182 = vpop.f32.mrf.mxu0
      %v4183 = vadd.f32 0.0, %v4182
      %v4184 = vpop.f32.mrf.mxu0
      %v4185 = vadd.f32 0.0, %v4184
      %4186 = vmatmul.bf16.gmra.mxu0 %v4122
      %v4187 = vpop.f32.mrf.mxu0
      %v4188 = vadd.f32 0.0, %v4187
      %v4189 = vpop.f32.mrf.mxu0
      %v4190 = vadd.f32 0.0, %v4189
      %4191 = vmatmul.bf16.gmra.mxu0 %v4124
      %v4192 = vpop.f32.mrf.mxu0
      %v4193 = vadd.f32 0.0, %v4192
      %v4194 = vpop.f32.mrf.mxu0
      %v4195 = vadd.f32 0.0, %v4194
      %4196 = vmatmul.bf16.gmra.mxu0 %v4126
      %v4197 = vpop.f32.mrf.mxu0
      %v4198 = vadd.f32 0.0, %v4197
      %v4199 = vpop.f32.mrf.mxu0
      %v4200 = vadd.f32 0.0, %v4199
      %4201 = vmatmul.bf16.gmra.mxu0 %v4128
      %v4202 = vpop.f32.mrf.mxu0
      %v4203 = vadd.f32 0.0, %v4202
      %v4204 = vpop.f32.mrf.mxu0
      %v4205 = vadd.f32 0.0, %v4204
      %4206 = vmatmul.bf16.gmra.mxu0 %v4130
      %v4207 = vpop.f32.mrf.mxu0
      %v4208 = vadd.f32 0.0, %v4207
      %v4209 = vpop.f32.mrf.mxu0
      %v4210 = vadd.f32 0.0, %v4209
      %4211 = vmatmul.bf16.gmra.mxu0 %v4132
      %v4212 = vpop.f32.mrf.mxu0
      %v4213 = vadd.f32 0.0, %v4212
      %v4214 = vpop.f32.mrf.mxu0
      %v4215 = vadd.f32 0.0, %v4214
      %4216 = vmatmul.bf16.gmra.mxu0 %v4134
      %v4217 = vpop.f32.mrf.mxu0
      %v4218 = vadd.f32 0.0, %v4217
      %v4219 = vpop.f32.mrf.mxu0
      %v4220 = vadd.f32 0.0, %v4219
      %4221 = vmatmul.bf16.gmra.mxu0 %v4136
      %v4222 = vpop.f32.mrf.mxu0
      %v4223 = vadd.f32 0.0, %v4222
      %v4224 = vpop.f32.mrf.mxu0
      %v4225 = vadd.f32 0.0, %v4224
      %4226 = vmatmul.bf16.gmra.mxu0 %v4138
      %v4227 = vpop.f32.mrf.mxu0
      %v4228 = vadd.f32 0.0, %v4227
      %v4229 = vpop.f32.mrf.mxu0
      %v4230 = vadd.f32 0.0, %v4229
      %4231 = vdwg.mxu0
      %v4232 = vadd.f32 %v3250, %v4153
      %v4233 = vadd.f32 %v3252, %v4155
      %v4234 = vadd.f32 %v3255, %v4158
      %v4235 = vadd.f32 %v3257, %v4160
      %v4236 = vadd.f32 %v3260, %v4163
      %v4237 = vadd.f32 %v3262, %v4165
      %v4238 = vadd.f32 %v3265, %v4168
      %v4239 = vadd.f32 %v3267, %v4170
      %v4240 = vadd.f32 %v3270, %v4173
      %v4241 = vadd.f32 %v3272, %v4175
      %v4242 = vadd.f32 %v3275, %v4178
      %v4243 = vadd.f32 %v3277, %v4180
      %v4244 = vadd.f32 %v3280, %v4183
      %v4245 = vadd.f32 %v3282, %v4185
      %v4246 = vadd.f32 %v3285, %v4188
      %v4247 = vadd.f32 %v3287, %v4190
      %v4248 = vadd.f32 %v3290, %v4193
      %v4249 = vadd.f32 %v3292, %v4195
      %v4250 = vadd.f32 %v3295, %v4198
      %v4251 = vadd.f32 %v3297, %v4200
      %v4252 = vadd.f32 %v3300, %v4203
      %v4253 = vadd.f32 %v3302, %v4205
      %v4254 = vadd.f32 %v3305, %v4208
      %v4255 = vadd.f32 %v3307, %v4210
      %v4256 = vadd.f32 %v3310, %v4213
      %v4257 = vadd.f32 %v3312, %v4215
      %v4258 = vadd.f32 %v3315, %v4218
      %v4259 = vadd.f32 %v3317, %v4220
      %v4260 = vadd.f32 %v3320, %v4223
      %v4261 = vadd.f32 %v3322, %v4225
      %v4262 = vadd.f32 %v3325, %v4228
      %v4263 = vadd.f32 %v3327, %v4230
      %v4264 = vsel %vm1491, %v4232, 0.0
      %v4265 = vsel %vm1491, %v4233, 0.0
      %v4266 = vadd.f32 %v4264, %v4265
      %v4267 = vsel %vm1491, %v4234, 0.0
      %v4268 = vadd.f32 %v4266, %v4267
      %v4269 = vsel %vm1491, %v4235, 0.0
      %v4270 = vadd.f32 %v4268, %v4269
      %v4271 = vsel %vm1491, %v4236, 0.0
      %v4272 = vadd.f32 %v4270, %v4271
      %v4273 = vsel %vm1491, %v4237, 0.0
      %v4274 = vadd.f32 %v4272, %v4273
      %v4275 = vsel %vm1491, %v4238, 0.0
      %v4276 = vadd.f32 %v4274, %v4275
      %v4277 = vsel %vm1491, %v4239, 0.0
      %v4278 = vadd.f32 %v4276, %v4277
      %v4279 = vsel %vm1491, %v4240, 0.0
      %v4280 = vadd.f32 %v4278, %v4279
      %v4281 = vsel %vm1491, %v4241, 0.0
      %v4282 = vadd.f32 %v4280, %v4281
      %v4283 = vsel %vm1491, %v4242, 0.0
      %v4284 = vadd.f32 %v4282, %v4283
      %v4285 = vsel %vm1491, %v4243, 0.0
      %v4286 = vadd.f32 %v4284, %v4285
      %v4287 = vsel %vm1491, %v4244, 0.0
      %v4288 = vadd.f32 %v4286, %v4287
      %v4289 = vsel %vm1491, %v4245, 0.0
      %v4290 = vadd.f32 %v4288, %v4289
      %v4291 = vsel %vm1491, %v4246, 0.0
      %v4292 = vadd.f32 %v4290, %v4291
      %v4293 = vsel %vm1491, %v4247, 0.0
      %v4294 = vadd.f32 %v4292, %v4293
      %v4295 = vsel %vm1491, %v4248, 0.0
      %v4296 = vadd.f32 %v4294, %v4295
      %v4297 = vsel %vm1491, %v4249, 0.0
      %v4298 = vadd.f32 %v4296, %v4297
      %v4299 = vsel %vm1491, %v4250, 0.0
      %v4300 = vadd.f32 %v4298, %v4299
      %v4301 = vsel %vm1491, %v4251, 0.0
      %v4302 = vadd.f32 %v4300, %v4301
      %v4303 = vsel %vm1491, %v4252, 0.0
      %v4304 = vadd.f32 %v4302, %v4303
      %v4305 = vsel %vm1491, %v4253, 0.0
      %v4306 = vadd.f32 %v4304, %v4305
      %v4307 = vsel %vm1491, %v4254, 0.0
      %v4308 = vadd.f32 %v4306, %v4307
      %v4309 = vsel %vm1491, %v4255, 0.0
      %v4310 = vadd.f32 %v4308, %v4309
      %v4311 = vsel %vm1491, %v4256, 0.0
      %v4312 = vadd.f32 %v4310, %v4311
      %v4313 = vsel %vm1491, %v4257, 0.0
      %v4314 = vadd.f32 %v4312, %v4313
      %v4315 = vsel %vm1491, %v4258, 0.0
      %v4316 = vadd.f32 %v4314, %v4315
      %v4317 = vsel %vm1491, %v4259, 0.0
      %v4318 = vadd.f32 %v4316, %v4317
      %v4319 = vsel %vm1491, %v4260, 0.0
      %v4320 = vadd.f32 %v4318, %v4319
      %v4321 = vsel %vm1491, %v4261, 0.0
      %v4322 = vadd.f32 %v4320, %v4321
      %v4323 = vsel %vm1491, %v4262, 0.0
      %v4324 = vadd.f32 %v4322, %v4323
      %v4325 = vsel %vm1491, %v4263, 0.0
      %v4326 = vadd.f32 %v4324, %v4325
      %v4327 = vrot.slane %v4326, 4
      %v4328 = vadd.f32 %v4326, %v4327
      %v4329 = vrot.slane %v4328, 2
      %v4330 = vadd.f32 %v4328, %v4329
      %v4331 = vrot.slane %v4330, 1
      %v4332 = vadd.f32 %v4330, %v4331
      %v4333 = vmul.f32 %v4332, 0.00390625
      %v4334 = vmul.f32 %v4232, %v4232
      %v4335 = vmul.f32 %v4233, %v4233
      %v4336 = vmul.f32 %v4234, %v4234
      %v4337 = vmul.f32 %v4235, %v4235
      %v4338 = vmul.f32 %v4236, %v4236
      %v4339 = vmul.f32 %v4237, %v4237
      %v4340 = vmul.f32 %v4238, %v4238
      %v4341 = vmul.f32 %v4239, %v4239
      %v4342 = vmul.f32 %v4240, %v4240
      %v4343 = vmul.f32 %v4241, %v4241
      %v4344 = vmul.f32 %v4242, %v4242
      %v4345 = vmul.f32 %v4243, %v4243
      %v4346 = vmul.f32 %v4244, %v4244
      %v4347 = vmul.f32 %v4245, %v4245
      %v4348 = vmul.f32 %v4246, %v4246
      %v4349 = vmul.f32 %v4247, %v4247
      %v4350 = vmul.f32 %v4248, %v4248
      %v4351 = vmul.f32 %v4249, %v4249
      %v4352 = vmul.f32 %v4250, %v4250
      %v4353 = vmul.f32 %v4251, %v4251
      %v4354 = vmul.f32 %v4252, %v4252
      %v4355 = vmul.f32 %v4253, %v4253
      %v4356 = vmul.f32 %v4254, %v4254
      %v4357 = vmul.f32 %v4255, %v4255
      %v4358 = vmul.f32 %v4256, %v4256
      %v4359 = vmul.f32 %v4257, %v4257
      %v4360 = vmul.f32 %v4258, %v4258
      %v4361 = vmul.f32 %v4259, %v4259
      %v4362 = vmul.f32 %v4260, %v4260
      %v4363 = vmul.f32 %v4261, %v4261
      %v4364 = vmul.f32 %v4262, %v4262
      %v4365 = vmul.f32 %v4263, %v4263
      %v4366 = vsel %vm1491, %v4334, 0.0
      %v4367 = vsel %vm1491, %v4335, 0.0
      %v4368 = vadd.f32 %v4366, %v4367
      %v4369 = vsel %vm1491, %v4336, 0.0
      %v4370 = vadd.f32 %v4368, %v4369
      %v4371 = vsel %vm1491, %v4337, 0.0
      %v4372 = vadd.f32 %v4370, %v4371
      %v4373 = vsel %vm1491, %v4338, 0.0
      %v4374 = vadd.f32 %v4372, %v4373
      %v4375 = vsel %vm1491, %v4339, 0.0
      %v4376 = vadd.f32 %v4374, %v4375
      %v4377 = vsel %vm1491, %v4340, 0.0
      %v4378 = vadd.f32 %v4376, %v4377
      %v4379 = vsel %vm1491, %v4341, 0.0
      %v4380 = vadd.f32 %v4378, %v4379
      %v4381 = vsel %vm1491, %v4342, 0.0
      %v4382 = vadd.f32 %v4380, %v4381
      %v4383 = vsel %vm1491, %v4343, 0.0
      %v4384 = vadd.f32 %v4382, %v4383
      %v4385 = vsel %vm1491, %v4344, 0.0
      %v4386 = vadd.f32 %v4384, %v4385
      %v4387 = vsel %vm1491, %v4345, 0.0
      %v4388 = vadd.f32 %v4386, %v4387
      %v4389 = vsel %vm1491, %v4346, 0.0
      %v4390 = vadd.f32 %v4388, %v4389
      %v4391 = vsel %vm1491, %v4347, 0.0
      %v4392 = vadd.f32 %v4390, %v4391
      %v4393 = vsel %vm1491, %v4348, 0.0
      %v4394 = vadd.f32 %v4392, %v4393
      %v4395 = vsel %vm1491, %v4349, 0.0
      %v4396 = vadd.f32 %v4394, %v4395
      %v4397 = vsel %vm1491, %v4350, 0.0
      %v4398 = vadd.f32 %v4396, %v4397
      %v4399 = vsel %vm1491, %v4351, 0.0
      %v4400 = vadd.f32 %v4398, %v4399
      %v4401 = vsel %vm1491, %v4352, 0.0
      %v4402 = vadd.f32 %v4400, %v4401
      %v4403 = vsel %vm1491, %v4353, 0.0
      %v4404 = vadd.f32 %v4402, %v4403
      %v4405 = vsel %vm1491, %v4354, 0.0
      %v4406 = vadd.f32 %v4404, %v4405
      %v4407 = vsel %vm1491, %v4355, 0.0
      %v4408 = vadd.f32 %v4406, %v4407
      %v4409 = vsel %vm1491, %v4356, 0.0
      %v4410 = vadd.f32 %v4408, %v4409
      %v4411 = vsel %vm1491, %v4357, 0.0
      %v4412 = vadd.f32 %v4410, %v4411
      %v4413 = vsel %vm1491, %v4358, 0.0
      %v4414 = vadd.f32 %v4412, %v4413
      %v4415 = vsel %vm1491, %v4359, 0.0
      %v4416 = vadd.f32 %v4414, %v4415
      %v4417 = vsel %vm1491, %v4360, 0.0
      %v4418 = vadd.f32 %v4416, %v4417
      %v4419 = vsel %vm1491, %v4361, 0.0
      %v4420 = vadd.f32 %v4418, %v4419
      %v4421 = vsel %vm1491, %v4362, 0.0
      %v4422 = vadd.f32 %v4420, %v4421
      %v4423 = vsel %vm1491, %v4363, 0.0
      %v4424 = vadd.f32 %v4422, %v4423
      %v4425 = vsel %vm1491, %v4364, 0.0
      %v4426 = vadd.f32 %v4424, %v4425
      %v4427 = vsel %vm1491, %v4365, 0.0
      %v4428 = vadd.f32 %v4426, %v4427
      %v4429 = vrot.slane %v4428, 4
      %v4430 = vadd.f32 %v4428, %v4429
      %v4431 = vrot.slane %v4430, 2
      %v4432 = vadd.f32 %v4430, %v4431
      %v4433 = vrot.slane %v4432, 1
      %v4434 = vadd.f32 %v4432, %v4433
      %v4435 = vmul.f32 %v4434, 0.00390625
      %v4436 = vmul.f32 %v4333, %v4333
      %v4437 = vsub.f32 %v4435, %v4436
      %v4438 = vadd.f32 %v4437, 1e-05
      %v4439 = vrsqrt.pop %v4438
      %v4440 = vmul.f32 %v4439, %v4438
      %v4441 = vmul.f32 %v4440, %v4439
      %v4442 = vmul.f32 0.5, %v4441
      %v4443 = vsub.f32 1.5, %v4442
      %v4444 = vmul.f32 %v4439, %v4443
      %vm4445 = vweird.f32 %v4438
      %vm4446 = vweird.f32 %v4439
      %vm4447 = vmor %vm4445, %vm4446
      %v4448 = vsel %vm4447, %v4439, %v4444
      %v4449 = vld [vmem:[%s2] sm:$0x1]
      %v4450 = vmul.f32 %v4448, %v4449
      %v4451 = vld [vmem:[%s3] sm:$0x1]
      %v4452 = vmul.f32 %v4333, %v4450
      %v4453 = vsub.f32 %v4451, %v4452
      %v4454 = vperm.slane %v4450, 0
      %v4455 = vmul.f32 %v4232, %v4454
      %v4456 = vmul.f32 %v4233, %v4454
      %v4457 = vmul.f32 %v4234, %v4454
      %v4458 = vmul.f32 %v4235, %v4454
      %v4459 = vmul.f32 %v4236, %v4454
      %v4460 = vmul.f32 %v4237, %v4454
      %v4461 = vmul.f32 %v4238, %v4454
      %v4462 = vmul.f32 %v4239, %v4454
      %v4463 = vmul.f32 %v4240, %v4454
      %v4464 = vmul.f32 %v4241, %v4454
      %v4465 = vmul.f32 %v4242, %v4454
      %v4466 = vmul.f32 %v4243, %v4454
      %v4467 = vmul.f32 %v4244, %v4454
      %v4468 = vmul.f32 %v4245, %v4454
      %v4469 = vmul.f32 %v4246, %v4454
      %v4470 = vmul.f32 %v4247, %v4454
      %v4471 = vmul.f32 %v4248, %v4454
      %v4472 = vmul.f32 %v4249, %v4454
      %v4473 = vmul.f32 %v4250, %v4454
      %v4474 = vmul.f32 %v4251, %v4454
      %v4475 = vmul.f32 %v4252, %v4454
      %v4476 = vmul.f32 %v4253, %v4454
      %v4477 = vmul.f32 %v4254, %v4454
      %v4478 = vmul.f32 %v4255, %v4454
      %v4479 = vmul.f32 %v4256, %v4454
      %v4480 = vmul.f32 %v4257, %v4454
      %v4481 = vmul.f32 %v4258, %v4454
      %v4482 = vmul.f32 %v4259, %v4454
      %v4483 = vmul.f32 %v4260, %v4454
      %v4484 = vmul.f32 %v4261, %v4454
      %v4485 = vmul.f32 %v4262, %v4454
      %v4486 = vmul.f32 %v4263, %v4454
      %v4488 = vperm.slane %v4453, 0
      %v4490 = vadd.f32 %v4455, %v4488
      %v4491 = vadd.f32 %v4456, %v4488
      %v4492 = vadd.f32 %v4457, %v4488
      %v4493 = vadd.f32 %v4458, %v4488
      %v4494 = vadd.f32 %v4459, %v4488
      %v4495 = vadd.f32 %v4460, %v4488
      %v4496 = vadd.f32 %v4461, %v4488
      %v4497 = vadd.f32 %v4462, %v4488
      %v4498 = vadd.f32 %v4463, %v4488
      %v4499 = vadd.f32 %v4464, %v4488
      %v4500 = vadd.f32 %v4465, %v4488
      %v4501 = vadd.f32 %v4466, %v4488
      %v4502 = vadd.f32 %v4467, %v4488
      %v4503 = vadd.f32 %v4468, %v4488
      %v4504 = vadd.f32 %v4469, %v4488
      %v4505 = vadd.f32 %v4470, %v4488
      %v4506 = vadd.f32 %v4471, %v4488
      %v4507 = vadd.f32 %v4472, %v4488
      %v4508 = vadd.f32 %v4473, %v4488
      %v4509 = vadd.f32 %v4474, %v4488
      %v4510 = vadd.f32 %v4475, %v4488
      %v4511 = vadd.f32 %v4476, %v4488
      %v4512 = vadd.f32 %v4477, %v4488
      %v4513 = vadd.f32 %v4478, %v4488
      %v4514 = vadd.f32 %v4479, %v4488
      %v4515 = vadd.f32 %v4480, %v4488
      %v4516 = vadd.f32 %v4481, %v4488
      %v4517 = vadd.f32 %v4482, %v4488
      %v4518 = vadd.f32 %v4483, %v4488
      %v4519 = vadd.f32 %v4484, %v4488
      %v4520 = vadd.f32 %v4485, %v4488
      %v4521 = vadd.f32 %v4486, %v4488
      %v4522 = vmax.f32 %v4490, 0.0
      %v4523 = vmax.f32 %v4491, 0.0
      %v4524 = vmax.f32 %v4492, 0.0
      %v4525 = vmax.f32 %v4493, 0.0
      %v4526 = vmax.f32 %v4494, 0.0
      %v4527 = vmax.f32 %v4495, 0.0
      %v4528 = vmax.f32 %v4496, 0.0
      %v4529 = vmax.f32 %v4497, 0.0
      %v4530 = vmax.f32 %v4498, 0.0
      %v4531 = vmax.f32 %v4499, 0.0
      %v4532 = vmax.f32 %v4500, 0.0
      %v4533 = vmax.f32 %v4501, 0.0
      %v4534 = vmax.f32 %v4502, 0.0
      %v4535 = vmax.f32 %v4503, 0.0
      %v4536 = vmax.f32 %v4504, 0.0
      %v4537 = vmax.f32 %v4505, 0.0
      %v4538 = vmax.f32 %v4506, 0.0
      %v4539 = vmax.f32 %v4507, 0.0
      %v4540 = vmax.f32 %v4508, 0.0
      %v4541 = vmax.f32 %v4509, 0.0
      %v4542 = vmax.f32 %v4510, 0.0
      %v4543 = vmax.f32 %v4511, 0.0
      %v4544 = vmax.f32 %v4512, 0.0
      %v4545 = vmax.f32 %v4513, 0.0
      %v4546 = vmax.f32 %v4514, 0.0
      %v4547 = vmax.f32 %v4515, 0.0
      %v4548 = vmax.f32 %v4516, 0.0
      %v4549 = vmax.f32 %v4517, 0.0
      %v4550 = vmax.f32 %v4518, 0.0
      %v4551 = vmax.f32 %v4519, 0.0
      %v4552 = vmax.f32 %v4520, 0.0
      %v4553 = vmax.f32 %v4521, 0.0
      %v4554 = vpack.c.bf16 %v4522, %v4522
      %v4555 = vpack.c.bf16 %v4523, %v4523
      %v4556 = vpack.c.bf16 %v4524, %v4524
      %v4557 = vpack.c.bf16 %v4525, %v4525
      %v4558 = vpack.c.bf16 %v4526, %v4526
      %v4559 = vpack.c.bf16 %v4527, %v4527
      %v4560 = vpack.c.bf16 %v4528, %v4528
      %v4561 = vpack.c.bf16 %v4529, %v4529
      %v4562 = vpack.c.bf16 %v4530, %v4530
      %v4563 = vpack.c.bf16 %v4531, %v4531
      %v4564 = vpack.c.bf16 %v4532, %v4532
      %v4565 = vpack.c.bf16 %v4533, %v4533
      %v4566 = vpack.c.bf16 %v4534, %v4534
      %v4567 = vpack.c.bf16 %v4535, %v4535
      %v4568 = vpack.c.bf16 %v4536, %v4536
      %v4569 = vpack.c.bf16 %v4537, %v4537
      %v4570 = vpack.c.bf16 %v4538, %v4538
      %v4571 = vpack.c.bf16 %v4539, %v4539
      %v4572 = vpack.c.bf16 %v4540, %v4540
      %v4573 = vpack.c.bf16 %v4541, %v4541
      %v4574 = vpack.c.bf16 %v4542, %v4542
      %v4575 = vpack.c.bf16 %v4543, %v4543
      %v4576 = vpack.c.bf16 %v4544, %v4544
      %v4577 = vpack.c.bf16 %v4545, %v4545
      %v4578 = vpack.c.bf16 %v4546, %v4546
      %v4579 = vpack.c.bf16 %v4547, %v4547
      %v4580 = vpack.c.bf16 %v4548, %v4548
      %v4581 = vpack.c.bf16 %v4549, %v4549
      %v4582 = vpack.c.bf16 %v4550, %v4550
      %v4583 = vpack.c.bf16 %v4551, %v4551
      %v4584 = vpack.c.bf16 %v4552, %v4552
      %v4585 = vpack.c.bf16 %v4553, %v4553
      %v4587 = vshrl.u32 %v4554, 16
      %v4589 = vrot.slane %v4587, 7
      %v4590 = vshll.u32 %v4554, 16
      %v4592 = vor.u32 %v4589, %v4590
      %v4593 = vrot.slane %v4589, 4
      %v4595 = vshrl.u32 %v4555, 16
      %v4597 = vrot.slane %v4595, 7
      %v4598 = vshll.u32 %v4555, 16
      %v4600 = vor.u32 %v4597, %v4598
      %v4601 = vsel %vm346, %v4593, %v4600
      %v4602 = vrot.slane %v4597, 4
      %v4604 = vshrl.u32 %v4556, 16
      %v4606 = vrot.slane %v4604, 7
      %v4607 = vshll.u32 %v4556, 16
      %v4609 = vor.u32 %v4606, %v4607
      %v4610 = vrot.slane %v4606, 4
      %v4612 = vshrl.u32 %v4557, 16
      %v4614 = vrot.slane %v4612, 7
      %v4615 = vshll.u32 %v4557, 16
      %v4617 = vor.u32 %v4614, %v4615
      %v4618 = vsel %vm346, %v4610, %v4617
      %v4619 = vrot.slane %v4614, 4
      %v4621 = vshrl.u32 %v4558, 16
      %v4623 = vrot.slane %v4621, 7
      %v4624 = vshll.u32 %v4558, 16
      %v4626 = vor.u32 %v4623, %v4624
      %v4627 = vrot.slane %v4623, 4
      %v4629 = vshrl.u32 %v4559, 16
      %v4631 = vrot.slane %v4629, 7
      %v4632 = vshll.u32 %v4559, 16
      %v4634 = vor.u32 %v4631, %v4632
      %v4635 = vsel %vm346, %v4627, %v4634
      %v4636 = vrot.slane %v4631, 4
      %v4638 = vshrl.u32 %v4560, 16
      %v4640 = vrot.slane %v4638, 7
      %v4641 = vshll.u32 %v4560, 16
      %v4643 = vor.u32 %v4640, %v4641
      %v4644 = vrot.slane %v4640, 4
      %v4646 = vshrl.u32 %v4561, 16
      %v4648 = vrot.slane %v4646, 7
      %v4649 = vshll.u32 %v4561, 16
      %v4651 = vor.u32 %v4648, %v4649
      %v4652 = vsel %vm346, %v4644, %v4651
      %v4653 = vrot.slane %v4648, 4
      %v4655 = vshrl.u32 %v4562, 16
      %v4657 = vrot.slane %v4655, 7
      %v4658 = vshll.u32 %v4562, 16
      %v4660 = vor.u32 %v4657, %v4658
      %v4661 = vrot.slane %v4657, 4
      %v4663 = vshrl.u32 %v4563, 16
      %v4665 = vrot.slane %v4663, 7
      %v4666 = vshll.u32 %v4563, 16
      %v4668 = vor.u32 %v4665, %v4666
      %v4669 = vsel %vm346, %v4661, %v4668
      %v4670 = vrot.slane %v4665, 4
      %v4672 = vshrl.u32 %v4564, 16
      %v4674 = vrot.slane %v4672, 7
      %v4675 = vshll.u32 %v4564, 16
      %v4677 = vor.u32 %v4674, %v4675
      %v4678 = vrot.slane %v4674, 4
      %v4680 = vshrl.u32 %v4565, 16
      %v4682 = vrot.slane %v4680, 7
      %v4683 = vshll.u32 %v4565, 16
      %v4685 = vor.u32 %v4682, %v4683
      %v4686 = vsel %vm346, %v4678, %v4685
      %v4687 = vrot.slane %v4682, 4
      %v4689 = vshrl.u32 %v4566, 16
      %v4691 = vrot.slane %v4689, 7
      %v4692 = vshll.u32 %v4566, 16
      %v4694 = vor.u32 %v4691, %v4692
      %v4695 = vrot.slane %v4691, 4
      %v4697 = vshrl.u32 %v4567, 16
      %v4699 = vrot.slane %v4697, 7
      %v4700 = vshll.u32 %v4567, 16
      %v4702 = vor.u32 %v4699, %v4700
      %v4703 = vsel %vm346, %v4695, %v4702
      %v4704 = vrot.slane %v4699, 4
      %v4706 = vshrl.u32 %v4568, 16
      %v4708 = vrot.slane %v4706, 7
      %v4709 = vshll.u32 %v4568, 16
      %v4711 = vor.u32 %v4708, %v4709
      %v4712 = vrot.slane %v4708, 4
      %v4714 = vshrl.u32 %v4569, 16
      %v4716 = vrot.slane %v4714, 7
      %v4717 = vshll.u32 %v4569, 16
      %v4719 = vor.u32 %v4716, %v4717
      %v4720 = vsel %vm346, %v4712, %v4719
      %v4721 = vrot.slane %v4716, 4
      %v4723 = vshrl.u32 %v4570, 16
      %v4725 = vrot.slane %v4723, 7
      %v4726 = vshll.u32 %v4570, 16
      %v4728 = vor.u32 %v4725, %v4726
      %v4729 = vrot.slane %v4725, 4
      %v4731 = vshrl.u32 %v4571, 16
      %v4733 = vrot.slane %v4731, 7
      %v4734 = vshll.u32 %v4571, 16
      %v4736 = vor.u32 %v4733, %v4734
      %v4737 = vsel %vm346, %v4729, %v4736
      %v4738 = vrot.slane %v4733, 4
      %v4740 = vshrl.u32 %v4572, 16
      %v4742 = vrot.slane %v4740, 7
      %v4743 = vshll.u32 %v4572, 16
      %v4745 = vor.u32 %v4742, %v4743
      %v4746 = vrot.slane %v4742, 4
      %v4748 = vshrl.u32 %v4573, 16
      %v4750 = vrot.slane %v4748, 7
      %v4751 = vshll.u32 %v4573, 16
      %v4753 = vor.u32 %v4750, %v4751
      %v4754 = vsel %vm346, %v4746, %v4753
      %v4755 = vrot.slane %v4750, 4
      %v4757 = vshrl.u32 %v4574, 16
      %v4759 = vrot.slane %v4757, 7
      %v4760 = vshll.u32 %v4574, 16
      %v4762 = vor.u32 %v4759, %v4760
      %v4763 = vrot.slane %v4759, 4
      %v4765 = vshrl.u32 %v4575, 16
      %v4767 = vrot.slane %v4765, 7
      %v4768 = vshll.u32 %v4575, 16
      %v4770 = vor.u32 %v4767, %v4768
      %v4771 = vsel %vm346, %v4763, %v4770
      %v4772 = vrot.slane %v4767, 4
      %v4774 = vshrl.u32 %v4576, 16
      %v4776 = vrot.slane %v4774, 7
      %v4777 = vshll.u32 %v4576, 16
      %v4779 = vor.u32 %v4776, %v4777
      %v4780 = vrot.slane %v4776, 4
      %v4782 = vshrl.u32 %v4577, 16
      %v4784 = vrot.slane %v4782, 7
      %v4785 = vshll.u32 %v4577, 16
      %v4787 = vor.u32 %v4784, %v4785
      %v4788 = vsel %vm346, %v4780, %v4787
      %v4789 = vrot.slane %v4784, 4
      %v4791 = vshrl.u32 %v4578, 16
      %v4793 = vrot.slane %v4791, 7
      %v4794 = vshll.u32 %v4578, 16
      %v4796 = vor.u32 %v4793, %v4794
      %v4797 = vrot.slane %v4793, 4
      %v4799 = vshrl.u32 %v4579, 16
      %v4801 = vrot.slane %v4799, 7
      %v4802 = vshll.u32 %v4579, 16
      %v4804 = vor.u32 %v4801, %v4802
      %v4805 = vsel %vm346, %v4797, %v4804
      %v4806 = vrot.slane %v4801, 4
      %v4808 = vshrl.u32 %v4580, 16
      %v4810 = vrot.slane %v4808, 7
      %v4811 = vshll.u32 %v4580, 16
      %v4813 = vor.u32 %v4810, %v4811
      %v4814 = vrot.slane %v4810, 4
      %v4816 = vshrl.u32 %v4581, 16
      %v4818 = vrot.slane %v4816, 7
      %v4819 = vshll.u32 %v4581, 16
      %v4821 = vor.u32 %v4818, %v4819
      %v4822 = vsel %vm346, %v4814, %v4821
      %v4823 = vrot.slane %v4818, 4
      %v4825 = vshrl.u32 %v4582, 16
      %v4827 = vrot.slane %v4825, 7
      %v4828 = vshll.u32 %v4582, 16
      %v4830 = vor.u32 %v4827, %v4828
      %v4831 = vrot.slane %v4827, 4
      %v4833 = vshrl.u32 %v4583, 16
      %v4835 = vrot.slane %v4833, 7
      %v4836 = vshll.u32 %v4583, 16
      %v4838 = vor.u32 %v4835, %v4836
      %v4839 = vsel %vm346, %v4831, %v4838
      %v4840 = vrot.slane %v4835, 4
      %v4842 = vshrl.u32 %v4584, 16
      %v4844 = vrot.slane %v4842, 7
      %v4845 = vshll.u32 %v4584, 16
      %v4847 = vor.u32 %v4844, %v4845
      %v4848 = vrot.slane %v4844, 4
      %v4850 = vshrl.u32 %v4585, 16
      %v4852 = vrot.slane %v4850, 7
      %v4853 = vshll.u32 %v4585, 16
      %v4855 = vor.u32 %v4852, %v4853
      %v4856 = vsel %vm346, %v4848, %v4855
      %v4857 = vrot.slane %v4852, 4
      %v4906 = vsel %vm670, %v4592, %v1122
      %4907 = vst [vmem:[%s667] sm:$0xf] %v4906
      %4908 = vst.msk [vmem:[%s667 + $0x4] sm:$0xf] %vm674, %v4601
      %v4909 = vld [vmem:[%s667 + $0x8] sm:$0x1]
      %v4910 = vsel %vm677, %v4602, %v4909
      %4911 = vst [vmem:[%s667 + $0x8] sm:$0x1] %v4910
      %v4912 = vld [vmem:[%s667 + $0xc] sm:$0xf]
      %v4913 = vsel %vm670, %v4609, %v4912
      %4914 = vst [vmem:[%s667 + $0xc] sm:$0xf] %v4913
      %4915 = vst.msk [vmem:[%s667 + $0x10] sm:$0xf] %vm674, %v4618
      %v4916 = vld [vmem:[%s667 + $0x14] sm:$0x1]
      %v4917 = vsel %vm677, %v4619, %v4916
      %4918 = vst [vmem:[%s667 + $0x14] sm:$0x1] %v4917
      %v4919 = vld [vmem:[%s667 + $0x18] sm:$0xf]
      %v4920 = vsel %vm670, %v4626, %v4919
      %4921 = vst [vmem:[%s667 + $0x18] sm:$0xf] %v4920
      %4922 = vst.msk [vmem:[%s667 + $0x1c] sm:$0xf] %vm674, %v4635
      %v4923 = vld [vmem:[%s667 + $0x20] sm:$0x1]
      %v4924 = vsel %vm677, %v4636, %v4923
      %4925 = vst [vmem:[%s667 + $0x20] sm:$0x1] %v4924
      %v4926 = vld [vmem:[%s667 + $0x24] sm:$0xf]
      %v4927 = vsel %vm670, %v4643, %v4926
      %4928 = vst [vmem:[%s667 + $0x24] sm:$0xf] %v4927
      %4929 = vst.msk [vmem:[%s667 + $0x28] sm:$0xf] %vm674, %v4652
      %v4930 = vld [vmem:[%s667 + $0x2c] sm:$0x1]
      %v4931 = vsel %vm677, %v4653, %v4930
      %4932 = vst [vmem:[%s667 + $0x2c] sm:$0x1] %v4931
      %v4933 = vld [vmem:[%s667 + $0x30] sm:$0xf]
      %v4934 = vsel %vm670, %v4660, %v4933
      %4935 = vst [vmem:[%s667 + $0x30] sm:$0xf] %v4934
      %4936 = vst.msk [vmem:[%s667 + $0x34] sm:$0xf] %vm674, %v4669
      %v4937 = vld [vmem:[%s667 + $0x38] sm:$0x1]
      %v4938 = vsel %vm677, %v4670, %v4937
      %4939 = vst [vmem:[%s667 + $0x38] sm:$0x1] %v4938
      %v4940 = vld [vmem:[%s667 + $0x3c] sm:$0xf]
      %v4941 = vsel %vm670, %v4677, %v4940
      %4942 = vst [vmem:[%s667 + $0x3c] sm:$0xf] %v4941
      %4943 = vst.msk [vmem:[%s667 + $0x40] sm:$0xf] %vm674, %v4686
      %v4944 = vld [vmem:[%s667 + $0x44] sm:$0x1]
      %v4945 = vsel %vm677, %v4687, %v4944
      %4946 = vst [vmem:[%s667 + $0x44] sm:$0x1] %v4945
      %v4947 = vld [vmem:[%s667 + $0x48] sm:$0xf]
      %v4948 = vsel %vm670, %v4694, %v4947
      %4949 = vst [vmem:[%s667 + $0x48] sm:$0xf] %v4948
      %4950 = vst.msk [vmem:[%s667 + $0x4c] sm:$0xf] %vm674, %v4703
      %v4951 = vld [vmem:[%s667 + $0x50] sm:$0x1]
      %v4952 = vsel %vm677, %v4704, %v4951
      %4953 = vst [vmem:[%s667 + $0x50] sm:$0x1] %v4952
      %v4954 = vld [vmem:[%s667 + $0x54] sm:$0xf]
      %v4955 = vsel %vm670, %v4711, %v4954
      %4956 = vst [vmem:[%s667 + $0x54] sm:$0xf] %v4955
      %4957 = vst.msk [vmem:[%s667 + $0x58] sm:$0xf] %vm674, %v4720
      %v4958 = vld [vmem:[%s667 + $0x5c] sm:$0x1]
      %v4959 = vsel %vm677, %v4721, %v4958
      %4960 = vst [vmem:[%s667 + $0x5c] sm:$0x1] %v4959
      %v4961 = vld [vmem:[%s667 + $0x60] sm:$0xf]
      %v4962 = vsel %vm670, %v4728, %v4961
      %4963 = vst [vmem:[%s667 + $0x60] sm:$0xf] %v4962
      %4964 = vst.msk [vmem:[%s667 + $0x64] sm:$0xf] %vm674, %v4737
      %v4965 = vld [vmem:[%s667 + $0x68] sm:$0x1]
      %v4966 = vsel %vm677, %v4738, %v4965
      %4967 = vst [vmem:[%s667 + $0x68] sm:$0x1] %v4966
      %v4968 = vld [vmem:[%s667 + $0x6c] sm:$0xf]
      %v4969 = vsel %vm670, %v4745, %v4968
      %4970 = vst [vmem:[%s667 + $0x6c] sm:$0xf] %v4969
      %4971 = vst.msk [vmem:[%s667 + $0x70] sm:$0xf] %vm674, %v4754
      %v4972 = vld [vmem:[%s667 + $0x74] sm:$0x1]
      %v4973 = vsel %vm677, %v4755, %v4972
      %4974 = vst [vmem:[%s667 + $0x74] sm:$0x1] %v4973
      %v4975 = vld [vmem:[%s667 + $0x78] sm:$0xf]
      %v4976 = vsel %vm670, %v4762, %v4975
      %4977 = vst [vmem:[%s667 + $0x78] sm:$0xf] %v4976
      %4978 = vst.msk [vmem:[%s667 + $0x7c] sm:$0xf] %vm674, %v4771
      %v4979 = vld [vmem:[%s667 + $0x80] sm:$0x1]
      %v4980 = vsel %vm677, %v4772, %v4979
      %4981 = vst [vmem:[%s667 + $0x80] sm:$0x1] %v4980
      %v4982 = vld [vmem:[%s667 + $0x84] sm:$0xf]
      %v4983 = vsel %vm670, %v4779, %v4982
      %4984 = vst [vmem:[%s667 + $0x84] sm:$0xf] %v4983
      %4985 = vst.msk [vmem:[%s667 + $0x88] sm:$0xf] %vm674, %v4788
      %v4986 = vld [vmem:[%s667 + $0x8c] sm:$0x1]
      %v4987 = vsel %vm677, %v4789, %v4986
      %4988 = vst [vmem:[%s667 + $0x8c] sm:$0x1] %v4987
      %v4989 = vld [vmem:[%s667 + $0x90] sm:$0xf]
      %v4990 = vsel %vm670, %v4796, %v4989
      %4991 = vst [vmem:[%s667 + $0x90] sm:$0xf] %v4990
      %4992 = vst.msk [vmem:[%s667 + $0x94] sm:$0xf] %vm674, %v4805
      %v4993 = vld [vmem:[%s667 + $0x98] sm:$0x1]
      %v4994 = vsel %vm677, %v4806, %v4993
      %4995 = vst [vmem:[%s667 + $0x98] sm:$0x1] %v4994
      %v4996 = vld [vmem:[%s667 + $0x9c] sm:$0xf]
      %v4997 = vsel %vm670, %v4813, %v4996
      %4998 = vst [vmem:[%s667 + $0x9c] sm:$0xf] %v4997
      %4999 = vst.msk [vmem:[%s667 + $0xa0] sm:$0xf] %vm674, %v4822
      %v5000 = vld [vmem:[%s667 + $0xa4] sm:$0x1]
      %v5001 = vsel %vm677, %v4823, %v5000
      %5002 = vst [vmem:[%s667 + $0xa4] sm:$0x1] %v5001
      %v5003 = vld [vmem:[%s667 + $0xa8] sm:$0xf]
      %v5004 = vsel %vm670, %v4830, %v5003
      %5005 = vst [vmem:[%s667 + $0xa8] sm:$0xf] %v5004
      %5006 = vst.msk [vmem:[%s667 + $0xac] sm:$0xf] %vm674, %v4839
      %v5007 = vld [vmem:[%s667 + $0xb0] sm:$0x1]
      %v5008 = vsel %vm677, %v4840, %v5007
      %5009 = vst [vmem:[%s667 + $0xb0] sm:$0x1] %v5008
      %v5010 = vld [vmem:[%s667 + $0xb4] sm:$0xf]
      %v5011 = vsel %vm670, %v4847, %v5010
      %5012 = vst [vmem:[%s667 + $0xb4] sm:$0xf] %v5011
      %5013 = vst.msk [vmem:[%s667 + $0xb8] sm:$0xf] %vm674, %v4856
      %v5014 = vld [vmem:[%s667 + $0xbc] sm:$0x1]
      %v5015 = vsel %vm677, %v4857, %v5014
      %5016 = vst [vmem:[%s667 + $0xbc] sm:$0x1] %v5015
      %v5017 = vld [vmem:[#allocation2] sm:$0xf]
      %v5018 = vsel %vm670, %v4609, %v5017
      %5019 = vst [vmem:[#allocation2] sm:$0xf] %v5018
      %5020 = vst.msk [vmem:[#allocation2 + $0x4] sm:$0xf] %vm674, %v4618
      %v5021 = vld [vmem:[#allocation2 + $0x8] sm:$0x1]
      %v5022 = vsel %vm677, %v4619, %v5021
      %5023 = vst [vmem:[#allocation2 + $0x8] sm:$0x1] %v5022
      %v5024 = vld [vmem:[%s793] sm:$0xf]
      %v5025 = vsel %vm670, %v4830, %v5024
      %5026 = vst [vmem:[%s793] sm:$0xf] %v5025
      %5027 = vst.msk [vmem:[%s793 + $0x4] sm:$0xf] %vm674, %v4839
      %v5028 = vld [vmem:[%s793 + $0x8] sm:$0x1]
      %v5029 = vsel %vm677, %v4840, %v5028
      %5030 = vst [vmem:[%s793 + $0x8] sm:$0x1] %v5029
      %v5031 = vld [vmem:[#allocation2] sm:$0x2]
      %v5032 = vld [vmem:[#allocation2 + $0xc] sm:$0x2]
      %v5033 = vld [vmem:[#allocation2 + $0x18] sm:$0x2]
      %v5034 = vld [vmem:[#allocation2 + $0x24] sm:$0x2]
      %v5035 = vld [vmem:[#allocation2 + $0x30] sm:$0x2]
      %v5036 = vld [vmem:[#allocation2 + $0x3c] sm:$0x2]
      %v5037 = vld [vmem:[#allocation2 + $0x48] sm:$0x2]
      %v5038 = vld [vmem:[#allocation2 + $0x54] sm:$0x2]
      %v5039 = vld [vmem:[#allocation2 + $0x60] sm:$0x2]
      %v5040 = vld [vmem:[#allocation2 + $0x6c] sm:$0x2]
      %v5041 = vld [vmem:[#allocation2 + $0x78] sm:$0x2]
      %v5042 = vld [vmem:[#allocation2 + $0x84] sm:$0x2]
      %v5043 = vld [vmem:[#allocation2 + $0x90] sm:$0x2]
      %v5044 = vld [vmem:[#allocation2 + $0x9c] sm:$0x2]
      %v5045 = vld [vmem:[#allocation2 + $0xa8] sm:$0x2]
      %v5046 = vld [vmem:[#allocation2 + $0xb4] sm:$0x2]
      %v5047 = vld [vmem:[#allocation2 + $0xc0] sm:$0x2]
      %v5048 = vld [vmem:[#allocation2 + $0xcc] sm:$0x2]
      %v5067 = vrot.slane %v5031, 5
      %v5068 = vrot.slane %v5067, 4
      %v5069 = vrot.slane %v5032, 5
      %v5070 = vrot.slane %v5069, 4
      %v5071 = vrot.slane %v5033, 5
      %v5072 = vrot.slane %v5071, 4
      %v5073 = vrot.slane %v5034, 5
      %v5074 = vrot.slane %v5073, 4
      %v5075 = vrot.slane %v5035, 5
      %v5076 = vrot.slane %v5075, 4
      %v5077 = vrot.slane %v5036, 5
      %v5078 = vrot.slane %v5077, 4
      %v5079 = vrot.slane %v5037, 5
      %v5080 = vrot.slane %v5079, 4
      %v5081 = vrot.slane %v5038, 5
      %v5082 = vrot.slane %v5081, 4
      %v5083 = vrot.slane %v5039, 5
      %v5084 = vrot.slane %v5083, 4
      %v5085 = vrot.slane %v5040, 5
      %v5086 = vrot.slane %v5085, 4
      %v5087 = vrot.slane %v5041, 5
      %v5088 = vrot.slane %v5087, 4
      %v5089 = vrot.slane %v5042, 5
      %v5090 = vrot.slane %v5089, 4
      %v5091 = vrot.slane %v5043, 5
      %v5092 = vrot.slane %v5091, 4
      %v5093 = vrot.slane %v5044, 5
      %v5094 = vrot.slane %v5093, 4
      %v5095 = vrot.slane %v5045, 5
      %v5096 = vrot.slane %v5095, 4
      %v5097 = vrot.slane %v5046, 5
      %v5098 = vrot.slane %v5097, 4
      %v5099 = vrot.slane %v5047, 5
      %v5100 = vrot.slane %v5099, 4
      %v5101 = vrot.slane %v5048, 5
      %v5102 = vrot.slane %v5101, 4
      %v5121 = vld [vmem:[#allocation2] sm:$0x1]
      %v5122 = vsel %vm677, %v5068, %v5121
      %5123 = vst [vmem:[#allocation2] sm:$0x1] %v5122
      %v5124 = vld [vmem:[#allocation2 + $0xc] sm:$0x1]
      %v5125 = vsel %vm677, %v5070, %v5124
      %5126 = vst [vmem:[#allocation2 + $0xc] sm:$0x1] %v5125
      %v5127 = vld [vmem:[#allocation2 + $0x18] sm:$0x1]
      %v5128 = vsel %vm677, %v5072, %v5127
      %5129 = vst [vmem:[#allocation2 + $0x18] sm:$0x1] %v5128
      %v5130 = vld [vmem:[#allocation2 + $0x24] sm:$0x1]
      %v5131 = vsel %vm677, %v5074, %v5130
      %5132 = vst [vmem:[#allocation2 + $0x24] sm:$0x1] %v5131
      %v5133 = vld [vmem:[#allocation2 + $0x30] sm:$0x1]
      %v5134 = vsel %vm677, %v5076, %v5133
      %5135 = vst [vmem:[#allocation2 + $0x30] sm:$0x1] %v5134
      %v5136 = vld [vmem:[#allocation2 + $0x3c] sm:$0x1]
      %v5137 = vsel %vm677, %v5078, %v5136
      %5138 = vst [vmem:[#allocation2 + $0x3c] sm:$0x1] %v5137
      %v5139 = vld [vmem:[#allocation2 + $0x48] sm:$0x1]
      %v5140 = vsel %vm677, %v5080, %v5139
      %5141 = vst [vmem:[#allocation2 + $0x48] sm:$0x1] %v5140
      %v5142 = vld [vmem:[#allocation2 + $0x54] sm:$0x1]
      %v5143 = vsel %vm677, %v5082, %v5142
      %5144 = vst [vmem:[#allocation2 + $0x54] sm:$0x1] %v5143
      %v5145 = vld [vmem:[#allocation2 + $0x60] sm:$0x1]
      %v5146 = vsel %vm677, %v5084, %v5145
      %5147 = vst [vmem:[#allocation2 + $0x60] sm:$0x1] %v5146
      %v5148 = vld [vmem:[#allocation2 + $0x6c] sm:$0x1]
      %v5149 = vsel %vm677, %v5086, %v5148
      %5150 = vst [vmem:[#allocation2 + $0x6c] sm:$0x1] %v5149
      %v5151 = vld [vmem:[#allocation2 + $0x78] sm:$0x1]
      %v5152 = vsel %vm677, %v5088, %v5151
      %5153 = vst [vmem:[#allocation2 + $0x78] sm:$0x1] %v5152
      %v5154 = vld [vmem:[#allocation2 + $0x84] sm:$0x1]
      %v5155 = vsel %vm677, %v5090, %v5154
      %5156 = vst [vmem:[#allocation2 + $0x84] sm:$0x1] %v5155
      %v5157 = vld [vmem:[#allocation2 + $0x90] sm:$0x1]
      %v5158 = vsel %vm677, %v5092, %v5157
      %5159 = vst [vmem:[#allocation2 + $0x90] sm:$0x1] %v5158
      %v5160 = vld [vmem:[#allocation2 + $0x9c] sm:$0x1]
      %v5161 = vsel %vm677, %v5094, %v5160
      %5162 = vst [vmem:[#allocation2 + $0x9c] sm:$0x1] %v5161
      %v5163 = vld [vmem:[#allocation2 + $0xa8] sm:$0x1]
      %v5164 = vsel %vm677, %v5096, %v5163
      %5165 = vst [vmem:[#allocation2 + $0xa8] sm:$0x1] %v5164
      %v5166 = vld [vmem:[#allocation2 + $0xb4] sm:$0x1]
      %v5167 = vsel %vm677, %v5098, %v5166
      %5168 = vst [vmem:[#allocation2 + $0xb4] sm:$0x1] %v5167
      %v5169 = vld [vmem:[#allocation2 + $0xc0] sm:$0x1]
      %v5170 = vsel %vm677, %v5100, %v5169
      %5171 = vst [vmem:[#allocation2 + $0xc0] sm:$0x1] %v5170
      %v5172 = vld [vmem:[#allocation2 + $0xcc] sm:$0x1]
      %v5173 = vsel %vm677, %v5102, %v5172
      %5174 = vst [vmem:[#allocation2 + $0xcc] sm:$0x1] %v5173
      %v5175 = vld [vmem:[#allocation2 + $0x4] sm:$0x8]
      %v5176 = vld [vmem:[#allocation2 + $0x10] sm:$0x8]
      %v5177 = vld [vmem:[#allocation2 + $0x1c] sm:$0x8]
      %v5178 = vld [vmem:[#allocation2 + $0x28] sm:$0x8]
      %v5179 = vld [vmem:[#allocation2 + $0x34] sm:$0x8]
      %v5180 = vld [vmem:[#allocation2 + $0x40] sm:$0x8]
      %v5181 = vld [vmem:[#allocation2 + $0x4c] sm:$0x8]
      %v5182 = vld [vmem:[#allocation2 + $0x58] sm:$0x8]
      %v5183 = vld [vmem:[#allocation2 + $0x64] sm:$0x8]
      %v5184 = vld [vmem:[#allocation2 + $0x70] sm:$0x8]
      %v5185 = vld [vmem:[#allocation2 + $0x7c] sm:$0x8]
      %v5186 = vld [vmem:[#allocation2 + $0x88] sm:$0x8]
      %v5187 = vld [vmem:[#allocation2 + $0x94] sm:$0x8]
      %v5188 = vld [vmem:[#allocation2 + $0xa0] sm:$0x8]
      %v5189 = vld [vmem:[#allocation2 + $0xac] sm:$0x8]
      %v5190 = vld [vmem:[#allocation2 + $0xb8] sm:$0x8]
      %v5191 = vld [vmem:[#allocation2 + $0xc4] sm:$0x8]
      %v5192 = vld [vmem:[#allocation2 + $0xd0] sm:$0x8]
      %v5211 = vrot.slane %v5175, 7
      %v5212 = vrot.slane %v5211, 4
      %v5213 = vrot.slane %v5176, 7
      %v5214 = vrot.slane %v5213, 4
      %v5215 = vrot.slane %v5177, 7
      %v5216 = vrot.slane %v5215, 4
      %v5217 = vrot.slane %v5178, 7
      %v5218 = vrot.slane %v5217, 4
      %v5219 = vrot.slane %v5179, 7
      %v5220 = vrot.slane %v5219, 4
      %v5221 = vrot.slane %v5180, 7
      %v5222 = vrot.slane %v5221, 4
      %v5223 = vrot.slane %v5181, 7
      %v5224 = vrot.slane %v5223, 4
      %v5225 = vrot.slane %v5182, 7
      %v5226 = vrot.slane %v5225, 4
      %v5227 = vrot.slane %v5183, 7
      %v5228 = vrot.slane %v5227, 4
      %v5229 = vrot.slane %v5184, 7
      %v5230 = vrot.slane %v5229, 4
      %v5231 = vrot.slane %v5185, 7
      %v5232 = vrot.slane %v5231, 4
      %v5233 = vrot.slane %v5186, 7
      %v5234 = vrot.slane %v5233, 4
      %v5235 = vrot.slane %v5187, 7
      %v5236 = vrot.slane %v5235, 4
      %v5237 = vrot.slane %v5188, 7
      %v5238 = vrot.slane %v5237, 4
      %v5239 = vrot.slane %v5189, 7
      %v5240 = vrot.slane %v5239, 4
      %v5241 = vrot.slane %v5190, 7
      %v5242 = vrot.slane %v5241, 4
      %v5243 = vrot.slane %v5191, 7
      %v5244 = vrot.slane %v5243, 4
      %v5245 = vrot.slane %v5192, 7
      %v5246 = vrot.slane %v5245, 4
      %v5265 = vld [vmem:[#allocation2 + $0x8] sm:$0x1]
      %v5266 = vsel %vm1035, %v5212, %v5265
      %5267 = vst [vmem:[#allocation2 + $0x8] sm:$0x1] %v5266
      %v5268 = vld [vmem:[#allocation2 + $0x14] sm:$0x1]
      %v5269 = vsel %vm1035, %v5214, %v5268
      %5270 = vst [vmem:[#allocation2 + $0x14] sm:$0x1] %v5269
      %v5271 = vld [vmem:[#allocation2 + $0x20] sm:$0x1]
      %v5272 = vsel %vm1035, %v5216, %v5271
      %5273 = vst [vmem:[#allocation2 + $0x20] sm:$0x1] %v5272
      %v5274 = vld [vmem:[#allocation2 + $0x2c] sm:$0x1]
      %v5275 = vsel %vm1035, %v5218, %v5274
      %5276 = vst [vmem:[#allocation2 + $0x2c] sm:$0x1] %v5275
      %v5277 = vld [vmem:[#allocation2 + $0x38] sm:$0x1]
      %v5278 = vsel %vm1035, %v5220, %v5277
      %5279 = vst [vmem:[#allocation2 + $0x38] sm:$0x1] %v5278
      %v5280 = vld [vmem:[#allocation2 + $0x44] sm:$0x1]
      %v5281 = vsel %vm1035, %v5222, %v5280
      %5282 = vst [vmem:[#allocation2 + $0x44] sm:$0x1] %v5281
      %v5283 = vld [vmem:[#allocation2 + $0x50] sm:$0x1]
      %v5284 = vsel %vm1035, %v5224, %v5283
      %5285 = vst [vmem:[#allocation2 + $0x50] sm:$0x1] %v5284
      %v5286 = vld [vmem:[#allocation2 + $0x5c] sm:$0x1]
      %v5287 = vsel %vm1035, %v5226, %v5286
      %5288 = vst [vmem:[#allocation2 + $0x5c] sm:$0x1] %v5287
      %v5289 = vld [vmem:[#allocation2 + $0x68] sm:$0x1]
      %v5290 = vsel %vm1035, %v5228, %v5289
      %5291 = vst [vmem:[#allocation2 + $0x68] sm:$0x1] %v5290
      %v5292 = vld [vmem:[#allocation2 + $0x74] sm:$0x1]
      %v5293 = vsel %vm1035, %v5230, %v5292
      %5294 = vst [vmem:[#allocation2 + $0x74] sm:$0x1] %v5293
      %v5295 = vld [vmem:[#allocation2 + $0x80] sm:$0x1]
      %v5296 = vsel %vm1035, %v5232, %v5295
      %5297 = vst [vmem:[#allocation2 + $0x80] sm:$0x1] %v5296
      %v5298 = vld [vmem:[#allocation2 + $0x8c] sm:$0x1]
      %v5299 = vsel %vm1035, %v5234, %v5298
      %5300 = vst [vmem:[#allocation2 + $0x8c] sm:$0x1] %v5299
      %v5301 = vld [vmem:[#allocation2 + $0x98] sm:$0x1]
      %v5302 = vsel %vm1035, %v5236, %v5301
      %5303 = vst [vmem:[#allocation2 + $0x98] sm:$0x1] %v5302
      %v5304 = vld [vmem:[#allocation2 + $0xa4] sm:$0x1]
      %v5305 = vsel %vm1035, %v5238, %v5304
      %5306 = vst [vmem:[#allocation2 + $0xa4] sm:$0x1] %v5305
      %v5307 = vld [vmem:[#allocation2 + $0xb0] sm:$0x1]
      %v5308 = vsel %vm1035, %v5240, %v5307
      %5309 = vst [vmem:[#allocation2 + $0xb0] sm:$0x1] %v5308
      %v5310 = vld [vmem:[#allocation2 + $0xbc] sm:$0x1]
      %v5311 = vsel %vm1035, %v5242, %v5310
      %5312 = vst [vmem:[#allocation2 + $0xbc] sm:$0x1] %v5311
      %v5313 = vld [vmem:[#allocation2 + $0xc8] sm:$0x1]
      %v5314 = vsel %vm1035, %v5244, %v5313
      %5315 = vst [vmem:[#allocation2 + $0xc8] sm:$0x1] %v5314
      %v5316 = vld [vmem:[#allocation2 + $0xd4] sm:$0x1]
      %v5317 = vsel %vm1035, %v5246, %v5316
      %5318 = vst [vmem:[#allocation2 + $0xd4] sm:$0x1] %v5317
      %v5319 = vld [vmem:[#allocation2] sm:$0xf]
      %v5320 = vld [vmem:[#allocation2 + $0x4] sm:$0xf]
      %v5321 = vld [vmem:[#allocation2 + $0xc] sm:$0xf]
      %v5322 = vld [vmem:[#allocation2 + $0x10] sm:$0xf]
      %v5323 = vld [vmem:[#allocation2 + $0x18] sm:$0xf]
      %v5324 = vld [vmem:[#allocation2 + $0x1c] sm:$0xf]
      %v5325 = vld [vmem:[#allocation2 + $0x24] sm:$0xf]
      %v5326 = vld [vmem:[#allocation2 + $0x28] sm:$0xf]
      %v5327 = vld [vmem:[#allocation2 + $0x30] sm:$0xf]
      %v5328 = vld [vmem:[#allocation2 + $0x34] sm:$0xf]
      %v5329 = vld [vmem:[#allocation2 + $0x3c] sm:$0xf]
      %v5330 = vld [vmem:[#allocation2 + $0x40] sm:$0xf]
      %v5331 = vld [vmem:[#allocation2 + $0x48] sm:$0xf]
      %v5332 = vld [vmem:[#allocation2 + $0x4c] sm:$0xf]
      %v5333 = vld [vmem:[#allocation2 + $0x54] sm:$0xf]
      %v5334 = vld [vmem:[#allocation2 + $0x58] sm:$0xf]
      %v5335 = vld [vmem:[#allocation2 + $0x60] sm:$0xf]
      %v5336 = vld [vmem:[#allocation2 + $0x64] sm:$0xf]
      %v5337 = vld [vmem:[#allocation2 + $0x6c] sm:$0xf]
      %v5338 = vld [vmem:[#allocation2 + $0x70] sm:$0xf]
      %v5339 = vld [vmem:[#allocation2 + $0x78] sm:$0xf]
      %v5340 = vld [vmem:[#allocation2 + $0x7c] sm:$0xf]
      %v5341 = vld [vmem:[#allocation2 + $0x84] sm:$0xf]
      %v5342 = vld [vmem:[#allocation2 + $0x88] sm:$0xf]
      %v5343 = vld [vmem:[#allocation2 + $0x90] sm:$0xf]
      %v5344 = vld [vmem:[#allocation2 + $0x94] sm:$0xf]
      %v5345 = vld [vmem:[#allocation2 + $0x9c] sm:$0xf]
      %v5346 = vld [vmem:[#allocation2 + $0xa0] sm:$0xf]
      %v5347 = vld [vmem:[#allocation2 + $0xa8] sm:$0xf]
      %v5348 = vld [vmem:[#allocation2 + $0xac] sm:$0xf]
      %v5349 = vld [vmem:[#allocation2 + $0xb4] sm:$0xf]
      %v5350 = vld [vmem:[#allocation2 + $0xb8] sm:$0xf]
      %v5351 = vld [vmem:[%s667] sm:$0xf]
      %v5352 = vld [vmem:[%s667 + $0x4] sm:$0xf]
      %v5353 = vld [vmem:[%s667 + $0xc] sm:$0xf]
      %v5354 = vld [vmem:[%s667 + $0x10] sm:$0xf]
      %v5355 = vld [vmem:[%s667 + $0x18] sm:$0xf]
      %v5356 = vld [vmem:[%s667 + $0x1c] sm:$0xf]
      %v5357 = vld [vmem:[%s667 + $0x24] sm:$0xf]
      %v5358 = vld [vmem:[%s667 + $0x28] sm:$0xf]
      %v5359 = vld [vmem:[%s667 + $0x30] sm:$0xf]
      %v5360 = vld [vmem:[%s667 + $0x34] sm:$0xf]
      %v5361 = vld [vmem:[%s667 + $0x3c] sm:$0xf]
      %v5362 = vld [vmem:[%s667 + $0x40] sm:$0xf]
      %v5363 = vld [vmem:[%s667 + $0x48] sm:$0xf]
      %v5364 = vld [vmem:[%s667 + $0x4c] sm:$0xf]
      %v5365 = vld [vmem:[%s667 + $0x54] sm:$0xf]
      %v5366 = vld [vmem:[%s667 + $0x58] sm:$0xf]
      %v5367 = vld [vmem:[%s667 + $0x60] sm:$0xf]
      %v5368 = vld [vmem:[%s667 + $0x64] sm:$0xf]
      %v5369 = vld [vmem:[%s667 + $0x6c] sm:$0xf]
      %v5370 = vld [vmem:[%s667 + $0x70] sm:$0xf]
      %v5371 = vld [vmem:[%s667 + $0x78] sm:$0xf]
      %v5372 = vld [vmem:[%s667 + $0x7c] sm:$0xf]
      %v5373 = vld [vmem:[%s667 + $0x84] sm:$0xf]
      %v5374 = vld [vmem:[%s667 + $0x88] sm:$0xf]
      %v5375 = vld [vmem:[%s667 + $0x90] sm:$0xf]
      %v5376 = vld [vmem:[%s667 + $0x94] sm:$0xf]
      %v5377 = vld [vmem:[%s667 + $0x9c] sm:$0xf]
      %v5378 = vld [vmem:[%s667 + $0xa0] sm:$0xf]
      %v5379 = vld [vmem:[%s667 + $0xa8] sm:$0xf]
      %v5380 = vld [vmem:[%s667 + $0xac] sm:$0xf]
      %v5381 = vld [vmem:[%s667 + $0xb4] sm:$0xf]
      %v5382 = vld [vmem:[%s667 + $0xb8] sm:$0xf]
      %v5383 = vld [vmem:[%s1154] sm:$0xf]
      %v5384 = vld [vmem:[%s1154 + $0x4] sm:$0xf]
      %v5385 = vld [vmem:[%s1154 + $0xc] sm:$0xf]
      %v5386 = vld [vmem:[%s1154 + $0x10] sm:$0xf]
      %v5387 = vld [vmem:[%s1154 + $0x18] sm:$0xf]
      %v5388 = vld [vmem:[%s1154 + $0x1c] sm:$0xf]
      %v5389 = vld [vmem:[%s1154 + $0x24] sm:$0xf]
      %v5390 = vld [vmem:[%s1154 + $0x28] sm:$0xf]
      %v5391 = vld [vmem:[%s1154 + $0x30] sm:$0xf]
      %v5392 = vld [vmem:[%s1154 + $0x34] sm:$0xf]
      %v5393 = vld [vmem:[%s1154 + $0x3c] sm:$0xf]
      %v5394 = vld [vmem:[%s1154 + $0x40] sm:$0xf]
      %v5395 = vld [vmem:[%s1154 + $0x48] sm:$0xf]
      %v5396 = vld [vmem:[%s1154 + $0x4c] sm:$0xf]
      %v5397 = vld [vmem:[%s1154 + $0x54] sm:$0xf]
      %v5398 = vld [vmem:[%s1154 + $0x58] sm:$0xf]
      %v5399 = vld [vmem:[%s1154 + $0x60] sm:$0xf]
      %v5400 = vld [vmem:[%s1154 + $0x64] sm:$0xf]
      %v5401 = vld [vmem:[%s1154 + $0x6c] sm:$0xf]
      %v5402 = vld [vmem:[%s1154 + $0x70] sm:$0xf]
      %v5403 = vld [vmem:[%s1154 + $0x78] sm:$0xf]
      %v5404 = vld [vmem:[%s1154 + $0x7c] sm:$0xf]
      %v5405 = vld [vmem:[%s1154 + $0x84] sm:$0xf]
      %v5406 = vld [vmem:[%s1154 + $0x88] sm:$0xf]
      %v5407 = vld [vmem:[%s1154 + $0x90] sm:$0xf]
      %v5408 = vld [vmem:[%s1154 + $0x94] sm:$0xf]
      %v5409 = vld [vmem:[%s1154 + $0x9c] sm:$0xf]
      %v5410 = vld [vmem:[%s1154 + $0xa0] sm:$0xf]
      %v5411 = vld [vmem:[%s1154 + $0xa8] sm:$0xf]
      %v5412 = vld [vmem:[%s1154 + $0xac] sm:$0xf]
      %v5413 = vld [vmem:[%s1154 + $0xb4] sm:$0xf]
      %v5414 = vld [vmem:[%s1154 + $0xb8] sm:$0xf]
      %v5447 = vunpack.c.l.b16 %v5319
      %v5448 = vunpack.c.l.b16 %v5320
      %v5449 = vunpack.c.l.b16 %v5321
      %v5450 = vunpack.c.l.b16 %v5322
      %v5451 = vunpack.c.l.b16 %v5323
      %v5452 = vunpack.c.l.b16 %v5324
      %v5453 = vunpack.c.l.b16 %v5325
      %v5454 = vunpack.c.l.b16 %v5326
      %v5455 = vunpack.c.l.b16 %v5327
      %v5456 = vunpack.c.l.b16 %v5328
      %v5457 = vunpack.c.l.b16 %v5329
      %v5458 = vunpack.c.l.b16 %v5330
      %v5459 = vunpack.c.l.b16 %v5331
      %v5460 = vunpack.c.l.b16 %v5332
      %v5461 = vunpack.c.l.b16 %v5333
      %v5462 = vunpack.c.l.b16 %v5334
      %v5463 = vunpack.c.l.b16 %v5335
      %v5464 = vunpack.c.l.b16 %v5336
      %v5465 = vunpack.c.l.b16 %v5337
      %v5466 = vunpack.c.l.b16 %v5338
      %v5467 = vunpack.c.l.b16 %v5339
      %v5468 = vunpack.c.l.b16 %v5340
      %v5469 = vunpack.c.l.b16 %v5341
      %v5470 = vunpack.c.l.b16 %v5342
      %v5471 = vunpack.c.l.b16 %v5343
      %v5472 = vunpack.c.l.b16 %v5344
      %v5473 = vunpack.c.l.b16 %v5345
      %v5474 = vunpack.c.l.b16 %v5346
      %v5475 = vunpack.c.l.b16 %v5347
      %v5476 = vunpack.c.l.b16 %v5348
      %v5477 = vunpack.c.l.b16 %v5349
      %v5478 = vunpack.c.l.b16 %v5350
      %v5479 = vpack.c.b16 %v5448, %v5447
      %v5480 = vpack.c.b16 %v5450, %v5449
      %v5481 = vpack.c.b16 %v5452, %v5451
      %v5482 = vpack.c.b16 %v5454, %v5453
      %v5483 = vpack.c.b16 %v5456, %v5455
      %v5484 = vpack.c.b16 %v5458, %v5457
      %v5485 = vpack.c.b16 %v5460, %v5459
      %v5486 = vpack.c.b16 %v5462, %v5461
      %v5487 = vpack.c.b16 %v5464, %v5463
      %v5488 = vpack.c.b16 %v5466, %v5465
      %v5489 = vpack.c.b16 %v5468, %v5467
      %v5490 = vpack.c.b16 %v5470, %v5469
      %v5491 = vpack.c.b16 %v5472, %v5471
      %v5492 = vpack.c.b16 %v5474, %v5473
      %v5493 = vpack.c.b16 %v5476, %v5475
      %v5494 = vpack.c.b16 %v5478, %v5477
      %v5527 = vunpack.c.l.b16 %v5351
      %v5528 = vunpack.c.l.b16 %v5352
      %v5529 = vunpack.c.l.b16 %v5353
      %v5530 = vunpack.c.l.b16 %v5354
      %v5531 = vunpack.c.l.b16 %v5355
      %v5532 = vunpack.c.l.b16 %v5356
      %v5533 = vunpack.c.l.b16 %v5357
      %v5534 = vunpack.c.l.b16 %v5358
      %v5535 = vunpack.c.l.b16 %v5359
      %v5536 = vunpack.c.l.b16 %v5360
      %v5537 = vunpack.c.l.b16 %v5361
      %v5538 = vunpack.c.l.b16 %v5362
      %v5539 = vunpack.c.l.b16 %v5363
      %v5540 = vunpack.c.l.b16 %v5364
      %v5541 = vunpack.c.l.b16 %v5365
      %v5542 = vunpack.c.l.b16 %v5366
      %v5543 = vunpack.c.l.b16 %v5367
      %v5544 = vunpack.c.l.b16 %v5368
      %v5545 = vunpack.c.l.b16 %v5369
      %v5546 = vunpack.c.l.b16 %v5370
      %v5547 = vunpack.c.l.b16 %v5371
      %v5548 = vunpack.c.l.b16 %v5372
      %v5549 = vunpack.c.l.b16 %v5373
      %v5550 = vunpack.c.l.b16 %v5374
      %v5551 = vunpack.c.l.b16 %v5375
      %v5552 = vunpack.c.l.b16 %v5376
      %v5553 = vunpack.c.l.b16 %v5377
      %v5554 = vunpack.c.l.b16 %v5378
      %v5555 = vunpack.c.l.b16 %v5379
      %v5556 = vunpack.c.l.b16 %v5380
      %v5557 = vunpack.c.l.b16 %v5381
      %v5558 = vunpack.c.l.b16 %v5382
      %v5559 = vpack.c.b16 %v5528, %v5527
      %v5560 = vpack.c.b16 %v5530, %v5529
      %v5561 = vpack.c.b16 %v5532, %v5531
      %v5562 = vpack.c.b16 %v5534, %v5533
      %v5563 = vpack.c.b16 %v5536, %v5535
      %v5564 = vpack.c.b16 %v5538, %v5537
      %v5565 = vpack.c.b16 %v5540, %v5539
      %v5566 = vpack.c.b16 %v5542, %v5541
      %v5567 = vpack.c.b16 %v5544, %v5543
      %v5568 = vpack.c.b16 %v5546, %v5545
      %v5569 = vpack.c.b16 %v5548, %v5547
      %v5570 = vpack.c.b16 %v5550, %v5549
      %v5571 = vpack.c.b16 %v5552, %v5551
      %v5572 = vpack.c.b16 %v5554, %v5553
      %v5573 = vpack.c.b16 %v5556, %v5555
      %v5574 = vpack.c.b16 %v5558, %v5557
      %5575 = vrot.lane.b32.xlu0 %v5559, 4
      %v5576 = vpop.permute.xlu0 %5575
      %5577 = vrot.lane.b32.xlu0 %v5560, 4
      %v5578 = vpop.permute.xlu0 %5577
      %5579 = vrot.lane.b32.xlu0 %v5561, 4
      %v5580 = vpop.permute.xlu0 %5579
      %5581 = vrot.lane.b32.xlu0 %v5562, 4
      %v5582 = vpop.permute.xlu0 %5581
      %5583 = vrot.lane.b32.xlu0 %v5563, 4
      %v5584 = vpop.permute.xlu0 %5583
      %5585 = vrot.lane.b32.xlu0 %v5564, 4
      %v5586 = vpop.permute.xlu0 %5585
      %5587 = vrot.lane.b32.xlu0 %v5565, 4
      %v5588 = vpop.permute.xlu0 %5587
      %5589 = vrot.lane.b32.xlu0 %v5566, 4
      %v5590 = vpop.permute.xlu0 %5589
      %5591 = vrot.lane.b32.xlu0 %v5567, 4
      %v5592 = vpop.permute.xlu0 %5591
      %5593 = vrot.lane.b32.xlu0 %v5568, 4
      %v5594 = vpop.permute.xlu0 %5593
      %5595 = vrot.lane.b32.xlu0 %v5569, 4
      %v5596 = vpop.permute.xlu0 %5595
      %5597 = vrot.lane.b32.xlu0 %v5570, 4
      %v5598 = vpop.permute.xlu0 %5597
      %5599 = vrot.lane.b32.xlu0 %v5571, 4
      %v5600 = vpop.permute.xlu0 %5599
      %5601 = vrot.lane.b32.xlu0 %v5572, 4
      %v5602 = vpop.permute.xlu0 %5601
      %5603 = vrot.lane.b32.xlu0 %v5573, 4
      %v5604 = vpop.permute.xlu0 %5603
      %5605 = vrot.lane.b32.xlu0 %v5574, 4
      %v5606 = vpop.permute.xlu0 %5605
      %v5639 = vunpack.c.l.b16 %v5383
      %v5640 = vunpack.c.l.b16 %v5384
      %v5641 = vunpack.c.l.b16 %v5385
      %v5642 = vunpack.c.l.b16 %v5386
      %v5643 = vunpack.c.l.b16 %v5387
      %v5644 = vunpack.c.l.b16 %v5388
      %v5645 = vunpack.c.l.b16 %v5389
      %v5646 = vunpack.c.l.b16 %v5390
      %v5647 = vunpack.c.l.b16 %v5391
      %v5648 = vunpack.c.l.b16 %v5392
      %v5649 = vunpack.c.l.b16 %v5393
      %v5650 = vunpack.c.l.b16 %v5394
      %v5651 = vunpack.c.l.b16 %v5395
      %v5652 = vunpack.c.l.b16 %v5396
      %v5653 = vunpack.c.l.b16 %v5397
      %v5654 = vunpack.c.l.b16 %v5398
      %v5655 = vunpack.c.l.b16 %v5399
      %v5656 = vunpack.c.l.b16 %v5400
      %v5657 = vunpack.c.l.b16 %v5401
      %v5658 = vunpack.c.l.b16 %v5402
      %v5659 = vunpack.c.l.b16 %v5403
      %v5660 = vunpack.c.l.b16 %v5404
      %v5661 = vunpack.c.l.b16 %v5405
      %v5662 = vunpack.c.l.b16 %v5406
      %v5663 = vunpack.c.l.b16 %v5407
      %v5664 = vunpack.c.l.b16 %v5408
      %v5665 = vunpack.c.l.b16 %v5409
      %v5666 = vunpack.c.l.b16 %v5410
      %v5667 = vunpack.c.l.b16 %v5411
      %v5668 = vunpack.c.l.b16 %v5412
      %v5669 = vunpack.c.l.b16 %v5413
      %v5670 = vunpack.c.l.b16 %v5414
      %v5671 = vpack.c.b16 %v5640, %v5639
      %v5672 = vpack.c.b16 %v5642, %v5641
      %v5673 = vpack.c.b16 %v5644, %v5643
      %v5674 = vpack.c.b16 %v5646, %v5645
      %v5675 = vpack.c.b16 %v5648, %v5647
      %v5676 = vpack.c.b16 %v5650, %v5649
      %v5677 = vpack.c.b16 %v5652, %v5651
      %v5678 = vpack.c.b16 %v5654, %v5653
      %v5679 = vpack.c.b16 %v5656, %v5655
      %v5680 = vpack.c.b16 %v5658, %v5657
      %v5681 = vpack.c.b16 %v5660, %v5659
      %v5682 = vpack.c.b16 %v5662, %v5661
      %v5683 = vpack.c.b16 %v5664, %v5663
      %v5684 = vpack.c.b16 %v5666, %v5665
      %v5685 = vpack.c.b16 %v5668, %v5667
      %v5686 = vpack.c.b16 %v5670, %v5669
      %5687 = vrot.lane.b32.xlu0 %v5671, 8
      %v5688 = vpop.permute.xlu0 %5687
      %5689 = vrot.lane.b32.xlu0 %v5672, 8
      %v5690 = vpop.permute.xlu0 %5689
      %5691 = vrot.lane.b32.xlu0 %v5673, 8
      %v5692 = vpop.permute.xlu0 %5691
      %5693 = vrot.lane.b32.xlu0 %v5674, 8
      %v5694 = vpop.permute.xlu0 %5693
      %5695 = vrot.lane.b32.xlu0 %v5675, 8
      %v5696 = vpop.permute.xlu0 %5695
      %5697 = vrot.lane.b32.xlu0 %v5676, 8
      %v5698 = vpop.permute.xlu0 %5697
      %5699 = vrot.lane.b32.xlu0 %v5677, 8
      %v5700 = vpop.permute.xlu0 %5699
      %5701 = vrot.lane.b32.xlu0 %v5678, 8
      %v5702 = vpop.permute.xlu0 %5701
      %5703 = vrot.lane.b32.xlu0 %v5679, 8
      %v5704 = vpop.permute.xlu0 %5703
      %5705 = vrot.lane.b32.xlu0 %v5680, 8
      %v5706 = vpop.permute.xlu0 %5705
      %5707 = vrot.lane.b32.xlu0 %v5681, 8
      %v5708 = vpop.permute.xlu0 %5707
      %5709 = vrot.lane.b32.xlu0 %v5682, 8
      %v5710 = vpop.permute.xlu0 %5709
      %5711 = vrot.lane.b32.xlu0 %v5683, 8
      %v5712 = vpop.permute.xlu0 %5711
      %5713 = vrot.lane.b32.xlu0 %v5684, 8
      %v5714 = vpop.permute.xlu0 %5713
      %5715 = vrot.lane.b32.xlu0 %v5685, 8
      %v5716 = vpop.permute.xlu0 %5715
      %5717 = vrot.lane.b32.xlu0 %v5686, 8
      %v5718 = vpop.permute.xlu0 %5717
      %v5721 = vsel %vm1491, %v5479, %v5576
      %v5724 = vsel %vm1491, %v5480, %v5578
      %v5727 = vsel %vm1491, %v5481, %v5580
      %v5730 = vsel %vm1491, %v5482, %v5582
      %v5733 = vsel %vm1491, %v5483, %v5584
      %v5736 = vsel %vm1491, %v5484, %v5586
      %v5739 = vsel %vm1491, %v5485, %v5588
      %v5742 = vsel %vm1491, %v5486, %v5590
      %v5745 = vsel %vm1491, %v5487, %v5592
      %v5748 = vsel %vm1491, %v5488, %v5594
      %v5751 = vsel %vm1491, %v5489, %v5596
      %v5754 = vsel %vm1491, %v5490, %v5598
      %v5757 = vsel %vm1491, %v5491, %v5600
      %v5760 = vsel %vm1491, %v5492, %v5602
      %v5763 = vsel %vm1491, %v5493, %v5604
      %v5766 = vsel %vm1491, %v5494, %v5606
      %v5768 = vsel %vm1540, %v5721, %v5688
      %v5770 = vsel %vm1540, %v5724, %v5690
      %v5772 = vsel %vm1540, %v5727, %v5692
      %v5774 = vsel %vm1540, %v5730, %v5694
      %v5776 = vsel %vm1540, %v5733, %v5696
      %v5778 = vsel %vm1540, %v5736, %v5698
      %v5780 = vsel %vm1540, %v5739, %v5700
      %v5782 = vsel %vm1540, %v5742, %v5702
      %v5784 = vsel %vm1540, %v5745, %v5704
      %v5786 = vsel %vm1540, %v5748, %v5706
      %v5788 = vsel %vm1540, %v5751, %v5708
      %v5790 = vsel %vm1540, %v5754, %v5710
      %v5792 = vsel %vm1540, %v5757, %v5712
      %v5794 = vsel %vm1540, %v5760, %v5714
      %v5796 = vsel %vm1540, %v5763, %v5716
      %v5798 = vsel %vm1540, %v5766, %v5718
      %v5799 = vld [vmem:[%s4] sm:$0xf]
      %v5800 = vld [vmem:[%s4 + $0x4] sm:$0x3]
      %v5801 = vld [vmem:[#allocation2 + $0x8] sm:$0x1]
      %v5802 = vld [vmem:[#allocation2 + $0x14] sm:$0x1]
      %v5803 = vld [vmem:[#allocation2 + $0x20] sm:$0x1]
      %v5804 = vld [vmem:[#allocation2 + $0x2c] sm:$0x1]
      %v5805 = vld [vmem:[#allocation2 + $0x38] sm:$0x1]
      %v5806 = vld [vmem:[#allocation2 + $0x44] sm:$0x1]
      %v5807 = vld [vmem:[#allocation2 + $0x50] sm:$0x1]
      %v5808 = vld [vmem:[#allocation2 + $0x5c] sm:$0x1]
      %v5809 = vld [vmem:[#allocation2 + $0x68] sm:$0x1]
      %v5810 = vld [vmem:[#allocation2 + $0x74] sm:$0x1]
      %v5811 = vld [vmem:[#allocation2 + $0x80] sm:$0x1]
      %v5812 = vld [vmem:[#allocation2 + $0x8c] sm:$0x1]
      %v5813 = vld [vmem:[#allocation2 + $0x98] sm:$0x1]
      %v5814 = vld [vmem:[#allocation2 + $0xa4] sm:$0x1]
      %v5815 = vld [vmem:[#allocation2 + $0xb0] sm:$0x1]
      %v5816 = vld [vmem:[#allocation2 + $0xbc] sm:$0x1]
      %v5818 = vshrl.u32 %v5319, 16
      %v5820 = vrot.slane %v5818, 4
      %v5821 = vshll.u32 %v5319, 16
      %v5823 = vrot.slane %v5821, 5
      %v5824 = vor.u32 %v5820, %v5823
      %v5825 = vrot.slane %v5824, 4
      %v5827 = vshll.u32 %v5320, 16
      %v5829 = vrot.slane %v5827, 5
      %v5830 = vsel %vm1593, %v5825, %v5829
      %v5831 = vshrl.u32 %v5320, 16
      %v5833 = vrot.slane %v5831, 4
      %v5834 = vor.u32 %v5833, %v5829
      %v5835 = vrot.slane %v5834, 4
      %v5837 = vshll.u32 %v5801, 16
      %v5839 = vrot.slane %v5837, 5
      %v5840 = vsel %vm1593, %v5835, %v5839
      %v5842 = vshrl.u32 %v5321, 16
      %v5844 = vrot.slane %v5842, 4
      %v5845 = vshll.u32 %v5321, 16
      %v5847 = vrot.slane %v5845, 5
      %v5848 = vor.u32 %v5844, %v5847
      %v5849 = vrot.slane %v5848, 4
      %v5851 = vshll.u32 %v5322, 16
      %v5853 = vrot.slane %v5851, 5
      %v5854 = vsel %vm1593, %v5849, %v5853
      %v5855 = vshrl.u32 %v5322, 16
      %v5857 = vrot.slane %v5855, 4
      %v5858 = vor.u32 %v5857, %v5853
      %v5859 = vrot.slane %v5858, 4
      %v5861 = vshll.u32 %v5802, 16
      %v5863 = vrot.slane %v5861, 5
      %v5864 = vsel %vm1593, %v5859, %v5863
      %v5866 = vshrl.u32 %v5323, 16
      %v5868 = vrot.slane %v5866, 4
      %v5869 = vshll.u32 %v5323, 16
      %v5871 = vrot.slane %v5869, 5
      %v5872 = vor.u32 %v5868, %v5871
      %v5873 = vrot.slane %v5872, 4
      %v5875 = vshll.u32 %v5324, 16
      %v5877 = vrot.slane %v5875, 5
      %v5878 = vsel %vm1593, %v5873, %v5877
      %v5879 = vshrl.u32 %v5324, 16
      %v5881 = vrot.slane %v5879, 4
      %v5882 = vor.u32 %v5881, %v5877
      %v5883 = vrot.slane %v5882, 4
      %v5885 = vshll.u32 %v5803, 16
      %v5887 = vrot.slane %v5885, 5
      %v5888 = vsel %vm1593, %v5883, %v5887
      %v5890 = vshrl.u32 %v5325, 16
      %v5892 = vrot.slane %v5890, 4
      %v5893 = vshll.u32 %v5325, 16
      %v5895 = vrot.slane %v5893, 5
      %v5896 = vor.u32 %v5892, %v5895
      %v5897 = vrot.slane %v5896, 4
      %v5899 = vshll.u32 %v5326, 16
      %v5901 = vrot.slane %v5899, 5
      %v5902 = vsel %vm1593, %v5897, %v5901
      %v5903 = vshrl.u32 %v5326, 16
      %v5905 = vrot.slane %v5903, 4
      %v5906 = vor.u32 %v5905, %v5901
      %v5907 = vrot.slane %v5906, 4
      %v5909 = vshll.u32 %v5804, 16
      %v5911 = vrot.slane %v5909, 5
      %v5912 = vsel %vm1593, %v5907, %v5911
      %v5914 = vshrl.u32 %v5327, 16
      %v5916 = vrot.slane %v5914, 4
      %v5917 = vshll.u32 %v5327, 16
      %v5919 = vrot.slane %v5917, 5
      %v5920 = vor.u32 %v5916, %v5919
      %v5921 = vrot.slane %v5920, 4
      %v5923 = vshll.u32 %v5328, 16
      %v5925 = vrot.slane %v5923, 5
      %v5926 = vsel %vm1593, %v5921, %v5925
      %v5927 = vshrl.u32 %v5328, 16
      %v5929 = vrot.slane %v5927, 4
      %v5930 = vor.u32 %v5929, %v5925
      %v5931 = vrot.slane %v5930, 4
      %v5933 = vshll.u32 %v5805, 16
      %v5935 = vrot.slane %v5933, 5
      %v5936 = vsel %vm1593, %v5931, %v5935
      %v5938 = vshrl.u32 %v5329, 16
      %v5940 = vrot.slane %v5938, 4
      %v5941 = vshll.u32 %v5329, 16
      %v5943 = vrot.slane %v5941, 5
      %v5944 = vor.u32 %v5940, %v5943
      %v5945 = vrot.slane %v5944, 4
      %v5947 = vshll.u32 %v5330, 16
      %v5949 = vrot.slane %v5947, 5
      %v5950 = vsel %vm1593, %v5945, %v5949
      %v5951 = vshrl.u32 %v5330, 16
      %v5953 = vrot.slane %v5951, 4
      %v5954 = vor.u32 %v5953, %v5949
      %v5955 = vrot.slane %v5954, 4
      %v5957 = vshll.u32 %v5806, 16
      %v5959 = vrot.slane %v5957, 5
      %v5960 = vsel %vm1593, %v5955, %v5959
      %v5962 = vshrl.u32 %v5331, 16
      %v5964 = vrot.slane %v5962, 4
      %v5965 = vshll.u32 %v5331, 16
      %v5967 = vrot.slane %v5965, 5
      %v5968 = vor.u32 %v5964, %v5967
      %v5969 = vrot.slane %v5968, 4
      %v5971 = vshll.u32 %v5332, 16
      %v5973 = vrot.slane %v5971, 5
      %v5974 = vsel %vm1593, %v5969, %v5973
      %v5975 = vshrl.u32 %v5332, 16
      %v5977 = vrot.slane %v5975, 4
      %v5978 = vor.u32 %v5977, %v5973
      %v5979 = vrot.slane %v5978, 4
      %v5981 = vshll.u32 %v5807, 16
      %v5983 = vrot.slane %v5981, 5
      %v5984 = vsel %vm1593, %v5979, %v5983
      %v5986 = vshrl.u32 %v5333, 16
      %v5988 = vrot.slane %v5986, 4
      %v5989 = vshll.u32 %v5333, 16
      %v5991 = vrot.slane %v5989, 5
      %v5992 = vor.u32 %v5988, %v5991
      %v5993 = vrot.slane %v5992, 4
      %v5995 = vshll.u32 %v5334, 16
      %v5997 = vrot.slane %v5995, 5
      %v5998 = vsel %vm1593, %v5993, %v5997
      %v5999 = vshrl.u32 %v5334, 16
      %v6001 = vrot.slane %v5999, 4
      %v6002 = vor.u32 %v6001, %v5997
      %v6003 = vrot.slane %v6002, 4
      %v6005 = vshll.u32 %v5808, 16
      %v6007 = vrot.slane %v6005, 5
      %v6008 = vsel %vm1593, %v6003, %v6007
      %v6010 = vshrl.u32 %v5335, 16
      %v6012 = vrot.slane %v6010, 4
      %v6013 = vshll.u32 %v5335, 16
      %v6015 = vrot.slane %v6013, 5
      %v6016 = vor.u32 %v6012, %v6015
      %v6017 = vrot.slane %v6016, 4
      %v6019 = vshll.u32 %v5336, 16
      %v6021 = vrot.slane %v6019, 5
      %v6022 = vsel %vm1593, %v6017, %v6021
      %v6023 = vshrl.u32 %v5336, 16
      %v6025 = vrot.slane %v6023, 4
      %v6026 = vor.u32 %v6025, %v6021
      %v6027 = vrot.slane %v6026, 4
      %v6029 = vshll.u32 %v5809, 16
      %v6031 = vrot.slane %v6029, 5
      %v6032 = vsel %vm1593, %v6027, %v6031
      %v6034 = vshrl.u32 %v5337, 16
      %v6036 = vrot.slane %v6034, 4
      %v6037 = vshll.u32 %v5337, 16
      %v6039 = vrot.slane %v6037, 5
      %v6040 = vor.u32 %v6036, %v6039
      %v6041 = vrot.slane %v6040, 4
      %v6043 = vshll.u32 %v5338, 16
      %v6045 = vrot.slane %v6043, 5
      %v6046 = vsel %vm1593, %v6041, %v6045
      %v6047 = vshrl.u32 %v5338, 16
      %v6049 = vrot.slane %v6047, 4
      %v6050 = vor.u32 %v6049, %v6045
      %v6051 = vrot.slane %v6050, 4
      %v6053 = vshll.u32 %v5810, 16
      %v6055 = vrot.slane %v6053, 5
      %v6056 = vsel %vm1593, %v6051, %v6055
      %v6058 = vshrl.u32 %v5339, 16
      %v6060 = vrot.slane %v6058, 4
      %v6061 = vshll.u32 %v5339, 16
      %v6063 = vrot.slane %v6061, 5
      %v6064 = vor.u32 %v6060, %v6063
      %v6065 = vrot.slane %v6064, 4
      %v6067 = vshll.u32 %v5340, 16
      %v6069 = vrot.slane %v6067, 5
      %v6070 = vsel %vm1593, %v6065, %v6069
      %v6071 = vshrl.u32 %v5340, 16
      %v6073 = vrot.slane %v6071, 4
      %v6074 = vor.u32 %v6073, %v6069
      %v6075 = vrot.slane %v6074, 4
      %v6077 = vshll.u32 %v5811, 16
      %v6079 = vrot.slane %v6077, 5
      %v6080 = vsel %vm1593, %v6075, %v6079
      %v6082 = vshrl.u32 %v5341, 16
      %v6084 = vrot.slane %v6082, 4
      %v6085 = vshll.u32 %v5341, 16
      %v6087 = vrot.slane %v6085, 5
      %v6088 = vor.u32 %v6084, %v6087
      %v6089 = vrot.slane %v6088, 4
      %v6091 = vshll.u32 %v5342, 16
      %v6093 = vrot.slane %v6091, 5
      %v6094 = vsel %vm1593, %v6089, %v6093
      %v6095 = vshrl.u32 %v5342, 16
      %v6097 = vrot.slane %v6095, 4
      %v6098 = vor.u32 %v6097, %v6093
      %v6099 = vrot.slane %v6098, 4
      %v6101 = vshll.u32 %v5812, 16
      %v6103 = vrot.slane %v6101, 5
      %v6104 = vsel %vm1593, %v6099, %v6103
      %v6106 = vshrl.u32 %v5343, 16
      %v6108 = vrot.slane %v6106, 4
      %v6109 = vshll.u32 %v5343, 16
      %v6111 = vrot.slane %v6109, 5
      %v6112 = vor.u32 %v6108, %v6111
      %v6113 = vrot.slane %v6112, 4
      %v6115 = vshll.u32 %v5344, 16
      %v6117 = vrot.slane %v6115, 5
      %v6118 = vsel %vm1593, %v6113, %v6117
      %v6119 = vshrl.u32 %v5344, 16
      %v6121 = vrot.slane %v6119, 4
      %v6122 = vor.u32 %v6121, %v6117
      %v6123 = vrot.slane %v6122, 4
      %v6125 = vshll.u32 %v5813, 16
      %v6127 = vrot.slane %v6125, 5
      %v6128 = vsel %vm1593, %v6123, %v6127
      %v6130 = vshrl.u32 %v5345, 16
      %v6132 = vrot.slane %v6130, 4
      %v6133 = vshll.u32 %v5345, 16
      %v6135 = vrot.slane %v6133, 5
      %v6136 = vor.u32 %v6132, %v6135
      %v6137 = vrot.slane %v6136, 4
      %v6139 = vshll.u32 %v5346, 16
      %v6141 = vrot.slane %v6139, 5
      %v6142 = vsel %vm1593, %v6137, %v6141
      %v6143 = vshrl.u32 %v5346, 16
      %v6145 = vrot.slane %v6143, 4
      %v6146 = vor.u32 %v6145, %v6141
      %v6147 = vrot.slane %v6146, 4
      %v6149 = vshll.u32 %v5814, 16
      %v6151 = vrot.slane %v6149, 5
      %v6152 = vsel %vm1593, %v6147, %v6151
      %v6154 = vshrl.u32 %v5347, 16
      %v6156 = vrot.slane %v6154, 4
      %v6157 = vshll.u32 %v5347, 16
      %v6159 = vrot.slane %v6157, 5
      %v6160 = vor.u32 %v6156, %v6159
      %v6161 = vrot.slane %v6160, 4
      %v6163 = vshll.u32 %v5348, 16
      %v6165 = vrot.slane %v6163, 5
      %v6166 = vsel %vm1593, %v6161, %v6165
      %v6167 = vshrl.u32 %v5348, 16
      %v6169 = vrot.slane %v6167, 4
      %v6170 = vor.u32 %v6169, %v6165
      %v6171 = vrot.slane %v6170, 4
      %v6173 = vshll.u32 %v5815, 16
      %v6175 = vrot.slane %v6173, 5
      %v6176 = vsel %vm1593, %v6171, %v6175
      %v6178 = vshrl.u32 %v5349, 16
      %v6180 = vrot.slane %v6178, 4
      %v6181 = vshll.u32 %v5349, 16
      %v6183 = vrot.slane %v6181, 5
      %v6184 = vor.u32 %v6180, %v6183
      %v6185 = vrot.slane %v6184, 4
      %v6187 = vshll.u32 %v5350, 16
      %v6189 = vrot.slane %v6187, 5
      %v6190 = vsel %vm1593, %v6185, %v6189
      %v6191 = vshrl.u32 %v5350, 16
      %v6193 = vrot.slane %v6191, 4
      %v6194 = vor.u32 %v6193, %v6189
      %v6195 = vrot.slane %v6194, 4
      %v6197 = vshll.u32 %v5816, 16
      %v6199 = vrot.slane %v6197, 5
      %v6200 = vsel %vm1593, %v6195, %v6199
      %v6201 = vld [vmem:[%s667 + $0x8] sm:$0x1]
      %v6202 = vld [vmem:[%s667 + $0x14] sm:$0x1]
      %v6203 = vld [vmem:[%s667 + $0x20] sm:$0x1]
      %v6204 = vld [vmem:[%s667 + $0x2c] sm:$0x1]
      %v6205 = vld [vmem:[%s667 + $0x38] sm:$0x1]
      %v6206 = vld [vmem:[%s667 + $0x44] sm:$0x1]
      %v6207 = vld [vmem:[%s667 + $0x50] sm:$0x1]
      %v6208 = vld [vmem:[%s667 + $0x5c] sm:$0x1]
      %v6209 = vld [vmem:[%s667 + $0x68] sm:$0x1]
      %v6210 = vld [vmem:[%s667 + $0x74] sm:$0x1]
      %v6211 = vld [vmem:[%s667 + $0x80] sm:$0x1]
      %v6212 = vld [vmem:[%s667 + $0x8c] sm:$0x1]
      %v6213 = vld [vmem:[%s667 + $0x98] sm:$0x1]
      %v6214 = vld [vmem:[%s667 + $0xa4] sm:$0x1]
      %v6215 = vld [vmem:[%s667 + $0xb0] sm:$0x1]
      %v6216 = vld [vmem:[%s667 + $0xbc] sm:$0x1]
      %v6218 = vshrl.u32 %v5351, 16
      %v6220 = vrot.slane %v6218, 4
      %v6221 = vshll.u32 %v5351, 16
      %v6223 = vrot.slane %v6221, 5
      %v6224 = vor.u32 %v6220, %v6223
      %v6225 = vrot.slane %v6224, 4
      %v6227 = vshll.u32 %v5352, 16
      %v6229 = vrot.slane %v6227, 5
      %v6230 = vsel %vm1593, %v6225, %v6229
      %v6231 = vshrl.u32 %v5352, 16
      %v6233 = vrot.slane %v6231, 4
      %v6234 = vor.u32 %v6233, %v6229
      %v6235 = vrot.slane %v6234, 4
      %v6237 = vshll.u32 %v6201, 16
      %v6239 = vrot.slane %v6237, 5
      %v6240 = vsel %vm1593, %v6235, %v6239
      %v6242 = vshrl.u32 %v5353, 16
      %v6244 = vrot.slane %v6242, 4
      %v6245 = vshll.u32 %v5353, 16
      %v6247 = vrot.slane %v6245, 5
      %v6248 = vor.u32 %v6244, %v6247
      %v6249 = vrot.slane %v6248, 4
      %v6251 = vshll.u32 %v5354, 16
      %v6253 = vrot.slane %v6251, 5
      %v6254 = vsel %vm1593, %v6249, %v6253
      %v6255 = vshrl.u32 %v5354, 16
      %v6257 = vrot.slane %v6255, 4
      %v6258 = vor.u32 %v6257, %v6253
      %v6259 = vrot.slane %v6258, 4
      %v6261 = vshll.u32 %v6202, 16
      %v6263 = vrot.slane %v6261, 5
      %v6264 = vsel %vm1593, %v6259, %v6263
      %v6266 = vshrl.u32 %v5355, 16
      %v6268 = vrot.slane %v6266, 4
      %v6269 = vshll.u32 %v5355, 16
      %v6271 = vrot.slane %v6269, 5
      %v6272 = vor.u32 %v6268, %v6271
      %v6273 = vrot.slane %v6272, 4
      %v6275 = vshll.u32 %v5356, 16
      %v6277 = vrot.slane %v6275, 5
      %v6278 = vsel %vm1593, %v6273, %v6277
      %v6279 = vshrl.u32 %v5356, 16
      %v6281 = vrot.slane %v6279, 4
      %v6282 = vor.u32 %v6281, %v6277
      %v6283 = vrot.slane %v6282, 4
      %v6285 = vshll.u32 %v6203, 16
      %v6287 = vrot.slane %v6285, 5
      %v6288 = vsel %vm1593, %v6283, %v6287
      %v6290 = vshrl.u32 %v5357, 16
      %v6292 = vrot.slane %v6290, 4
      %v6293 = vshll.u32 %v5357, 16
      %v6295 = vrot.slane %v6293, 5
      %v6296 = vor.u32 %v6292, %v6295
      %v6297 = vrot.slane %v6296, 4
      %v6299 = vshll.u32 %v5358, 16
      %v6301 = vrot.slane %v6299, 5
      %v6302 = vsel %vm1593, %v6297, %v6301
      %v6303 = vshrl.u32 %v5358, 16
      %v6305 = vrot.slane %v6303, 4
      %v6306 = vor.u32 %v6305, %v6301
      %v6307 = vrot.slane %v6306, 4
      %v6309 = vshll.u32 %v6204, 16
      %v6311 = vrot.slane %v6309, 5
      %v6312 = vsel %vm1593, %v6307, %v6311
      %v6314 = vshrl.u32 %v5359, 16
      %v6316 = vrot.slane %v6314, 4
      %v6317 = vshll.u32 %v5359, 16
      %v6319 = vrot.slane %v6317, 5
      %v6320 = vor.u32 %v6316, %v6319
      %v6321 = vrot.slane %v6320, 4
      %v6323 = vshll.u32 %v5360, 16
      %v6325 = vrot.slane %v6323, 5
      %v6326 = vsel %vm1593, %v6321, %v6325
      %v6327 = vshrl.u32 %v5360, 16
      %v6329 = vrot.slane %v6327, 4
      %v6330 = vor.u32 %v6329, %v6325
      %v6331 = vrot.slane %v6330, 4
      %v6333 = vshll.u32 %v6205, 16
      %v6335 = vrot.slane %v6333, 5
      %v6336 = vsel %vm1593, %v6331, %v6335
      %v6338 = vshrl.u32 %v5361, 16
      %v6340 = vrot.slane %v6338, 4
      %v6341 = vshll.u32 %v5361, 16
      %v6343 = vrot.slane %v6341, 5
      %v6344 = vor.u32 %v6340, %v6343
      %v6345 = vrot.slane %v6344, 4
      %v6347 = vshll.u32 %v5362, 16
      %v6349 = vrot.slane %v6347, 5
      %v6350 = vsel %vm1593, %v6345, %v6349
      %v6351 = vshrl.u32 %v5362, 16
      %v6353 = vrot.slane %v6351, 4
      %v6354 = vor.u32 %v6353, %v6349
      %v6355 = vrot.slane %v6354, 4
      %v6357 = vshll.u32 %v6206, 16
      %v6359 = vrot.slane %v6357, 5
      %v6360 = vsel %vm1593, %v6355, %v6359
      %v6362 = vshrl.u32 %v5363, 16
      %v6364 = vrot.slane %v6362, 4
      %v6365 = vshll.u32 %v5363, 16
      %v6367 = vrot.slane %v6365, 5
      %v6368 = vor.u32 %v6364, %v6367
      %v6369 = vrot.slane %v6368, 4
      %v6371 = vshll.u32 %v5364, 16
      %v6373 = vrot.slane %v6371, 5
      %v6374 = vsel %vm1593, %v6369, %v6373
      %v6375 = vshrl.u32 %v5364, 16
      %v6377 = vrot.slane %v6375, 4
      %v6378 = vor.u32 %v6377, %v6373
      %v6379 = vrot.slane %v6378, 4
      %v6381 = vshll.u32 %v6207, 16
      %v6383 = vrot.slane %v6381, 5
      %v6384 = vsel %vm1593, %v6379, %v6383
      %v6386 = vshrl.u32 %v5365, 16
      %v6388 = vrot.slane %v6386, 4
      %v6389 = vshll.u32 %v5365, 16
      %v6391 = vrot.slane %v6389, 5
      %v6392 = vor.u32 %v6388, %v6391
      %v6393 = vrot.slane %v6392, 4
      %v6395 = vshll.u32 %v5366, 16
      %v6397 = vrot.slane %v6395, 5
      %v6398 = vsel %vm1593, %v6393, %v6397
      %v6399 = vshrl.u32 %v5366, 16
      %v6401 = vrot.slane %v6399, 4
      %v6402 = vor.u32 %v6401, %v6397
      %v6403 = vrot.slane %v6402, 4
      %v6405 = vshll.u32 %v6208, 16
      %v6407 = vrot.slane %v6405, 5
      %v6408 = vsel %vm1593, %v6403, %v6407
      %v6410 = vshrl.u32 %v5367, 16
      %v6412 = vrot.slane %v6410, 4
      %v6413 = vshll.u32 %v5367, 16
      %v6415 = vrot.slane %v6413, 5
      %v6416 = vor.u32 %v6412, %v6415
      %v6417 = vrot.slane %v6416, 4
      %v6419 = vshll.u32 %v5368, 16
      %v6421 = vrot.slane %v6419, 5
      %v6422 = vsel %vm1593, %v6417, %v6421
      %v6423 = vshrl.u32 %v5368, 16
      %v6425 = vrot.slane %v6423, 4
      %v6426 = vor.u32 %v6425, %v6421
      %v6427 = vrot.slane %v6426, 4
      %v6429 = vshll.u32 %v6209, 16
      %v6431 = vrot.slane %v6429, 5
      %v6432 = vsel %vm1593, %v6427, %v6431
      %v6434 = vshrl.u32 %v5369, 16
      %v6436 = vrot.slane %v6434, 4
      %v6437 = vshll.u32 %v5369, 16
      %v6439 = vrot.slane %v6437, 5
      %v6440 = vor.u32 %v6436, %v6439
      %v6441 = vrot.slane %v6440, 4
      %v6443 = vshll.u32 %v5370, 16
      %v6445 = vrot.slane %v6443, 5
      %v6446 = vsel %vm1593, %v6441, %v6445
      %v6447 = vshrl.u32 %v5370, 16
      %v6449 = vrot.slane %v6447, 4
      %v6450 = vor.u32 %v6449, %v6445
      %v6451 = vrot.slane %v6450, 4
      %v6453 = vshll.u32 %v6210, 16
      %v6455 = vrot.slane %v6453, 5
      %v6456 = vsel %vm1593, %v6451, %v6455
      %v6458 = vshrl.u32 %v5371, 16
      %v6460 = vrot.slane %v6458, 4
      %v6461 = vshll.u32 %v5371, 16
      %v6463 = vrot.slane %v6461, 5
      %v6464 = vor.u32 %v6460, %v6463
      %v6465 = vrot.slane %v6464, 4
      %v6467 = vshll.u32 %v5372, 16
      %v6469 = vrot.slane %v6467, 5
      %v6470 = vsel %vm1593, %v6465, %v6469
      %v6471 = vshrl.u32 %v5372, 16
      %v6473 = vrot.slane %v6471, 4
      %v6474 = vor.u32 %v6473, %v6469
      %v6475 = vrot.slane %v6474, 4
      %v6477 = vshll.u32 %v6211, 16
      %v6479 = vrot.slane %v6477, 5
      %v6480 = vsel %vm1593, %v6475, %v6479
      %v6482 = vshrl.u32 %v5373, 16
      %v6484 = vrot.slane %v6482, 4
      %v6485 = vshll.u32 %v5373, 16
      %v6487 = vrot.slane %v6485, 5
      %v6488 = vor.u32 %v6484, %v6487
      %v6489 = vrot.slane %v6488, 4
      %v6491 = vshll.u32 %v5374, 16
      %v6493 = vrot.slane %v6491, 5
      %v6494 = vsel %vm1593, %v6489, %v6493
      %v6495 = vshrl.u32 %v5374, 16
      %v6497 = vrot.slane %v6495, 4
      %v6498 = vor.u32 %v6497, %v6493
      %v6499 = vrot.slane %v6498, 4
      %v6501 = vshll.u32 %v6212, 16
      %v6503 = vrot.slane %v6501, 5
      %v6504 = vsel %vm1593, %v6499, %v6503
      %v6506 = vshrl.u32 %v5375, 16
      %v6508 = vrot.slane %v6506, 4
      %v6509 = vshll.u32 %v5375, 16
      %v6511 = vrot.slane %v6509, 5
      %v6512 = vor.u32 %v6508, %v6511
      %v6513 = vrot.slane %v6512, 4
      %v6515 = vshll.u32 %v5376, 16
      %v6517 = vrot.slane %v6515, 5
      %v6518 = vsel %vm1593, %v6513, %v6517
      %v6519 = vshrl.u32 %v5376, 16
      %v6521 = vrot.slane %v6519, 4
      %v6522 = vor.u32 %v6521, %v6517
      %v6523 = vrot.slane %v6522, 4
      %v6525 = vshll.u32 %v6213, 16
      %v6527 = vrot.slane %v6525, 5
      %v6528 = vsel %vm1593, %v6523, %v6527
      %v6530 = vshrl.u32 %v5377, 16
      %v6532 = vrot.slane %v6530, 4
      %v6533 = vshll.u32 %v5377, 16
      %v6535 = vrot.slane %v6533, 5
      %v6536 = vor.u32 %v6532, %v6535
      %v6537 = vrot.slane %v6536, 4
      %v6539 = vshll.u32 %v5378, 16
      %v6541 = vrot.slane %v6539, 5
      %v6542 = vsel %vm1593, %v6537, %v6541
      %v6543 = vshrl.u32 %v5378, 16
      %v6545 = vrot.slane %v6543, 4
      %v6546 = vor.u32 %v6545, %v6541
      %v6547 = vrot.slane %v6546, 4
      %v6549 = vshll.u32 %v6214, 16
      %v6551 = vrot.slane %v6549, 5
      %v6552 = vsel %vm1593, %v6547, %v6551
      %v6554 = vshrl.u32 %v5379, 16
      %v6556 = vrot.slane %v6554, 4
      %v6557 = vshll.u32 %v5379, 16
      %v6559 = vrot.slane %v6557, 5
      %v6560 = vor.u32 %v6556, %v6559
      %v6561 = vrot.slane %v6560, 4
      %v6563 = vshll.u32 %v5380, 16
      %v6565 = vrot.slane %v6563, 5
      %v6566 = vsel %vm1593, %v6561, %v6565
      %v6567 = vshrl.u32 %v5380, 16
      %v6569 = vrot.slane %v6567, 4
      %v6570 = vor.u32 %v6569, %v6565
      %v6571 = vrot.slane %v6570, 4
      %v6573 = vshll.u32 %v6215, 16
      %v6575 = vrot.slane %v6573, 5
      %v6576 = vsel %vm1593, %v6571, %v6575
      %v6578 = vshrl.u32 %v5381, 16
      %v6580 = vrot.slane %v6578, 4
      %v6581 = vshll.u32 %v5381, 16
      %v6583 = vrot.slane %v6581, 5
      %v6584 = vor.u32 %v6580, %v6583
      %v6585 = vrot.slane %v6584, 4
      %v6587 = vshll.u32 %v5382, 16
      %v6589 = vrot.slane %v6587, 5
      %v6590 = vsel %vm1593, %v6585, %v6589
      %v6591 = vshrl.u32 %v5382, 16
      %v6593 = vrot.slane %v6591, 4
      %v6594 = vor.u32 %v6593, %v6589
      %v6595 = vrot.slane %v6594, 4
      %v6597 = vshll.u32 %v6216, 16
      %v6599 = vrot.slane %v6597, 5
      %v6600 = vsel %vm1593, %v6595, %v6599
      %v6601 = vld [vmem:[%s1154 + $0x8] sm:$0x1]
      %v6602 = vld [vmem:[%s1154 + $0x14] sm:$0x1]
      %v6603 = vld [vmem:[%s1154 + $0x20] sm:$0x1]
      %v6604 = vld [vmem:[%s1154 + $0x2c] sm:$0x1]
      %v6605 = vld [vmem:[%s1154 + $0x38] sm:$0x1]
      %v6606 = vld [vmem:[%s1154 + $0x44] sm:$0x1]
      %v6607 = vld [vmem:[%s1154 + $0x50] sm:$0x1]
      %v6608 = vld [vmem:[%s1154 + $0x5c] sm:$0x1]
      %v6609 = vld [vmem:[%s1154 + $0x68] sm:$0x1]
      %v6610 = vld [vmem:[%s1154 + $0x74] sm:$0x1]
      %v6611 = vld [vmem:[%s1154 + $0x80] sm:$0x1]
      %v6612 = vld [vmem:[%s1154 + $0x8c] sm:$0x1]
      %v6613 = vld [vmem:[%s1154 + $0x98] sm:$0x1]
      %v6614 = vld [vmem:[%s1154 + $0xa4] sm:$0x1]
      %v6615 = vld [vmem:[%s1154 + $0xb0] sm:$0x1]
      %v6616 = vld [vmem:[%s1154 + $0xbc] sm:$0x1]
      %v6618 = vshrl.u32 %v5383, 16
      %v6620 = vrot.slane %v6618, 4
      %v6621 = vshll.u32 %v5383, 16
      %v6623 = vrot.slane %v6621, 5
      %v6624 = vor.u32 %v6620, %v6623
      %v6625 = vrot.slane %v6624, 4
      %v6627 = vshll.u32 %v5384, 16
      %v6629 = vrot.slane %v6627, 5
      %v6630 = vsel %vm1593, %v6625, %v6629
      %v6631 = vshrl.u32 %v5384, 16
      %v6633 = vrot.slane %v6631, 4
      %v6634 = vor.u32 %v6633, %v6629
      %v6635 = vrot.slane %v6634, 4
      %v6637 = vshll.u32 %v6601, 16
      %v6639 = vrot.slane %v6637, 5
      %v6640 = vsel %vm1593, %v6635, %v6639
      %v6642 = vshrl.u32 %v5385, 16
      %v6644 = vrot.slane %v6642, 4
      %v6645 = vshll.u32 %v5385, 16
      %v6647 = vrot.slane %v6645, 5
      %v6648 = vor.u32 %v6644, %v6647
      %v6649 = vrot.slane %v6648, 4
      %v6651 = vshll.u32 %v5386, 16
      %v6653 = vrot.slane %v6651, 5
      %v6654 = vsel %vm1593, %v6649, %v6653
      %v6655 = vshrl.u32 %v5386, 16
      %v6657 = vrot.slane %v6655, 4
      %v6658 = vor.u32 %v6657, %v6653
      %v6659 = vrot.slane %v6658, 4
      %v6661 = vshll.u32 %v6602, 16
      %v6663 = vrot.slane %v6661, 5
      %v6664 = vsel %vm1593, %v6659, %v6663
      %v6666 = vshrl.u32 %v5387, 16
      %v6668 = vrot.slane %v6666, 4
      %v6669 = vshll.u32 %v5387, 16
      %v6671 = vrot.slane %v6669, 5
      %v6672 = vor.u32 %v6668, %v6671
      %v6673 = vrot.slane %v6672, 4
      %v6675 = vshll.u32 %v5388, 16
      %v6677 = vrot.slane %v6675, 5
      %v6678 = vsel %vm1593, %v6673, %v6677
      %v6679 = vshrl.u32 %v5388, 16
      %v6681 = vrot.slane %v6679, 4
      %v6682 = vor.u32 %v6681, %v6677
      %v6683 = vrot.slane %v6682, 4
      %v6685 = vshll.u32 %v6603, 16
      %v6687 = vrot.slane %v6685, 5
      %v6688 = vsel %vm1593, %v6683, %v6687
      %v6690 = vshrl.u32 %v5389, 16
      %v6692 = vrot.slane %v6690, 4
      %v6693 = vshll.u32 %v5389, 16
      %v6695 = vrot.slane %v6693, 5
      %v6696 = vor.u32 %v6692, %v6695
      %v6697 = vrot.slane %v6696, 4
      %v6699 = vshll.u32 %v5390, 16
      %v6701 = vrot.slane %v6699, 5
      %v6702 = vsel %vm1593, %v6697, %v6701
      %v6703 = vshrl.u32 %v5390, 16
      %v6705 = vrot.slane %v6703, 4
      %v6706 = vor.u32 %v6705, %v6701
      %v6707 = vrot.slane %v6706, 4
      %v6709 = vshll.u32 %v6604, 16
      %v6711 = vrot.slane %v6709, 5
      %v6712 = vsel %vm1593, %v6707, %v6711
      %v6714 = vshrl.u32 %v5391, 16
      %v6716 = vrot.slane %v6714, 4
      %v6717 = vshll.u32 %v5391, 16
      %v6719 = vrot.slane %v6717, 5
      %v6720 = vor.u32 %v6716, %v6719
      %v6721 = vrot.slane %v6720, 4
      %v6723 = vshll.u32 %v5392, 16
      %v6725 = vrot.slane %v6723, 5
      %v6726 = vsel %vm1593, %v6721, %v6725
      %v6727 = vshrl.u32 %v5392, 16
      %v6729 = vrot.slane %v6727, 4
      %v6730 = vor.u32 %v6729, %v6725
      %v6731 = vrot.slane %v6730, 4
      %v6733 = vshll.u32 %v6605, 16
      %v6735 = vrot.slane %v6733, 5
      %v6736 = vsel %vm1593, %v6731, %v6735
      %v6738 = vshrl.u32 %v5393, 16
      %v6740 = vrot.slane %v6738, 4
      %v6741 = vshll.u32 %v5393, 16
      %v6743 = vrot.slane %v6741, 5
      %v6744 = vor.u32 %v6740, %v6743
      %v6745 = vrot.slane %v6744, 4
      %v6747 = vshll.u32 %v5394, 16
      %v6749 = vrot.slane %v6747, 5
      %v6750 = vsel %vm1593, %v6745, %v6749
      %v6751 = vshrl.u32 %v5394, 16
      %v6753 = vrot.slane %v6751, 4
      %v6754 = vor.u32 %v6753, %v6749
      %v6755 = vrot.slane %v6754, 4
      %v6757 = vshll.u32 %v6606, 16
      %v6759 = vrot.slane %v6757, 5
      %v6760 = vsel %vm1593, %v6755, %v6759
      %v6762 = vshrl.u32 %v5395, 16
      %v6764 = vrot.slane %v6762, 4
      %v6765 = vshll.u32 %v5395, 16
      %v6767 = vrot.slane %v6765, 5
      %v6768 = vor.u32 %v6764, %v6767
      %v6769 = vrot.slane %v6768, 4
      %v6771 = vshll.u32 %v5396, 16
      %v6773 = vrot.slane %v6771, 5
      %v6774 = vsel %vm1593, %v6769, %v6773
      %v6775 = vshrl.u32 %v5396, 16
      %v6777 = vrot.slane %v6775, 4
      %v6778 = vor.u32 %v6777, %v6773
      %v6779 = vrot.slane %v6778, 4
      %v6781 = vshll.u32 %v6607, 16
      %v6783 = vrot.slane %v6781, 5
      %v6784 = vsel %vm1593, %v6779, %v6783
      %v6786 = vshrl.u32 %v5397, 16
      %v6788 = vrot.slane %v6786, 4
      %v6789 = vshll.u32 %v5397, 16
      %v6791 = vrot.slane %v6789, 5
      %v6792 = vor.u32 %v6788, %v6791
      %v6793 = vrot.slane %v6792, 4
      %v6795 = vshll.u32 %v5398, 16
      %v6797 = vrot.slane %v6795, 5
      %v6798 = vsel %vm1593, %v6793, %v6797
      %v6799 = vshrl.u32 %v5398, 16
      %v6801 = vrot.slane %v6799, 4
      %v6802 = vor.u32 %v6801, %v6797
      %v6803 = vrot.slane %v6802, 4
      %v6805 = vshll.u32 %v6608, 16
      %v6807 = vrot.slane %v6805, 5
      %v6808 = vsel %vm1593, %v6803, %v6807
      %v6810 = vshrl.u32 %v5399, 16
      %v6812 = vrot.slane %v6810, 4
      %v6813 = vshll.u32 %v5399, 16
      %v6815 = vrot.slane %v6813, 5
      %v6816 = vor.u32 %v6812, %v6815
      %v6817 = vrot.slane %v6816, 4
      %v6819 = vshll.u32 %v5400, 16
      %v6821 = vrot.slane %v6819, 5
      %v6822 = vsel %vm1593, %v6817, %v6821
      %v6823 = vshrl.u32 %v5400, 16
      %v6825 = vrot.slane %v6823, 4
      %v6826 = vor.u32 %v6825, %v6821
      %v6827 = vrot.slane %v6826, 4
      %v6829 = vshll.u32 %v6609, 16
      %v6831 = vrot.slane %v6829, 5
      %v6832 = vsel %vm1593, %v6827, %v6831
      %v6834 = vshrl.u32 %v5401, 16
      %v6836 = vrot.slane %v6834, 4
      %v6837 = vshll.u32 %v5401, 16
      %v6839 = vrot.slane %v6837, 5
      %v6840 = vor.u32 %v6836, %v6839
      %v6841 = vrot.slane %v6840, 4
      %v6843 = vshll.u32 %v5402, 16
      %v6845 = vrot.slane %v6843, 5
      %v6846 = vsel %vm1593, %v6841, %v6845
      %v6847 = vshrl.u32 %v5402, 16
      %v6849 = vrot.slane %v6847, 4
      %v6850 = vor.u32 %v6849, %v6845
      %v6851 = vrot.slane %v6850, 4
      %v6853 = vshll.u32 %v6610, 16
      %v6855 = vrot.slane %v6853, 5
      %v6856 = vsel %vm1593, %v6851, %v6855
      %v6858 = vshrl.u32 %v5403, 16
      %v6860 = vrot.slane %v6858, 4
      %v6861 = vshll.u32 %v5403, 16
      %v6863 = vrot.slane %v6861, 5
      %v6864 = vor.u32 %v6860, %v6863
      %v6865 = vrot.slane %v6864, 4
      %v6867 = vshll.u32 %v5404, 16
      %v6869 = vrot.slane %v6867, 5
      %v6870 = vsel %vm1593, %v6865, %v6869
      %v6871 = vshrl.u32 %v5404, 16
      %v6873 = vrot.slane %v6871, 4
      %v6874 = vor.u32 %v6873, %v6869
      %v6875 = vrot.slane %v6874, 4
      %v6877 = vshll.u32 %v6611, 16
      %v6879 = vrot.slane %v6877, 5
      %v6880 = vsel %vm1593, %v6875, %v6879
      %v6882 = vshrl.u32 %v5405, 16
      %v6884 = vrot.slane %v6882, 4
      %v6885 = vshll.u32 %v5405, 16
      %v6887 = vrot.slane %v6885, 5
      %v6888 = vor.u32 %v6884, %v6887
      %v6889 = vrot.slane %v6888, 4
      %v6891 = vshll.u32 %v5406, 16
      %v6893 = vrot.slane %v6891, 5
      %v6894 = vsel %vm1593, %v6889, %v6893
      %v6895 = vshrl.u32 %v5406, 16
      %v6897 = vrot.slane %v6895, 4
      %v6898 = vor.u32 %v6897, %v6893
      %v6899 = vrot.slane %v6898, 4
      %v6901 = vshll.u32 %v6612, 16
      %v6903 = vrot.slane %v6901, 5
      %v6904 = vsel %vm1593, %v6899, %v6903
      %v6906 = vshrl.u32 %v5407, 16
      %v6908 = vrot.slane %v6906, 4
      %v6909 = vshll.u32 %v5407, 16
      %v6911 = vrot.slane %v6909, 5
      %v6912 = vor.u32 %v6908, %v6911
      %v6913 = vrot.slane %v6912, 4
      %v6915 = vshll.u32 %v5408, 16
      %v6917 = vrot.slane %v6915, 5
      %v6918 = vsel %vm1593, %v6913, %v6917
      %v6919 = vshrl.u32 %v5408, 16
      %v6921 = vrot.slane %v6919, 4
      %v6922 = vor.u32 %v6921, %v6917
      %v6923 = vrot.slane %v6922, 4
      %v6925 = vshll.u32 %v6613, 16
      %v6927 = vrot.slane %v6925, 5
      %v6928 = vsel %vm1593, %v6923, %v6927
      %v6930 = vshrl.u32 %v5409, 16
      %v6932 = vrot.slane %v6930, 4
      %v6933 = vshll.u32 %v5409, 16
      %v6935 = vrot.slane %v6933, 5
      %v6936 = vor.u32 %v6932, %v6935
      %v6937 = vrot.slane %v6936, 4
      %v6939 = vshll.u32 %v5410, 16
      %v6941 = vrot.slane %v6939, 5
      %v6942 = vsel %vm1593, %v6937, %v6941
      %v6943 = vshrl.u32 %v5410, 16
      %v6945 = vrot.slane %v6943, 4
      %v6946 = vor.u32 %v6945, %v6941
      %v6947 = vrot.slane %v6946, 4
      %v6949 = vshll.u32 %v6614, 16
      %v6951 = vrot.slane %v6949, 5
      %v6952 = vsel %vm1593, %v6947, %v6951
      %v6954 = vshrl.u32 %v5411, 16
      %v6956 = vrot.slane %v6954, 4
      %v6957 = vshll.u32 %v5411, 16
      %v6959 = vrot.slane %v6957, 5
      %v6960 = vor.u32 %v6956, %v6959
      %v6961 = vrot.slane %v6960, 4
      %v6963 = vshll.u32 %v5412, 16
      %v6965 = vrot.slane %v6963, 5
      %v6966 = vsel %vm1593, %v6961, %v6965
      %v6967 = vshrl.u32 %v5412, 16
      %v6969 = vrot.slane %v6967, 4
      %v6970 = vor.u32 %v6969, %v6965
      %v6971 = vrot.slane %v6970, 4
      %v6973 = vshll.u32 %v6615, 16
      %v6975 = vrot.slane %v6973, 5
      %v6976 = vsel %vm1593, %v6971, %v6975
      %v6978 = vshrl.u32 %v5413, 16
      %v6980 = vrot.slane %v6978, 4
      %v6981 = vshll.u32 %v5413, 16
      %v6983 = vrot.slane %v6981, 5
      %v6984 = vor.u32 %v6980, %v6983
      %v6985 = vrot.slane %v6984, 4
      %v6987 = vshll.u32 %v5414, 16
      %v6989 = vrot.slane %v6987, 5
      %v6990 = vsel %vm1593, %v6985, %v6989
      %v6991 = vshrl.u32 %v5414, 16
      %v6993 = vrot.slane %v6991, 4
      %v6994 = vor.u32 %v6993, %v6989
      %v6995 = vrot.slane %v6994, 4
      %v6997 = vshll.u32 %v6616, 16
      %v6999 = vrot.slane %v6997, 5
      %v7000 = vsel %vm1593, %v6995, %v6999
      %v7001 = vunpack.c.l.b16 %v5830
      %v7002 = vunpack.c.l.b16 %v5840
      %v7003 = vunpack.c.l.b16 %v5854
      %v7004 = vunpack.c.l.b16 %v5864
      %v7005 = vunpack.c.l.b16 %v5878
      %v7006 = vunpack.c.l.b16 %v5888
      %v7007 = vunpack.c.l.b16 %v5902
      %v7008 = vunpack.c.l.b16 %v5912
      %v7009 = vunpack.c.l.b16 %v5926
      %v7010 = vunpack.c.l.b16 %v5936
      %v7011 = vunpack.c.l.b16 %v5950
      %v7012 = vunpack.c.l.b16 %v5960
      %v7013 = vunpack.c.l.b16 %v5974
      %v7014 = vunpack.c.l.b16 %v5984
      %v7015 = vunpack.c.l.b16 %v5998
      %v7016 = vunpack.c.l.b16 %v6008
      %v7017 = vunpack.c.l.b16 %v6022
      %v7018 = vunpack.c.l.b16 %v6032
      %v7019 = vunpack.c.l.b16 %v6046
      %v7020 = vunpack.c.l.b16 %v6056
      %v7021 = vunpack.c.l.b16 %v6070
      %v7022 = vunpack.c.l.b16 %v6080
      %v7023 = vunpack.c.l.b16 %v6094
      %v7024 = vunpack.c.l.b16 %v6104
      %v7025 = vunpack.c.l.b16 %v6118
      %v7026 = vunpack.c.l.b16 %v6128
      %v7027 = vunpack.c.l.b16 %v6142
      %v7028 = vunpack.c.l.b16 %v6152
      %v7029 = vunpack.c.l.b16 %v6166
      %v7030 = vunpack.c.l.b16 %v6176
      %v7031 = vunpack.c.l.b16 %v6190
      %v7032 = vunpack.c.l.b16 %v6200
      %v7033 = vpack.c.b16 %v7002, %v7001
      %v7034 = vpack.c.b16 %v7004, %v7003
      %v7035 = vpack.c.b16 %v7006, %v7005
      %v7036 = vpack.c.b16 %v7008, %v7007
      %v7037 = vpack.c.b16 %v7010, %v7009
      %v7038 = vpack.c.b16 %v7012, %v7011
      %v7039 = vpack.c.b16 %v7014, %v7013
      %v7040 = vpack.c.b16 %v7016, %v7015
      %v7041 = vpack.c.b16 %v7018, %v7017
      %v7042 = vpack.c.b16 %v7020, %v7019
      %v7043 = vpack.c.b16 %v7022, %v7021
      %v7044 = vpack.c.b16 %v7024, %v7023
      %v7045 = vpack.c.b16 %v7026, %v7025
      %v7046 = vpack.c.b16 %v7028, %v7027
      %v7047 = vpack.c.b16 %v7030, %v7029
      %v7048 = vpack.c.b16 %v7032, %v7031
      %v7049 = vunpack.c.l.b16 %v6230
      %v7050 = vunpack.c.l.b16 %v6240
      %v7051 = vunpack.c.l.b16 %v6254
      %v7052 = vunpack.c.l.b16 %v6264
      %v7053 = vunpack.c.l.b16 %v6278
      %v7054 = vunpack.c.l.b16 %v6288
      %v7055 = vunpack.c.l.b16 %v6302
      %v7056 = vunpack.c.l.b16 %v6312
      %v7057 = vunpack.c.l.b16 %v6326
      %v7058 = vunpack.c.l.b16 %v6336
      %v7059 = vunpack.c.l.b16 %v6350
      %v7060 = vunpack.c.l.b16 %v6360
      %v7061 = vunpack.c.l.b16 %v6374
      %v7062 = vunpack.c.l.b16 %v6384
      %v7063 = vunpack.c.l.b16 %v6398
      %v7064 = vunpack.c.l.b16 %v6408
      %v7065 = vunpack.c.l.b16 %v6422
      %v7066 = vunpack.c.l.b16 %v6432
      %v7067 = vunpack.c.l.b16 %v6446
      %v7068 = vunpack.c.l.b16 %v6456
      %v7069 = vunpack.c.l.b16 %v6470
      %v7070 = vunpack.c.l.b16 %v6480
      %v7071 = vunpack.c.l.b16 %v6494
      %v7072 = vunpack.c.l.b16 %v6504
      %v7073 = vunpack.c.l.b16 %v6518
      %v7074 = vunpack.c.l.b16 %v6528
      %v7075 = vunpack.c.l.b16 %v6542
      %v7076 = vunpack.c.l.b16 %v6552
      %v7077 = vunpack.c.l.b16 %v6566
      %v7078 = vunpack.c.l.b16 %v6576
      %v7079 = vunpack.c.l.b16 %v6590
      %v7080 = vunpack.c.l.b16 %v6600
      %v7081 = vpack.c.b16 %v7050, %v7049
      %v7082 = vpack.c.b16 %v7052, %v7051
      %v7083 = vpack.c.b16 %v7054, %v7053
      %v7084 = vpack.c.b16 %v7056, %v7055
      %v7085 = vpack.c.b16 %v7058, %v7057
      %v7086 = vpack.c.b16 %v7060, %v7059
      %v7087 = vpack.c.b16 %v7062, %v7061
      %v7088 = vpack.c.b16 %v7064, %v7063
      %v7089 = vpack.c.b16 %v7066, %v7065
      %v7090 = vpack.c.b16 %v7068, %v7067
      %v7091 = vpack.c.b16 %v7070, %v7069
      %v7092 = vpack.c.b16 %v7072, %v7071
      %v7093 = vpack.c.b16 %v7074, %v7073
      %v7094 = vpack.c.b16 %v7076, %v7075
      %v7095 = vpack.c.b16 %v7078, %v7077
      %v7096 = vpack.c.b16 %v7080, %v7079
      %7097 = vrot.lane.b32.xlu0 %v7081, 4
      %v7098 = vpop.permute.xlu0 %7097
      %7099 = vrot.lane.b32.xlu0 %v7082, 4
      %v7100 = vpop.permute.xlu0 %7099
      %7101 = vrot.lane.b32.xlu0 %v7083, 4
      %v7102 = vpop.permute.xlu0 %7101
      %7103 = vrot.lane.b32.xlu0 %v7084, 4
      %v7104 = vpop.permute.xlu0 %7103
      %7105 = vrot.lane.b32.xlu0 %v7085, 4
      %v7106 = vpop.permute.xlu0 %7105
      %7107 = vrot.lane.b32.xlu0 %v7086, 4
      %v7108 = vpop.permute.xlu0 %7107
      %7109 = vrot.lane.b32.xlu0 %v7087, 4
      %v7110 = vpop.permute.xlu0 %7109
      %7111 = vrot.lane.b32.xlu0 %v7088, 4
      %v7112 = vpop.permute.xlu0 %7111
      %7113 = vrot.lane.b32.xlu0 %v7089, 4
      %v7114 = vpop.permute.xlu0 %7113
      %7115 = vrot.lane.b32.xlu0 %v7090, 4
      %v7116 = vpop.permute.xlu0 %7115
      %7117 = vrot.lane.b32.xlu0 %v7091, 4
      %v7118 = vpop.permute.xlu0 %7117
      %7119 = vrot.lane.b32.xlu0 %v7092, 4
      %v7120 = vpop.permute.xlu0 %7119
      %7121 = vrot.lane.b32.xlu0 %v7093, 4
      %v7122 = vpop.permute.xlu0 %7121
      %7123 = vrot.lane.b32.xlu0 %v7094, 4
      %v7124 = vpop.permute.xlu0 %7123
      %7125 = vrot.lane.b32.xlu0 %v7095, 4
      %v7126 = vpop.permute.xlu0 %7125
      %7127 = vrot.lane.b32.xlu0 %v7096, 4
      %v7128 = vpop.permute.xlu0 %7127
      %v7129 = vunpack.c.l.b16 %v6630
      %v7130 = vunpack.c.l.b16 %v6640
      %v7131 = vunpack.c.l.b16 %v6654
      %v7132 = vunpack.c.l.b16 %v6664
      %v7133 = vunpack.c.l.b16 %v6678
      %v7134 = vunpack.c.l.b16 %v6688
      %v7135 = vunpack.c.l.b16 %v6702
      %v7136 = vunpack.c.l.b16 %v6712
      %v7137 = vunpack.c.l.b16 %v6726
      %v7138 = vunpack.c.l.b16 %v6736
      %v7139 = vunpack.c.l.b16 %v6750
      %v7140 = vunpack.c.l.b16 %v6760
      %v7141 = vunpack.c.l.b16 %v6774
      %v7142 = vunpack.c.l.b16 %v6784
      %v7143 = vunpack.c.l.b16 %v6798
      %v7144 = vunpack.c.l.b16 %v6808
      %v7145 = vunpack.c.l.b16 %v6822
      %v7146 = vunpack.c.l.b16 %v6832
      %v7147 = vunpack.c.l.b16 %v6846
      %v7148 = vunpack.c.l.b16 %v6856
      %v7149 = vunpack.c.l.b16 %v6870
      %v7150 = vunpack.c.l.b16 %v6880
      %v7151 = vunpack.c.l.b16 %v6894
      %v7152 = vunpack.c.l.b16 %v6904
      %v7153 = vunpack.c.l.b16 %v6918
      %v7154 = vunpack.c.l.b16 %v6928
      %v7155 = vunpack.c.l.b16 %v6942
      %v7156 = vunpack.c.l.b16 %v6952
      %v7157 = vunpack.c.l.b16 %v6966
      %v7158 = vunpack.c.l.b16 %v6976
      %v7159 = vunpack.c.l.b16 %v6990
      %v7160 = vunpack.c.l.b16 %v7000
      %v7161 = vpack.c.b16 %v7130, %v7129
      %v7162 = vpack.c.b16 %v7132, %v7131
      %v7163 = vpack.c.b16 %v7134, %v7133
      %v7164 = vpack.c.b16 %v7136, %v7135
      %v7165 = vpack.c.b16 %v7138, %v7137
      %v7166 = vpack.c.b16 %v7140, %v7139
      %v7167 = vpack.c.b16 %v7142, %v7141
      %v7168 = vpack.c.b16 %v7144, %v7143
      %v7169 = vpack.c.b16 %v7146, %v7145
      %v7170 = vpack.c.b16 %v7148, %v7147
      %v7171 = vpack.c.b16 %v7150, %v7149
      %v7172 = vpack.c.b16 %v7152, %v7151
      %v7173 = vpack.c.b16 %v7154, %v7153
      %v7174 = vpack.c.b16 %v7156, %v7155
      %v7175 = vpack.c.b16 %v7158, %v7157
      %v7176 = vpack.c.b16 %v7160, %v7159
      %7177 = vrot.lane.b32.xlu0 %v7161, 8
      %v7178 = vpop.permute.xlu0 %7177
      %7179 = vrot.lane.b32.xlu0 %v7162, 8
      %v7180 = vpop.permute.xlu0 %7179
      %7181 = vrot.lane.b32.xlu0 %v7163, 8
      %v7182 = vpop.permute.xlu0 %7181
      %7183 = vrot.lane.b32.xlu0 %v7164, 8
      %v7184 = vpop.permute.xlu0 %7183
      %7185 = vrot.lane.b32.xlu0 %v7165, 8
      %v7186 = vpop.permute.xlu0 %7185
      %7187 = vrot.lane.b32.xlu0 %v7166, 8
      %v7188 = vpop.permute.xlu0 %7187
      %7189 = vrot.lane.b32.xlu0 %v7167, 8
      %v7190 = vpop.permute.xlu0 %7189
      %7191 = vrot.lane.b32.xlu0 %v7168, 8
      %v7192 = vpop.permute.xlu0 %7191
      %7193 = vrot.lane.b32.xlu0 %v7169, 8
      %v7194 = vpop.permute.xlu0 %7193
      %7195 = vrot.lane.b32.xlu0 %v7170, 8
      %v7196 = vpop.permute.xlu0 %7195
      %7197 = vrot.lane.b32.xlu0 %v7171, 8
      %v7198 = vpop.permute.xlu0 %7197
      %7199 = vrot.lane.b32.xlu0 %v7172, 8
      %v7200 = vpop.permute.xlu0 %7199
      %7201 = vrot.lane.b32.xlu0 %v7173, 8
      %v7202 = vpop.permute.xlu0 %7201
      %7203 = vrot.lane.b32.xlu0 %v7174, 8
      %v7204 = vpop.permute.xlu0 %7203
      %7205 = vrot.lane.b32.xlu0 %v7175, 8
      %v7206 = vpop.permute.xlu0 %7205
      %7207 = vrot.lane.b32.xlu0 %v7176, 8
      %v7208 = vpop.permute.xlu0 %7207
      %v7211 = vsel %vm1491, %v7033, %v7098
      %v7214 = vsel %vm1491, %v7034, %v7100
      %v7217 = vsel %vm1491, %v7035, %v7102
      %v7220 = vsel %vm1491, %v7036, %v7104
      %v7223 = vsel %vm1491, %v7037, %v7106
      %v7226 = vsel %vm1491, %v7038, %v7108
      %v7229 = vsel %vm1491, %v7039, %v7110
      %v7232 = vsel %vm1491, %v7040, %v7112
      %v7235 = vsel %vm1491, %v7041, %v7114
      %v7238 = vsel %vm1491, %v7042, %v7116
      %v7241 = vsel %vm1491, %v7043, %v7118
      %v7244 = vsel %vm1491, %v7044, %v7120
      %v7247 = vsel %vm1491, %v7045, %v7122
      %v7250 = vsel %vm1491, %v7046, %v7124
      %v7253 = vsel %vm1491, %v7047, %v7126
      %v7256 = vsel %vm1491, %v7048, %v7128
      %v7258 = vsel %vm1540, %v7211, %v7178
      %v7260 = vsel %vm1540, %v7214, %v7180
      %v7262 = vsel %vm1540, %v7217, %v7182
      %v7264 = vsel %vm1540, %v7220, %v7184
      %v7266 = vsel %vm1540, %v7223, %v7186
      %v7268 = vsel %vm1540, %v7226, %v7188
      %v7270 = vsel %vm1540, %v7229, %v7190
      %v7272 = vsel %vm1540, %v7232, %v7192
      %v7274 = vsel %vm1540, %v7235, %v7194
      %v7276 = vsel %vm1540, %v7238, %v7196
      %v7278 = vsel %vm1540, %v7241, %v7198
      %v7280 = vsel %vm1540, %v7244, %v7200
      %v7282 = vsel %vm1540, %v7247, %v7202
      %v7284 = vsel %vm1540, %v7250, %v7204
      %v7286 = vsel %vm1540, %v7253, %v7206
      %v7288 = vsel %vm1540, %v7256, %v7208
      %s7289 = scalar_lea.vmem %s4, 8
      %v7290 = vld [vmem:[%s7289] sm:$0xf]
      %v7291 = vld [vmem:[%s7289 + $0x4] sm:$0x3]
      %v7294 = vunpack.c.l.b16 %v7290
      %v7295 = vunpack.c.l.b16 %v7291
      %v7296 = vpack.c.b16 %v7295, %v7294
      %v7297 = vsel %vm3074, %v7258, 0
      %v7299 = vsel %vm3074, %v7260, 0
      %v7301 = vsel %vm3074, %v7262, 0
      %v7303 = vsel %vm3074, %v7264, 0
      %v7305 = vsel %vm3074, %v7266, 0
      %v7307 = vsel %vm3074, %v7268, 0
      %v7309 = vsel %vm3074, %v7270, 0
      %v7311 = vsel %vm3074, %v7272, 0
      %v7313 = vsel %vm3074, %v7274, 0
      %v7315 = vsel %vm3074, %v7276, 0
      %v7317 = vsel %vm3074, %v7278, 0
      %v7319 = vsel %vm3074, %v7280, 0
      %v7321 = vsel %vm3074, %v7282, 0
      %v7323 = vsel %vm3074, %v7284, 0
      %v7325 = vsel %vm3074, %v7286, 0
      %v7327 = vsel %vm3074, %v7288, 0
      %v7330 = vsel %vm3107, %v7296, 0
      %7332 = vmatpush.bf16.msra.mxu0 0
      %7333 = vmatpush.bf16.msra.mxu0 0
      %7334 = vmatpush.bf16.msra.mxu0 0
      %7335 = vmatpush.bf16.msra.mxu0 0
      %7336 = vmatpush.bf16.msra.mxu0 0
      %7337 = vmatpush.bf16.msra.mxu0 0
      %7338 = vmatpush.bf16.msra.mxu0 0
      %7339 = vmatpush.bf16.msra.mxu0 %v7330
      %7340 = vmatmul.bf16.gmra.mxu0 %v7297
      %v7341 = vpop.f32.mrf.mxu0
      %v7342 = vadd.f32 0.0, %v7341
      %v7343 = vpop.f32.mrf.mxu0
      %v7344 = vadd.f32 0.0, %v7343
      %7345 = vmatmul.bf16.gmra.mxu0 %v7299
      %v7346 = vpop.f32.mrf.mxu0
      %v7347 = vadd.f32 0.0, %v7346
      %v7348 = vpop.f32.mrf.mxu0
      %v7349 = vadd.f32 0.0, %v7348
      %7350 = vmatmul.bf16.gmra.mxu0 %v7301
      %v7351 = vpop.f32.mrf.mxu0
      %v7352 = vadd.f32 0.0, %v7351
      %v7353 = vpop.f32.mrf.mxu0
      %v7354 = vadd.f32 0.0, %v7353
      %7355 = vmatmul.bf16.gmra.mxu0 %v7303
      %v7356 = vpop.f32.mrf.mxu0
      %v7357 = vadd.f32 0.0, %v7356
      %v7358 = vpop.f32.mrf.mxu0
      %v7359 = vadd.f32 0.0, %v7358
      %7360 = vmatmul.bf16.gmra.mxu0 %v7305
      %v7361 = vpop.f32.mrf.mxu0
      %v7362 = vadd.f32 0.0, %v7361
      %v7363 = vpop.f32.mrf.mxu0
      %v7364 = vadd.f32 0.0, %v7363
      %7365 = vmatmul.bf16.gmra.mxu0 %v7307
      %v7366 = vpop.f32.mrf.mxu0
      %v7367 = vadd.f32 0.0, %v7366
      %v7368 = vpop.f32.mrf.mxu0
      %v7369 = vadd.f32 0.0, %v7368
      %7370 = vmatmul.bf16.gmra.mxu0 %v7309
      %v7371 = vpop.f32.mrf.mxu0
      %v7372 = vadd.f32 0.0, %v7371
      %v7373 = vpop.f32.mrf.mxu0
      %v7374 = vadd.f32 0.0, %v7373
      %7375 = vmatmul.bf16.gmra.mxu0 %v7311
      %v7376 = vpop.f32.mrf.mxu0
      %v7377 = vadd.f32 0.0, %v7376
      %v7378 = vpop.f32.mrf.mxu0
      %v7379 = vadd.f32 0.0, %v7378
      %7380 = vmatmul.bf16.gmra.mxu0 %v7313
      %v7381 = vpop.f32.mrf.mxu0
      %v7382 = vadd.f32 0.0, %v7381
      %v7383 = vpop.f32.mrf.mxu0
      %v7384 = vadd.f32 0.0, %v7383
      %7385 = vmatmul.bf16.gmra.mxu0 %v7315
      %v7386 = vpop.f32.mrf.mxu0
      %v7387 = vadd.f32 0.0, %v7386
      %v7388 = vpop.f32.mrf.mxu0
      %v7389 = vadd.f32 0.0, %v7388
      %7390 = vmatmul.bf16.gmra.mxu0 %v7317
      %v7391 = vpop.f32.mrf.mxu0
      %v7392 = vadd.f32 0.0, %v7391
      %v7393 = vpop.f32.mrf.mxu0
      %v7394 = vadd.f32 0.0, %v7393
      %7395 = vmatmul.bf16.gmra.mxu0 %v7319
      %v7396 = vpop.f32.mrf.mxu0
      %v7397 = vadd.f32 0.0, %v7396
      %v7398 = vpop.f32.mrf.mxu0
      %v7399 = vadd.f32 0.0, %v7398
      %7400 = vmatmul.bf16.gmra.mxu0 %v7321
      %v7401 = vpop.f32.mrf.mxu0
      %v7402 = vadd.f32 0.0, %v7401
      %v7403 = vpop.f32.mrf.mxu0
      %v7404 = vadd.f32 0.0, %v7403
      %7405 = vmatmul.bf16.gmra.mxu0 %v7323
      %v7406 = vpop.f32.mrf.mxu0
      %v7407 = vadd.f32 0.0, %v7406
      %v7408 = vpop.f32.mrf.mxu0
      %v7409 = vadd.f32 0.0, %v7408
      %7410 = vmatmul.bf16.gmra.mxu0 %v7325
      %v7411 = vpop.f32.mrf.mxu0
      %v7412 = vadd.f32 0.0, %v7411
      %v7413 = vpop.f32.mrf.mxu0
      %v7414 = vadd.f32 0.0, %v7413
      %7415 = vmatmul.bf16.gmra.mxu0 %v7327
      %v7416 = vpop.f32.mrf.mxu0
      %v7417 = vadd.f32 0.0, %v7416
      %v7418 = vpop.f32.mrf.mxu0
      %v7419 = vadd.f32 0.0, %v7418
      %7420 = vdwg.mxu0
      %v7423 = vunpack.c.l.b16 %v5799
      %v7424 = vunpack.c.l.b16 %v5800
      %v7425 = vpack.c.b16 %v7424, %v7423
      %v7426 = vsel %vm3074, %v5768, 0
      %v7428 = vsel %vm3074, %v5770, 0
      %v7430 = vsel %vm3074, %v5772, 0
      %v7432 = vsel %vm3074, %v5774, 0
      %v7434 = vsel %vm3074, %v5776, 0
      %v7436 = vsel %vm3074, %v5778, 0
      %v7438 = vsel %vm3074, %v5780, 0
      %v7440 = vsel %vm3074, %v5782, 0
      %v7442 = vsel %vm3074, %v5784, 0
      %v7444 = vsel %vm3074, %v5786, 0
      %v7446 = vsel %vm3074, %v5788, 0
      %v7448 = vsel %vm3074, %v5790, 0
      %v7450 = vsel %vm3074, %v5792, 0
      %v7452 = vsel %vm3074, %v5794, 0
      %v7454 = vsel %vm3074, %v5796, 0
      %v7456 = vsel %vm3074, %v5798, 0
      %v7459 = vsel %vm3107, %v7425, 0
      %7461 = vmatpush.bf16.msra.mxu0 0
      %7462 = vmatpush.bf16.msra.mxu0 0
      %7463 = vmatpush.bf16.msra.mxu0 0
      %7464 = vmatpush.bf16.msra.mxu0 0
      %7465 = vmatpush.bf16.msra.mxu0 0
      %7466 = vmatpush.bf16.msra.mxu0 0
      %7467 = vmatpush.bf16.msra.mxu0 0
      %7468 = vmatpush.bf16.msra.mxu0 %v7459
      %7469 = vmatmul.bf16.gmra.mxu0 %v7426
      %v7470 = vpop.f32.mrf.mxu0
      %v7471 = vadd.f32 %v7342, %v7470
      %v7472 = vpop.f32.mrf.mxu0
      %v7473 = vadd.f32 %v7344, %v7472
      %7474 = vmatmul.bf16.gmra.mxu0 %v7428
      %v7475 = vpop.f32.mrf.mxu0
      %v7476 = vadd.f32 %v7347, %v7475
      %v7477 = vpop.f32.mrf.mxu0
      %v7478 = vadd.f32 %v7349, %v7477
      %7479 = vmatmul.bf16.gmra.mxu0 %v7430
      %v7480 = vpop.f32.mrf.mxu0
      %v7481 = vadd.f32 %v7352, %v7480
      %v7482 = vpop.f32.mrf.mxu0
      %v7483 = vadd.f32 %v7354, %v7482
      %7484 = vmatmul.bf16.gmra.mxu0 %v7432
      %v7485 = vpop.f32.mrf.mxu0
      %v7486 = vadd.f32 %v7357, %v7485
      %v7487 = vpop.f32.mrf.mxu0
      %v7488 = vadd.f32 %v7359, %v7487
      %7489 = vmatmul.bf16.gmra.mxu0 %v7434
      %v7490 = vpop.f32.mrf.mxu0
      %v7491 = vadd.f32 %v7362, %v7490
      %v7492 = vpop.f32.mrf.mxu0
      %v7493 = vadd.f32 %v7364, %v7492
      %7494 = vmatmul.bf16.gmra.mxu0 %v7436
      %v7495 = vpop.f32.mrf.mxu0
      %v7496 = vadd.f32 %v7367, %v7495
      %v7497 = vpop.f32.mrf.mxu0
      %v7498 = vadd.f32 %v7369, %v7497
      %7499 = vmatmul.bf16.gmra.mxu0 %v7438
      %v7500 = vpop.f32.mrf.mxu0
      %v7501 = vadd.f32 %v7372, %v7500
      %v7502 = vpop.f32.mrf.mxu0
      %v7503 = vadd.f32 %v7374, %v7502
      %7504 = vmatmul.bf16.gmra.mxu0 %v7440
      %v7505 = vpop.f32.mrf.mxu0
      %v7506 = vadd.f32 %v7377, %v7505
      %v7507 = vpop.f32.mrf.mxu0
      %v7508 = vadd.f32 %v7379, %v7507
      %7509 = vmatmul.bf16.gmra.mxu0 %v7442
      %v7510 = vpop.f32.mrf.mxu0
      %v7511 = vadd.f32 %v7382, %v7510
      %v7512 = vpop.f32.mrf.mxu0
      %v7513 = vadd.f32 %v7384, %v7512
      %7514 = vmatmul.bf16.gmra.mxu0 %v7444
      %v7515 = vpop.f32.mrf.mxu0
      %v7516 = vadd.f32 %v7387, %v7515
      %v7517 = vpop.f32.mrf.mxu0
      %v7518 = vadd.f32 %v7389, %v7517
      %7519 = vmatmul.bf16.gmra.mxu0 %v7446
      %v7520 = vpop.f32.mrf.mxu0
      %v7521 = vadd.f32 %v7392, %v7520
      %v7522 = vpop.f32.mrf.mxu0
      %v7523 = vadd.f32 %v7394, %v7522
      %7524 = vmatmul.bf16.gmra.mxu0 %v7448
      %v7525 = vpop.f32.mrf.mxu0
      %v7526 = vadd.f32 %v7397, %v7525
      %v7527 = vpop.f32.mrf.mxu0
      %v7528 = vadd.f32 %v7399, %v7527
      %7529 = vmatmul.bf16.gmra.mxu0 %v7450
      %v7530 = vpop.f32.mrf.mxu0
      %v7531 = vadd.f32 %v7402, %v7530
      %v7532 = vpop.f32.mrf.mxu0
      %v7533 = vadd.f32 %v7404, %v7532
      %7534 = vmatmul.bf16.gmra.mxu0 %v7452
      %v7535 = vpop.f32.mrf.mxu0
      %v7536 = vadd.f32 %v7407, %v7535
      %v7537 = vpop.f32.mrf.mxu0
      %v7538 = vadd.f32 %v7409, %v7537
      %7539 = vmatmul.bf16.gmra.mxu0 %v7454
      %v7540 = vpop.f32.mrf.mxu0
      %v7541 = vadd.f32 %v7412, %v7540
      %v7542 = vpop.f32.mrf.mxu0
      %v7543 = vadd.f32 %v7414, %v7542
      %7544 = vmatmul.bf16.gmra.mxu0 %v7456
      %v7545 = vpop.f32.mrf.mxu0
      %v7546 = vadd.f32 %v7417, %v7545
      %v7547 = vpop.f32.mrf.mxu0
      %v7548 = vadd.f32 %v7419, %v7547
      %7549 = vdwg.mxu0
      %v7550 = vld [vmem:[#allocation2] sm:$0xe]
      %v7551 = vld [vmem:[#allocation2 + $0xc] sm:$0xe]
      %v7552 = vld [vmem:[#allocation2 + $0x18] sm:$0xe]
      %v7553 = vld [vmem:[#allocation2 + $0x24] sm:$0xe]
      %v7554 = vld [vmem:[#allocation2 + $0x30] sm:$0xe]
      %v7555 = vld [vmem:[#allocation2 + $0x3c] sm:$0xe]
      %v7556 = vld [vmem:[#allocation2 + $0x48] sm:$0xe]
      %v7557 = vld [vmem:[#allocation2 + $0x54] sm:$0xe]
      %v7558 = vld [vmem:[#allocation2 + $0x60] sm:$0xe]
      %v7559 = vld [vmem:[#allocation2 + $0x6c] sm:$0xe]
      %v7560 = vld [vmem:[#allocation2 + $0x78] sm:$0xe]
      %v7561 = vld [vmem:[#allocation2 + $0x84] sm:$0xe]
      %v7562 = vld [vmem:[#allocation2 + $0x90] sm:$0xe]
      %v7563 = vld [vmem:[#allocation2 + $0x9c] sm:$0xe]
      %v7564 = vld [vmem:[#allocation2 + $0xa8] sm:$0xe]
      %v7565 = vld [vmem:[#allocation2 + $0xb4] sm:$0xe]
      %v7598 = vrot.slane %v7550, 5
      %v7599 = vrot.slane %v7598, 4
      %v7600 = vrot.slane %v5320, 5
      %v7601 = vsel %vm3379, %v7599, %v7600
      %v7602 = vrot.slane %v7600, 4
      %v7603 = vrot.slane %v5801, 5
      %v7604 = vsel %vm3379, %v7602, %v7603
      %v7605 = vrot.slane %v7551, 5
      %v7606 = vrot.slane %v7605, 4
      %v7607 = vrot.slane %v5322, 5
      %v7608 = vsel %vm3379, %v7606, %v7607
      %v7609 = vrot.slane %v7607, 4
      %v7610 = vrot.slane %v5802, 5
      %v7611 = vsel %vm3379, %v7609, %v7610
      %v7612 = vrot.slane %v7552, 5
      %v7613 = vrot.slane %v7612, 4
      %v7614 = vrot.slane %v5324, 5
      %v7615 = vsel %vm3379, %v7613, %v7614
      %v7616 = vrot.slane %v7614, 4
      %v7617 = vrot.slane %v5803, 5
      %v7618 = vsel %vm3379, %v7616, %v7617
      %v7619 = vrot.slane %v7553, 5
      %v7620 = vrot.slane %v7619, 4
      %v7621 = vrot.slane %v5326, 5
      %v7622 = vsel %vm3379, %v7620, %v7621
      %v7623 = vrot.slane %v7621, 4
      %v7624 = vrot.slane %v5804, 5
      %v7625 = vsel %vm3379, %v7623, %v7624
      %v7626 = vrot.slane %v7554, 5
      %v7627 = vrot.slane %v7626, 4
      %v7628 = vrot.slane %v5328, 5
      %v7629 = vsel %vm3379, %v7627, %v7628
      %v7630 = vrot.slane %v7628, 4
      %v7631 = vrot.slane %v5805, 5
      %v7632 = vsel %vm3379, %v7630, %v7631
      %v7633 = vrot.slane %v7555, 5
      %v7634 = vrot.slane %v7633, 4
      %v7635 = vrot.slane %v5330, 5
      %v7636 = vsel %vm3379, %v7634, %v7635
      %v7637 = vrot.slane %v7635, 4
      %v7638 = vrot.slane %v5806, 5
      %v7639 = vsel %vm3379, %v7637, %v7638
      %v7640 = vrot.slane %v7556, 5
      %v7641 = vrot.slane %v7640, 4
      %v7642 = vrot.slane %v5332, 5
      %v7643 = vsel %vm3379, %v7641, %v7642
      %v7644 = vrot.slane %v7642, 4
      %v7645 = vrot.slane %v5807, 5
      %v7646 = vsel %vm3379, %v7644, %v7645
      %v7647 = vrot.slane %v7557, 5
      %v7648 = vrot.slane %v7647, 4
      %v7649 = vrot.slane %v5334, 5
      %v7650 = vsel %vm3379, %v7648, %v7649
      %v7651 = vrot.slane %v7649, 4
      %v7652 = vrot.slane %v5808, 5
      %v7653 = vsel %vm3379, %v7651, %v7652
      %v7654 = vrot.slane %v7558, 5
      %v7655 = vrot.slane %v7654, 4
      %v7656 = vrot.slane %v5336, 5
      %v7657 = vsel %vm3379, %v7655, %v7656
      %v7658 = vrot.slane %v7656, 4
      %v7659 = vrot.slane %v5809, 5
      %v7660 = vsel %vm3379, %v7658, %v7659
      %v7661 = vrot.slane %v7559, 5
      %v7662 = vrot.slane %v7661, 4
      %v7663 = vrot.slane %v5338, 5
      %v7664 = vsel %vm3379, %v7662, %v7663
      %v7665 = vrot.slane %v7663, 4
      %v7666 = vrot.slane %v5810, 5
      %v7667 = vsel %vm3379, %v7665, %v7666
      %v7668 = vrot.slane %v7560, 5
      %v7669 = vrot.slane %v7668, 4
      %v7670 = vrot.slane %v5340, 5
      %v7671 = vsel %vm3379, %v7669, %v7670
      %v7672 = vrot.slane %v7670, 4
      %v7673 = vrot.slane %v5811, 5
      %v7674 = vsel %vm3379, %v7672, %v7673
      %v7675 = vrot.slane %v7561, 5
      %v7676 = vrot.slane %v7675, 4
      %v7677 = vrot.slane %v5342, 5
      %v7678 = vsel %vm3379, %v7676, %v7677
      %v7679 = vrot.slane %v7677, 4
      %v7680 = vrot.slane %v5812, 5
      %v7681 = vsel %vm3379, %v7679, %v7680
      %v7682 = vrot.slane %v7562, 5
      %v7683 = vrot.slane %v7682, 4
      %v7684 = vrot.slane %v5344, 5
      %v7685 = vsel %vm3379, %v7683, %v7684
      %v7686 = vrot.slane %v7684, 4
      %v7687 = vrot.slane %v5813, 5
      %v7688 = vsel %vm3379, %v7686, %v7687
      %v7689 = vrot.slane %v7563, 5
      %v7690 = vrot.slane %v7689, 4
      %v7691 = vrot.slane %v5346, 5
      %v7692 = vsel %vm3379, %v7690, %v7691
      %v7693 = vrot.slane %v7691, 4
      %v7694 = vrot.slane %v5814, 5
      %v7695 = vsel %vm3379, %v7693, %v7694
      %v7696 = vrot.slane %v7564, 5
      %v7697 = vrot.slane %v7696, 4
      %v7698 = vrot.slane %v5348, 5
      %v7699 = vsel %vm3379, %v7697, %v7698
      %v7700 = vrot.slane %v7698, 4
      %v7701 = vrot.slane %v5815, 5
      %v7702 = vsel %vm3379, %v7700, %v7701
      %v7703 = vrot.slane %v7565, 5
      %v7704 = vrot.slane %v7703, 4
      %v7705 = vrot.slane %v5350, 5
      %v7706 = vsel %vm3379, %v7704, %v7705
      %v7707 = vrot.slane %v7705, 4
      %v7708 = vrot.slane %v5816, 5
      %v7709 = vsel %vm3379, %v7707, %v7708
      %v7710 = vld [vmem:[%s667] sm:$0xe]
      %v7711 = vld [vmem:[%s667 + $0xc] sm:$0xe]
      %v7712 = vld [vmem:[%s667 + $0x18] sm:$0xe]
      %v7713 = vld [vmem:[%s667 + $0x24] sm:$0xe]
      %v7714 = vld [vmem:[%s667 + $0x30] sm:$0xe]
      %v7715 = vld [vmem:[%s667 + $0x3c] sm:$0xe]
      %v7716 = vld [vmem:[%s667 + $0x48] sm:$0xe]
      %v7717 = vld [vmem:[%s667 + $0x54] sm:$0xe]
      %v7718 = vld [vmem:[%s667 + $0x60] sm:$0xe]
      %v7719 = vld [vmem:[%s667 + $0x6c] sm:$0xe]
      %v7720 = vld [vmem:[%s667 + $0x78] sm:$0xe]
      %v7721 = vld [vmem:[%s667 + $0x84] sm:$0xe]
      %v7722 = vld [vmem:[%s667 + $0x90] sm:$0xe]
      %v7723 = vld [vmem:[%s667 + $0x9c] sm:$0xe]
      %v7724 = vld [vmem:[%s667 + $0xa8] sm:$0xe]
      %v7725 = vld [vmem:[%s667 + $0xb4] sm:$0xe]
      %v7758 = vrot.slane %v7710, 5
      %v7759 = vrot.slane %v7758, 4
      %v7760 = vrot.slane %v5352, 5
      %v7761 = vsel %vm3379, %v7759, %v7760
      %v7762 = vrot.slane %v7760, 4
      %v7763 = vrot.slane %v6201, 5
      %v7764 = vsel %vm3379, %v7762, %v7763
      %v7765 = vrot.slane %v7711, 5
      %v7766 = vrot.slane %v7765, 4
      %v7767 = vrot.slane %v5354, 5
      %v7768 = vsel %vm3379, %v7766, %v7767
      %v7769 = vrot.slane %v7767, 4
      %v7770 = vrot.slane %v6202, 5
      %v7771 = vsel %vm3379, %v7769, %v7770
      %v7772 = vrot.slane %v7712, 5
      %v7773 = vrot.slane %v7772, 4
      %v7774 = vrot.slane %v5356, 5
      %v7775 = vsel %vm3379, %v7773, %v7774
      %v7776 = vrot.slane %v7774, 4
      %v7777 = vrot.slane %v6203, 5
      %v7778 = vsel %vm3379, %v7776, %v7777
      %v7779 = vrot.slane %v7713, 5
      %v7780 = vrot.slane %v7779, 4
      %v7781 = vrot.slane %v5358, 5
      %v7782 = vsel %vm3379, %v7780, %v7781
      %v7783 = vrot.slane %v7781, 4
      %v7784 = vrot.slane %v6204, 5
      %v7785 = vsel %vm3379, %v7783, %v7784
      %v7786 = vrot.slane %v7714, 5
      %v7787 = vrot.slane %v7786, 4
      %v7788 = vrot.slane %v5360, 5
      %v7789 = vsel %vm3379, %v7787, %v7788
      %v7790 = vrot.slane %v7788, 4
      %v7791 = vrot.slane %v6205, 5
      %v7792 = vsel %vm3379, %v7790, %v7791
      %v7793 = vrot.slane %v7715, 5
      %v7794 = vrot.slane %v7793, 4
      %v7795 = vrot.slane %v5362, 5
      %v7796 = vsel %vm3379, %v7794, %v7795
      %v7797 = vrot.slane %v7795, 4
      %v7798 = vrot.slane %v6206, 5
      %v7799 = vsel %vm3379, %v7797, %v7798
      %v7800 = vrot.slane %v7716, 5
      %v7801 = vrot.slane %v7800, 4
      %v7802 = vrot.slane %v5364, 5
      %v7803 = vsel %vm3379, %v7801, %v7802
      %v7804 = vrot.slane %v7802, 4
      %v7805 = vrot.slane %v6207, 5
      %v7806 = vsel %vm3379, %v7804, %v7805
      %v7807 = vrot.slane %v7717, 5
      %v7808 = vrot.slane %v7807, 4
      %v7809 = vrot.slane %v5366, 5
      %v7810 = vsel %vm3379, %v7808, %v7809
      %v7811 = vrot.slane %v7809, 4
      %v7812 = vrot.slane %v6208, 5
      %v7813 = vsel %vm3379, %v7811, %v7812
      %v7814 = vrot.slane %v7718, 5
      %v7815 = vrot.slane %v7814, 4
      %v7816 = vrot.slane %v5368, 5
      %v7817 = vsel %vm3379, %v7815, %v7816
      %v7818 = vrot.slane %v7816, 4
      %v7819 = vrot.slane %v6209, 5
      %v7820 = vsel %vm3379, %v7818, %v7819
      %v7821 = vrot.slane %v7719, 5
      %v7822 = vrot.slane %v7821, 4
      %v7823 = vrot.slane %v5370, 5
      %v7824 = vsel %vm3379, %v7822, %v7823
      %v7825 = vrot.slane %v7823, 4
      %v7826 = vrot.slane %v6210, 5
      %v7827 = vsel %vm3379, %v7825, %v7826
      %v7828 = vrot.slane %v7720, 5
      %v7829 = vrot.slane %v7828, 4
      %v7830 = vrot.slane %v5372, 5
      %v7831 = vsel %vm3379, %v7829, %v7830
      %v7832 = vrot.slane %v7830, 4
      %v7833 = vrot.slane %v6211, 5
      %v7834 = vsel %vm3379, %v7832, %v7833
      %v7835 = vrot.slane %v7721, 5
      %v7836 = vrot.slane %v7835, 4
      %v7837 = vrot.slane %v5374, 5
      %v7838 = vsel %vm3379, %v7836, %v7837
      %v7839 = vrot.slane %v7837, 4
      %v7840 = vrot.slane %v6212, 5
      %v7841 = vsel %vm3379, %v7839, %v7840
      %v7842 = vrot.slane %v7722, 5
      %v7843 = vrot.slane %v7842, 4
      %v7844 = vrot.slane %v5376, 5
      %v7845 = vsel %vm3379, %v7843, %v7844
      %v7846 = vrot.slane %v7844, 4
      %v7847 = vrot.slane %v6213, 5
      %v7848 = vsel %vm3379, %v7846, %v7847
      %v7849 = vrot.slane %v7723, 5
      %v7850 = vrot.slane %v7849, 4
      %v7851 = vrot.slane %v5378, 5
      %v7852 = vsel %vm3379, %v7850, %v7851
      %v7853 = vrot.slane %v7851, 4
      %v7854 = vrot.slane %v6214, 5
      %v7855 = vsel %vm3379, %v7853, %v7854
      %v7856 = vrot.slane %v7724, 5
      %v7857 = vrot.slane %v7856, 4
      %v7858 = vrot.slane %v5380, 5
      %v7859 = vsel %vm3379, %v7857, %v7858
      %v7860 = vrot.slane %v7858, 4
      %v7861 = vrot.slane %v6215, 5
      %v7862 = vsel %vm3379, %v7860, %v7861
      %v7863 = vrot.slane %v7725, 5
      %v7864 = vrot.slane %v7863, 4
      %v7865 = vrot.slane %v5382, 5
      %v7866 = vsel %vm3379, %v7864, %v7865
      %v7867 = vrot.slane %v7865, 4
      %v7868 = vrot.slane %v6216, 5
      %v7869 = vsel %vm3379, %v7867, %v7868
      %v7870 = vld [vmem:[%s1154] sm:$0xe]
      %v7871 = vld [vmem:[%s1154 + $0xc] sm:$0xe]
      %v7872 = vld [vmem:[%s1154 + $0x18] sm:$0xe]
      %v7873 = vld [vmem:[%s1154 + $0x24] sm:$0xe]
      %v7874 = vld [vmem:[%s1154 + $0x30] sm:$0xe]
      %v7875 = vld [vmem:[%s1154 + $0x3c] sm:$0xe]
      %v7876 = vld [vmem:[%s1154 + $0x48] sm:$0xe]
      %v7877 = vld [vmem:[%s1154 + $0x54] sm:$0xe]
      %v7878 = vld [vmem:[%s1154 + $0x60] sm:$0xe]
      %v7879 = vld [vmem:[%s1154 + $0x6c] sm:$0xe]
      %v7880 = vld [vmem:[%s1154 + $0x78] sm:$0xe]
      %v7881 = vld [vmem:[%s1154 + $0x84] sm:$0xe]
      %v7882 = vld [vmem:[%s1154 + $0x90] sm:$0xe]
      %v7883 = vld [vmem:[%s1154 + $0x9c] sm:$0xe]
      %v7884 = vld [vmem:[%s1154 + $0xa8] sm:$0xe]
      %v7885 = vld [vmem:[%s1154 + $0xb4] sm:$0xe]
      %v7918 = vrot.slane %v7870, 5
      %v7919 = vrot.slane %v7918, 4
      %v7920 = vrot.slane %v5384, 5
      %v7921 = vsel %vm3379, %v7919, %v7920
      %v7922 = vrot.slane %v7920, 4
      %v7923 = vrot.slane %v6601, 5
      %v7924 = vsel %vm3379, %v7922, %v7923
      %v7925 = vrot.slane %v7871, 5
      %v7926 = vrot.slane %v7925, 4
      %v7927 = vrot.slane %v5386, 5
      %v7928 = vsel %vm3379, %v7926, %v7927
      %v7929 = vrot.slane %v7927, 4
      %v7930 = vrot.slane %v6602, 5
      %v7931 = vsel %vm3379, %v7929, %v7930
      %v7932 = vrot.slane %v7872, 5
      %v7933 = vrot.slane %v7932, 4
      %v7934 = vrot.slane %v5388, 5
      %v7935 = vsel %vm3379, %v7933, %v7934
      %v7936 = vrot.slane %v7934, 4
      %v7937 = vrot.slane %v6603, 5
      %v7938 = vsel %vm3379, %v7936, %v7937
      %v7939 = vrot.slane %v7873, 5
      %v7940 = vrot.slane %v7939, 4
      %v7941 = vrot.slane %v5390, 5
      %v7942 = vsel %vm3379, %v7940, %v7941
      %v7943 = vrot.slane %v7941, 4
      %v7944 = vrot.slane %v6604, 5
      %v7945 = vsel %vm3379, %v7943, %v7944
      %v7946 = vrot.slane %v7874, 5
      %v7947 = vrot.slane %v7946, 4
      %v7948 = vrot.slane %v5392, 5
      %v7949 = vsel %vm3379, %v7947, %v7948
      %v7950 = vrot.slane %v7948, 4
      %v7951 = vrot.slane %v6605, 5
      %v7952 = vsel %vm3379, %v7950, %v7951
      %v7953 = vrot.slane %v7875, 5
      %v7954 = vrot.slane %v7953, 4
      %v7955 = vrot.slane %v5394, 5
      %v7956 = vsel %vm3379, %v7954, %v7955
      %v7957 = vrot.slane %v7955, 4
      %v7958 = vrot.slane %v6606, 5
      %v7959 = vsel %vm3379, %v7957, %v7958
      %v7960 = vrot.slane %v7876, 5
      %v7961 = vrot.slane %v7960, 4
      %v7962 = vrot.slane %v5396, 5
      %v7963 = vsel %vm3379, %v7961, %v7962
      %v7964 = vrot.slane %v7962, 4
      %v7965 = vrot.slane %v6607, 5
      %v7966 = vsel %vm3379, %v7964, %v7965
      %v7967 = vrot.slane %v7877, 5
      %v7968 = vrot.slane %v7967, 4
      %v7969 = vrot.slane %v5398, 5
      %v7970 = vsel %vm3379, %v7968, %v7969
      %v7971 = vrot.slane %v7969, 4
      %v7972 = vrot.slane %v6608, 5
      %v7973 = vsel %vm3379, %v7971, %v7972
      %v7974 = vrot.slane %v7878, 5
      %v7975 = vrot.slane %v7974, 4
      %v7976 = vrot.slane %v5400, 5
      %v7977 = vsel %vm3379, %v7975, %v7976
      %v7978 = vrot.slane %v7976, 4
      %v7979 = vrot.slane %v6609, 5
      %v7980 = vsel %vm3379, %v7978, %v7979
      %v7981 = vrot.slane %v7879, 5
      %v7982 = vrot.slane %v7981, 4
      %v7983 = vrot.slane %v5402, 5
      %v7984 = vsel %vm3379, %v7982, %v7983
      %v7985 = vrot.slane %v7983, 4
      %v7986 = vrot.slane %v6610, 5
      %v7987 = vsel %vm3379, %v7985, %v7986
      %v7988 = vrot.slane %v7880, 5
      %v7989 = vrot.slane %v7988, 4
      %v7990 = vrot.slane %v5404, 5
      %v7991 = vsel %vm3379, %v7989, %v7990
      %v7992 = vrot.slane %v7990, 4
      %v7993 = vrot.slane %v6611, 5
      %v7994 = vsel %vm3379, %v7992, %v7993
      %v7995 = vrot.slane %v7881, 5
      %v7996 = vrot.slane %v7995, 4
      %v7997 = vrot.slane %v5406, 5
      %v7998 = vsel %vm3379, %v7996, %v7997
      %v7999 = vrot.slane %v7997, 4
      %v8000 = vrot.slane %v6612, 5
      %v8001 = vsel %vm3379, %v7999, %v8000
      %v8002 = vrot.slane %v7882, 5
      %v8003 = vrot.slane %v8002, 4
      %v8004 = vrot.slane %v5408, 5
      %v8005 = vsel %vm3379, %v8003, %v8004
      %v8006 = vrot.slane %v8004, 4
      %v8007 = vrot.slane %v6613, 5
      %v8008 = vsel %vm3379, %v8006, %v8007
      %v8009 = vrot.slane %v7883, 5
      %v8010 = vrot.slane %v8009, 4
      %v8011 = vrot.slane %v5410, 5
      %v8012 = vsel %vm3379, %v8010, %v8011
      %v8013 = vrot.slane %v8011, 4
      %v8014 = vrot.slane %v6614, 5
      %v8015 = vsel %vm3379, %v8013, %v8014
      %v8016 = vrot.slane %v7884, 5
      %v8017 = vrot.slane %v8016, 4
      %v8018 = vrot.slane %v5412, 5
      %v8019 = vsel %vm3379, %v8017, %v8018
      %v8020 = vrot.slane %v8018, 4
      %v8021 = vrot.slane %v6615, 5
      %v8022 = vsel %vm3379, %v8020, %v8021
      %v8023 = vrot.slane %v7885, 5
      %v8024 = vrot.slane %v8023, 4
      %v8025 = vrot.slane %v5414, 5
      %v8026 = vsel %vm3379, %v8024, %v8025
      %v8027 = vrot.slane %v8025, 4
      %v8028 = vrot.slane %v6616, 5
      %v8029 = vsel %vm3379, %v8027, %v8028
      %v8030 = vunpack.c.l.b16 %v7601
      %v8031 = vunpack.c.l.b16 %v7604
      %v8032 = vunpack.c.l.b16 %v7608
      %v8033 = vunpack.c.l.b16 %v7611
      %v8034 = vunpack.c.l.b16 %v7615
      %v8035 = vunpack.c.l.b16 %v7618
      %v8036 = vunpack.c.l.b16 %v7622
      %v8037 = vunpack.c.l.b16 %v7625
      %v8038 = vunpack.c.l.b16 %v7629
      %v8039 = vunpack.c.l.b16 %v7632
      %v8040 = vunpack.c.l.b16 %v7636
      %v8041 = vunpack.c.l.b16 %v7639
      %v8042 = vunpack.c.l.b16 %v7643
      %v8043 = vunpack.c.l.b16 %v7646
      %v8044 = vunpack.c.l.b16 %v7650
      %v8045 = vunpack.c.l.b16 %v7653
      %v8046 = vunpack.c.l.b16 %v7657
      %v8047 = vunpack.c.l.b16 %v7660
      %v8048 = vunpack.c.l.b16 %v7664
      %v8049 = vunpack.c.l.b16 %v7667
      %v8050 = vunpack.c.l.b16 %v7671
      %v8051 = vunpack.c.l.b16 %v7674
      %v8052 = vunpack.c.l.b16 %v7678
      %v8053 = vunpack.c.l.b16 %v7681
      %v8054 = vunpack.c.l.b16 %v7685
      %v8055 = vunpack.c.l.b16 %v7688
      %v8056 = vunpack.c.l.b16 %v7692
      %v8057 = vunpack.c.l.b16 %v7695
      %v8058 = vunpack.c.l.b16 %v7699
      %v8059 = vunpack.c.l.b16 %v7702
      %v8060 = vunpack.c.l.b16 %v7706
      %v8061 = vunpack.c.l.b16 %v7709
      %v8062 = vpack.c.b16 %v8031, %v8030
      %v8063 = vpack.c.b16 %v8033, %v8032
      %v8064 = vpack.c.b16 %v8035, %v8034
      %v8065 = vpack.c.b16 %v8037, %v8036
      %v8066 = vpack.c.b16 %v8039, %v8038
      %v8067 = vpack.c.b16 %v8041, %v8040
      %v8068 = vpack.c.b16 %v8043, %v8042
      %v8069 = vpack.c.b16 %v8045, %v8044
      %v8070 = vpack.c.b16 %v8047, %v8046
      %v8071 = vpack.c.b16 %v8049, %v8048
      %v8072 = vpack.c.b16 %v8051, %v8050
      %v8073 = vpack.c.b16 %v8053, %v8052
      %v8074 = vpack.c.b16 %v8055, %v8054
      %v8075 = vpack.c.b16 %v8057, %v8056
      %v8076 = vpack.c.b16 %v8059, %v8058
      %v8077 = vpack.c.b16 %v8061, %v8060
      %v8078 = vunpack.c.l.b16 %v7761
      %v8079 = vunpack.c.l.b16 %v7764
      %v8080 = vunpack.c.l.b16 %v7768
      %v8081 = vunpack.c.l.b16 %v7771
      %v8082 = vunpack.c.l.b16 %v7775
      %v8083 = vunpack.c.l.b16 %v7778
      %v8084 = vunpack.c.l.b16 %v7782
      %v8085 = vunpack.c.l.b16 %v7785
      %v8086 = vunpack.c.l.b16 %v7789
      %v8087 = vunpack.c.l.b16 %v7792
      %v8088 = vunpack.c.l.b16 %v7796
      %v8089 = vunpack.c.l.b16 %v7799
      %v8090 = vunpack.c.l.b16 %v7803
      %v8091 = vunpack.c.l.b16 %v7806
      %v8092 = vunpack.c.l.b16 %v7810
      %v8093 = vunpack.c.l.b16 %v7813
      %v8094 = vunpack.c.l.b16 %v7817
      %v8095 = vunpack.c.l.b16 %v7820
      %v8096 = vunpack.c.l.b16 %v7824
      %v8097 = vunpack.c.l.b16 %v7827
      %v8098 = vunpack.c.l.b16 %v7831
      %v8099 = vunpack.c.l.b16 %v7834
      %v8100 = vunpack.c.l.b16 %v7838
      %v8101 = vunpack.c.l.b16 %v7841
      %v8102 = vunpack.c.l.b16 %v7845
      %v8103 = vunpack.c.l.b16 %v7848
      %v8104 = vunpack.c.l.b16 %v7852
      %v8105 = vunpack.c.l.b16 %v7855
      %v8106 = vunpack.c.l.b16 %v7859
      %v8107 = vunpack.c.l.b16 %v7862
      %v8108 = vunpack.c.l.b16 %v7866
      %v8109 = vunpack.c.l.b16 %v7869
      %v8110 = vpack.c.b16 %v8079, %v8078
      %v8111 = vpack.c.b16 %v8081, %v8080
      %v8112 = vpack.c.b16 %v8083, %v8082
      %v8113 = vpack.c.b16 %v8085, %v8084
      %v8114 = vpack.c.b16 %v8087, %v8086
      %v8115 = vpack.c.b16 %v8089, %v8088
      %v8116 = vpack.c.b16 %v8091, %v8090
      %v8117 = vpack.c.b16 %v8093, %v8092
      %v8118 = vpack.c.b16 %v8095, %v8094
      %v8119 = vpack.c.b16 %v8097, %v8096
      %v8120 = vpack.c.b16 %v8099, %v8098
      %v8121 = vpack.c.b16 %v8101, %v8100
      %v8122 = vpack.c.b16 %v8103, %v8102
      %v8123 = vpack.c.b16 %v8105, %v8104
      %v8124 = vpack.c.b16 %v8107, %v8106
      %v8125 = vpack.c.b16 %v8109, %v8108
      %8126 = vrot.lane.b32.xlu0 %v8110, 4
      %v8127 = vpop.permute.xlu0 %8126
      %8128 = vrot.lane.b32.xlu0 %v8111, 4
      %v8129 = vpop.permute.xlu0 %8128
      %8130 = vrot.lane.b32.xlu0 %v8112, 4
      %v8131 = vpop.permute.xlu0 %8130
      %8132 = vrot.lane.b32.xlu0 %v8113, 4
      %v8133 = vpop.permute.xlu0 %8132
      %8134 = vrot.lane.b32.xlu0 %v8114, 4
      %v8135 = vpop.permute.xlu0 %8134
      %8136 = vrot.lane.b32.xlu0 %v8115, 4
      %v8137 = vpop.permute.xlu0 %8136
      %8138 = vrot.lane.b32.xlu0 %v8116, 4
      %v8139 = vpop.permute.xlu0 %8138
      %8140 = vrot.lane.b32.xlu0 %v8117, 4
      %v8141 = vpop.permute.xlu0 %8140
      %8142 = vrot.lane.b32.xlu0 %v8118, 4
      %v8143 = vpop.permute.xlu0 %8142
      %8144 = vrot.lane.b32.xlu0 %v8119, 4
      %v8145 = vpop.permute.xlu0 %8144
      %8146 = vrot.lane.b32.xlu0 %v8120, 4
      %v8147 = vpop.permute.xlu0 %8146
      %8148 = vrot.lane.b32.xlu0 %v8121, 4
      %v8149 = vpop.permute.xlu0 %8148
      %8150 = vrot.lane.b32.xlu0 %v8122, 4
      %v8151 = vpop.permute.xlu0 %8150
      %8152 = vrot.lane.b32.xlu0 %v8123, 4
      %v8153 = vpop.permute.xlu0 %8152
      %8154 = vrot.lane.b32.xlu0 %v8124, 4
      %v8155 = vpop.permute.xlu0 %8154
      %8156 = vrot.lane.b32.xlu0 %v8125, 4
      %v8157 = vpop.permute.xlu0 %8156
      %v8158 = vunpack.c.l.b16 %v7921
      %v8159 = vunpack.c.l.b16 %v7924
      %v8160 = vunpack.c.l.b16 %v7928
      %v8161 = vunpack.c.l.b16 %v7931
      %v8162 = vunpack.c.l.b16 %v7935
      %v8163 = vunpack.c.l.b16 %v7938
      %v8164 = vunpack.c.l.b16 %v7942
      %v8165 = vunpack.c.l.b16 %v7945
      %v8166 = vunpack.c.l.b16 %v7949
      %v8167 = vunpack.c.l.b16 %v7952
      %v8168 = vunpack.c.l.b16 %v7956
      %v8169 = vunpack.c.l.b16 %v7959
      %v8170 = vunpack.c.l.b16 %v7963
      %v8171 = vunpack.c.l.b16 %v7966
      %v8172 = vunpack.c.l.b16 %v7970
      %v8173 = vunpack.c.l.b16 %v7973
      %v8174 = vunpack.c.l.b16 %v7977
      %v8175 = vunpack.c.l.b16 %v7980
      %v8176 = vunpack.c.l.b16 %v7984
      %v8177 = vunpack.c.l.b16 %v7987
      %v8178 = vunpack.c.l.b16 %v7991
      %v8179 = vunpack.c.l.b16 %v7994
      %v8180 = vunpack.c.l.b16 %v7998
      %v8181 = vunpack.c.l.b16 %v8001
      %v8182 = vunpack.c.l.b16 %v8005
      %v8183 = vunpack.c.l.b16 %v8008
      %v8184 = vunpack.c.l.b16 %v8012
      %v8185 = vunpack.c.l.b16 %v8015
      %v8186 = vunpack.c.l.b16 %v8019
      %v8187 = vunpack.c.l.b16 %v8022
      %v8188 = vunpack.c.l.b16 %v8026
      %v8189 = vunpack.c.l.b16 %v8029
      %v8190 = vpack.c.b16 %v8159, %v8158
      %v8191 = vpack.c.b16 %v8161, %v8160
      %v8192 = vpack.c.b16 %v8163, %v8162
      %v8193 = vpack.c.b16 %v8165, %v8164
      %v8194 = vpack.c.b16 %v8167, %v8166
      %v8195 = vpack.c.b16 %v8169, %v8168
      %v8196 = vpack.c.b16 %v8171, %v8170
      %v8197 = vpack.c.b16 %v8173, %v8172
      %v8198 = vpack.c.b16 %v8175, %v8174
      %v8199 = vpack.c.b16 %v8177, %v8176
      %v8200 = vpack.c.b16 %v8179, %v8178
      %v8201 = vpack.c.b16 %v8181, %v8180
      %v8202 = vpack.c.b16 %v8183, %v8182
      %v8203 = vpack.c.b16 %v8185, %v8184
      %v8204 = vpack.c.b16 %v8187, %v8186
      %v8205 = vpack.c.b16 %v8189, %v8188
      %8206 = vrot.lane.b32.xlu0 %v8190, 8
      %v8207 = vpop.permute.xlu0 %8206
      %8208 = vrot.lane.b32.xlu0 %v8191, 8
      %v8209 = vpop.permute.xlu0 %8208
      %8210 = vrot.lane.b32.xlu0 %v8192, 8
      %v8211 = vpop.permute.xlu0 %8210
      %8212 = vrot.lane.b32.xlu0 %v8193, 8
      %v8213 = vpop.permute.xlu0 %8212
      %8214 = vrot.lane.b32.xlu0 %v8194, 8
      %v8215 = vpop.permute.xlu0 %8214
      %8216 = vrot.lane.b32.xlu0 %v8195, 8
      %v8217 = vpop.permute.xlu0 %8216
      %8218 = vrot.lane.b32.xlu0 %v8196, 8
      %v8219 = vpop.permute.xlu0 %8218
      %8220 = vrot.lane.b32.xlu0 %v8197, 8
      %v8221 = vpop.permute.xlu0 %8220
      %8222 = vrot.lane.b32.xlu0 %v8198, 8
      %v8223 = vpop.permute.xlu0 %8222
      %8224 = vrot.lane.b32.xlu0 %v8199, 8
      %v8225 = vpop.permute.xlu0 %8224
      %8226 = vrot.lane.b32.xlu0 %v8200, 8
      %v8227 = vpop.permute.xlu0 %8226
      %8228 = vrot.lane.b32.xlu0 %v8201, 8
      %v8229 = vpop.permute.xlu0 %8228
      %8230 = vrot.lane.b32.xlu0 %v8202, 8
      %v8231 = vpop.permute.xlu0 %8230
      %8232 = vrot.lane.b32.xlu0 %v8203, 8
      %v8233 = vpop.permute.xlu0 %8232
      %8234 = vrot.lane.b32.xlu0 %v8204, 8
      %v8235 = vpop.permute.xlu0 %8234
      %8236 = vrot.lane.b32.xlu0 %v8205, 8
      %v8237 = vpop.permute.xlu0 %8236
      %v8240 = vsel %vm1491, %v8062, %v8127
      %v8243 = vsel %vm1491, %v8063, %v8129
      %v8246 = vsel %vm1491, %v8064, %v8131
      %v8249 = vsel %vm1491, %v8065, %v8133
      %v8252 = vsel %vm1491, %v8066, %v8135
      %v8255 = vsel %vm1491, %v8067, %v8137
      %v8258 = vsel %vm1491, %v8068, %v8139
      %v8261 = vsel %vm1491, %v8069, %v8141
      %v8264 = vsel %vm1491, %v8070, %v8143
      %v8267 = vsel %vm1491, %v8071, %v8145
      %v8270 = vsel %vm1491, %v8072, %v8147
      %v8273 = vsel %vm1491, %v8073, %v8149
      %v8276 = vsel %vm1491, %v8074, %v8151
      %v8279 = vsel %vm1491, %v8075, %v8153
      %v8282 = vsel %vm1491, %v8076, %v8155
      %v8285 = vsel %vm1491, %v8077, %v8157
      %v8287 = vsel %vm1540, %v8240, %v8207
      %v8289 = vsel %vm1540, %v8243, %v8209
      %v8291 = vsel %vm1540, %v8246, %v8211
      %v8293 = vsel %vm1540, %v8249, %v8213
      %v8295 = vsel %vm1540, %v8252, %v8215
      %v8297 = vsel %vm1540, %v8255, %v8217
      %v8299 = vsel %vm1540, %v8258, %v8219
      %v8301 = vsel %vm1540, %v8261, %v8221
      %v8303 = vsel %vm1540, %v8264, %v8223
      %v8305 = vsel %vm1540, %v8267, %v8225
      %v8307 = vsel %vm1540, %v8270, %v8227
      %v8309 = vsel %vm1540, %v8273, %v8229
      %v8311 = vsel %vm1540, %v8276, %v8231
      %v8313 = vsel %vm1540, %v8279, %v8233
      %v8315 = vsel %vm1540, %v8282, %v8235
      %v8317 = vsel %vm1540, %v8285, %v8237
      %s8318 = scalar_lea.vmem %s4, 16
      %v8319 = vld [vmem:[%s8318] sm:$0xf]
      %v8320 = vld [vmem:[%s8318 + $0x4] sm:$0x3]
      %v8323 = vunpack.c.l.b16 %v8319
      %v8324 = vunpack.c.l.b16 %v8320
      %v8325 = vpack.c.b16 %v8324, %v8323
      %v8326 = vsel %vm3074, %v8287, 0
      %v8328 = vsel %vm3074, %v8289, 0
      %v8330 = vsel %vm3074, %v8291, 0
      %v8332 = vsel %vm3074, %v8293, 0
      %v8334 = vsel %vm3074, %v8295, 0
      %v8336 = vsel %vm3074, %v8297, 0
      %v8338 = vsel %vm3074, %v8299, 0
      %v8340 = vsel %vm3074, %v8301, 0
      %v8342 = vsel %vm3074, %v8303, 0
      %v8344 = vsel %vm3074, %v8305, 0
      %v8346 = vsel %vm3074, %v8307, 0
      %v8348 = vsel %vm3074, %v8309, 0
      %v8350 = vsel %vm3074, %v8311, 0
      %v8352 = vsel %vm3074, %v8313, 0
      %v8354 = vsel %vm3074, %v8315, 0
      %v8356 = vsel %vm3074, %v8317, 0
      %v8359 = vsel %vm3107, %v8325, 0
      %8361 = vmatpush.bf16.msra.mxu0 0
      %8362 = vmatpush.bf16.msra.mxu0 0
      %8363 = vmatpush.bf16.msra.mxu0 0
      %8364 = vmatpush.bf16.msra.mxu0 0
      %8365 = vmatpush.bf16.msra.mxu0 0
      %8366 = vmatpush.bf16.msra.mxu0 0
      %8367 = vmatpush.bf16.msra.mxu0 0
      %8368 = vmatpush.bf16.msra.mxu0 %v8359
      %8369 = vmatmul.bf16.gmra.mxu0 %v8326
      %v8370 = vpop.f32.mrf.mxu0
      %v8371 = vadd.f32 0.0, %v8370
      %v8372 = vpop.f32.mrf.mxu0
      %v8373 = vadd.f32 0.0, %v8372
      %8374 = vmatmul.bf16.gmra.mxu0 %v8328
      %v8375 = vpop.f32.mrf.mxu0
      %v8376 = vadd.f32 0.0, %v8375
      %v8377 = vpop.f32.mrf.mxu0
      %v8378 = vadd.f32 0.0, %v8377
      %8379 = vmatmul.bf16.gmra.mxu0 %v8330
      %v8380 = vpop.f32.mrf.mxu0
      %v8381 = vadd.f32 0.0, %v8380
      %v8382 = vpop.f32.mrf.mxu0
      %v8383 = vadd.f32 0.0, %v8382
      %8384 = vmatmul.bf16.gmra.mxu0 %v8332
      %v8385 = vpop.f32.mrf.mxu0
      %v8386 = vadd.f32 0.0, %v8385
      %v8387 = vpop.f32.mrf.mxu0
      %v8388 = vadd.f32 0.0, %v8387
      %8389 = vmatmul.bf16.gmra.mxu0 %v8334
      %v8390 = vpop.f32.mrf.mxu0
      %v8391 = vadd.f32 0.0, %v8390
      %v8392 = vpop.f32.mrf.mxu0
      %v8393 = vadd.f32 0.0, %v8392
      %8394 = vmatmul.bf16.gmra.mxu0 %v8336
      %v8395 = vpop.f32.mrf.mxu0
      %v8396 = vadd.f32 0.0, %v8395
      %v8397 = vpop.f32.mrf.mxu0
      %v8398 = vadd.f32 0.0, %v8397
      %8399 = vmatmul.bf16.gmra.mxu0 %v8338
      %v8400 = vpop.f32.mrf.mxu0
      %v8401 = vadd.f32 0.0, %v8400
      %v8402 = vpop.f32.mrf.mxu0
      %v8403 = vadd.f32 0.0, %v8402
      %8404 = vmatmul.bf16.gmra.mxu0 %v8340
      %v8405 = vpop.f32.mrf.mxu0
      %v8406 = vadd.f32 0.0, %v8405
      %v8407 = vpop.f32.mrf.mxu0
      %v8408 = vadd.f32 0.0, %v8407
      %8409 = vmatmul.bf16.gmra.mxu0 %v8342
      %v8410 = vpop.f32.mrf.mxu0
      %v8411 = vadd.f32 0.0, %v8410
      %v8412 = vpop.f32.mrf.mxu0
      %v8413 = vadd.f32 0.0, %v8412
      %8414 = vmatmul.bf16.gmra.mxu0 %v8344
      %v8415 = vpop.f32.mrf.mxu0
      %v8416 = vadd.f32 0.0, %v8415
      %v8417 = vpop.f32.mrf.mxu0
      %v8418 = vadd.f32 0.0, %v8417
      %8419 = vmatmul.bf16.gmra.mxu0 %v8346
      %v8420 = vpop.f32.mrf.mxu0
      %v8421 = vadd.f32 0.0, %v8420
      %v8422 = vpop.f32.mrf.mxu0
      %v8423 = vadd.f32 0.0, %v8422
      %8424 = vmatmul.bf16.gmra.mxu0 %v8348
      %v8425 = vpop.f32.mrf.mxu0
      %v8426 = vadd.f32 0.0, %v8425
      %v8427 = vpop.f32.mrf.mxu0
      %v8428 = vadd.f32 0.0, %v8427
      %8429 = vmatmul.bf16.gmra.mxu0 %v8350
      %v8430 = vpop.f32.mrf.mxu0
      %v8431 = vadd.f32 0.0, %v8430
      %v8432 = vpop.f32.mrf.mxu0
      %v8433 = vadd.f32 0.0, %v8432
      %8434 = vmatmul.bf16.gmra.mxu0 %v8352
      %v8435 = vpop.f32.mrf.mxu0
      %v8436 = vadd.f32 0.0, %v8435
      %v8437 = vpop.f32.mrf.mxu0
      %v8438 = vadd.f32 0.0, %v8437
      %8439 = vmatmul.bf16.gmra.mxu0 %v8354
      %v8440 = vpop.f32.mrf.mxu0
      %v8441 = vadd.f32 0.0, %v8440
      %v8442 = vpop.f32.mrf.mxu0
      %v8443 = vadd.f32 0.0, %v8442
      %8444 = vmatmul.bf16.gmra.mxu0 %v8356
      %v8445 = vpop.f32.mrf.mxu0
      %v8446 = vadd.f32 0.0, %v8445
      %v8447 = vpop.f32.mrf.mxu0
      %v8448 = vadd.f32 0.0, %v8447
      %8449 = vdwg.mxu0
      %v8450 = vadd.f32 %v7471, %v8371
      %v8451 = vadd.f32 %v7473, %v8373
      %v8452 = vadd.f32 %v7476, %v8376
      %v8453 = vadd.f32 %v7478, %v8378
      %v8454 = vadd.f32 %v7481, %v8381
      %v8455 = vadd.f32 %v7483, %v8383
      %v8456 = vadd.f32 %v7486, %v8386
      %v8457 = vadd.f32 %v7488, %v8388
      %v8458 = vadd.f32 %v7491, %v8391
      %v8459 = vadd.f32 %v7493, %v8393
      %v8460 = vadd.f32 %v7496, %v8396
      %v8461 = vadd.f32 %v7498, %v8398
      %v8462 = vadd.f32 %v7501, %v8401
      %v8463 = vadd.f32 %v7503, %v8403
      %v8464 = vadd.f32 %v7506, %v8406
      %v8465 = vadd.f32 %v7508, %v8408
      %v8466 = vadd.f32 %v7511, %v8411
      %v8467 = vadd.f32 %v7513, %v8413
      %v8468 = vadd.f32 %v7516, %v8416
      %v8469 = vadd.f32 %v7518, %v8418
      %v8470 = vadd.f32 %v7521, %v8421
      %v8471 = vadd.f32 %v7523, %v8423
      %v8472 = vadd.f32 %v7526, %v8426
      %v8473 = vadd.f32 %v7528, %v8428
      %v8474 = vadd.f32 %v7531, %v8431
      %v8475 = vadd.f32 %v7533, %v8433
      %v8476 = vadd.f32 %v7536, %v8436
      %v8477 = vadd.f32 %v7538, %v8438
      %v8478 = vadd.f32 %v7541, %v8441
      %v8479 = vadd.f32 %v7543, %v8443
      %v8480 = vadd.f32 %v7546, %v8446
      %v8481 = vadd.f32 %v7548, %v8448
      %v8482 = vsel %vm1491, %v8450, 0.0
      %v8483 = vsel %vm1491, %v8451, 0.0
      %v8484 = vadd.f32 %v8482, %v8483
      %v8485 = vsel %vm1491, %v8452, 0.0
      %v8486 = vadd.f32 %v8484, %v8485
      %v8487 = vsel %vm1491, %v8453, 0.0
      %v8488 = vadd.f32 %v8486, %v8487
      %v8489 = vsel %vm1491, %v8454, 0.0
      %v8490 = vadd.f32 %v8488, %v8489
      %v8491 = vsel %vm1491, %v8455, 0.0
      %v8492 = vadd.f32 %v8490, %v8491
      %v8493 = vsel %vm1491, %v8456, 0.0
      %v8494 = vadd.f32 %v8492, %v8493
      %v8495 = vsel %vm1491, %v8457, 0.0
      %v8496 = vadd.f32 %v8494, %v8495
      %v8497 = vsel %vm1491, %v8458, 0.0
      %v8498 = vadd.f32 %v8496, %v8497
      %v8499 = vsel %vm1491, %v8459, 0.0
      %v8500 = vadd.f32 %v8498, %v8499
      %v8501 = vsel %vm1491, %v8460, 0.0
      %v8502 = vadd.f32 %v8500, %v8501
      %v8503 = vsel %vm1491, %v8461, 0.0
      %v8504 = vadd.f32 %v8502, %v8503
      %v8505 = vsel %vm1491, %v8462, 0.0
      %v8506 = vadd.f32 %v8504, %v8505
      %v8507 = vsel %vm1491, %v8463, 0.0
      %v8508 = vadd.f32 %v8506, %v8507
      %v8509 = vsel %vm1491, %v8464, 0.0
      %v8510 = vadd.f32 %v8508, %v8509
      %v8511 = vsel %vm1491, %v8465, 0.0
      %v8512 = vadd.f32 %v8510, %v8511
      %v8513 = vsel %vm1491, %v8466, 0.0
      %v8514 = vadd.f32 %v8512, %v8513
      %v8515 = vsel %vm1491, %v8467, 0.0
      %v8516 = vadd.f32 %v8514, %v8515
      %v8517 = vsel %vm1491, %v8468, 0.0
      %v8518 = vadd.f32 %v8516, %v8517
      %v8519 = vsel %vm1491, %v8469, 0.0
      %v8520 = vadd.f32 %v8518, %v8519
      %v8521 = vsel %vm1491, %v8470, 0.0
      %v8522 = vadd.f32 %v8520, %v8521
      %v8523 = vsel %vm1491, %v8471, 0.0
      %v8524 = vadd.f32 %v8522, %v8523
      %v8525 = vsel %vm1491, %v8472, 0.0
      %v8526 = vadd.f32 %v8524, %v8525
      %v8527 = vsel %vm1491, %v8473, 0.0
      %v8528 = vadd.f32 %v8526, %v8527
      %v8529 = vsel %vm1491, %v8474, 0.0
      %v8530 = vadd.f32 %v8528, %v8529
      %v8531 = vsel %vm1491, %v8475, 0.0
      %v8532 = vadd.f32 %v8530, %v8531
      %v8533 = vsel %vm1491, %v8476, 0.0
      %v8534 = vadd.f32 %v8532, %v8533
      %v8535 = vsel %vm1491, %v8477, 0.0
      %v8536 = vadd.f32 %v8534, %v8535
      %v8537 = vsel %vm1491, %v8478, 0.0
      %v8538 = vadd.f32 %v8536, %v8537
      %v8539 = vsel %vm1491, %v8479, 0.0
      %v8540 = vadd.f32 %v8538, %v8539
      %v8541 = vsel %vm1491, %v8480, 0.0
      %v8542 = vadd.f32 %v8540, %v8541
      %v8543 = vsel %vm1491, %v8481, 0.0
      %v8544 = vadd.f32 %v8542, %v8543
      %v8545 = vrot.slane %v8544, 4
      %v8546 = vadd.f32 %v8544, %v8545
      %v8547 = vrot.slane %v8546, 2
      %v8548 = vadd.f32 %v8546, %v8547
      %v8549 = vrot.slane %v8548, 1
      %v8550 = vadd.f32 %v8548, %v8549
      %v8551 = vmul.f32 %v8550, 0.00390625
      %v8552 = vmul.f32 %v8450, %v8450
      %v8553 = vmul.f32 %v8451, %v8451
      %v8554 = vmul.f32 %v8452, %v8452
      %v8555 = vmul.f32 %v8453, %v8453
      %v8556 = vmul.f32 %v8454, %v8454
      %v8557 = vmul.f32 %v8455, %v8455
      %v8558 = vmul.f32 %v8456, %v8456
      %v8559 = vmul.f32 %v8457, %v8457
      %v8560 = vmul.f32 %v8458, %v8458
      %v8561 = vmul.f32 %v8459, %v8459
      %v8562 = vmul.f32 %v8460, %v8460
      %v8563 = vmul.f32 %v8461, %v8461
      %v8564 = vmul.f32 %v8462, %v8462
      %v8565 = vmul.f32 %v8463, %v8463
      %v8566 = vmul.f32 %v8464, %v8464
      %v8567 = vmul.f32 %v8465, %v8465
      %v8568 = vmul.f32 %v8466, %v8466
      %v8569 = vmul.f32 %v8467, %v8467
      %v8570 = vmul.f32 %v8468, %v8468
      %v8571 = vmul.f32 %v8469, %v8469
      %v8572 = vmul.f32 %v8470, %v8470
      %v8573 = vmul.f32 %v8471, %v8471
      %v8574 = vmul.f32 %v8472, %v8472
      %v8575 = vmul.f32 %v8473, %v8473
      %v8576 = vmul.f32 %v8474, %v8474
      %v8577 = vmul.f32 %v8475, %v8475
      %v8578 = vmul.f32 %v8476, %v8476
      %v8579 = vmul.f32 %v8477, %v8477
      %v8580 = vmul.f32 %v8478, %v8478
      %v8581 = vmul.f32 %v8479, %v8479
      %v8582 = vmul.f32 %v8480, %v8480
      %v8583 = vmul.f32 %v8481, %v8481
      %v8584 = vsel %vm1491, %v8552, 0.0
      %v8585 = vsel %vm1491, %v8553, 0.0
      %v8586 = vadd.f32 %v8584, %v8585
      %v8587 = vsel %vm1491, %v8554, 0.0
      %v8588 = vadd.f32 %v8586, %v8587
      %v8589 = vsel %vm1491, %v8555, 0.0
      %v8590 = vadd.f32 %v8588, %v8589
      %v8591 = vsel %vm1491, %v8556, 0.0
      %v8592 = vadd.f32 %v8590, %v8591
      %v8593 = vsel %vm1491, %v8557, 0.0
      %v8594 = vadd.f32 %v8592, %v8593
      %v8595 = vsel %vm1491, %v8558, 0.0
      %v8596 = vadd.f32 %v8594, %v8595
      %v8597 = vsel %vm1491, %v8559, 0.0
      %v8598 = vadd.f32 %v8596, %v8597
      %v8599 = vsel %vm1491, %v8560, 0.0
      %v8600 = vadd.f32 %v8598, %v8599
      %v8601 = vsel %vm1491, %v8561, 0.0
      %v8602 = vadd.f32 %v8600, %v8601
      %v8603 = vsel %vm1491, %v8562, 0.0
      %v8604 = vadd.f32 %v8602, %v8603
      %v8605 = vsel %vm1491, %v8563, 0.0
      %v8606 = vadd.f32 %v8604, %v8605
      %v8607 = vsel %vm1491, %v8564, 0.0
      %v8608 = vadd.f32 %v8606, %v8607
      %v8609 = vsel %vm1491, %v8565, 0.0
      %v8610 = vadd.f32 %v8608, %v8609
      %v8611 = vsel %vm1491, %v8566, 0.0
      %v8612 = vadd.f32 %v8610, %v8611
      %v8613 = vsel %vm1491, %v8567, 0.0
      %v8614 = vadd.f32 %v8612, %v8613
      %v8615 = vsel %vm1491, %v8568, 0.0
      %v8616 = vadd.f32 %v8614, %v8615
      %v8617 = vsel %vm1491, %v8569, 0.0
      %v8618 = vadd.f32 %v8616, %v8617
      %v8619 = vsel %vm1491, %v8570, 0.0
      %v8620 = vadd.f32 %v8618, %v8619
      %v8621 = vsel %vm1491, %v8571, 0.0
      %v8622 = vadd.f32 %v8620, %v8621
      %v8623 = vsel %vm1491, %v8572, 0.0
      %v8624 = vadd.f32 %v8622, %v8623
      %v8625 = vsel %vm1491, %v8573, 0.0
      %v8626 = vadd.f32 %v8624, %v8625
      %v8627 = vsel %vm1491, %v8574, 0.0
      %v8628 = vadd.f32 %v8626, %v8627
      %v8629 = vsel %vm1491, %v8575, 0.0
      %v8630 = vadd.f32 %v8628, %v8629
      %v8631 = vsel %vm1491, %v8576, 0.0
      %v8632 = vadd.f32 %v8630, %v8631
      %v8633 = vsel %vm1491, %v8577, 0.0
      %v8634 = vadd.f32 %v8632, %v8633
      %v8635 = vsel %vm1491, %v8578, 0.0
      %v8636 = vadd.f32 %v8634, %v8635
      %v8637 = vsel %vm1491, %v8579, 0.0
      %v8638 = vadd.f32 %v8636, %v8637
      %v8639 = vsel %vm1491, %v8580, 0.0
      %v8640 = vadd.f32 %v8638, %v8639
      %v8641 = vsel %vm1491, %v8581, 0.0
      %v8642 = vadd.f32 %v8640, %v8641
      %v8643 = vsel %vm1491, %v8582, 0.0
      %v8644 = vadd.f32 %v8642, %v8643
      %v8645 = vsel %vm1491, %v8583, 0.0
      %v8646 = vadd.f32 %v8644, %v8645
      %v8647 = vrot.slane %v8646, 4
      %v8648 = vadd.f32 %v8646, %v8647
      %v8649 = vrot.slane %v8648, 2
      %v8650 = vadd.f32 %v8648, %v8649
      %v8651 = vrot.slane %v8650, 1
      %v8652 = vadd.f32 %v8650, %v8651
      %v8653 = vmul.f32 %v8652, 0.00390625
      %v8654 = vmul.f32 %v8551, %v8551
      %v8655 = vsub.f32 %v8653, %v8654
      %v8656 = vadd.f32 %v8655, 1e-05
      %v8657 = vrsqrt.pop %v8656
      %v8658 = vmul.f32 %v8657, %v8656
      %v8659 = vmul.f32 %v8658, %v8657
      %v8660 = vmul.f32 0.5, %v8659
      %v8661 = vsub.f32 1.5, %v8660
      %v8662 = vmul.f32 %v8657, %v8661
      %vm8663 = vweird.f32 %v8656
      %vm8664 = vweird.f32 %v8657
      %vm8665 = vmor %vm8663, %vm8664
      %v8666 = vsel %vm8665, %v8657, %v8662
      %v8667 = vld [vmem:[%s5] sm:$0x1]
      %v8668 = vmul.f32 %v8666, %v8667
      %v8669 = vld [vmem:[%s6] sm:$0x1]
      %v8670 = vmul.f32 %v8551, %v8668
      %v8671 = vsub.f32 %v8669, %v8670
      %v8672 = vperm.slane %v8668, 0
      %v8673 = vmul.f32 %v8450, %v8672
      %v8674 = vmul.f32 %v8451, %v8672
      %v8675 = vmul.f32 %v8452, %v8672
      %v8676 = vmul.f32 %v8453, %v8672
      %v8677 = vmul.f32 %v8454, %v8672
      %v8678 = vmul.f32 %v8455, %v8672
      %v8679 = vmul.f32 %v8456, %v8672
      %v8680 = vmul.f32 %v8457, %v8672
      %v8681 = vmul.f32 %v8458, %v8672
      %v8682 = vmul.f32 %v8459, %v8672
      %v8683 = vmul.f32 %v8460, %v8672
      %v8684 = vmul.f32 %v8461, %v8672
      %v8685 = vmul.f32 %v8462, %v8672
      %v8686 = vmul.f32 %v8463, %v8672
      %v8687 = vmul.f32 %v8464, %v8672
      %v8688 = vmul.f32 %v8465, %v8672
      %v8689 = vmul.f32 %v8466, %v8672
      %v8690 = vmul.f32 %v8467, %v8672
      %v8691 = vmul.f32 %v8468, %v8672
      %v8692 = vmul.f32 %v8469, %v8672
      %v8693 = vmul.f32 %v8470, %v8672
      %v8694 = vmul.f32 %v8471, %v8672
      %v8695 = vmul.f32 %v8472, %v8672
      %v8696 = vmul.f32 %v8473, %v8672
      %v8697 = vmul.f32 %v8474, %v8672
      %v8698 = vmul.f32 %v8475, %v8672
      %v8699 = vmul.f32 %v8476, %v8672
      %v8700 = vmul.f32 %v8477, %v8672
      %v8701 = vmul.f32 %v8478, %v8672
      %v8702 = vmul.f32 %v8479, %v8672
      %v8703 = vmul.f32 %v8480, %v8672
      %v8704 = vmul.f32 %v8481, %v8672
      %v8706 = vperm.slane %v8671, 0
      %v8708 = vadd.f32 %v8673, %v8706
      %v8709 = vadd.f32 %v8674, %v8706
      %v8710 = vadd.f32 %v8675, %v8706
      %v8711 = vadd.f32 %v8676, %v8706
      %v8712 = vadd.f32 %v8677, %v8706
      %v8713 = vadd.f32 %v8678, %v8706
      %v8714 = vadd.f32 %v8679, %v8706
      %v8715 = vadd.f32 %v8680, %v8706
      %v8716 = vadd.f32 %v8681, %v8706
      %v8717 = vadd.f32 %v8682, %v8706
      %v8718 = vadd.f32 %v8683, %v8706
      %v8719 = vadd.f32 %v8684, %v8706
      %v8720 = vadd.f32 %v8685, %v8706
      %v8721 = vadd.f32 %v8686, %v8706
      %v8722 = vadd.f32 %v8687, %v8706
      %v8723 = vadd.f32 %v8688, %v8706
      %v8724 = vadd.f32 %v8689, %v8706
      %v8725 = vadd.f32 %v8690, %v8706
      %v8726 = vadd.f32 %v8691, %v8706
      %v8727 = vadd.f32 %v8692, %v8706
      %v8728 = vadd.f32 %v8693, %v8706
      %v8729 = vadd.f32 %v8694, %v8706
      %v8730 = vadd.f32 %v8695, %v8706
      %v8731 = vadd.f32 %v8696, %v8706
      %v8732 = vadd.f32 %v8697, %v8706
      %v8733 = vadd.f32 %v8698, %v8706
      %v8734 = vadd.f32 %v8699, %v8706
      %v8735 = vadd.f32 %v8700, %v8706
      %v8736 = vadd.f32 %v8701, %v8706
      %v8737 = vadd.f32 %v8702, %v8706
      %v8738 = vadd.f32 %v8703, %v8706
      %v8739 = vadd.f32 %v8704, %v8706
      %v8740 = vld [vmem:[%s273] sm:$0xff]
      %v8741 = vld [vmem:[%s273 + $0x8] sm:$0xff]
      %v8742 = vld [vmem:[%s273 + $0x10] sm:$0xff]
      %v8743 = vld [vmem:[%s273 + $0x18] sm:$0xff]
      %v8744 = vld [vmem:[%s273 + $0x20] sm:$0xff]
      %v8745 = vld [vmem:[%s273 + $0x28] sm:$0xff]
      %v8746 = vld [vmem:[%s273 + $0x30] sm:$0xff]
      %v8747 = vld [vmem:[%s273 + $0x38] sm:$0xff]
      %v8748 = vld [vmem:[%s273 + $0x40] sm:$0xff]
      %v8749 = vld [vmem:[%s273 + $0x48] sm:$0xff]
      %v8750 = vld [vmem:[%s273 + $0x50] sm:$0xff]
      %v8751 = vld [vmem:[%s273 + $0x58] sm:$0xff]
      %v8752 = vld [vmem:[%s273 + $0x60] sm:$0xff]
      %v8753 = vld [vmem:[%s273 + $0x68] sm:$0xff]
      %v8754 = vld [vmem:[%s273 + $0x70] sm:$0xff]
      %v8755 = vld [vmem:[%s273 + $0x78] sm:$0xff]
      %v8756 = vld [vmem:[%s273 + $0x80] sm:$0xff]
      %v8757 = vld [vmem:[%s273 + $0x88] sm:$0xff]
      %v8758 = vld [vmem:[%s273 + $0x90] sm:$0xff]
      %v8759 = vld [vmem:[%s273 + $0x98] sm:$0xff]
      %v8760 = vld [vmem:[%s273 + $0xa0] sm:$0xff]
      %v8761 = vld [vmem:[%s273 + $0xa8] sm:$0xff]
      %v8762 = vld [vmem:[%s273 + $0xb0] sm:$0xff]
      %v8763 = vld [vmem:[%s273 + $0xb8] sm:$0xff]
      %v8764 = vld [vmem:[%s273 + $0xc0] sm:$0xff]
      %v8765 = vld [vmem:[%s273 + $0xc8] sm:$0xff]
      %v8766 = vld [vmem:[%s273 + $0xd0] sm:$0xff]
      %v8767 = vld [vmem:[%s273 + $0xd8] sm:$0xff]
      %v8768 = vld [vmem:[%s273 + $0xe0] sm:$0xff]
      %v8769 = vld [vmem:[%s273 + $0xe8] sm:$0xff]
      %v8770 = vld [vmem:[%s273 + $0xf0] sm:$0xff]
      %v8771 = vld [vmem:[%s273 + $0xf8] sm:$0xff]
      %v8772 = vadd.f32 %v8708, %v8740
      %v8773 = vadd.f32 %v8709, %v8741
      %v8774 = vadd.f32 %v8710, %v8742
      %v8775 = vadd.f32 %v8711, %v8743
      %v8776 = vadd.f32 %v8712, %v8744
      %v8777 = vadd.f32 %v8713, %v8745
      %v8778 = vadd.f32 %v8714, %v8746
      %v8779 = vadd.f32 %v8715, %v8747
      %v8780 = vadd.f32 %v8716, %v8748
      %v8781 = vadd.f32 %v8717, %v8749
      %v8782 = vadd.f32 %v8718, %v8750
      %v8783 = vadd.f32 %v8719, %v8751
      %v8784 = vadd.f32 %v8720, %v8752
      %v8785 = vadd.f32 %v8721, %v8753
      %v8786 = vadd.f32 %v8722, %v8754
      %v8787 = vadd.f32 %v8723, %v8755
      %v8788 = vadd.f32 %v8724, %v8756
      %v8789 = vadd.f32 %v8725, %v8757
      %v8790 = vadd.f32 %v8726, %v8758
      %v8791 = vadd.f32 %v8727, %v8759
      %v8792 = vadd.f32 %v8728, %v8760
      %v8793 = vadd.f32 %v8729, %v8761
      %v8794 = vadd.f32 %v8730, %v8762
      %v8795 = vadd.f32 %v8731, %v8763
      %v8796 = vadd.f32 %v8732, %v8764
      %v8797 = vadd.f32 %v8733, %v8765
      %v8798 = vadd.f32 %v8734, %v8766
      %v8799 = vadd.f32 %v8735, %v8767
      %v8800 = vadd.f32 %v8736, %v8768
      %v8801 = vadd.f32 %v8737, %v8769
      %v8802 = vadd.f32 %v8738, %v8770
      %v8803 = vadd.f32 %v8739, %v8771
      %8804 = vst.msk [vmem:[%s278] sm:$0xff] %vm1491, %v8772
      %8805 = vst.msk [vmem:[%s278 + $0x8] sm:$0xff] %vm1491, %v8773
      %8806 = vst.msk [vmem:[%s278 + $0x10] sm:$0xff] %vm1491, %v8774
      %8807 = vst.msk [vmem:[%s278 + $0x18] sm:$0xff] %vm1491, %v8775
      %8808 = vst.msk [vmem:[%s278 + $0x20] sm:$0xff] %vm1491, %v8776
      %8809 = vst.msk [vmem:[%s278 + $0x28] sm:$0xff] %vm1491, %v8777
      %8810 = vst.msk [vmem:[%s278 + $0x30] sm:$0xff] %vm1491, %v8778
      %8811 = vst.msk [vmem:[%s278 + $0x38] sm:$0xff] %vm1491, %v8779
      %8812 = vst.msk [vmem:[%s278 + $0x40] sm:$0xff] %vm1491, %v8780
      %8813 = vst.msk [vmem:[%s278 + $0x48] sm:$0xff] %vm1491, %v8781
      %8814 = vst.msk [vmem:[%s278 + $0x50] sm:$0xff] %vm1491, %v8782
      %8815 = vst.msk [vmem:[%s278 + $0x58] sm:$0xff] %vm1491, %v8783
      %8816 = vst.msk [vmem:[%s278 + $0x60] sm:$0xff] %vm1491, %v8784
      %8817 = vst.msk [vmem:[%s278 + $0x68] sm:$0xff] %vm1491, %v8785
      %8818 = vst.msk [vmem:[%s278 + $0x70] sm:$0xff] %vm1491, %v8786
      %8819 = vst.msk [vmem:[%s278 + $0x78] sm:$0xff] %vm1491, %v8787
      %8820 = vst.msk [vmem:[%s278 + $0x80] sm:$0xff] %vm1491, %v8788
      %8821 = vst.msk [vmem:[%s278 + $0x88] sm:$0xff] %vm1491, %v8789
      %8822 = vst.msk [vmem:[%s278 + $0x90] sm:$0xff] %vm1491, %v8790
      %8823 = vst.msk [vmem:[%s278 + $0x98] sm:$0xff] %vm1491, %v8791
      %8824 = vst.msk [vmem:[%s278 + $0xa0] sm:$0xff] %vm1491, %v8792
      %8825 = vst.msk [vmem:[%s278 + $0xa8] sm:$0xff] %vm1491, %v8793
      %8826 = vst.msk [vmem:[%s278 + $0xb0] sm:$0xff] %vm1491, %v8794
      %8827 = vst.msk [vmem:[%s278 + $0xb8] sm:$0xff] %vm1491, %v8795
      %8828 = vst.msk [vmem:[%s278 + $0xc0] sm:$0xff] %vm1491, %v8796
      %8829 = vst.msk [vmem:[%s278 + $0xc8] sm:$0xff] %vm1491, %v8797
      %8830 = vst.msk [vmem:[%s278 + $0xd0] sm:$0xff] %vm1491, %v8798
      %8831 = vst.msk [vmem:[%s278 + $0xd8] sm:$0xff] %vm1491, %v8799
      %8832 = vst.msk [vmem:[%s278 + $0xe0] sm:$0xff] %vm1491, %v8800
      %8833 = vst.msk [vmem:[%s278 + $0xe8] sm:$0xff] %vm1491, %v8801
      %8834 = vst.msk [vmem:[%s278 + $0xf0] sm:$0xff] %vm1491, %v8802
      %8835 = vst.msk [vmem:[%s278 + $0xf8] sm:$0xff] %vm1491, %v8803
      %p8836 = scmp.lt.s32.totalorder %s18, 1
      %s8837 = scalar_select %p8836, %s18, 1
      %s8838 = smul.addr %s8837, 32
      %s8839 = smul.addr %s8838, 8
      %s8840 = scalar_lea.vmem %s7, %s8839
      // Predicated region
      $region49: #{tpu_custom_call.1} parent=47 // pred_check
        %p8841 = pneg %p188
      $region50: #{tpu_custom_call.1} parent=47 // pred_check_branch
        %8843 = sbr.rel (%p8841) target = $region52
      $region51: #{tpu_custom_call.1} parent=47 // pred_region
        _
      $region52: #{tpu_custom_call.1} parent=47 // pred_fallthru
        _
    $region48: #{tpu_custom_call.1} parent=5 // pred_fallthru
      _
    %p8844 = scmp.le.s32.totalorder 2, %s13
    // Predicated region
    $region53: #{tpu_custom_call.1} parent=5 // pred_check
      %p8845 = pneg %p8844
    $region54: #{tpu_custom_call.1} parent=5 // pred_check_branch
      %8847 = sbr.rel (%p8845) target = $region56
    $region55: #{tpu_custom_call.1} parent=5 // pred_region
      %s8848 = ssub.s32 %s13, 2
      // Predicated region
      $region57: #{tpu_custom_call.1} parent=55 // pred_check
        %p8849 = pneg %p194
      $region58: #{tpu_custom_call.1} parent=55 // pred_check_branch
        %8851 = sbr.rel (%p8849) target = $region60
      $region59: #{tpu_custom_call.1} parent=55 // pred_region
        %p8852 = scmp.lt.s32.totalorder %s19, 1
        %s8853 = scalar_select %p8852, %s19, 1
        %s8854 = smul.addr %s8853, 32
        %s8855 = smul.addr %s8854, 8
        %s8856 = scalar_lea.vmem %s7, %s8855
      $region60: #{tpu_custom_call.1} parent=55 // pred_fallthru
        _
    $region56: #{tpu_custom_call.1} parent=5 // pred_fallthru
      _
  $region6: #{tpu_custom_call.1} parent=0 // loop_footer
    %s17 = sadd.s32 1, %s13
  $region7: #{tpu_custom_call.1} parent=0 // loop_footer_branch
    %12 = sbr.rel target = $region3
  $region8: #{tpu_custom_call.1} parent=0 // loop_exit
    _

</llo_original>
